<compile_context>
chip_gen: v7x
topology: tpu7x:2x2x1
jax: 0.10.0
libtpu: 0.0.40
codegen_flags: <defaults>
</compile_context>

<pallas_src>
import functools

import jax
import jax.numpy as jnp
from jax.experimental import pallas as pl
from jax.experimental.pallas import tpu as pltpu


# ----------------------------------------------------------------------------
# Helpers
# ----------------------------------------------------------------------------
def _pick_tile(n, candidates):
    """Largest candidate tile dividing n, preferring >= 2 grid steps (megacore)."""
    for t in candidates:
        if n % t == 0 and n // t >= 2:
            return t
    for t in candidates:
        if n % t == 0:
            return t
    return candidates[-1]


# ----------------------------------------------------------------------------
# Pallas kernels
# ----------------------------------------------------------------------------
def _gemm_t_kernel(w_ref, x_ref, shift_ref, *rest, relu, has_res):
    """out[Cout, TM] = W[Cout, K] @ cols[K, TM] + shift (+ residual) (+ ReLU).

    Transposed conv-as-GEMM: M on lanes -> lane-dense stores; bf16 operands,
    f32 accumulation (preferred_element_type), f32 epilogue.
    """
    o_ref = rest[-1]
    acc = jnp.dot(w_ref[...], x_ref[...], preferred_element_type=jnp.float32)
    y = acc + shift_ref[...]
    if has_res:
        y = y + rest[0][...]
    if relu:
        y = jnp.maximum(y, 0.0)
    o_ref[...] = y


def _maxpool_kernel(x_ref, o_ref, *, H, W):
    """3x3 window max over the (-inf padded) block; reads the input once."""
    x = x_ref[...]
    m = x[:, 0:H, 0:W]
    for dh in range(3):
        for dw in range(3):
            if dh == 0 and dw == 0:
                continue
            m = jnp.maximum(m, x[:, dh:dh + H, dw:dw + W])
    o_ref[...] = m


def _head_kernel(x_ref, wt_ref, b_ref, o_ref):
    """Fused I3DHead + segment mean: avg-pool over (s,t,h,w) + FC^T + bias."""
    pooled = jnp.mean(x_ref[...], axis=2)                            # (C, b)
    logits_t = jnp.dot(wt_ref[...], pooled,
                       preferred_element_type=jnp.float32)           # (ncls, b)
    o_ref[...] = logits_t + b_ref[...]


# ----------------------------------------------------------------------------
# Glue: transposed im2col (pure slicing / stacking, no transposes, no FLOPs)
# ----------------------------------------------------------------------------
def _im2col_t(x, ksize, stride, padding):
    """[C, N, T, H, W] -> cols [C*kt*kh*kw, N*To*Ho*Wo], K-order (Cin, dt, dh, dw).

    1x1x1 convs need no duplication (single strided slice); spatial convs stack
    taps along a new axis -- no transposes anywhere.
    """
    # TODO(synk): the kh*kw tap accumulation could move inside the GEMM kernel
    # (windowed reads of a VMEM-resident slab) to avoid materializing cols in HBM
    # for the 1x7x7 stem / 1x3x3 convs; left as XLA glue here.
    c, n, t, h, w = x.shape
    kt, kh, kw = ksize
    st, sh, sw = stride
    pt, ph, pw = padding
    xp = jnp.pad(x, ((0, 0), (0, 0), (pt, pt), (ph, ph), (pw, pw)))
    to = (t + 2 * pt - kt) // st + 1
    ho = (h + 2 * ph - kh) // sh + 1
    wo = (w + 2 * pw - kw) // sw + 1
    taps = []
    for dt in range(kt):
        for dh in range(kh):
            for dw in range(kw):
                taps.append(xp[:, :, dt:dt + st * to:st,
                               dh:dh + sh * ho:sh, dw:dw + sw * wo:sw])
    col = taps[0] if len(taps) == 1 else jnp.stack(taps, axis=1)
    return col.reshape(c * kt * kh * kw, n * to * ho * wo), (to, ho, wo)


# ----------------------------------------------------------------------------
# Pallas-backed ops
# ----------------------------------------------------------------------------
def _pallas_gemm_t(w2, cols, shift, residual=None, relu=True):
    # w2: [Cout, K] bf16 (BN scale folded); cols: [K, M] bf16; shift: [Cout] f32
    # residual: optional [Cout, M] f32.  Returns [Cout, M] f32.
    cout, k = w2.shape
    m = cols.shape[1]
    tm = _pick_tile(m, (2048, 1024, 512, 256, 128))
    mp = ((m + tm - 1) // tm) * tm
    if mp != m:  # never hit in this config; keeps the wrapper general
        cols = jnp.pad(cols, ((0, 0), (0, mp - m)))
        if residual is not None:
            residual = jnp.pad(residual, ((0, 0), (0, mp - m)))
    in_specs = [
        pl.BlockSpec((cout, k), lambda i: (0, 0)),    # grid-invariant weight
        pl.BlockSpec((k, tm), lambda i: (0, i)),
        pl.BlockSpec((cout, 1), lambda i: (0, 0)),    # folded BN shift
    ]
    args = [w2, cols, shift.reshape(cout, 1)]
    if residual is not None:
        in_specs.append(pl.BlockSpec((cout, tm), lambda i: (0, i)))
        args.append(residual)
    out = pl.pallas_call(
        functools.partial(_gemm_t_kernel, relu=relu, has_res=residual is not None),
        out_shape=jax.ShapeDtypeStruct((cout, mp), jnp.float32),
        grid=(mp // tm,),
        in_specs=in_specs,
        out_specs=pl.BlockSpec((cout, tm), lambda i: (0, i)),
        compiler_params=pltpu.CompilerParams(dimension_semantics=("parallel",)),
    )(*args)
    return out if mp == m else out[:, :m]


def pallas_conv_bn_act(x, p, stride, padding, relu, residual=None):
    # x: [Cin, N, T, H, W] f32.  Conv (+ folded BN) (+ residual) (+ ReLU).
    cols, (to, ho, wo) = _im2col_t(x, p["ksize"], stride, padding)
    cols = cols.astype(jnp.bfloat16)
    cout = p["w2"].shape[0]
    res2 = None if residual is None else residual.reshape(cout, -1)
    y = _pallas_gemm_t(p["w2"], cols, p["shift"], residual=res2, relu=relu)
    return y.reshape(cout, x.shape[1], to, ho, wo)


def pallas_maxpool_1x3x3(x):
    # MaxPool3d kernel (1,3,3), stride (1,1,1), padding (0,1,1) on [C, N, T, H, W].
    c, n, t, h, w = x.shape
    xp = jnp.pad(x, ((0, 0), (0, 0), (0, 0), (1, 1), (1, 1)),
                 constant_values=-jnp.inf)
    r = c * n * t
    xp = xp.reshape(r, h + 2, w + 2)
    tr = _pick_tile(r, (256, 128, 64, 32, 16, 8))
    rp = ((r + tr - 1) // tr) * tr
    if rp != r:
        xp = jnp.pad(xp, ((0, rp - r), (0, 0), (0, 0)), constant_values=-jnp.inf)
    out = pl.pallas_call(
        functools.partial(_maxpool_kernel, H=h, W=w),
        out_shape=jax.ShapeDtypeStruct((rp, h, w), jnp.float32),
        grid=(rp // tr,),
        in_specs=[pl.BlockSpec((tr, h + 2, w + 2), lambda i: (i, 0, 0))],
        out_specs=pl.BlockSpec((tr, h, w), lambda i: (i, 0, 0)),
        compiler_params=pltpu.CompilerParams(dimension_semantics=("parallel",)),
    )(xp)
    out = out[:r] if rp != r else out
    return out.reshape(c, n, t, h, w)


def pallas_head_mean(feat, hp, b, s):
    # I3DHead: global avg-pool over (t,h,w) + Linear, then mean over segments s.
    # Pool and segment-mean are linear, so they fuse into one mean over (s,t,h,w)
    # followed by the FC, all in a single pallas_call.
    # TODO(synk): I3DHead dropout omitted (eval/inference semantics -> identity).
    # TODO(synk): single-block head is fine at this size; tile over (b, THW) before
    #             scaling to real ResNet3dSlowOnly activation sizes.
    c = feat.shape[0]
    thw = feat.shape[2] * feat.shape[3] * feat.shape[4]
    x = feat.reshape(c, b, s * thw)
    ncls = hp["w"].shape[1]
    out_t = pl.pallas_call(
        _head_kernel,
        out_shape=jax.ShapeDtypeStruct((ncls, b), jnp.float32),
    )(x, hp["w"].T, hp["b"].reshape(ncls, 1))
    return out_t.T


# ----------------------------------------------------------------------------
# Forward (mirrors ResNet3d_Skl.forward)
# ----------------------------------------------------------------------------
def pallas_forward(params, x):
    b, s = x.shape[0], x.shape[1]
    n = b * s
    # 'b s c t h w -> (b s) c t h w', then to the channels-leading working layout
    # [C, N, T, H, W] used by every kernel (one-time layout change on the tiny input).
    x = x.reshape((n,) + x.shape[2:])
    x = jnp.transpose(x, (1, 0, 2, 3, 4))

    bb = params["backbone"]
    # stem: conv 1x7x7 (stride 1, pad (0,3,3)) + BN + ReLU + maxpool 1x3x3
    x = pallas_conv_bn_act(x, bb["stem"], (1, 1, 1), (0, 3, 3), relu=True)
    x = pallas_maxpool_1x3x3(x)

    for stage in bb["stages"]:
        for blk in stage:
            identity = x
            out = pallas_conv_bn_act(x, blk["conv1"], (1, 1, 1), blk["pad1"], True)
            out = pallas_conv_bn_act(out, blk["conv2"], blk["stride"], (0, 1, 1), True)
            if blk["downsample"] is not None:
                identity = pallas_conv_bn_act(x, blk["downsample"], blk["stride"],
                                              (0, 0, 0), relu=False)
            # conv3 + BN + residual add + ReLU fused into one GEMM epilogue
            x = pallas_conv_bn_act(out, blk["conv3"], (1, 1, 1), (0, 0, 0),
                                   relu=True, residual=identity)

    return pallas_head_mean(x, params["head"], b, s)   # (b, num_classes)


# ----------------------------------------------------------------------------
# Pure-JAX reference (same folded bf16 weights, eval-mode BN) for validation
# ----------------------------------------------------------------------------
def _ref_conv(x, p, stride, padding, relu, residual=None):
    y = jax.lax.conv_general_dilated(
        x.astype(jnp.bfloat16), p["w5"], window_strides=stride,
        padding=[(pd, pd) for pd in padding],
        dimension_numbers=("NCDHW", "OIDHW", "NCDHW"),
        preferred_element_type=jnp.float32)
    y = y + p["shift"][None, :, None, None, None]
    if residual is not None:
        y = y + residual
    return jnp.maximum(y, 0.0) if relu else y


def reference_forward(params, x):
    b, s = x.shape[0], x.shape[1]
    x = x.reshape((b * s,) + x.shape[2:])
    bb = params["backbone"]
    x = _ref_conv(x, bb["stem"], (1, 1, 1), (0, 3, 3), True)
    x = jax.lax.reduce_window(x, -jnp.inf, jax.lax.max, (1, 1, 1, 3, 3),
                              (1, 1, 1, 1, 1),
                              [(0, 0), (0, 0), (0, 0), (1, 1), (1, 1)])
    for stage in bb["stages"]:
        for blk in stage:
            identity = x
            out = _ref_conv(x, blk["conv1"], (1, 1, 1), blk["pad1"], True)
            out = _ref_conv(out, blk["conv2"], blk["stride"], (0, 1, 1), True)
            if blk["downsample"] is not None:
                identity = _ref_conv(x, blk["downsample"], blk["stride"],
                                     (0, 0, 0), False)
            x = _ref_conv(out, blk["conv3"], (1, 1, 1), (0, 0, 0), True,
                          residual=identity)
    hp = params["head"]
    soft = x.mean(axis=(2, 3, 4)) @ hp["w"] + hp["b"]
    return soft.reshape(b, s, -1).mean(axis=1)


# ----------------------------------------------------------------------------
# Deterministic parameter construction (BN folded into weights, eval mode)
# ----------------------------------------------------------------------------
def _conv_params(key, cout, cin, ksize):
    kt, kh, kw = ksize
    k1, k2, k3, k4, k5 = jax.random.split(key, 5)
    fan_in = cin * kt * kh * kw
    w = jax.random.normal(k1, (cout, cin, kt, kh, kw), jnp.float32) * (2.0 / fan_in) ** 0.5
    gamma = jax.random.uniform(k2, (cout,), jnp.float32, 0.5, 1.5)
    beta = jax.random.normal(k3, (cout,), jnp.float32) * 0.1
    mean = jax.random.normal(k4, (cout,), jnp.float32) * 0.1
    var = jax.random.uniform(k5, (cout,), jnp.float32, 0.5, 1.5)
    eps = 1e-5
    scale = gamma / jnp.sqrt(var + eps)
    shift = beta - mean * scale
    # Fold BN scale into the conv weight (eval-mode BN); cast the GEMM operand to
    # bf16 (MXU-native on v6e/v7x). The + shift epilogue stays in f32.
    wf = (w * scale[:, None, None, None, None]).astype(jnp.bfloat16)
    return {"w5": wf, "w2": wf.reshape(cout, -1), "shift": shift, "ksize": ksize}


def build_params(key, in_channels=4, base_channels=8, stage_blocks=(1, 1),
                 spatial_strides=(2, 2), temporal_strides=(1, 2), inflate=(0, 1),
                 num_classes=10):
    keys = iter(jax.random.split(key, 64))
    params = {"backbone": {}, "head": {}}
    params["backbone"]["stem"] = _conv_params(next(keys), base_channels, in_channels,
                                              (1, 7, 7))

    inplanes = base_channels
    stages = []
    for i, nblocks in enumerate(stage_blocks):
        planes = base_channels * (2 ** i)
        blocks = []
        for j in range(nblocks):
            stride = ((temporal_strides[i], spatial_strides[i], spatial_strides[i])
                      if j == 0 else (1, 1, 1))
            k1 = (3, 1, 1) if inflate[i] else (1, 1, 1)
            pad1 = (1, 0, 0) if inflate[i] else (0, 0, 0)
            blk = {
                "conv1": _conv_params(next(keys), planes, inplanes, k1),
                "conv2": _conv_params(next(keys), planes, planes, (1, 3, 3)),
                "conv3": _conv_params(next(keys), planes * 4, planes, (1, 1, 1)),
                "pad1": pad1,
                "stride": stride,
                "downsample": None,
            }
            if stride != (1, 1, 1) or inplanes != planes * 4:
                blk["downsample"] = _conv_params(next(keys), planes * 4, inplanes,
                                                 (1, 1, 1))
            blocks.append(blk)
            inplanes = planes * 4
        stages.append(blocks)
    params["backbone"]["stages"] = stages

    kf1, kf2 = jax.random.split(next(keys))
    params["head"]["w"] = jax.random.normal(kf1, (inplanes, num_classes), jnp.float32) * 0.01
    params["head"]["b"] = jax.random.normal(kf2, (num_classes,), jnp.float32) * 0.01
    return params


# ----------------------------------------------------------------------------
if __name__ == "__main__":
    # input: (batch=2, segments=2, channels=4, frames=4, h=16, w=16)
    x = jax.random.normal(jax.random.PRNGKey(0), (2, 2, 4, 4, 16, 16), jnp.float32)
    params = build_params(jax.random.PRNGKey(42))

    pallas_fn = jax.jit(lambda inp: pallas_forward(params, inp))
    out = jax.block_until_ready(pallas_fn(x))
    assert out.shape == (2, 10), out.shape

    ref_fn = jax.jit(lambda inp: reference_forward(params, inp))
    ref = jax.block_until_ready(ref_fn(x))
    assert jnp.allclose(out, ref, atol=1e-2, rtol=1e-2), (
        "Pallas output diverges from reference:\n%s\n%s" % (out, ref))

    print("KERNEL_OK")
</pallas_src>

<mosaic_0001>
module attributes {stable_mosaic.version = 11 : i64} {
  func.func @_gemm_t_kernel(%arg0: i32, %arg1: memref<8x196xbf16, #tpu.memory_space<vmem>>, %arg2: memref<196x2048xbf16, #tpu.memory_space<vmem>>, %arg3: memref<8x1xf32, #tpu.memory_space<vmem>>, %arg4: memref<8x2048xf32, #tpu.memory_space<vmem>>) attributes {dimension_semantics = [#tpu.dimension_semantics<parallel>], iteration_bounds = array<i64: 2>, scalar_prefetch = 0 : i64, scratch_operands = 0 : i64, tpu.core_type = #tpu.core_type<tc>, window_params = [{pipeline_mode = #tpu.pipeline_mode<synchronous>, transform_indices = @transform_0, window_bounds = array<i64: 8, 196>}, {transform_indices = @transform_1, window_bounds = array<i64: 196, 2048>}, {pipeline_mode = #tpu.pipeline_mode<synchronous>, transform_indices = @transform_2, window_bounds = array<i64: 8, 1>}, {transform_indices = @transform_3, window_bounds = array<i64: 8, 2048>}]} {
    %c0 = arith.constant 0 : index
    %c0_0 = arith.constant 0 : index
    %0 = vector.load %arg1[%c0, %c0_0] : memref<8x196xbf16, #tpu.memory_space<vmem>>, vector<8x196xbf16>
    %c0_1 = arith.constant 0 : index
    %c0_2 = arith.constant 0 : index
    %1 = vector.load %arg2[%c0_1, %c0_2] : memref<196x2048xbf16, #tpu.memory_space<vmem>>, vector<196x2048xbf16>
    %cst = arith.constant dense<0.000000e+00> : vector<8x2048xf32>
    %2 = tpu.matmul %0, %1, %cst {dimension_numbers = #tpu.dot_dimension_numbers<[1], [0], [0], [1], [0, 0, 1, 1], [], []>} : vector<8x196xbf16>, vector<196x2048xbf16>, vector<8x2048xf32> -> vector<8x2048xf32>
    %c0_3 = arith.constant 0 : index
    %c0_4 = arith.constant 0 : index
    %3 = vector.load %arg3[%c0_3, %c0_4] : memref<8x1xf32, #tpu.memory_space<vmem>>, vector<8x1xf32>
    %4 = vector.broadcast %3 : vector<8x1xf32> to vector<8x2048xf32>
    %5 = arith.addf %2, %4 : vector<8x2048xf32>
    %cst_5 = arith.constant 0.000000e+00 : f32
    %6 = vector.broadcast %cst_5 : f32 to vector<8x2048xf32>
    %7 = arith.maximumf %5, %6 : vector<8x2048xf32>
    %c0_6 = arith.constant 0 : index
    %c0_7 = arith.constant 0 : index
    %8 = vector.load %arg4[%c0_6, %c0_7] : memref<8x2048xf32, #tpu.memory_space<vmem>>, vector<8x2048xf32>
    tpu.vector_store %arg4[%c0_6, %c0_7], %7 {strides = array<i32>} : memref<8x2048xf32, #tpu.memory_space<vmem>>, vector<8x2048xf32>,
    return
  }
  func.func @transform_0(%arg0: i32) -> (i32, i32) {
    %c0_i32 = arith.constant 0 : i32
    %c0_i32_0 = arith.constant 0 : i32
    %c0_i32_1 = arith.constant 0 : i32
    return %c0_i32, %c0_i32_0 : i32, i32
  }
  func.func @transform_1(%arg0: i32) -> (i32, i32) {
    %c0_i32 = arith.constant 0 : i32
    %c0_i32_0 = arith.constant 0 : i32
    return %c0_i32, %arg0 : i32, i32
  }
  func.func @transform_2(%arg0: i32) -> (i32, i32) {
    %c0_i32 = arith.constant 0 : i32
    %c0_i32_0 = arith.constant 0 : i32
    %c0_i32_1 = arith.constant 0 : i32
    return %c0_i32, %c0_i32_0 : i32, i32
  }
  func.func @transform_3(%arg0: i32) -> (i32, i32) {
    %c0_i32 = arith.constant 0 : i32
    %c0_i32_0 = arith.constant 0 : i32
    return %c0_i32, %arg0 : i32, i32
  }
}

module attributes {stable_mosaic.version = 11 : i64} {
  func.func @_maxpool_kernel(%arg0: i32, %arg1: memref<64x18x18xf32, #tpu.memory_space<vmem>>, %arg2: memref<64x16x16xf32, #tpu.memory_space<vmem>>) attributes {dimension_semantics = [#tpu.dimension_semantics<parallel>], iteration_bounds = array<i64: 2>, scalar_prefetch = 0 : i64, scratch_operands = 0 : i64, tpu.core_type = #tpu.core_type<tc>, window_params = [{transform_indices = @transform_0, window_bounds = array<i64: 64, 18, 18>}, {transform_indices = @transform_1, window_bounds = array<i64: 64, 16, 16>}]} {
    %c0 = arith.constant 0 : index
    %c0_0 = arith.constant 0 : index
    %c0_1 = arith.constant 0 : index
    %0 = vector.load %arg1[%c0, %c0_0, %c0_1] : memref<64x18x18xf32, #tpu.memory_space<vmem>>, vector<64x18x18xf32>
    %1 = vector.extract_strided_slice %0 {offsets = [0, 0, 0], sizes = [64, 16, 16], strides = [1, 1, 1]} : vector<64x18x18xf32> to vector<64x16x16xf32>
    %2 = vector.extract_strided_slice %0 {offsets = [0, 0, 1], sizes = [64, 16, 16], strides = [1, 1, 1]} : vector<64x18x18xf32> to vector<64x16x16xf32>
    %3 = arith.maximumf %1, %2 : vector<64x16x16xf32>
    %4 = vector.extract_strided_slice %0 {offsets = [0, 0, 2], sizes = [64, 16, 16], strides = [1, 1, 1]} : vector<64x18x18xf32> to vector<64x16x16xf32>
    %5 = arith.maximumf %3, %4 : vector<64x16x16xf32>
    %6 = vector.extract_strided_slice %0 {offsets = [0, 1, 0], sizes = [64, 16, 16], strides = [1, 1, 1]} : vector<64x18x18xf32> to vector<64x16x16xf32>
    %7 = arith.maximumf %5, %6 : vector<64x16x16xf32>
    %8 = vector.extract_strided_slice %0 {offsets = [0, 1, 1], sizes = [64, 16, 16], strides = [1, 1, 1]} : vector<64x18x18xf32> to vector<64x16x16xf32>
    %9 = arith.maximumf %7, %8 : vector<64x16x16xf32>
    %10 = vector.extract_strided_slice %0 {offsets = [0, 1, 2], sizes = [64, 16, 16], strides = [1, 1, 1]} : vector<64x18x18xf32> to vector<64x16x16xf32>
    %11 = arith.maximumf %9, %10 : vector<64x16x16xf32>
    %12 = vector.extract_strided_slice %0 {offsets = [0, 2, 0], sizes = [64, 16, 16], strides = [1, 1, 1]} : vector<64x18x18xf32> to vector<64x16x16xf32>
    %13 = arith.maximumf %11, %12 : vector<64x16x16xf32>
    %14 = vector.extract_strided_slice %0 {offsets = [0, 2, 1], sizes = [64, 16, 16], strides = [1, 1, 1]} : vector<64x18x18xf32> to vector<64x16x16xf32>
    %15 = arith.maximumf %13, %14 : vector<64x16x16xf32>
    %16 = vector.extract_strided_slice %0 {offsets = [0, 2, 2], sizes = [64, 16, 16], strides = [1, 1, 1]} : vector<64x18x18xf32> to vector<64x16x16xf32>
    %17 = arith.maximumf %15, %16 : vector<64x16x16xf32>
    %c0_2 = arith.constant 0 : index
    %c0_3 = arith.constant 0 : index
    %c0_4 = arith.constant 0 : index
    %18 = vector.load %arg2[%c0_2, %c0_3, %c0_4] : memref<64x16x16xf32, #tpu.memory_space<vmem>>, vector<64x16x16xf32>
    tpu.vector_store %arg2[%c0_2, %c0_3, %c0_4], %17 {strides = array<i32>} : memref<64x16x16xf32, #tpu.memory_space<vmem>>, vector<64x16x16xf32>,
    return
  }
  func.func @transform_0(%arg0: i32) -> (i32, i32, i32) {
    %c0_i32 = arith.constant 0 : i32
    %c0_i32_0 = arith.constant 0 : i32
    %c0_i32_1 = arith.constant 0 : i32
    return %arg0, %c0_i32, %c0_i32_0 : i32, i32, i32
  }
  func.func @transform_1(%arg0: i32) -> (i32, i32, i32) {
    %c0_i32 = arith.constant 0 : i32
    %c0_i32_0 = arith.constant 0 : i32
    %c0_i32_1 = arith.constant 0 : i32
    return %arg0, %c0_i32, %c0_i32_0 : i32, i32, i32
  }
}

module attributes {stable_mosaic.version = 11 : i64} {
  func.func @_gemm_t_kernel(%arg0: i32, %arg1: memref<8x8xbf16, #tpu.memory_space<vmem>>, %arg2: memref<8x2048xbf16, #tpu.memory_space<vmem>>, %arg3: memref<8x1xf32, #tpu.memory_space<vmem>>, %arg4: memref<8x2048xf32, #tpu.memory_space<vmem>>) attributes {dimension_semantics = [#tpu.dimension_semantics<parallel>], iteration_bounds = array<i64: 2>, scalar_prefetch = 0 : i64, scratch_operands = 0 : i64, tpu.core_type = #tpu.core_type<tc>, window_params = [{pipeline_mode = #tpu.pipeline_mode<synchronous>, transform_indices = @transform_0, window_bounds = array<i64: 8, 8>}, {transform_indices = @transform_1, window_bounds = array<i64: 8, 2048>}, {pipeline_mode = #tpu.pipeline_mode<synchronous>, transform_indices = @transform_2, window_bounds = array<i64: 8, 1>}, {transform_indices = @transform_3, window_bounds = array<i64: 8, 2048>}]} {
    %c0 = arith.constant 0 : index
    %c0_0 = arith.constant 0 : index
    %0 = vector.load %arg1[%c0, %c0_0] : memref<8x8xbf16, #tpu.memory_space<vmem>>, vector<8x8xbf16>
    %c0_1 = arith.constant 0 : index
    %c0_2 = arith.constant 0 : index
    %1 = vector.load %arg2[%c0_1, %c0_2] : memref<8x2048xbf16, #tpu.memory_space<vmem>>, vector<8x2048xbf16>
    %cst = arith.constant dense<0.000000e+00> : vector<8x2048xf32>
    %2 = tpu.matmul %0, %1, %cst {dimension_numbers = #tpu.dot_dimension_numbers<[1], [0], [0], [1], [0, 0, 1, 1], [], []>} : vector<8x8xbf16>, vector<8x2048xbf16>, vector<8x2048xf32> -> vector<8x2048xf32>
    %c0_3 = arith.constant 0 : index
    %c0_4 = arith.constant 0 : index
    %3 = vector.load %arg3[%c0_3, %c0_4] : memref<8x1xf32, #tpu.memory_space<vmem>>, vector<8x1xf32>
    %4 = vector.broadcast %3 : vector<8x1xf32> to vector<8x2048xf32>
    %5 = arith.addf %2, %4 : vector<8x2048xf32>
    %cst_5 = arith.constant 0.000000e+00 : f32
    %6 = vector.broadcast %cst_5 : f32 to vector<8x2048xf32>
    %7 = arith.maximumf %5, %6 : vector<8x2048xf32>
    %c0_6 = arith.constant 0 : index
    %c0_7 = arith.constant 0 : index
    %8 = vector.load %arg4[%c0_6, %c0_7] : memref<8x2048xf32, #tpu.memory_space<vmem>>, vector<8x2048xf32>
    tpu.vector_store %arg4[%c0_6, %c0_7], %7 {strides = array<i32>} : memref<8x2048xf32, #tpu.memory_space<vmem>>, vector<8x2048xf32>,
    return
  }
  func.func @transform_0(%arg0: i32) -> (i32, i32) {
    %c0_i32 = arith.constant 0 : i32
    %c0_i32_0 = arith.constant 0 : i32
    %c0_i32_1 = arith.constant 0 : i32
    return %c0_i32, %c0_i32_0 : i32, i32
  }
  func.func @transform_1(%arg0: i32) -> (i32, i32) {
    %c0_i32 = arith.constant 0 : i32
    %c0_i32_0 = arith.constant 0 : i32
    return %c0_i32, %arg0 : i32, i32
  }
  func.func @transform_2(%arg0: i32) -> (i32, i32) {
    %c0_i32 = arith.constant 0 : i32
    %c0_i32_0 = arith.constant 0 : i32
    %c0_i32_1 = arith.constant 0 : i32
    return %c0_i32, %c0_i32_0 : i32, i32
  }
  func.func @transform_3(%arg0: i32) -> (i32, i32) {
    %c0_i32 = arith.constant 0 : i32
    %c0_i32_0 = arith.constant 0 : i32
    return %c0_i32, %arg0 : i32, i32
  }
}

module attributes {stable_mosaic.version = 11 : i64} {
  func.func @_gemm_t_kernel(%arg0: i32, %arg1: memref<8x72xbf16, #tpu.memory_space<vmem>>, %arg2: memref<72x512xbf16, #tpu.memory_space<vmem>>, %arg3: memref<8x1xf32, #tpu.memory_space<vmem>>, %arg4: memref<8x512xf32, #tpu.memory_space<vmem>>) attributes {dimension_semantics = [#tpu.dimension_semantics<parallel>], iteration_bounds = array<i64: 2>, scalar_prefetch = 0 : i64, scratch_operands = 0 : i64, tpu.core_type = #tpu.core_type<tc>, window_params = [{pipeline_mode = #tpu.pipeline_mode<synchronous>, transform_indices = @transform_0, window_bounds = array<i64: 8, 72>}, {transform_indices = @transform_1, window_bounds = array<i64: 72, 512>}, {pipeline_mode = #tpu.pipeline_mode<synchronous>, transform_indices = @transform_2, window_bounds = array<i64: 8, 1>}, {transform_indices = @transform_3, window_bounds = array<i64: 8, 512>}]} {
    %c0 = arith.constant 0 : index
    %c0_0 = arith.constant 0 : index
    %0 = vector.load %arg1[%c0, %c0_0] : memref<8x72xbf16, #tpu.memory_space<vmem>>, vector<8x72xbf16>
    %c0_1 = arith.constant 0 : index
    %c0_2 = arith.constant 0 : index
    %1 = vector.load %arg2[%c0_1, %c0_2] : memref<72x512xbf16, #tpu.memory_space<vmem>>, vector<72x512xbf16>
    %cst = arith.constant dense<0.000000e+00> : vector<8x512xf32>
    %2 = tpu.matmul %0, %1, %cst {dimension_numbers = #tpu.dot_dimension_numbers<[1], [0], [0], [1], [0, 0, 1, 1], [], []>} : vector<8x72xbf16>, vector<72x512xbf16>, vector<8x512xf32> -> vector<8x512xf32>
    %c0_3 = arith.constant 0 : index
    %c0_4 = arith.constant 0 : index
    %3 = vector.load %arg3[%c0_3, %c0_4] : memref<8x1xf32, #tpu.memory_space<vmem>>, vector<8x1xf32>
    %4 = vector.broadcast %3 : vector<8x1xf32> to vector<8x512xf32>
    %5 = arith.addf %2, %4 : vector<8x512xf32>
    %cst_5 = arith.constant 0.000000e+00 : f32
    %6 = vector.broadcast %cst_5 : f32 to vector<8x512xf32>
    %7 = arith.maximumf %5, %6 : vector<8x512xf32>
    %c0_6 = arith.constant 0 : index
    %c0_7 = arith.constant 0 : index
    %8 = vector.load %arg4[%c0_6, %c0_7] : memref<8x512xf32, #tpu.memory_space<vmem>>, vector<8x512xf32>
    tpu.vector_store %arg4[%c0_6, %c0_7], %7 {strides = array<i32>} : memref<8x512xf32, #tpu.memory_space<vmem>>, vector<8x512xf32>,
    return
  }
  func.func @transform_0(%arg0: i32) -> (i32, i32) {
    %c0_i32 = arith.constant 0 : i32
    %c0_i32_0 = arith.constant 0 : i32
    %c0_i32_1 = arith.constant 0 : i32
    return %c0_i32, %c0_i32_0 : i32, i32
  }
  func.func @transform_1(%arg0: i32) -> (i32, i32) {
    %c0_i32 = arith.constant 0 : i32
    %c0_i32_0 = arith.constant 0 : i32
    return %c0_i32, %arg0 : i32, i32
  }
  func.func @transform_2(%arg0: i32) -> (i32, i32) {
    %c0_i32 = arith.constant 0 : i32
    %c0_i32_0 = arith.constant 0 : i32
    %c0_i32_1 = arith.constant 0 : i32
    return %c0_i32, %c0_i32_0 : i32, i32
  }
  func.func @transform_3(%arg0: i32) -> (i32, i32) {
    %c0_i32 = arith.constant 0 : i32
    %c0_i32_0 = arith.constant 0 : i32
    return %c0_i32, %arg0 : i32, i32
  }
}

module attributes {stable_mosaic.version = 11 : i64} {
  func.func @_gemm_t_kernel(%arg0: i32, %arg1: memref<32x8xbf16, #tpu.memory_space<vmem>>, %arg2: memref<8x512xbf16, #tpu.memory_space<vmem>>, %arg3: memref<32x1xf32, #tpu.memory_space<vmem>>, %arg4: memref<32x512xf32, #tpu.memory_space<vmem>>) attributes {dimension_semantics = [#tpu.dimension_semantics<parallel>], iteration_bounds = array<i64: 2>, scalar_prefetch = 0 : i64, scratch_operands = 0 : i64, tpu.core_type = #tpu.core_type<tc>, window_params = [{pipeline_mode = #tpu.pipeline_mode<synchronous>, transform_indices = @transform_0, window_bounds = array<i64: 32, 8>}, {transform_indices = @transform_1, window_bounds = array<i64: 8, 512>}, {pipeline_mode = #tpu.pipeline_mode<synchronous>, transform_indices = @transform_2, window_bounds = array<i64: 32, 1>}, {transform_indices = @transform_3, window_bounds = array<i64: 32, 512>}]} {
    %c0 = arith.constant 0 : index
    %c0_0 = arith.constant 0 : index
    %0 = vector.load %arg1[%c0, %c0_0] : memref<32x8xbf16, #tpu.memory_space<vmem>>, vector<32x8xbf16>
    %c0_1 = arith.constant 0 : index
    %c0_2 = arith.constant 0 : index
    %1 = vector.load %arg2[%c0_1, %c0_2] : memref<8x512xbf16, #tpu.memory_space<vmem>>, vector<8x512xbf16>
    %cst = arith.constant dense<0.000000e+00> : vector<32x512xf32>
    %2 = tpu.matmul %0, %1, %cst {dimension_numbers = #tpu.dot_dimension_numbers<[1], [0], [0], [1], [0, 0, 1, 1], [], []>} : vector<32x8xbf16>, vector<8x512xbf16>, vector<32x512xf32> -> vector<32x512xf32>
    %c0_3 = arith.constant 0 : index
    %c0_4 = arith.constant 0 : index
    %3 = vector.load %arg3[%c0_3, %c0_4] : memref<32x1xf32, #tpu.memory_space<vmem>>, vector<32x1xf32>
    %4 = vector.broadcast %3 : vector<32x1xf32> to vector<32x512xf32>
    %5 = arith.addf %2, %4 : vector<32x512xf32>
    %c0_5 = arith.constant 0 : index
    %c0_6 = arith.constant 0 : index
    %6 = vector.load %arg4[%c0_5, %c0_6] : memref<32x512xf32, #tpu.memory_space<vmem>>, vector<32x512xf32>
    tpu.vector_store %arg4[%c0_5, %c0_6], %5 {strides = array<i32>} : memref<32x512xf32, #tpu.memory_space<vmem>>, vector<32x512xf32>,
    return
  }
  func.func @transform_0(%arg0: i32) -> (i32, i32) {
    %c0_i32 = arith.constant 0 : i32
    %c0_i32_0 = arith.constant 0 : i32
    %c0_i32_1 = arith.constant 0 : i32
    return %c0_i32, %c0_i32_0 : i32, i32
  }
  func.func @transform_1(%arg0: i32) -> (i32, i32) {
    %c0_i32 = arith.constant 0 : i32
    %c0_i32_0 = arith.constant 0 : i32
    return %c0_i32, %arg0 : i32, i32
  }
  func.func @transform_2(%arg0: i32) -> (i32, i32) {
    %c0_i32 = arith.constant 0 : i32
    %c0_i32_0 = arith.constant 0 : i32
    %c0_i32_1 = arith.constant 0 : i32
    return %c0_i32, %c0_i32_0 : i32, i32
  }
  func.func @transform_3(%arg0: i32) -> (i32, i32) {
    %c0_i32 = arith.constant 0 : i32
    %c0_i32_0 = arith.constant 0 : i32
    return %c0_i32, %arg0 : i32, i32
  }
}

module attributes {stable_mosaic.version = 11 : i64} {
  func.func @_gemm_t_kernel(%arg0: i32, %arg1: memref<32x8xbf16, #tpu.memory_space<vmem>>, %arg2: memref<8x512xbf16, #tpu.memory_space<vmem>>, %arg3: memref<32x1xf32, #tpu.memory_space<vmem>>, %arg4: memref<32x512xf32, #tpu.memory_space<vmem>>, %arg5: memref<32x512xf32, #tpu.memory_space<vmem>>) attributes {dimension_semantics = [#tpu.dimension_semantics<parallel>], iteration_bounds = array<i64: 2>, scalar_prefetch = 0 : i64, scratch_operands = 0 : i64, tpu.core_type = #tpu.core_type<tc>, window_params = [{pipeline_mode = #tpu.pipeline_mode<synchronous>, transform_indices = @transform_0, window_bounds = array<i64: 32, 8>}, {transform_indices = @transform_1, window_bounds = array<i64: 8, 512>}, {pipeline_mode = #tpu.pipeline_mode<synchronous>, transform_indices = @transform_2, window_bounds = array<i64: 32, 1>}, {transform_indices = @transform_3, window_bounds = array<i64: 32, 512>}, {transform_indices = @transform_4, window_bounds = array<i64: 32, 512>}]} {
    %c0 = arith.constant 0 : index
    %c0_0 = arith.constant 0 : index
    %0 = vector.load %arg1[%c0, %c0_0] : memref<32x8xbf16, #tpu.memory_space<vmem>>, vector<32x8xbf16>
    %c0_1 = arith.constant 0 : index
    %c0_2 = arith.constant 0 : index
    %1 = vector.load %arg2[%c0_1, %c0_2] : memref<8x512xbf16, #tpu.memory_space<vmem>>, vector<8x512xbf16>
    %cst = arith.constant dense<0.000000e+00> : vector<32x512xf32>
    %2 = tpu.matmul %0, %1, %cst {dimension_numbers = #tpu.dot_dimension_numbers<[1], [0], [0], [1], [0, 0, 1, 1], [], []>} : vector<32x8xbf16>, vector<8x512xbf16>, vector<32x512xf32> -> vector<32x512xf32>
    %c0_3 = arith.constant 0 : index
    %c0_4 = arith.constant 0 : index
    %3 = vector.load %arg3[%c0_3, %c0_4] : memref<32x1xf32, #tpu.memory_space<vmem>>, vector<32x1xf32>
    %4 = vector.broadcast %3 : vector<32x1xf32> to vector<32x512xf32>
    %5 = arith.addf %2, %4 : vector<32x512xf32>
    %c0_5 = arith.constant 0 : index
    %c0_6 = arith.constant 0 : index
    %6 = vector.load %arg4[%c0_5, %c0_6] : memref<32x512xf32, #tpu.memory_space<vmem>>, vector<32x512xf32>
    %7 = arith.addf %5, %6 : vector<32x512xf32>
    %cst_7 = arith.constant 0.000000e+00 : f32
    %8 = vector.broadcast %cst_7 : f32 to vector<32x512xf32>
    %9 = arith.maximumf %7, %8 : vector<32x512xf32>
    %c0_8 = arith.constant 0 : index
    %c0_9 = arith.constant 0 : index
    %10 = vector.load %arg5[%c0_8, %c0_9] : memref<32x512xf32, #tpu.memory_space<vmem>>, vector<32x512xf32>
    tpu.vector_store %arg5[%c0_8, %c0_9], %9 {strides = array<i32>} : memref<32x512xf32, #tpu.memory_space<vmem>>, vector<32x512xf32>,
    return
  }
  func.func @transform_0(%arg0: i32) -> (i32, i32) {
    %c0_i32 = arith.constant 0 : i32
    %c0_i32_0 = arith.constant 0 : i32
    %c0_i32_1 = arith.constant 0 : i32
    return %c0_i32, %c0_i32_0 : i32, i32
  }
  func.func @transform_1(%arg0: i32) -> (i32, i32) {
    %c0_i32 = arith.constant 0 : i32
    %c0_i32_0 = arith.constant 0 : i32
    return %c0_i32, %arg0 : i32, i32
  }
  func.func @transform_2(%arg0: i32) -> (i32, i32) {
    %c0_i32 = arith.constant 0 : i32
    %c0_i32_0 = arith.constant 0 : i32
    %c0_i32_1 = arith.constant 0 : i32
    return %c0_i32, %c0_i32_0 : i32, i32
  }
  func.func @transform_3(%arg0: i32) -> (i32, i32) {
    %c0_i32 = arith.constant 0 : i32
    %c0_i32_0 = arith.constant 0 : i32
    return %c0_i32, %arg0 : i32, i32
  }
  func.func @transform_4(%arg0: i32) -> (i32, i32) {
    %c0_i32 = arith.constant 0 : i32
    %c0_i32_0 = arith.constant 0 : i32
    return %c0_i32, %arg0 : i32, i32
  }
}

module attributes {stable_mosaic.version = 11 : i64} {
  func.func @_gemm_t_kernel(%arg0: i32, %arg1: memref<16x96xbf16, #tpu.memory_space<vmem>>, %arg2: memref<96x512xbf16, #tpu.memory_space<vmem>>, %arg3: memref<16x1xf32, #tpu.memory_space<vmem>>, %arg4: memref<16x512xf32, #tpu.memory_space<vmem>>) attributes {dimension_semantics = [#tpu.dimension_semantics<parallel>], iteration_bounds = array<i64: 2>, scalar_prefetch = 0 : i64, scratch_operands = 0 : i64, tpu.core_type = #tpu.core_type<tc>, window_params = [{pipeline_mode = #tpu.pipeline_mode<synchronous>, transform_indices = @transform_0, window_bounds = array<i64: 16, 96>}, {transform_indices = @transform_1, window_bounds = array<i64: 96, 512>}, {pipeline_mode = #tpu.pipeline_mode<synchronous>, transform_indices = @transform_2, window_bounds = array<i64: 16, 1>}, {transform_indices = @transform_3, window_bounds = array<i64: 16, 512>}]} {
    %c0 = arith.constant 0 : index
    %c0_0 = arith.constant 0 : index
    %0 = vector.load %arg1[%c0, %c0_0] : memref<16x96xbf16, #tpu.memory_space<vmem>>, vector<16x96xbf16>
    %c0_1 = arith.constant 0 : index
    %c0_2 = arith.constant 0 : index
    %1 = vector.load %arg2[%c0_1, %c0_2] : memref<96x512xbf16, #tpu.memory_space<vmem>>, vector<96x512xbf16>
    %cst = arith.constant dense<0.000000e+00> : vector<16x512xf32>
    %2 = tpu.matmul %0, %1, %cst {dimension_numbers = #tpu.dot_dimension_numbers<[1], [0], [0], [1], [0, 0, 1, 1], [], []>} : vector<16x96xbf16>, vector<96x512xbf16>, vector<16x512xf32> -> vector<16x512xf32>
    %c0_3 = arith.constant 0 : index
    %c0_4 = arith.constant 0 : index
    %3 = vector.load %arg3[%c0_3, %c0_4] : memref<16x1xf32, #tpu.memory_space<vmem>>, vector<16x1xf32>
    %4 = vector.broadcast %3 : vector<16x1xf32> to vector<16x512xf32>
    %5 = arith.addf %2, %4 : vector<16x512xf32>
    %cst_5 = arith.constant 0.000000e+00 : f32
    %6 = vector.broadcast %cst_5 : f32 to vector<16x512xf32>
    %7 = arith.maximumf %5, %6 : vector<16x512xf32>
    %c0_6 = arith.constant 0 : index
    %c0_7 = arith.constant 0 : index
    %8 = vector.load %arg4[%c0_6, %c0_7] : memref<16x512xf32, #tpu.memory_space<vmem>>, vector<16x512xf32>
    tpu.vector_store %arg4[%c0_6, %c0_7], %7 {strides = array<i32>} : memref<16x512xf32, #tpu.memory_space<vmem>>, vector<16x512xf32>,
    return
  }
  func.func @transform_0(%arg0: i32) -> (i32, i32) {
    %c0_i32 = arith.constant 0 : i32
    %c0_i32_0 = arith.constant 0 : i32
    %c0_i32_1 = arith.constant 0 : i32
    return %c0_i32, %c0_i32_0 : i32, i32
  }
  func.func @transform_1(%arg0: i32) -> (i32, i32) {
    %c0_i32 = arith.constant 0 : i32
    %c0_i32_0 = arith.constant 0 : i32
    return %c0_i32, %arg0 : i32, i32
  }
  func.func @transform_2(%arg0: i32) -> (i32, i32) {
    %c0_i32 = arith.constant 0 : i32
    %c0_i32_0 = arith.constant 0 : i32
    %c0_i32_1 = arith.constant 0 : i32
    return %c0_i32, %c0_i32_0 : i32, i32
  }
  func.func @transform_3(%arg0: i32) -> (i32, i32) {
    %c0_i32 = arith.constant 0 : i32
    %c0_i32_0 = arith.constant 0 : i32
    return %c0_i32, %arg0 : i32, i32
  }
}

module attributes {stable_mosaic.version = 11 : i64} {
  func.func @_gemm_t_kernel(%arg0: i32, %arg1: memref<16x144xbf16, #tpu.memory_space<vmem>>, %arg2: memref<144x128xbf16, #tpu.memory_space<vmem>>, %arg3: memref<16x1xf32, #tpu.memory_space<vmem>>, %arg4: memref<16x128xf32, #tpu.memory_space<vmem>>) attributes {dimension_semantics = [#tpu.dimension_semantics<parallel>], iteration_bounds = array<i64: 1>, scalar_prefetch = 0 : i64, scratch_operands = 0 : i64, tpu.core_type = #tpu.core_type<tc>, window_params = [{pipeline_mode = #tpu.pipeline_mode<synchronous>, transform_indices = @transform_0, window_bounds = array<i64: 16, 144>}, {transform_indices = @transform_1, window_bounds = array<i64: 144, 128>}, {pipeline_mode = #tpu.pipeline_mode<synchronous>, transform_indices = @transform_2, window_bounds = array<i64: 16, 1>}, {transform_indices = @transform_3, window_bounds = array<i64: 16, 128>}]} {
    %c0 = arith.constant 0 : index
    %c0_0 = arith.constant 0 : index
    %0 = vector.load %arg1[%c0, %c0_0] : memref<16x144xbf16, #tpu.memory_space<vmem>>, vector<16x144xbf16>
    %c0_1 = arith.constant 0 : index
    %c0_2 = arith.constant 0 : index
    %1 = vector.load %arg2[%c0_1, %c0_2] : memref<144x128xbf16, #tpu.memory_space<vmem>>, vector<144x128xbf16>
    %cst = arith.constant dense<0.000000e+00> : vector<16x128xf32>
    %2 = tpu.matmul %0, %1, %cst {dimension_numbers = #tpu.dot_dimension_numbers<[1], [0], [0], [1], [0, 0, 1, 1], [], []>} : vector<16x144xbf16>, vector<144x128xbf16>, vector<16x128xf32> -> vector<16x128xf32>
    %c0_3 = arith.constant 0 : index
    %c0_4 = arith.constant 0 : index
    %3 = vector.load %arg3[%c0_3, %c0_4] : memref<16x1xf32, #tpu.memory_space<vmem>>, vector<16x1xf32>
    %4 = vector.broadcast %3 : vector<16x1xf32> to vector<16x128xf32>
    %5 = arith.addf %2, %4 : vector<16x128xf32>
    %cst_5 = arith.constant 0.000000e+00 : f32
    %6 = vector.broadcast %cst_5 : f32 to vector<16x128xf32>
    %7 = arith.maximumf %5, %6 : vector<16x128xf32>
    %c0_6 = arith.constant 0 : index
    %c0_7 = arith.constant 0 : index
    %8 = vector.load %arg4[%c0_6, %c0_7] : memref<16x128xf32, #tpu.memory_space<vmem>>, vector<16x128xf32>
    tpu.vector_store %arg4[%c0_6, %c0_7], %7 {strides = array<i32>} : memref<16x128xf32, #tpu.memory_space<vmem>>, vector<16x128xf32>,
    return
  }
  func.func @transform_0(%arg0: i32) -> (i32, i32) {
    %c0_i32 = arith.constant 0 : i32
    %c0_i32_0 = arith.constant 0 : i32
    %c0_i32_1 = arith.constant 0 : i32
    return %c0_i32, %c0_i32_0 : i32, i32
  }
  func.func @transform_1(%arg0: i32) -> (i32, i32) {
    %c0_i32 = arith.constant 0 : i32
    %c0_i32_0 = arith.constant 0 : i32
    return %c0_i32, %arg0 : i32, i32
  }
  func.func @transform_2(%arg0: i32) -> (i32, i32) {
    %c0_i32 = arith.constant 0 : i32
    %c0_i32_0 = arith.constant 0 : i32
    %c0_i32_1 = arith.constant 0 : i32
    return %c0_i32, %c0_i32_0 : i32, i32
  }
  func.func @transform_3(%arg0: i32) -> (i32, i32) {
    %c0_i32 = arith.constant 0 : i32
    %c0_i32_0 = arith.constant 0 : i32
    return %c0_i32, %arg0 : i32, i32
  }
}

module attributes {stable_mosaic.version = 11 : i64} {
  func.func @_gemm_t_kernel(%arg0: i32, %arg1: memref<64x32xbf16, #tpu.memory_space<vmem>>, %arg2: memref<32x128xbf16, #tpu.memory_space<vmem>>, %arg3: memref<64x1xf32, #tpu.memory_space<vmem>>, %arg4: memref<64x128xf32, #tpu.memory_space<vmem>>) attributes {dimension_semantics = [#tpu.dimension_semantics<parallel>], iteration_bounds = array<i64: 1>, scalar_prefetch = 0 : i64, scratch_operands = 0 : i64, tpu.core_type = #tpu.core_type<tc>, window_params = [{pipeline_mode = #tpu.pipeline_mode<synchronous>, transform_indices = @transform_0, window_bounds = array<i64: 64, 32>}, {transform_indices = @transform_1, window_bounds = array<i64: 32, 128>}, {pipeline_mode = #tpu.pipeline_mode<synchronous>, transform_indices = @transform_2, window_bounds = array<i64: 64, 1>}, {transform_indices = @transform_3, window_bounds = array<i64: 64, 128>}]} {
    %c0 = arith.constant 0 : index
    %c0_0 = arith.constant 0 : index
    %0 = vector.load %arg1[%c0, %c0_0] : memref<64x32xbf16, #tpu.memory_space<vmem>>, vector<64x32xbf16>
    %c0_1 = arith.constant 0 : index
    %c0_2 = arith.constant 0 : index
    %1 = vector.load %arg2[%c0_1, %c0_2] : memref<32x128xbf16, #tpu.memory_space<vmem>>, vector<32x128xbf16>
    %cst = arith.constant dense<0.000000e+00> : vector<64x128xf32>
    %2 = tpu.matmul %0, %1, %cst {dimension_numbers = #tpu.dot_dimension_numbers<[1], [0], [0], [1], [0, 0, 1, 1], [], []>} : vector<64x32xbf16>, vector<32x128xbf16>, vector<64x128xf32> -> vector<64x128xf32>
    %c0_3 = arith.constant 0 : index
    %c0_4 = arith.constant 0 : index
    %3 = vector.load %arg3[%c0_3, %c0_4] : memref<64x1xf32, #tpu.memory_space<vmem>>, vector<64x1xf32>
    %4 = vector.broadcast %3 : vector<64x1xf32> to vector<64x128xf32>
    %5 = arith.addf %2, %4 : vector<64x128xf32>
    %c0_5 = arith.constant 0 : index
    %c0_6 = arith.constant 0 : index
    %6 = vector.load %arg4[%c0_5, %c0_6] : memref<64x128xf32, #tpu.memory_space<vmem>>, vector<64x128xf32>
    tpu.vector_store %arg4[%c0_5, %c0_6], %5 {strides = array<i32>} : memref<64x128xf32, #tpu.memory_space<vmem>>, vector<64x128xf32>,
    return
  }
  func.func @transform_0(%arg0: i32) -> (i32, i32) {
    %c0_i32 = arith.constant 0 : i32
    %c0_i32_0 = arith.constant 0 : i32
    %c0_i32_1 = arith.constant 0 : i32
    return %c0_i32, %c0_i32_0 : i32, i32
  }
  func.func @transform_1(%arg0: i32) -> (i32, i32) {
    %c0_i32 = arith.constant 0 : i32
    %c0_i32_0 = arith.constant 0 : i32
    return %c0_i32, %arg0 : i32, i32
  }
  func.func @transform_2(%arg0: i32) -> (i32, i32) {
    %c0_i32 = arith.constant 0 : i32
    %c0_i32_0 = arith.constant 0 : i32
    %c0_i32_1 = arith.constant 0 : i32
    return %c0_i32, %c0_i32_0 : i32, i32
  }
  func.func @transform_3(%arg0: i32) -> (i32, i32) {
    %c0_i32 = arith.constant 0 : i32
    %c0_i32_0 = arith.constant 0 : i32
    return %c0_i32, %arg0 : i32, i32
  }
}

module attributes {stable_mosaic.version = 11 : i64} {
  func.func @_gemm_t_kernel(%arg0: i32, %arg1: memref<64x16xbf16, #tpu.memory_space<vmem>>, %arg2: memref<16x128xbf16, #tpu.memory_space<vmem>>, %arg3: memref<64x1xf32, #tpu.memory_space<vmem>>, %arg4: memref<64x128xf32, #tpu.memory_space<vmem>>, %arg5: memref<64x128xf32, #tpu.memory_space<vmem>>) attributes {dimension_semantics = [#tpu.dimension_semantics<parallel>], iteration_bounds = array<i64: 1>, scalar_prefetch = 0 : i64, scratch_operands = 0 : i64, tpu.core_type = #tpu.core_type<tc>, window_params = [{pipeline_mode = #tpu.pipeline_mode<synchronous>, transform_indices = @transform_0, window_bounds = array<i64: 64, 16>}, {transform_indices = @transform_1, window_bounds = array<i64: 16, 128>}, {pipeline_mode = #tpu.pipeline_mode<synchronous>, transform_indices = @transform_2, window_bounds = array<i64: 64, 1>}, {transform_indices = @transform_3, window_bounds = array<i64: 64, 128>}, {transform_indices = @transform_4, window_bounds = array<i64: 64, 128>}]} {
    %c0 = arith.constant 0 : index
    %c0_0 = arith.constant 0 : index
    %0 = vector.load %arg1[%c0, %c0_0] : memref<64x16xbf16, #tpu.memory_space<vmem>>, vector<64x16xbf16>
    %c0_1 = arith.constant 0 : index
    %c0_2 = arith.constant 0 : index
    %1 = vector.load %arg2[%c0_1, %c0_2] : memref<16x128xbf16, #tpu.memory_space<vmem>>, vector<16x128xbf16>
    %cst = arith.constant dense<0.000000e+00> : vector<64x128xf32>
    %2 = tpu.matmul %0, %1, %cst {dimension_numbers = #tpu.dot_dimension_numbers<[1], [0], [0], [1], [0, 0, 1, 1], [], []>} : vector<64x16xbf16>, vector<16x128xbf16>, vector<64x128xf32> -> vector<64x128xf32>
    %c0_3 = arith.constant 0 : index
    %c0_4 = arith.constant 0 : index
    %3 = vector.load %arg3[%c0_3, %c0_4] : memref<64x1xf32, #tpu.memory_space<vmem>>, vector<64x1xf32>
    %4 = vector.broadcast %3 : vector<64x1xf32> to vector<64x128xf32>
    %5 = arith.addf %2, %4 : vector<64x128xf32>
    %c0_5 = arith.constant 0 : index
    %c0_6 = arith.constant 0 : index
    %6 = vector.load %arg4[%c0_5, %c0_6] : memref<64x128xf32, #tpu.memory_space<vmem>>, vector<64x128xf32>
    %7 = arith.addf %5, %6 : vector<64x128xf32>
    %cst_7 = arith.constant 0.000000e+00 : f32
    %8 = vector.broadcast %cst_7 : f32 to vector<64x128xf32>
    %9 = arith.maximumf %7, %8 : vector<64x128xf32>
    %c0_8 = arith.constant 0 : index
    %c0_9 = arith.constant 0 : index
    %10 = vector.load %arg5[%c0_8, %c0_9] : memref<64x128xf32, #tpu.memory_space<vmem>>, vector<64x128xf32>
    tpu.vector_store %arg5[%c0_8, %c0_9], %9 {strides = array<i32>} : memref<64x128xf32, #tpu.memory_space<vmem>>, vector<64x128xf32>,
    return
  }
  func.func @transform_0(%arg0: i32) -> (i32, i32) {
    %c0_i32 = arith.constant 0 : i32
    %c0_i32_0 = arith.constant 0 : i32
    %c0_i32_1 = arith.constant 0 : i32
    return %c0_i32, %c0_i32_0 : i32, i32
  }
  func.func @transform_1(%arg0: i32) -> (i32, i32) {
    %c0_i32 = arith.constant 0 : i32
    %c0_i32_0 = arith.constant 0 : i32
    return %c0_i32, %arg0 : i32, i32
  }
  func.func @transform_2(%arg0: i32) -> (i32, i32) {
    %c0_i32 = arith.constant 0 : i32
    %c0_i32_0 = arith.constant 0 : i32
    %c0_i32_1 = arith.constant 0 : i32
    return %c0_i32, %c0_i32_0 : i32, i32
  }
  func.func @transform_3(%arg0: i32) -> (i32, i32) {
    %c0_i32 = arith.constant 0 : i32
    %c0_i32_0 = arith.constant 0 : i32
    return %c0_i32, %arg0 : i32, i32
  }
  func.func @transform_4(%arg0: i32) -> (i32, i32) {
    %c0_i32 = arith.constant 0 : i32
    %c0_i32_0 = arith.constant 0 : i32
    return %c0_i32, %arg0 : i32, i32
  }
}

module attributes {stable_mosaic.version = 11 : i64} {
  func.func @_head_kernel(%arg0: memref<64x2x64xf32, #tpu.memory_space<vmem>>, %arg1: memref<10x64xf32, #tpu.memory_space<vmem>>, %arg2: memref<10x1xf32, #tpu.memory_space<vmem>>, %arg3: memref<10x2xf32, #tpu.memory_space<vmem>>) attributes {dimension_semantics = [], scalar_prefetch = 0 : i64, scratch_operands = 0 : i64, tpu.core_type = #tpu.core_type<tc>} {
    %c0 = arith.constant 0 : index
    %c0_0 = arith.constant 0 : index
    %c0_1 = arith.constant 0 : index
    %0 = vector.load %arg0[%c0, %c0_0, %c0_1] : memref<64x2x64xf32, #tpu.memory_space<vmem>>, vector<64x2x64xf32>
    %cst = arith.constant dense<0.000000e+00> : vector<64x2xf32>
    %1 = vector.multi_reduction <add>, %0, %cst [2] : vector<64x2x64xf32> to vector<64x2xf32>
    %cst_2 = arith.constant 6.400000e+01 : f32
    %2 = vector.broadcast %cst_2 : f32 to vector<64x2xf32>
    %3 = arith.divf %1, %2 : vector<64x2xf32>
    %c0_3 = arith.constant 0 : index
    %c0_4 = arith.constant 0 : index
    %4 = vector.load %arg1[%c0_3, %c0_4] : memref<10x64xf32, #tpu.memory_space<vmem>>, vector<10x64xf32>
    %cst_5 = arith.constant dense<0.000000e+00> : vector<10x2xf32>
    %5 = tpu.matmul %4, %3, %cst_5 {dimension_numbers = #tpu.dot_dimension_numbers<[1], [0], [0], [1], [0, 0, 1, 1], [], []>} : vector<10x64xf32>, vector<64x2xf32>, vector<10x2xf32> -> vector<10x2xf32>
    %c0_6 = arith.constant 0 : index
    %c0_7 = arith.constant 0 : index
    %6 = vector.load %arg2[%c0_6, %c0_7] : memref<10x1xf32, #tpu.memory_space<vmem>>, vector<10x1xf32>
    %7 = vector.broadcast %6 : vector<10x1xf32> to vector<10x2xf32>
    %8 = arith.addf %5, %7 : vector<10x2xf32>
    %c0_8 = arith.constant 0 : index
    %c0_9 = arith.constant 0 : index
    %9 = vector.load %arg3[%c0_8, %c0_9] : memref<10x2xf32, #tpu.memory_space<vmem>>, vector<10x2xf32>
    tpu.vector_store %arg3[%c0_8, %c0_9], %8 {strides = array<i32>} : memref<10x2xf32, #tpu.memory_space<vmem>>, vector<10x2xf32>,
    return
  }
}

</mosaic_0001>

<llo_original>
// kernel: _lambda_.11
$region0: #{_lambda_.11}
  #allocation0 [shape = 'u32[]', space=smem, size = 0x4, offset = 0x4, fixed_abs, tag = 'smem constant byte address 0x4 - core index']
  #allocation1 [shape = 'u32[144,128]{1,0:T(1,128)}', space=vmem, size = 0x12000, scoped, tag = 'internal scratch']
  %s0 = inlined_call_operand.vmem [shape: bf16[8,196], index: 0, kind: input, shape index: {}]
  %s1 = inlined_call_operand.vmem [shape: bf16[196,4096], index: 1, kind: input, shape index: {}]
  %s2 = inlined_call_operand.vmem [shape: f32[8,1], index: 2, kind: input, shape index: {}]
  %s3 = inlined_call_operand.vmem [shape: f32[8,4096], index: 3, kind: output, shape index: {}]
  %s4 = sld [smem:[#allocation0]]
  $region68: #{_lambda_.11} parent=0
    _
  %s6 = ssub.s32 1, %s4
  %s7 = scalar_select 0, %s6, %s4
  $region1: #{_lambda_.11} parent=0
    #allocation2 [shape = 'u8[1638400]{0}', space=vmem, size = 0x190000, scoped, tag = 'input window, operand 1']
    loop: start=0, step=1, limit=4
    $region2: #{_lambda_.11} parent=1 // loop_pre_header
      _
    $region3: #{_lambda_.11} parent=1 // loop_header
      %s9 = sphi 0, %s13
      %p10 = scmp.ge.s32.totalorder %s9, 4
      %s17 = sphi 0, %s17
      %s19 = sphi 0, %s17
      %s20 = sphi 0, %s19
      %s34 = sphi 0, %s20
      %s40 = sphi 0, %s42
      %s43 = sphi 0, %s40
      %s44 = sphi 0, %s43
      %s60 = sphi 0, %s44
      %s64 = sphi 0, %s64
      %s66 = sphi 0, %s64
      %s67 = sphi 0, %s66
      %s81 = sphi 0, %s67
      %s87 = sphi 0, %s89
      %s90 = sphi 0, %s87
      %s91 = sphi 0, %s90
      %s107 = sphi 0, %s91
    $region4: #{_lambda_.11} parent=1 // loop_header_branch
      %12 = sbr.rel (%p10) target = $region8
    $region5: #{_lambda_.11} parent=1 // loop_body
      %s14 = ssub.s32 %s9, 1
      %s15 = ssub.s32 %s9, 2
      %s16 = sadd.s32 %s9, 1
      %s18 = sadd.s32 %s17, 1
      %p21 = scmp.eq.s32.totalorder %s9, 1
      %p22 = scmp.ne.s32.totalorder %s17, %s19
      %p23 = scmp.eq.s32.totalorder %s9, 0
      %p24 = por %p22, %p23
      %p25 = scmp.ne.s32.totalorder %s17, %s19
      %p26 = scmp.eq.s32.totalorder %s14, 1
      %p27 = por %p25, %p26
      %p28 = scmp.ne.s32.totalorder %s19, %s20
      %p29 = scmp.eq.s32.totalorder %s14, 0
      %p30 = por %p28, %p29
      %p31 = scmp.ne.s32.totalorder %s19, %s20
      %p32 = scmp.eq.s32.totalorder %s15, 1
      %p33 = por %p31, %p32
      %p35 = scmp.ne.s32.totalorder %s20, %s34
      %p36 = scmp.eq.s32.totalorder %s15, 0
      %p37 = por %p35, %p36
      %s38 = ssub.s32 %s9, %s16
      %p39 = scmp.eq.s32.totalorder %s38, 0
      %s41 = sadd.s32 %s40, 1
      %s42 = scalar_select %p39, %s40, %s41
      %p45 = pneg %p39
      %p46 = scmp.eq.s32.totalorder %s9, 1
      %p47 = por %p45, %p46
      %p48 = scmp.ne.s32.totalorder %s40, %s43
      %p49 = scmp.eq.s32.totalorder %s9, 0
      %p50 = por %p48, %p49
      %p51 = scmp.ne.s32.totalorder %s40, %s43
      %p52 = scmp.eq.s32.totalorder %s14, 1
      %p53 = por %p51, %p52
      %p54 = scmp.ne.s32.totalorder %s43, %s44
      %p55 = scmp.eq.s32.totalorder %s14, 0
      %p56 = por %p54, %p55
      %p57 = scmp.ne.s32.totalorder %s43, %s44
      %p58 = scmp.eq.s32.totalorder %s15, 1
      %p59 = por %p57, %p58
      %p61 = scmp.ne.s32.totalorder %s44, %s60
      %p62 = scmp.eq.s32.totalorder %s15, 0
      %p63 = por %p61, %p62
      %s65 = sadd.s32 %s64, 1
      %p68 = scmp.eq.s32.totalorder %s9, 1
      %p69 = scmp.ne.s32.totalorder %s64, %s66
      %p70 = scmp.eq.s32.totalorder %s9, 0
      %p71 = por %p69, %p70
      %p72 = scmp.ne.s32.totalorder %s64, %s66
      %p73 = scmp.eq.s32.totalorder %s14, 1
      %p74 = por %p72, %p73
      %p75 = scmp.ne.s32.totalorder %s66, %s67
      %p76 = scmp.eq.s32.totalorder %s14, 0
      %p77 = por %p75, %p76
      %p78 = scmp.ne.s32.totalorder %s66, %s67
      %p79 = scmp.eq.s32.totalorder %s15, 1
      %p80 = por %p78, %p79
      %p82 = scmp.ne.s32.totalorder %s67, %s81
      %p83 = scmp.eq.s32.totalorder %s15, 0
      %p84 = por %p82, %p83
      %s85 = ssub.s32 %s9, %s16
      %p86 = scmp.eq.s32.totalorder %s85, 0
      %s88 = sadd.s32 %s87, 1
      %s89 = scalar_select %p86, %s87, %s88
      %p92 = pneg %p86
      %p93 = scmp.eq.s32.totalorder %s9, 1
      %p94 = por %p92, %p93
      %p95 = scmp.ne.s32.totalorder %s87, %s90
      %p96 = scmp.eq.s32.totalorder %s9, 0
      %p97 = por %p95, %p96
      %p98 = scmp.ne.s32.totalorder %s87, %s90
      %p99 = scmp.eq.s32.totalorder %s14, 1
      %p100 = por %p98, %p99
      %p101 = scmp.ne.s32.totalorder %s90, %s91
      %p102 = scmp.eq.s32.totalorder %s14, 0
      %p103 = por %p101, %p102
      %p104 = scmp.ne.s32.totalorder %s90, %s91
      %p105 = scmp.eq.s32.totalorder %s15, 1
      %p106 = por %p104, %p105
      %p108 = scmp.ne.s32.totalorder %s91, %s107
      %p109 = scmp.eq.s32.totalorder %s15, 0
      %p110 = por %p108, %p109
      %p111 = scmp.le.s32.totalorder 1, %s9
      %p112 = scmp.lt.s32.totalorder %s9, 3
      %p113 = pnand %p111, %p112
      %p114 = pneg %p113
      // Predicated region
      $region9: #{_lambda_.11} parent=5 // pred_check
        _
      $region10: #{_lambda_.11} parent=5 // pred_check_branch
        %116 = sbr.rel (%p113) target = $region12
      $region11: #{_lambda_.11} parent=5 // pred_region
        %s117 = ssub.s32 %s9, 1
        // Predicated region
        $region13: #{_lambda_.11} parent=11 // pred_check
          %p118 = pneg %p30
        $region14: #{_lambda_.11} parent=11 // pred_check_branch
          %120 = sbr.rel (%p118) target = $region16
        $region15: #{_lambda_.11} parent=11 // pred_region
          _
        $region16: #{_lambda_.11} parent=11 // pred_fallthru
          _
        // Predicated region
        $region17: #{_lambda_.11} parent=11 // pred_check
          %p121 = pneg %p77
        $region18: #{_lambda_.11} parent=11 // pred_check_branch
          %123 = sbr.rel (%p121) target = $region20
        $region19: #{_lambda_.11} parent=11 // pred_region
          _
        $region20: #{_lambda_.11} parent=11 // pred_fallthru
          _
      $region12: #{_lambda_.11} parent=5 // pred_fallthru
        _
      %p124 = scmp.lt.s32.totalorder %s9, 2
      // Predicated region
      $region21: #{_lambda_.11} parent=5 // pred_check
        %p125 = pneg %p124
      $region22: #{_lambda_.11} parent=5 // pred_check_branch
        %127 = sbr.rel (%p125) target = $region24
      $region23: #{_lambda_.11} parent=5 // pred_region
        // Predicated region
        $region25: #{_lambda_.11} parent=23 // pred_check
          %p128 = pneg %p50
        $region26: #{_lambda_.11} parent=23 // pred_check_branch
          %130 = sbr.rel (%p128) target = $region28
        $region27: #{_lambda_.11} parent=23 // pred_region
          %s131 = sand.u32 %s40, 1
          %s132 = sand.u32 %s40, 1
          %s133 = smul.addr %s132, 1600
          %s134 = scalar_lea.vmem [#allocation2], %s133
          %s135 = smul.u32 16, %s9
          %s136 = smul.addr %s135, 4
          %s137 = scalar_lea.vmem %s1, %s136
          // Predicated region
          $region29: #{_lambda_.11} parent=27 // pred_check
            _
          $region30: #{_lambda_.11} parent=27 // pred_check_branch
            %139 = sbr.rel (0) target = $region32
          $region31: #{_lambda_.11} parent=27 // pred_region
            // Predicated region
            $region33: #{_lambda_.11} parent=31 // pred_check
              _
            $region34: #{_lambda_.11} parent=31 // pred_check_branch
              %141 = sbr.rel (0) target = $region36
            $region35: #{_lambda_.11} parent=31 // pred_region
              loop: start=0, step=1, limit=1
              $region37: #{_lambda_.11} parent=35 // loop_pre_header
                _
              $region38: #{_lambda_.11} parent=35 // loop_header
                %s143 = sphi 0, %s147
                %p144 = scmp.ge.s32.totalorder %s143, 1
                %s148 = sphi %s137, %s137
                %s149 = sphi %s134, %s134
              $region39: #{_lambda_.11} parent=35 // loop_header_branch
                %146 = sbr.rel (%p144) target = $region43
              $region40: #{_lambda_.11} parent=35 // loop_body
                %v150 = vld [vmem:[%s148] sm:$0xff]
                %151 = vst [vmem:[%s149] sm:$0xff] %v150
                %v152 = vld [vmem:[%s148 + $0x8] sm:$0xff]
                %153 = vst [vmem:[%s149 + $0x8] sm:$0xff] %v152
                %v154 = vld [vmem:[%s148 + $0x10] sm:$0xff]
                %155 = vst [vmem:[%s149 + $0x10] sm:$0xff] %v154
                %v156 = vld [vmem:[%s148 + $0x18] sm:$0xff]
                %157 = vst [vmem:[%s149 + $0x18] sm:$0xff] %v156
                %v158 = vld [vmem:[%s148 + $0x20] sm:$0xff]
                %159 = vst [vmem:[%s149 + $0x20] sm:$0xff] %v158
                %v160 = vld [vmem:[%s148 + $0x28] sm:$0xff]
                %161 = vst [vmem:[%s149 + $0x28] sm:$0xff] %v160
                %v162 = vld [vmem:[%s148 + $0x30] sm:$0xff]
                %163 = vst [vmem:[%s149 + $0x30] sm:$0xff] %v162
                %v164 = vld [vmem:[%s148 + $0x38] sm:$0xff]
                %165 = vst [vmem:[%s149 + $0x38] sm:$0xff] %v164
                %v166 = vld [vmem:[%s148 + $0x80] sm:$0xff]
                %167 = vst [vmem:[%s149 + $0x40] sm:$0xff] %v166
                %v168 = vld [vmem:[%s148 + $0x88] sm:$0xff]
                %169 = vst [vmem:[%s149 + $0x48] sm:$0xff] %v168
                %v170 = vld [vmem:[%s148 + $0x90] sm:$0xff]
                %171 = vst [vmem:[%s149 + $0x50] sm:$0xff] %v170
                %v172 = vld [vmem:[%s148 + $0x98] sm:$0xff]
                %173 = vst [vmem:[%s149 + $0x58] sm:$0xff] %v172
                %v174 = vld [vmem:[%s148 + $0xa0] sm:$0xff]
                %175 = vst [vmem:[%s149 + $0x60] sm:$0xff] %v174
                %v176 = vld [vmem:[%s148 + $0xa8] sm:$0xff]
                %177 = vst [vmem:[%s149 + $0x68] sm:$0xff] %v176
                %v178 = vld [vmem:[%s148 + $0xb0] sm:$0xff]
                %179 = vst [vmem:[%s149 + $0x70] sm:$0xff] %v178
                %v180 = vld [vmem:[%s148 + $0xb8] sm:$0xff]
                %181 = vst [vmem:[%s149 + $0x78] sm:$0xff] %v180
                %v182 = vld [vmem:[%s148 + $0x100] sm:$0xff]
                %183 = vst [vmem:[%s149 + $0x80] sm:$0xff] %v182
                %v184 = vld [vmem:[%s148 + $0x108] sm:$0xff]
                %185 = vst [vmem:[%s149 + $0x88] sm:$0xff] %v184
                %v186 = vld [vmem:[%s148 + $0x110] sm:$0xff]
                %187 = vst [vmem:[%s149 + $0x90] sm:$0xff] %v186
                %v188 = vld [vmem:[%s148 + $0x118] sm:$0xff]
                %189 = vst [vmem:[%s149 + $0x98] sm:$0xff] %v188
                %v190 = vld [vmem:[%s148 + $0x120] sm:$0xff]
                %191 = vst [vmem:[%s149 + $0xa0] sm:$0xff] %v190
                %v192 = vld [vmem:[%s148 + $0x128] sm:$0xff]
                %193 = vst [vmem:[%s149 + $0xa8] sm:$0xff] %v192
                %v194 = vld [vmem:[%s148 + $0x130] sm:$0xff]
                %195 = vst [vmem:[%s149 + $0xb0] sm:$0xff] %v194
                %v196 = vld [vmem:[%s148 + $0x138] sm:$0xff]
                %197 = vst [vmem:[%s149 + $0xb8] sm:$0xff] %v196
                %v198 = vld [vmem:[%s148 + $0x180] sm:$0xff]
                %199 = vst [vmem:[%s149 + $0xc0] sm:$0xff] %v198
                %v200 = vld [vmem:[%s148 + $0x188] sm:$0xff]
                %201 = vst [vmem:[%s149 + $0xc8] sm:$0xff] %v200
                %v202 = vld [vmem:[%s148 + $0x190] sm:$0xff]
                %203 = vst [vmem:[%s149 + $0xd0] sm:$0xff] %v202
                %v204 = vld [vmem:[%s148 + $0x198] sm:$0xff]
                %205 = vst [vmem:[%s149 + $0xd8] sm:$0xff] %v204
                %v206 = vld [vmem:[%s148 + $0x1a0] sm:$0xff]
                %207 = vst [vmem:[%s149 + $0xe0] sm:$0xff] %v206
                %v208 = vld [vmem:[%s148 + $0x1a8] sm:$0xff]
                %209 = vst [vmem:[%s149 + $0xe8] sm:$0xff] %v208
                %v210 = vld [vmem:[%s148 + $0x1b0] sm:$0xff]
                %211 = vst [vmem:[%s149 + $0xf0] sm:$0xff] %v210
                %v212 = vld [vmem:[%s148 + $0x1b8] sm:$0xff]
                %213 = vst [vmem:[%s149 + $0xf8] sm:$0xff] %v212
                %v214 = vld [vmem:[%s148 + $0x200] sm:$0xff]
                %215 = vst [vmem:[%s149 + $0x100] sm:$0xff] %v214
                %v216 = vld [vmem:[%s148 + $0x208] sm:$0xff]
                %217 = vst [vmem:[%s149 + $0x108] sm:$0xff] %v216
                %v218 = vld [vmem:[%s148 + $0x210] sm:$0xff]
                %219 = vst [vmem:[%s149 + $0x110] sm:$0xff] %v218
                %v220 = vld [vmem:[%s148 + $0x218] sm:$0xff]
                %221 = vst [vmem:[%s149 + $0x118] sm:$0xff] %v220
                %v222 = vld [vmem:[%s148 + $0x220] sm:$0xff]
                %223 = vst [vmem:[%s149 + $0x120] sm:$0xff] %v222
                %v224 = vld [vmem:[%s148 + $0x228] sm:$0xff]
                %225 = vst [vmem:[%s149 + $0x128] sm:$0xff] %v224
                %v226 = vld [vmem:[%s148 + $0x230] sm:$0xff]
                %227 = vst [vmem:[%s149 + $0x130] sm:$0xff] %v226
                %v228 = vld [vmem:[%s148 + $0x238] sm:$0xff]
                %229 = vst [vmem:[%s149 + $0x138] sm:$0xff] %v228
                %v230 = vld [vmem:[%s148 + $0x280] sm:$0xff]
                %231 = vst [vmem:[%s149 + $0x140] sm:$0xff] %v230
                %v232 = vld [vmem:[%s148 + $0x288] sm:$0xff]
                %233 = vst [vmem:[%s149 + $0x148] sm:$0xff] %v232
                %v234 = vld [vmem:[%s148 + $0x290] sm:$0xff]
                %235 = vst [vmem:[%s149 + $0x150] sm:$0xff] %v234
                %v236 = vld [vmem:[%s148 + $0x298] sm:$0xff]
                %237 = vst [vmem:[%s149 + $0x158] sm:$0xff] %v236
                %v238 = vld [vmem:[%s148 + $0x2a0] sm:$0xff]
                %239 = vst [vmem:[%s149 + $0x160] sm:$0xff] %v238
                %v240 = vld [vmem:[%s148 + $0x2a8] sm:$0xff]
                %241 = vst [vmem:[%s149 + $0x168] sm:$0xff] %v240
                %v242 = vld [vmem:[%s148 + $0x2b0] sm:$0xff]
                %243 = vst [vmem:[%s149 + $0x170] sm:$0xff] %v242
                %v244 = vld [vmem:[%s148 + $0x2b8] sm:$0xff]
                %245 = vst [vmem:[%s149 + $0x178] sm:$0xff] %v244
                %v246 = vld [vmem:[%s148 + $0x300] sm:$0xff]
                %247 = vst [vmem:[%s149 + $0x180] sm:$0xff] %v246
                %v248 = vld [vmem:[%s148 + $0x308] sm:$0xff]
                %249 = vst [vmem:[%s149 + $0x188] sm:$0xff] %v248
                %v250 = vld [vmem:[%s148 + $0x310] sm:$0xff]
                %251 = vst [vmem:[%s149 + $0x190] sm:$0xff] %v250
                %v252 = vld [vmem:[%s148 + $0x318] sm:$0xff]
                %253 = vst [vmem:[%s149 + $0x198] sm:$0xff] %v252
                %v254 = vld [vmem:[%s148 + $0x320] sm:$0xff]
                %255 = vst [vmem:[%s149 + $0x1a0] sm:$0xff] %v254
                %v256 = vld [vmem:[%s148 + $0x328] sm:$0xff]
                %257 = vst [vmem:[%s149 + $0x1a8] sm:$0xff] %v256
                %v258 = vld [vmem:[%s148 + $0x330] sm:$0xff]
                %259 = vst [vmem:[%s149 + $0x1b0] sm:$0xff] %v258
                %v260 = vld [vmem:[%s148 + $0x338] sm:$0xff]
                %261 = vst [vmem:[%s149 + $0x1b8] sm:$0xff] %v260
                %v262 = vld [vmem:[%s148 + $0x380] sm:$0xff]
                %263 = vst [vmem:[%s149 + $0x1c0] sm:$0xff] %v262
                %v264 = vld [vmem:[%s148 + $0x388] sm:$0xff]
                %265 = vst [vmem:[%s149 + $0x1c8] sm:$0xff] %v264
                %v266 = vld [vmem:[%s148 + $0x390] sm:$0xff]
                %267 = vst [vmem:[%s149 + $0x1d0] sm:$0xff] %v266
                %v268 = vld [vmem:[%s148 + $0x398] sm:$0xff]
                %269 = vst [vmem:[%s149 + $0x1d8] sm:$0xff] %v268
                %v270 = vld [vmem:[%s148 + $0x3a0] sm:$0xff]
                %271 = vst [vmem:[%s149 + $0x1e0] sm:$0xff] %v270
                %v272 = vld [vmem:[%s148 + $0x3a8] sm:$0xff]
                %273 = vst [vmem:[%s149 + $0x1e8] sm:$0xff] %v272
                %v274 = vld [vmem:[%s148 + $0x3b0] sm:$0xff]
                %275 = vst [vmem:[%s149 + $0x1f0] sm:$0xff] %v274
                %v276 = vld [vmem:[%s148 + $0x3b8] sm:$0xff]
                %277 = vst [vmem:[%s149 + $0x1f8] sm:$0xff] %v276
                %v278 = vld [vmem:[%s148 + $0x400] sm:$0xff]
                %279 = vst [vmem:[%s149 + $0x200] sm:$0xff] %v278
                %v280 = vld [vmem:[%s148 + $0x408] sm:$0xff]
                %281 = vst [vmem:[%s149 + $0x208] sm:$0xff] %v280
                %v282 = vld [vmem:[%s148 + $0x410] sm:$0xff]
                %283 = vst [vmem:[%s149 + $0x210] sm:$0xff] %v282
                %v284 = vld [vmem:[%s148 + $0x418] sm:$0xff]
                %285 = vst [vmem:[%s149 + $0x218] sm:$0xff] %v284
                %v286 = vld [vmem:[%s148 + $0x420] sm:$0xff]
                %287 = vst [vmem:[%s149 + $0x220] sm:$0xff] %v286
                %v288 = vld [vmem:[%s148 + $0x428] sm:$0xff]
                %289 = vst [vmem:[%s149 + $0x228] sm:$0xff] %v288
                %v290 = vld [vmem:[%s148 + $0x430] sm:$0xff]
                %291 = vst [vmem:[%s149 + $0x230] sm:$0xff] %v290
                %v292 = vld [vmem:[%s148 + $0x438] sm:$0xff]
                %293 = vst [vmem:[%s149 + $0x238] sm:$0xff] %v292
                %v294 = vld [vmem:[%s148 + $0x480] sm:$0xff]
                %295 = vst [vmem:[%s149 + $0x240] sm:$0xff] %v294
                %v296 = vld [vmem:[%s148 + $0x488] sm:$0xff]
                %297 = vst [vmem:[%s149 + $0x248] sm:$0xff] %v296
                %v298 = vld [vmem:[%s148 + $0x490] sm:$0xff]
                %299 = vst [vmem:[%s149 + $0x250] sm:$0xff] %v298
                %v300 = vld [vmem:[%s148 + $0x498] sm:$0xff]
                %301 = vst [vmem:[%s149 + $0x258] sm:$0xff] %v300
                %v302 = vld [vmem:[%s148 + $0x4a0] sm:$0xff]
                %303 = vst [vmem:[%s149 + $0x260] sm:$0xff] %v302
                %v304 = vld [vmem:[%s148 + $0x4a8] sm:$0xff]
                %305 = vst [vmem:[%s149 + $0x268] sm:$0xff] %v304
                %v306 = vld [vmem:[%s148 + $0x4b0] sm:$0xff]
                %307 = vst [vmem:[%s149 + $0x270] sm:$0xff] %v306
                %v308 = vld [vmem:[%s148 + $0x4b8] sm:$0xff]
                %309 = vst [vmem:[%s149 + $0x278] sm:$0xff] %v308
                %v310 = vld [vmem:[%s148 + $0x500] sm:$0xff]
                %311 = vst [vmem:[%s149 + $0x280] sm:$0xff] %v310
                %v312 = vld [vmem:[%s148 + $0x508] sm:$0xff]
                %313 = vst [vmem:[%s149 + $0x288] sm:$0xff] %v312
                %v314 = vld [vmem:[%s148 + $0x510] sm:$0xff]
                %315 = vst [vmem:[%s149 + $0x290] sm:$0xff] %v314
                %v316 = vld [vmem:[%s148 + $0x518] sm:$0xff]
                %317 = vst [vmem:[%s149 + $0x298] sm:$0xff] %v316
                %v318 = vld [vmem:[%s148 + $0x520] sm:$0xff]
                %319 = vst [vmem:[%s149 + $0x2a0] sm:$0xff] %v318
                %v320 = vld [vmem:[%s148 + $0x528] sm:$0xff]
                %321 = vst [vmem:[%s149 + $0x2a8] sm:$0xff] %v320
                %v322 = vld [vmem:[%s148 + $0x530] sm:$0xff]
                %323 = vst [vmem:[%s149 + $0x2b0] sm:$0xff] %v322
                %v324 = vld [vmem:[%s148 + $0x538] sm:$0xff]
                %325 = vst [vmem:[%s149 + $0x2b8] sm:$0xff] %v324
                %v326 = vld [vmem:[%s148 + $0x580] sm:$0xff]
                %327 = vst [vmem:[%s149 + $0x2c0] sm:$0xff] %v326
                %v328 = vld [vmem:[%s148 + $0x588] sm:$0xff]
                %329 = vst [vmem:[%s149 + $0x2c8] sm:$0xff] %v328
                %v330 = vld [vmem:[%s148 + $0x590] sm:$0xff]
                %331 = vst [vmem:[%s149 + $0x2d0] sm:$0xff] %v330
                %v332 = vld [vmem:[%s148 + $0x598] sm:$0xff]
                %333 = vst [vmem:[%s149 + $0x2d8] sm:$0xff] %v332
                %v334 = vld [vmem:[%s148 + $0x5a0] sm:$0xff]
                %335 = vst [vmem:[%s149 + $0x2e0] sm:$0xff] %v334
                %v336 = vld [vmem:[%s148 + $0x5a8] sm:$0xff]
                %337 = vst [vmem:[%s149 + $0x2e8] sm:$0xff] %v336
                %v338 = vld [vmem:[%s148 + $0x5b0] sm:$0xff]
                %339 = vst [vmem:[%s149 + $0x2f0] sm:$0xff] %v338
                %v340 = vld [vmem:[%s148 + $0x5b8] sm:$0xff]
                %341 = vst [vmem:[%s149 + $0x2f8] sm:$0xff] %v340
                %v342 = vld [vmem:[%s148 + $0x600] sm:$0xff]
                %343 = vst [vmem:[%s149 + $0x300] sm:$0xff] %v342
                %v344 = vld [vmem:[%s148 + $0x608] sm:$0xff]
                %345 = vst [vmem:[%s149 + $0x308] sm:$0xff] %v344
                %v346 = vld [vmem:[%s148 + $0x610] sm:$0xff]
                %347 = vst [vmem:[%s149 + $0x310] sm:$0xff] %v346
                %v348 = vld [vmem:[%s148 + $0x618] sm:$0xff]
                %349 = vst [vmem:[%s149 + $0x318] sm:$0xff] %v348
                %v350 = vld [vmem:[%s148 + $0x620] sm:$0xff]
                %351 = vst [vmem:[%s149 + $0x320] sm:$0xff] %v350
                %v352 = vld [vmem:[%s148 + $0x628] sm:$0xff]
                %353 = vst [vmem:[%s149 + $0x328] sm:$0xff] %v352
                %v354 = vld [vmem:[%s148 + $0x630] sm:$0xff]
                %355 = vst [vmem:[%s149 + $0x330] sm:$0xff] %v354
                %v356 = vld [vmem:[%s148 + $0x638] sm:$0xff]
                %357 = vst [vmem:[%s149 + $0x338] sm:$0xff] %v356
                %v358 = vld [vmem:[%s148 + $0x680] sm:$0xff]
                %359 = vst [vmem:[%s149 + $0x340] sm:$0xff] %v358
                %v360 = vld [vmem:[%s148 + $0x688] sm:$0xff]
                %361 = vst [vmem:[%s149 + $0x348] sm:$0xff] %v360
                %v362 = vld [vmem:[%s148 + $0x690] sm:$0xff]
                %363 = vst [vmem:[%s149 + $0x350] sm:$0xff] %v362
                %v364 = vld [vmem:[%s148 + $0x698] sm:$0xff]
                %365 = vst [vmem:[%s149 + $0x358] sm:$0xff] %v364
                %v366 = vld [vmem:[%s148 + $0x6a0] sm:$0xff]
                %367 = vst [vmem:[%s149 + $0x360] sm:$0xff] %v366
                %v368 = vld [vmem:[%s148 + $0x6a8] sm:$0xff]
                %369 = vst [vmem:[%s149 + $0x368] sm:$0xff] %v368
                %v370 = vld [vmem:[%s148 + $0x6b0] sm:$0xff]
                %371 = vst [vmem:[%s149 + $0x370] sm:$0xff] %v370
                %v372 = vld [vmem:[%s148 + $0x6b8] sm:$0xff]
                %373 = vst [vmem:[%s149 + $0x378] sm:$0xff] %v372
                %v374 = vld [vmem:[%s148 + $0x700] sm:$0xff]
                %375 = vst [vmem:[%s149 + $0x380] sm:$0xff] %v374
                %v376 = vld [vmem:[%s148 + $0x708] sm:$0xff]
                %377 = vst [vmem:[%s149 + $0x388] sm:$0xff] %v376
                %v378 = vld [vmem:[%s148 + $0x710] sm:$0xff]
                %379 = vst [vmem:[%s149 + $0x390] sm:$0xff] %v378
                %v380 = vld [vmem:[%s148 + $0x718] sm:$0xff]
                %381 = vst [vmem:[%s149 + $0x398] sm:$0xff] %v380
                %v382 = vld [vmem:[%s148 + $0x720] sm:$0xff]
                %383 = vst [vmem:[%s149 + $0x3a0] sm:$0xff] %v382
                %v384 = vld [vmem:[%s148 + $0x728] sm:$0xff]
                %385 = vst [vmem:[%s149 + $0x3a8] sm:$0xff] %v384
                %v386 = vld [vmem:[%s148 + $0x730] sm:$0xff]
                %387 = vst [vmem:[%s149 + $0x3b0] sm:$0xff] %v386
                %v388 = vld [vmem:[%s148 + $0x738] sm:$0xff]
                %389 = vst [vmem:[%s149 + $0x3b8] sm:$0xff] %v388
                %v390 = vld [vmem:[%s148 + $0x780] sm:$0xff]
                %391 = vst [vmem:[%s149 + $0x3c0] sm:$0xff] %v390
                %v392 = vld [vmem:[%s148 + $0x788] sm:$0xff]
                %393 = vst [vmem:[%s149 + $0x3c8] sm:$0xff] %v392
                %v394 = vld [vmem:[%s148 + $0x790] sm:$0xff]
                %395 = vst [vmem:[%s149 + $0x3d0] sm:$0xff] %v394
                %v396 = vld [vmem:[%s148 + $0x798] sm:$0xff]
                %397 = vst [vmem:[%s149 + $0x3d8] sm:$0xff] %v396
                %v398 = vld [vmem:[%s148 + $0x7a0] sm:$0xff]
                %399 = vst [vmem:[%s149 + $0x3e0] sm:$0xff] %v398
                %v400 = vld [vmem:[%s148 + $0x7a8] sm:$0xff]
                %401 = vst [vmem:[%s149 + $0x3e8] sm:$0xff] %v400
                %v402 = vld [vmem:[%s148 + $0x7b0] sm:$0xff]
                %403 = vst [vmem:[%s149 + $0x3f0] sm:$0xff] %v402
                %v404 = vld [vmem:[%s148 + $0x7b8] sm:$0xff]
                %405 = vst [vmem:[%s149 + $0x3f8] sm:$0xff] %v404
                %v406 = vld [vmem:[%s148 + $0x800] sm:$0xff]
                %407 = vst [vmem:[%s149 + $0x400] sm:$0xff] %v406
                %v408 = vld [vmem:[%s148 + $0x808] sm:$0xff]
                %409 = vst [vmem:[%s149 + $0x408] sm:$0xff] %v408
                %v410 = vld [vmem:[%s148 + $0x810] sm:$0xff]
                %411 = vst [vmem:[%s149 + $0x410] sm:$0xff] %v410
                %v412 = vld [vmem:[%s148 + $0x818] sm:$0xff]
                %413 = vst [vmem:[%s149 + $0x418] sm:$0xff] %v412
                %v414 = vld [vmem:[%s148 + $0x820] sm:$0xff]
                %415 = vst [vmem:[%s149 + $0x420] sm:$0xff] %v414
                %v416 = vld [vmem:[%s148 + $0x828] sm:$0xff]
                %417 = vst [vmem:[%s149 + $0x428] sm:$0xff] %v416
                %v418 = vld [vmem:[%s148 + $0x830] sm:$0xff]
                %419 = vst [vmem:[%s149 + $0x430] sm:$0xff] %v418
                %v420 = vld [vmem:[%s148 + $0x838] sm:$0xff]
                %421 = vst [vmem:[%s149 + $0x438] sm:$0xff] %v420
                %v422 = vld [vmem:[%s148 + $0x880] sm:$0xff]
                %423 = vst [vmem:[%s149 + $0x440] sm:$0xff] %v422
                %v424 = vld [vmem:[%s148 + $0x888] sm:$0xff]
                %425 = vst [vmem:[%s149 + $0x448] sm:$0xff] %v424
                %v426 = vld [vmem:[%s148 + $0x890] sm:$0xff]
                %427 = vst [vmem:[%s149 + $0x450] sm:$0xff] %v426
                %v428 = vld [vmem:[%s148 + $0x898] sm:$0xff]
                %429 = vst [vmem:[%s149 + $0x458] sm:$0xff] %v428
                %v430 = vld [vmem:[%s148 + $0x8a0] sm:$0xff]
                %431 = vst [vmem:[%s149 + $0x460] sm:$0xff] %v430
                %v432 = vld [vmem:[%s148 + $0x8a8] sm:$0xff]
                %433 = vst [vmem:[%s149 + $0x468] sm:$0xff] %v432
                %v434 = vld [vmem:[%s148 + $0x8b0] sm:$0xff]
                %435 = vst [vmem:[%s149 + $0x470] sm:$0xff] %v434
                %v436 = vld [vmem:[%s148 + $0x8b8] sm:$0xff]
                %437 = vst [vmem:[%s149 + $0x478] sm:$0xff] %v436
                %v438 = vld [vmem:[%s148 + $0x900] sm:$0xff]
                %439 = vst [vmem:[%s149 + $0x480] sm:$0xff] %v438
                %v440 = vld [vmem:[%s148 + $0x908] sm:$0xff]
                %441 = vst [vmem:[%s149 + $0x488] sm:$0xff] %v440
                %v442 = vld [vmem:[%s148 + $0x910] sm:$0xff]
                %443 = vst [vmem:[%s149 + $0x490] sm:$0xff] %v442
                %v444 = vld [vmem:[%s148 + $0x918] sm:$0xff]
                %445 = vst [vmem:[%s149 + $0x498] sm:$0xff] %v444
                %v446 = vld [vmem:[%s148 + $0x920] sm:$0xff]
                %447 = vst [vmem:[%s149 + $0x4a0] sm:$0xff] %v446
                %v448 = vld [vmem:[%s148 + $0x928] sm:$0xff]
                %449 = vst [vmem:[%s149 + $0x4a8] sm:$0xff] %v448
                %v450 = vld [vmem:[%s148 + $0x930] sm:$0xff]
                %451 = vst [vmem:[%s149 + $0x4b0] sm:$0xff] %v450
                %v452 = vld [vmem:[%s148 + $0x938] sm:$0xff]
                %453 = vst [vmem:[%s149 + $0x4b8] sm:$0xff] %v452
                %v454 = vld [vmem:[%s148 + $0x980] sm:$0xff]
                %455 = vst [vmem:[%s149 + $0x4c0] sm:$0xff] %v454
                %v456 = vld [vmem:[%s148 + $0x988] sm:$0xff]
                %457 = vst [vmem:[%s149 + $0x4c8] sm:$0xff] %v456
                %v458 = vld [vmem:[%s148 + $0x990] sm:$0xff]
                %459 = vst [vmem:[%s149 + $0x4d0] sm:$0xff] %v458
                %v460 = vld [vmem:[%s148 + $0x998] sm:$0xff]
                %461 = vst [vmem:[%s149 + $0x4d8] sm:$0xff] %v460
                %v462 = vld [vmem:[%s148 + $0x9a0] sm:$0xff]
                %463 = vst [vmem:[%s149 + $0x4e0] sm:$0xff] %v462
                %v464 = vld [vmem:[%s148 + $0x9a8] sm:$0xff]
                %465 = vst [vmem:[%s149 + $0x4e8] sm:$0xff] %v464
                %v466 = vld [vmem:[%s148 + $0x9b0] sm:$0xff]
                %467 = vst [vmem:[%s149 + $0x4f0] sm:$0xff] %v466
                %v468 = vld [vmem:[%s148 + $0x9b8] sm:$0xff]
                %469 = vst [vmem:[%s149 + $0x4f8] sm:$0xff] %v468
                %v470 = vld [vmem:[%s148 + $0xa00] sm:$0xff]
                %471 = vst [vmem:[%s149 + $0x500] sm:$0xff] %v470
                %v472 = vld [vmem:[%s148 + $0xa08] sm:$0xff]
                %473 = vst [vmem:[%s149 + $0x508] sm:$0xff] %v472
                %v474 = vld [vmem:[%s148 + $0xa10] sm:$0xff]
                %475 = vst [vmem:[%s149 + $0x510] sm:$0xff] %v474
                %v476 = vld [vmem:[%s148 + $0xa18] sm:$0xff]
                %477 = vst [vmem:[%s149 + $0x518] sm:$0xff] %v476
                %v478 = vld [vmem:[%s148 + $0xa20] sm:$0xff]
                %479 = vst [vmem:[%s149 + $0x520] sm:$0xff] %v478
                %v480 = vld [vmem:[%s148 + $0xa28] sm:$0xff]
                %481 = vst [vmem:[%s149 + $0x528] sm:$0xff] %v480
                %v482 = vld [vmem:[%s148 + $0xa30] sm:$0xff]
                %483 = vst [vmem:[%s149 + $0x530] sm:$0xff] %v482
                %v484 = vld [vmem:[%s148 + $0xa38] sm:$0xff]
                %485 = vst [vmem:[%s149 + $0x538] sm:$0xff] %v484
                %v486 = vld [vmem:[%s148 + $0xa80] sm:$0xff]
                %487 = vst [vmem:[%s149 + $0x540] sm:$0xff] %v486
                %v488 = vld [vmem:[%s148 + $0xa88] sm:$0xff]
                %489 = vst [vmem:[%s149 + $0x548] sm:$0xff] %v488
                %v490 = vld [vmem:[%s148 + $0xa90] sm:$0xff]
                %491 = vst [vmem:[%s149 + $0x550] sm:$0xff] %v490
                %v492 = vld [vmem:[%s148 + $0xa98] sm:$0xff]
                %493 = vst [vmem:[%s149 + $0x558] sm:$0xff] %v492
                %v494 = vld [vmem:[%s148 + $0xaa0] sm:$0xff]
                %495 = vst [vmem:[%s149 + $0x560] sm:$0xff] %v494
                %v496 = vld [vmem:[%s148 + $0xaa8] sm:$0xff]
                %497 = vst [vmem:[%s149 + $0x568] sm:$0xff] %v496
                %v498 = vld [vmem:[%s148 + $0xab0] sm:$0xff]
                %499 = vst [vmem:[%s149 + $0x570] sm:$0xff] %v498
                %v500 = vld [vmem:[%s148 + $0xab8] sm:$0xff]
                %501 = vst [vmem:[%s149 + $0x578] sm:$0xff] %v500
                %v502 = vld [vmem:[%s148 + $0xb00] sm:$0xff]
                %503 = vst [vmem:[%s149 + $0x580] sm:$0xff] %v502
                %v504 = vld [vmem:[%s148 + $0xb08] sm:$0xff]
                %505 = vst [vmem:[%s149 + $0x588] sm:$0xff] %v504
                %v506 = vld [vmem:[%s148 + $0xb10] sm:$0xff]
                %507 = vst [vmem:[%s149 + $0x590] sm:$0xff] %v506
                %v508 = vld [vmem:[%s148 + $0xb18] sm:$0xff]
                %509 = vst [vmem:[%s149 + $0x598] sm:$0xff] %v508
                %v510 = vld [vmem:[%s148 + $0xb20] sm:$0xff]
                %511 = vst [vmem:[%s149 + $0x5a0] sm:$0xff] %v510
                %v512 = vld [vmem:[%s148 + $0xb28] sm:$0xff]
                %513 = vst [vmem:[%s149 + $0x5a8] sm:$0xff] %v512
                %v514 = vld [vmem:[%s148 + $0xb30] sm:$0xff]
                %515 = vst [vmem:[%s149 + $0x5b0] sm:$0xff] %v514
                %v516 = vld [vmem:[%s148 + $0xb38] sm:$0xff]
                %517 = vst [vmem:[%s149 + $0x5b8] sm:$0xff] %v516
                %v518 = vld [vmem:[%s148 + $0xb80] sm:$0xff]
                %519 = vst [vmem:[%s149 + $0x5c0] sm:$0xff] %v518
                %v520 = vld [vmem:[%s148 + $0xb88] sm:$0xff]
                %521 = vst [vmem:[%s149 + $0x5c8] sm:$0xff] %v520
                %v522 = vld [vmem:[%s148 + $0xb90] sm:$0xff]
                %523 = vst [vmem:[%s149 + $0x5d0] sm:$0xff] %v522
                %v524 = vld [vmem:[%s148 + $0xb98] sm:$0xff]
                %525 = vst [vmem:[%s149 + $0x5d8] sm:$0xff] %v524
                %v526 = vld [vmem:[%s148 + $0xba0] sm:$0xff]
                %527 = vst [vmem:[%s149 + $0x5e0] sm:$0xff] %v526
                %v528 = vld [vmem:[%s148 + $0xba8] sm:$0xff]
                %529 = vst [vmem:[%s149 + $0x5e8] sm:$0xff] %v528
                %v530 = vld [vmem:[%s148 + $0xbb0] sm:$0xff]
                %531 = vst [vmem:[%s149 + $0x5f0] sm:$0xff] %v530
                %v532 = vld [vmem:[%s148 + $0xbb8] sm:$0xff]
                %533 = vst [vmem:[%s149 + $0x5f8] sm:$0xff] %v532
                %v534 = vld [vmem:[%s148 + $0xc00] sm:$0xff]
                %535 = vst [vmem:[%s149 + $0x600] sm:$0xff] %v534
                %v536 = vld [vmem:[%s148 + $0xc08] sm:$0xff]
                %537 = vst [vmem:[%s149 + $0x608] sm:$0xff] %v536
                %v538 = vld [vmem:[%s148 + $0xc10] sm:$0xff]
                %539 = vst [vmem:[%s149 + $0x610] sm:$0xff] %v538
                %v540 = vld [vmem:[%s148 + $0xc18] sm:$0xff]
                %541 = vst [vmem:[%s149 + $0x618] sm:$0xff] %v540
                %v542 = vld [vmem:[%s148 + $0xc20] sm:$0xff]
                %543 = vst [vmem:[%s149 + $0x620] sm:$0xff] %v542
                %v544 = vld [vmem:[%s148 + $0xc28] sm:$0xff]
                %545 = vst [vmem:[%s149 + $0x628] sm:$0xff] %v544
                %v546 = vld [vmem:[%s148 + $0xc30] sm:$0xff]
                %547 = vst [vmem:[%s149 + $0x630] sm:$0xff] %v546
                %v548 = vld [vmem:[%s148 + $0xc38] sm:$0xff]
                %549 = vst [vmem:[%s149 + $0x638] sm:$0xff] %v548
              $region41: #{_lambda_.11} parent=35 // loop_footer
                %s147 = sadd.s32 1, %s143
              $region42: #{_lambda_.11} parent=35 // loop_footer_branch
                %142 = sbr.rel target = $region38
              $region43: #{_lambda_.11} parent=35 // loop_exit
                _
            $region36: #{_lambda_.11} parent=31 // pred_fallthru
              _
            // Predicated region
            $region44: #{_lambda_.11} parent=31 // pred_check
              _
            $region45: #{_lambda_.11} parent=31 // pred_check_branch
              %551 = sbr.rel target = $region47
            $region46: #{_lambda_.11} parent=31 // pred_region
              _
            $region47: #{_lambda_.11} parent=31 // pred_fallthru
              _
          $region32: #{_lambda_.11} parent=27 // pred_fallthru
            _
          %552 = vnop
        $region28: #{_lambda_.11} parent=23 // pred_fallthru
          _
      $region24: #{_lambda_.11} parent=5 // pred_fallthru
        _
      %p553 = scmp.le.s32.totalorder 1, %s9
      %p554 = scmp.lt.s32.totalorder %s9, 3
      %p555 = pnand %p553, %p554
      %p556 = pneg %p555
      // Predicated region
      $region48: #{_lambda_.11} parent=5 // pred_check
        _
      $region49: #{_lambda_.11} parent=5 // pred_check_branch
        %558 = sbr.rel (%p555) target = $region51
      $region50: #{_lambda_.11} parent=5 // pred_region
        %s559 = ssub.s32 %s9, 1
        %s560 = sand.u32 %s43, 1
        %s561 = sand.u32 %s43, 1
        %s562 = smul.addr %s561, 1600
        %s563 = scalar_lea.vmem [#allocation2], %s562
        // Predicated region
        $region52: #{_lambda_.11} parent=50 // pred_check
          %p564 = pneg %p56
        $region53: #{_lambda_.11} parent=50 // pred_check_branch
          %566 = sbr.rel (%p564) target = $region55
        $region54: #{_lambda_.11} parent=50 // pred_region
          _
        $region55: #{_lambda_.11} parent=50 // pred_fallthru
          _
        %p567 = pneg %p30
        %p568 = pneg %p27
        %s569 = sand.u32 %s43, 1
        %s570 = sand.u32 %s43, 1
        %s571 = smul.addr %s570, 1600
        %s572 = scalar_lea.vmem [#allocation2], %s571
        %p573 = pneg %p56
        %p574 = pneg %p53
        %p575 = pneg %p77
        %p576 = pneg %p74
        %p577 = pneg %p103
        %p578 = pneg %p100
        %s579 = smul.u32 16, %s14
        %p580 = scmp.lt.s32.totalorder %s579, 31
        %s581 = scalar_select %p580, %s579, 31
        %s582 = smul.addr %s581, 8
        %s583 = scalar_lea.vmem %s3, %s582
        %s584 = smul.u32 16, %s14
        %s585 = smul.u32 16, %s14
        %p586 = scmp.lt.s32.totalorder %s585, 31
        %s587 = scalar_select %p586, %s585, 31
        %s588 = smul.addr %s587, 8
        %s589 = scalar_lea.vmem %s3, %s588
        %s590 = smul.u32 16, %s14
        %v592 = vld [vmem:[%s0] sm:$0xff]
        %v593 = vld [vmem:[%s563] sm:$0xff]
        %v594 = vld [vmem:[%s563 + $0x8] sm:$0xff]
        %v595 = vld [vmem:[%s563 + $0x10] sm:$0xff]
        %v596 = vld [vmem:[%s563 + $0x18] sm:$0xff]
        %v597 = vld [vmem:[%s563 + $0x20] sm:$0xff]
        %v598 = vld [vmem:[%s563 + $0x28] sm:$0xff]
        %v599 = vld [vmem:[%s563 + $0x30] sm:$0xff]
        %v600 = vld [vmem:[%s563 + $0x38] sm:$0xff]
        %v601 = vld [vmem:[%s563 + $0x40] sm:$0xff]
        %v602 = vld [vmem:[%s563 + $0x48] sm:$0xff]
        %v603 = vld [vmem:[%s563 + $0x50] sm:$0xff]
        %v604 = vld [vmem:[%s563 + $0x58] sm:$0xff]
        %v605 = vld [vmem:[%s563 + $0x60] sm:$0xff]
        %v606 = vld [vmem:[%s563 + $0x68] sm:$0xff]
        %v607 = vld [vmem:[%s563 + $0x70] sm:$0xff]
        %v608 = vld [vmem:[%s563 + $0x78] sm:$0xff]
        %v609 = vld [vmem:[%s563 + $0x80] sm:$0xff]
        %v610 = vld [vmem:[%s563 + $0x88] sm:$0xff]
        %v611 = vld [vmem:[%s563 + $0x90] sm:$0xff]
        %v612 = vld [vmem:[%s563 + $0x98] sm:$0xff]
        %v613 = vld [vmem:[%s563 + $0xa0] sm:$0xff]
        %v614 = vld [vmem:[%s563 + $0xa8] sm:$0xff]
        %v615 = vld [vmem:[%s563 + $0xb0] sm:$0xff]
        %v616 = vld [vmem:[%s563 + $0xb8] sm:$0xff]
        %v617 = vld [vmem:[%s563 + $0xc0] sm:$0xff]
        %v618 = vld [vmem:[%s563 + $0xc8] sm:$0xff]
        %v619 = vld [vmem:[%s563 + $0xd0] sm:$0xff]
        %v620 = vld [vmem:[%s563 + $0xd8] sm:$0xff]
        %v621 = vld [vmem:[%s563 + $0xe0] sm:$0xff]
        %v622 = vld [vmem:[%s563 + $0xe8] sm:$0xff]
        %v623 = vld [vmem:[%s563 + $0xf0] sm:$0xff]
        %v624 = vld [vmem:[%s563 + $0xf8] sm:$0xff]
        %v625 = vld [vmem:[%s563 + $0x100] sm:$0xff]
        %v626 = vld [vmem:[%s563 + $0x108] sm:$0xff]
        %v627 = vld [vmem:[%s563 + $0x110] sm:$0xff]
        %v628 = vld [vmem:[%s563 + $0x118] sm:$0xff]
        %v629 = vld [vmem:[%s563 + $0x120] sm:$0xff]
        %v630 = vld [vmem:[%s563 + $0x128] sm:$0xff]
        %v631 = vld [vmem:[%s563 + $0x130] sm:$0xff]
        %v632 = vld [vmem:[%s563 + $0x138] sm:$0xff]
        %v633 = vld [vmem:[%s563 + $0x140] sm:$0xff]
        %v634 = vld [vmem:[%s563 + $0x148] sm:$0xff]
        %v635 = vld [vmem:[%s563 + $0x150] sm:$0xff]
        %v636 = vld [vmem:[%s563 + $0x158] sm:$0xff]
        %v637 = vld [vmem:[%s563 + $0x160] sm:$0xff]
        %v638 = vld [vmem:[%s563 + $0x168] sm:$0xff]
        %v639 = vld [vmem:[%s563 + $0x170] sm:$0xff]
        %v640 = vld [vmem:[%s563 + $0x178] sm:$0xff]
        %v641 = vld [vmem:[%s563 + $0x180] sm:$0xff]
        %v642 = vld [vmem:[%s563 + $0x188] sm:$0xff]
        %v643 = vld [vmem:[%s563 + $0x190] sm:$0xff]
        %v644 = vld [vmem:[%s563 + $0x198] sm:$0xff]
        %v645 = vld [vmem:[%s563 + $0x1a0] sm:$0xff]
        %v646 = vld [vmem:[%s563 + $0x1a8] sm:$0xff]
        %v647 = vld [vmem:[%s563 + $0x1b0] sm:$0xff]
        %v648 = vld [vmem:[%s563 + $0x1b8] sm:$0xff]
        %v649 = vld [vmem:[%s563 + $0x1c0] sm:$0xff]
        %v650 = vld [vmem:[%s563 + $0x1c8] sm:$0xff]
        %v651 = vld [vmem:[%s563 + $0x1d0] sm:$0xff]
        %v652 = vld [vmem:[%s563 + $0x1d8] sm:$0xff]
        %v653 = vld [vmem:[%s563 + $0x1e0] sm:$0xff]
        %v654 = vld [vmem:[%s563 + $0x1e8] sm:$0xff]
        %v655 = vld [vmem:[%s563 + $0x1f0] sm:$0xff]
        %v656 = vld [vmem:[%s563 + $0x1f8] sm:$0xff]
        %v657 = vld [vmem:[%s563 + $0x200] sm:$0xff]
        %v658 = vld [vmem:[%s563 + $0x208] sm:$0xff]
        %v659 = vld [vmem:[%s563 + $0x210] sm:$0xff]
        %v660 = vld [vmem:[%s563 + $0x218] sm:$0xff]
        %v661 = vld [vmem:[%s563 + $0x220] sm:$0xff]
        %v662 = vld [vmem:[%s563 + $0x228] sm:$0xff]
        %v663 = vld [vmem:[%s563 + $0x230] sm:$0xff]
        %v664 = vld [vmem:[%s563 + $0x238] sm:$0xff]
        %v665 = vld [vmem:[%s563 + $0x240] sm:$0xff]
        %v666 = vld [vmem:[%s563 + $0x248] sm:$0xff]
        %v667 = vld [vmem:[%s563 + $0x250] sm:$0xff]
        %v668 = vld [vmem:[%s563 + $0x258] sm:$0xff]
        %v669 = vld [vmem:[%s563 + $0x260] sm:$0xff]
        %v670 = vld [vmem:[%s563 + $0x268] sm:$0xff]
        %v671 = vld [vmem:[%s563 + $0x270] sm:$0xff]
        %v672 = vld [vmem:[%s563 + $0x278] sm:$0xff]
        %v673 = vld [vmem:[%s563 + $0x280] sm:$0xff]
        %v674 = vld [vmem:[%s563 + $0x288] sm:$0xff]
        %v675 = vld [vmem:[%s563 + $0x290] sm:$0xff]
        %v676 = vld [vmem:[%s563 + $0x298] sm:$0xff]
        %v677 = vld [vmem:[%s563 + $0x2a0] sm:$0xff]
        %v678 = vld [vmem:[%s563 + $0x2a8] sm:$0xff]
        %v679 = vld [vmem:[%s563 + $0x2b0] sm:$0xff]
        %v680 = vld [vmem:[%s563 + $0x2b8] sm:$0xff]
        %v681 = vld [vmem:[%s563 + $0x2c0] sm:$0xff]
        %v682 = vld [vmem:[%s563 + $0x2c8] sm:$0xff]
        %v683 = vld [vmem:[%s563 + $0x2d0] sm:$0xff]
        %v684 = vld [vmem:[%s563 + $0x2d8] sm:$0xff]
        %v685 = vld [vmem:[%s563 + $0x2e0] sm:$0xff]
        %v686 = vld [vmem:[%s563 + $0x2e8] sm:$0xff]
        %v687 = vld [vmem:[%s563 + $0x2f0] sm:$0xff]
        %v688 = vld [vmem:[%s563 + $0x2f8] sm:$0xff]
        %v689 = vld [vmem:[%s563 + $0x300] sm:$0xff]
        %v690 = vld [vmem:[%s563 + $0x308] sm:$0xff]
        %v691 = vld [vmem:[%s563 + $0x310] sm:$0xff]
        %v692 = vld [vmem:[%s563 + $0x318] sm:$0xff]
        %v693 = vld [vmem:[%s563 + $0x320] sm:$0xff]
        %v694 = vld [vmem:[%s563 + $0x328] sm:$0xff]
        %v695 = vld [vmem:[%s563 + $0x330] sm:$0xff]
        %v696 = vld [vmem:[%s563 + $0x338] sm:$0xff]
        %v697 = vld [vmem:[%s563 + $0x340] sm:$0xff]
        %v698 = vld [vmem:[%s563 + $0x348] sm:$0xff]
        %v699 = vld [vmem:[%s563 + $0x350] sm:$0xff]
        %v700 = vld [vmem:[%s563 + $0x358] sm:$0xff]
        %v701 = vld [vmem:[%s563 + $0x360] sm:$0xff]
        %v702 = vld [vmem:[%s563 + $0x368] sm:$0xff]
        %v703 = vld [vmem:[%s563 + $0x370] sm:$0xff]
        %v704 = vld [vmem:[%s563 + $0x378] sm:$0xff]
        %v705 = vld [vmem:[%s563 + $0x380] sm:$0xff]
        %v706 = vld [vmem:[%s563 + $0x388] sm:$0xff]
        %v707 = vld [vmem:[%s563 + $0x390] sm:$0xff]
        %v708 = vld [vmem:[%s563 + $0x398] sm:$0xff]
        %v709 = vld [vmem:[%s563 + $0x3a0] sm:$0xff]
        %v710 = vld [vmem:[%s563 + $0x3a8] sm:$0xff]
        %v711 = vld [vmem:[%s563 + $0x3b0] sm:$0xff]
        %v712 = vld [vmem:[%s563 + $0x3b8] sm:$0xff]
        %v713 = vld [vmem:[%s563 + $0x3c0] sm:$0xff]
        %v714 = vld [vmem:[%s563 + $0x3c8] sm:$0xff]
        %v715 = vld [vmem:[%s563 + $0x3d0] sm:$0xff]
        %v716 = vld [vmem:[%s563 + $0x3d8] sm:$0xff]
        %v717 = vld [vmem:[%s563 + $0x3e0] sm:$0xff]
        %v718 = vld [vmem:[%s563 + $0x3e8] sm:$0xff]
        %v719 = vld [vmem:[%s563 + $0x3f0] sm:$0xff]
        %v720 = vld [vmem:[%s563 + $0x3f8] sm:$0xff]
        %v721 = vld [vmem:[%s563 + $0x400] sm:$0xff]
        %v722 = vld [vmem:[%s563 + $0x408] sm:$0xff]
        %v723 = vld [vmem:[%s563 + $0x410] sm:$0xff]
        %v724 = vld [vmem:[%s563 + $0x418] sm:$0xff]
        %v725 = vld [vmem:[%s563 + $0x420] sm:$0xff]
        %v726 = vld [vmem:[%s563 + $0x428] sm:$0xff]
        %v727 = vld [vmem:[%s563 + $0x430] sm:$0xff]
        %v728 = vld [vmem:[%s563 + $0x438] sm:$0xff]
        %v729 = vld [vmem:[%s563 + $0x440] sm:$0xff]
        %v730 = vld [vmem:[%s563 + $0x448] sm:$0xff]
        %v731 = vld [vmem:[%s563 + $0x450] sm:$0xff]
        %v732 = vld [vmem:[%s563 + $0x458] sm:$0xff]
        %v733 = vld [vmem:[%s563 + $0x460] sm:$0xff]
        %v734 = vld [vmem:[%s563 + $0x468] sm:$0xff]
        %v735 = vld [vmem:[%s563 + $0x470] sm:$0xff]
        %v736 = vld [vmem:[%s563 + $0x478] sm:$0xff]
        %v737 = vld [vmem:[%s563 + $0x480] sm:$0xff]
        %v738 = vld [vmem:[%s563 + $0x488] sm:$0xff]
        %v739 = vld [vmem:[%s563 + $0x490] sm:$0xff]
        %v740 = vld [vmem:[%s563 + $0x498] sm:$0xff]
        %v741 = vld [vmem:[%s563 + $0x4a0] sm:$0xff]
        %v742 = vld [vmem:[%s563 + $0x4a8] sm:$0xff]
        %v743 = vld [vmem:[%s563 + $0x4b0] sm:$0xff]
        %v744 = vld [vmem:[%s563 + $0x4b8] sm:$0xff]
        %v745 = vld [vmem:[%s563 + $0x4c0] sm:$0xff]
        %v746 = vld [vmem:[%s563 + $0x4c8] sm:$0xff]
        %v747 = vld [vmem:[%s563 + $0x4d0] sm:$0xff]
        %v748 = vld [vmem:[%s563 + $0x4d8] sm:$0xff]
        %v749 = vld [vmem:[%s563 + $0x4e0] sm:$0xff]
        %v750 = vld [vmem:[%s563 + $0x4e8] sm:$0xff]
        %v751 = vld [vmem:[%s563 + $0x4f0] sm:$0xff]
        %v752 = vld [vmem:[%s563 + $0x4f8] sm:$0xff]
        %v753 = vld [vmem:[%s563 + $0x500] sm:$0xff]
        %v754 = vld [vmem:[%s563 + $0x508] sm:$0xff]
        %v755 = vld [vmem:[%s563 + $0x510] sm:$0xff]
        %v756 = vld [vmem:[%s563 + $0x518] sm:$0xff]
        %v757 = vld [vmem:[%s563 + $0x520] sm:$0xff]
        %v758 = vld [vmem:[%s563 + $0x528] sm:$0xff]
        %v759 = vld [vmem:[%s563 + $0x530] sm:$0xff]
        %v760 = vld [vmem:[%s563 + $0x538] sm:$0xff]
        %v761 = vld [vmem:[%s563 + $0x540] sm:$0xff]
        %v762 = vld [vmem:[%s563 + $0x548] sm:$0xff]
        %v763 = vld [vmem:[%s563 + $0x550] sm:$0xff]
        %v764 = vld [vmem:[%s563 + $0x558] sm:$0xff]
        %v765 = vld [vmem:[%s563 + $0x560] sm:$0xff]
        %v766 = vld [vmem:[%s563 + $0x568] sm:$0xff]
        %v767 = vld [vmem:[%s563 + $0x570] sm:$0xff]
        %v768 = vld [vmem:[%s563 + $0x578] sm:$0xff]
        %v769 = vld [vmem:[%s563 + $0x580] sm:$0xff]
        %v770 = vld [vmem:[%s563 + $0x588] sm:$0xff]
        %v771 = vld [vmem:[%s563 + $0x590] sm:$0xff]
        %v772 = vld [vmem:[%s563 + $0x598] sm:$0xff]
        %v773 = vld [vmem:[%s563 + $0x5a0] sm:$0xff]
        %v774 = vld [vmem:[%s563 + $0x5a8] sm:$0xff]
        %v775 = vld [vmem:[%s563 + $0x5b0] sm:$0xff]
        %v776 = vld [vmem:[%s563 + $0x5b8] sm:$0xff]
        %v777 = vld [vmem:[%s563 + $0x5c0] sm:$0xff]
        %v778 = vld [vmem:[%s563 + $0x5c8] sm:$0xff]
        %v779 = vld [vmem:[%s563 + $0x5d0] sm:$0xff]
        %v780 = vld [vmem:[%s563 + $0x5d8] sm:$0xff]
        %v781 = vld [vmem:[%s563 + $0x5e0] sm:$0xff]
        %v782 = vld [vmem:[%s563 + $0x5e8] sm:$0xff]
        %v783 = vld [vmem:[%s563 + $0x5f0] sm:$0xff]
        %v784 = vld [vmem:[%s563 + $0x5f8] sm:$0xff]
        %v785 = vld [vmem:[%s563 + $0x600] sm:$0x33]
        %v786 = vld [vmem:[%s563 + $0x608] sm:$0x33]
        %v787 = vld [vmem:[%s563 + $0x610] sm:$0x33]
        %v788 = vld [vmem:[%s563 + $0x618] sm:$0x33]
        %v789 = vld [vmem:[%s563 + $0x620] sm:$0x33]
        %v790 = vld [vmem:[%s563 + $0x628] sm:$0x33]
        %v791 = vld [vmem:[%s563 + $0x630] sm:$0x33]
        %v792 = vld [vmem:[%s563 + $0x638] sm:$0x33]
        %v793 = vld [vmem:[%s2] sm:$0xff]
        %795 = vset.pattern.permute.xlu0 0
        %796 = vperm.xlu0 %795, %v793
        %v797 = vpop.permute.xlu0 %796
        %v800 = vunpack.c.l.b16 %v592
        %v801 = vunpack.c.h.b16 %v592
        %v802 = vpack.c.b16 %v800, %v800
        %v803 = vpack.c.b16 %v801, %v801
        %v1005 = vunpack.c.l.b16 %v593
        %v1006 = vunpack.c.h.b16 %v593
        %v1007 = vunpack.c.l.b16 %v594
        %v1008 = vunpack.c.h.b16 %v594
        %v1009 = vunpack.c.l.b16 %v595
        %v1010 = vunpack.c.h.b16 %v595
        %v1011 = vunpack.c.l.b16 %v596
        %v1012 = vunpack.c.h.b16 %v596
        %v1013 = vunpack.c.l.b16 %v597
        %v1014 = vunpack.c.h.b16 %v597
        %v1015 = vunpack.c.l.b16 %v598
        %v1016 = vunpack.c.h.b16 %v598
        %v1017 = vunpack.c.l.b16 %v599
        %v1018 = vunpack.c.h.b16 %v599
        %v1019 = vunpack.c.l.b16 %v600
        %v1020 = vunpack.c.h.b16 %v600
        %v1021 = vunpack.c.l.b16 %v601
        %v1022 = vunpack.c.h.b16 %v601
        %v1023 = vunpack.c.l.b16 %v602
        %v1024 = vunpack.c.h.b16 %v602
        %v1025 = vunpack.c.l.b16 %v603
        %v1026 = vunpack.c.h.b16 %v603
        %v1027 = vunpack.c.l.b16 %v604
        %v1028 = vunpack.c.h.b16 %v604
        %v1029 = vunpack.c.l.b16 %v605
        %v1030 = vunpack.c.h.b16 %v605
        %v1031 = vunpack.c.l.b16 %v606
        %v1032 = vunpack.c.h.b16 %v606
        %v1033 = vunpack.c.l.b16 %v607
        %v1034 = vunpack.c.h.b16 %v607
        %v1035 = vunpack.c.l.b16 %v608
        %v1036 = vunpack.c.h.b16 %v608
        %v1037 = vunpack.c.l.b16 %v609
        %v1038 = vunpack.c.h.b16 %v609
        %v1039 = vunpack.c.l.b16 %v610
        %v1040 = vunpack.c.h.b16 %v610
        %v1041 = vunpack.c.l.b16 %v611
        %v1042 = vunpack.c.h.b16 %v611
        %v1043 = vunpack.c.l.b16 %v612
        %v1044 = vunpack.c.h.b16 %v612
        %v1045 = vunpack.c.l.b16 %v613
        %v1046 = vunpack.c.h.b16 %v613
        %v1047 = vunpack.c.l.b16 %v614
        %v1048 = vunpack.c.h.b16 %v614
        %v1049 = vunpack.c.l.b16 %v615
        %v1050 = vunpack.c.h.b16 %v615
        %v1051 = vunpack.c.l.b16 %v616
        %v1052 = vunpack.c.h.b16 %v616
        %v1053 = vunpack.c.l.b16 %v617
        %v1054 = vunpack.c.h.b16 %v617
        %v1055 = vunpack.c.l.b16 %v618
        %v1056 = vunpack.c.h.b16 %v618
        %v1057 = vunpack.c.l.b16 %v619
        %v1058 = vunpack.c.h.b16 %v619
        %v1059 = vunpack.c.l.b16 %v620
        %v1060 = vunpack.c.h.b16 %v620
        %v1061 = vunpack.c.l.b16 %v621
        %v1062 = vunpack.c.h.b16 %v621
        %v1063 = vunpack.c.l.b16 %v622
        %v1064 = vunpack.c.h.b16 %v622
        %v1065 = vunpack.c.l.b16 %v623
        %v1066 = vunpack.c.h.b16 %v623
        %v1067 = vunpack.c.l.b16 %v624
        %v1068 = vunpack.c.h.b16 %v624
        %v1069 = vunpack.c.l.b16 %v625
        %v1070 = vunpack.c.h.b16 %v625
        %v1071 = vunpack.c.l.b16 %v626
        %v1072 = vunpack.c.h.b16 %v626
        %v1073 = vunpack.c.l.b16 %v627
        %v1074 = vunpack.c.h.b16 %v627
        %v1075 = vunpack.c.l.b16 %v628
        %v1076 = vunpack.c.h.b16 %v628
        %v1077 = vunpack.c.l.b16 %v629
        %v1078 = vunpack.c.h.b16 %v629
        %v1079 = vunpack.c.l.b16 %v630
        %v1080 = vunpack.c.h.b16 %v630
        %v1081 = vunpack.c.l.b16 %v631
        %v1082 = vunpack.c.h.b16 %v631
        %v1083 = vunpack.c.l.b16 %v632
        %v1084 = vunpack.c.h.b16 %v632
        %v1085 = vunpack.c.l.b16 %v633
        %v1086 = vunpack.c.h.b16 %v633
        %v1087 = vunpack.c.l.b16 %v634
        %v1088 = vunpack.c.h.b16 %v634
        %v1089 = vunpack.c.l.b16 %v635
        %v1090 = vunpack.c.h.b16 %v635
        %v1091 = vunpack.c.l.b16 %v636
        %v1092 = vunpack.c.h.b16 %v636
        %v1093 = vunpack.c.l.b16 %v637
        %v1094 = vunpack.c.h.b16 %v637
        %v1095 = vunpack.c.l.b16 %v638
        %v1096 = vunpack.c.h.b16 %v638
        %v1097 = vunpack.c.l.b16 %v639
        %v1098 = vunpack.c.h.b16 %v639
        %v1099 = vunpack.c.l.b16 %v640
        %v1100 = vunpack.c.h.b16 %v640
        %v1101 = vunpack.c.l.b16 %v641
        %v1102 = vunpack.c.h.b16 %v641
        %v1103 = vunpack.c.l.b16 %v642
        %v1104 = vunpack.c.h.b16 %v642
        %v1105 = vunpack.c.l.b16 %v643
        %v1106 = vunpack.c.h.b16 %v643
        %v1107 = vunpack.c.l.b16 %v644
        %v1108 = vunpack.c.h.b16 %v644
        %v1109 = vunpack.c.l.b16 %v645
        %v1110 = vunpack.c.h.b16 %v645
        %v1111 = vunpack.c.l.b16 %v646
        %v1112 = vunpack.c.h.b16 %v646
        %v1113 = vunpack.c.l.b16 %v647
        %v1114 = vunpack.c.h.b16 %v647
        %v1115 = vunpack.c.l.b16 %v648
        %v1116 = vunpack.c.h.b16 %v648
        %v1117 = vunpack.c.l.b16 %v649
        %v1118 = vunpack.c.h.b16 %v649
        %v1119 = vunpack.c.l.b16 %v650
        %v1120 = vunpack.c.h.b16 %v650
        %v1121 = vunpack.c.l.b16 %v651
        %v1122 = vunpack.c.h.b16 %v651
        %v1123 = vunpack.c.l.b16 %v652
        %v1124 = vunpack.c.h.b16 %v652
        %v1125 = vunpack.c.l.b16 %v653
        %v1126 = vunpack.c.h.b16 %v653
        %v1127 = vunpack.c.l.b16 %v654
        %v1128 = vunpack.c.h.b16 %v654
        %v1129 = vunpack.c.l.b16 %v655
        %v1130 = vunpack.c.h.b16 %v655
        %v1131 = vunpack.c.l.b16 %v656
        %v1132 = vunpack.c.h.b16 %v656
        %v1133 = vunpack.c.l.b16 %v657
        %v1134 = vunpack.c.h.b16 %v657
        %v1135 = vunpack.c.l.b16 %v658
        %v1136 = vunpack.c.h.b16 %v658
        %v1137 = vunpack.c.l.b16 %v659
        %v1138 = vunpack.c.h.b16 %v659
        %v1139 = vunpack.c.l.b16 %v660
        %v1140 = vunpack.c.h.b16 %v660
        %v1141 = vunpack.c.l.b16 %v661
        %v1142 = vunpack.c.h.b16 %v661
        %v1143 = vunpack.c.l.b16 %v662
        %v1144 = vunpack.c.h.b16 %v662
        %v1145 = vunpack.c.l.b16 %v663
        %v1146 = vunpack.c.h.b16 %v663
        %v1147 = vunpack.c.l.b16 %v664
        %v1148 = vunpack.c.h.b16 %v664
        %v1149 = vunpack.c.l.b16 %v665
        %v1150 = vunpack.c.h.b16 %v665
        %v1151 = vunpack.c.l.b16 %v666
        %v1152 = vunpack.c.h.b16 %v666
        %v1153 = vunpack.c.l.b16 %v667
        %v1154 = vunpack.c.h.b16 %v667
        %v1155 = vunpack.c.l.b16 %v668
        %v1156 = vunpack.c.h.b16 %v668
        %v1157 = vunpack.c.l.b16 %v669
        %v1158 = vunpack.c.h.b16 %v669
        %v1159 = vunpack.c.l.b16 %v670
        %v1160 = vunpack.c.h.b16 %v670
        %v1161 = vunpack.c.l.b16 %v671
        %v1162 = vunpack.c.h.b16 %v671
        %v1163 = vunpack.c.l.b16 %v672
        %v1164 = vunpack.c.h.b16 %v672
        %v1165 = vunpack.c.l.b16 %v673
        %v1166 = vunpack.c.h.b16 %v673
        %v1167 = vunpack.c.l.b16 %v674
        %v1168 = vunpack.c.h.b16 %v674
        %v1169 = vunpack.c.l.b16 %v675
        %v1170 = vunpack.c.h.b16 %v675
        %v1171 = vunpack.c.l.b16 %v676
        %v1172 = vunpack.c.h.b16 %v676
        %v1173 = vunpack.c.l.b16 %v677
        %v1174 = vunpack.c.h.b16 %v677
        %v1175 = vunpack.c.l.b16 %v678
        %v1176 = vunpack.c.h.b16 %v678
        %v1177 = vunpack.c.l.b16 %v679
        %v1178 = vunpack.c.h.b16 %v679
        %v1179 = vunpack.c.l.b16 %v680
        %v1180 = vunpack.c.h.b16 %v680
        %v1181 = vunpack.c.l.b16 %v681
        %v1182 = vunpack.c.h.b16 %v681
        %v1183 = vunpack.c.l.b16 %v682
        %v1184 = vunpack.c.h.b16 %v682
        %v1185 = vunpack.c.l.b16 %v683
        %v1186 = vunpack.c.h.b16 %v683
        %v1187 = vunpack.c.l.b16 %v684
        %v1188 = vunpack.c.h.b16 %v684
        %v1189 = vunpack.c.l.b16 %v685
        %v1190 = vunpack.c.h.b16 %v685
        %v1191 = vunpack.c.l.b16 %v686
        %v1192 = vunpack.c.h.b16 %v686
        %v1193 = vunpack.c.l.b16 %v687
        %v1194 = vunpack.c.h.b16 %v687
        %v1195 = vunpack.c.l.b16 %v688
        %v1196 = vunpack.c.h.b16 %v688
        %v1197 = vunpack.c.l.b16 %v689
        %v1198 = vunpack.c.h.b16 %v689
        %v1199 = vunpack.c.l.b16 %v690
        %v1200 = vunpack.c.h.b16 %v690
        %v1201 = vunpack.c.l.b16 %v691
        %v1202 = vunpack.c.h.b16 %v691
        %v1203 = vunpack.c.l.b16 %v692
        %v1204 = vunpack.c.h.b16 %v692
        %v1205 = vunpack.c.l.b16 %v693
        %v1206 = vunpack.c.h.b16 %v693
        %v1207 = vunpack.c.l.b16 %v694
        %v1208 = vunpack.c.h.b16 %v694
        %v1209 = vunpack.c.l.b16 %v695
        %v1210 = vunpack.c.h.b16 %v695
        %v1211 = vunpack.c.l.b16 %v696
        %v1212 = vunpack.c.h.b16 %v696
        %v1213 = vunpack.c.l.b16 %v697
        %v1214 = vunpack.c.h.b16 %v697
        %v1215 = vunpack.c.l.b16 %v698
        %v1216 = vunpack.c.h.b16 %v698
        %v1217 = vunpack.c.l.b16 %v699
        %v1218 = vunpack.c.h.b16 %v699
        %v1219 = vunpack.c.l.b16 %v700
        %v1220 = vunpack.c.h.b16 %v700
        %v1221 = vunpack.c.l.b16 %v701
        %v1222 = vunpack.c.h.b16 %v701
        %v1223 = vunpack.c.l.b16 %v702
        %v1224 = vunpack.c.h.b16 %v702
        %v1225 = vunpack.c.l.b16 %v703
        %v1226 = vunpack.c.h.b16 %v703
        %v1227 = vunpack.c.l.b16 %v704
        %v1228 = vunpack.c.h.b16 %v704
        %v1229 = vunpack.c.l.b16 %v705
        %v1230 = vunpack.c.h.b16 %v705
        %v1231 = vunpack.c.l.b16 %v706
        %v1232 = vunpack.c.h.b16 %v706
        %v1233 = vunpack.c.l.b16 %v707
        %v1234 = vunpack.c.h.b16 %v707
        %v1235 = vunpack.c.l.b16 %v708
        %v1236 = vunpack.c.h.b16 %v708
        %v1237 = vunpack.c.l.b16 %v709
        %v1238 = vunpack.c.h.b16 %v709
        %v1239 = vunpack.c.l.b16 %v710
        %v1240 = vunpack.c.h.b16 %v710
        %v1241 = vunpack.c.l.b16 %v711
        %v1242 = vunpack.c.h.b16 %v711
        %v1243 = vunpack.c.l.b16 %v712
        %v1244 = vunpack.c.h.b16 %v712
        %v1245 = vunpack.c.l.b16 %v713
        %v1246 = vunpack.c.h.b16 %v713
        %v1247 = vunpack.c.l.b16 %v714
        %v1248 = vunpack.c.h.b16 %v714
        %v1249 = vunpack.c.l.b16 %v715
        %v1250 = vunpack.c.h.b16 %v715
        %v1251 = vunpack.c.l.b16 %v716
        %v1252 = vunpack.c.h.b16 %v716
        %v1253 = vunpack.c.l.b16 %v717
        %v1254 = vunpack.c.h.b16 %v717
        %v1255 = vunpack.c.l.b16 %v718
        %v1256 = vunpack.c.h.b16 %v718
        %v1257 = vunpack.c.l.b16 %v719
        %v1258 = vunpack.c.h.b16 %v719
        %v1259 = vunpack.c.l.b16 %v720
        %v1260 = vunpack.c.h.b16 %v720
        %v1261 = vunpack.c.l.b16 %v721
        %v1262 = vunpack.c.h.b16 %v721
        %v1263 = vunpack.c.l.b16 %v722
        %v1264 = vunpack.c.h.b16 %v722
        %v1265 = vunpack.c.l.b16 %v723
        %v1266 = vunpack.c.h.b16 %v723
        %v1267 = vunpack.c.l.b16 %v724
        %v1268 = vunpack.c.h.b16 %v724
        %v1269 = vunpack.c.l.b16 %v725
        %v1270 = vunpack.c.h.b16 %v725
        %v1271 = vunpack.c.l.b16 %v726
        %v1272 = vunpack.c.h.b16 %v726
        %v1273 = vunpack.c.l.b16 %v727
        %v1274 = vunpack.c.h.b16 %v727
        %v1275 = vunpack.c.l.b16 %v728
        %v1276 = vunpack.c.h.b16 %v728
        %v1277 = vunpack.c.l.b16 %v729
        %v1278 = vunpack.c.h.b16 %v729
        %v1279 = vunpack.c.l.b16 %v730
        %v1280 = vunpack.c.h.b16 %v730
        %v1281 = vunpack.c.l.b16 %v731
        %v1282 = vunpack.c.h.b16 %v731
        %v1283 = vunpack.c.l.b16 %v732
        %v1284 = vunpack.c.h.b16 %v732
        %v1285 = vunpack.c.l.b16 %v733
        %v1286 = vunpack.c.h.b16 %v733
        %v1287 = vunpack.c.l.b16 %v734
        %v1288 = vunpack.c.h.b16 %v734
        %v1289 = vunpack.c.l.b16 %v735
        %v1290 = vunpack.c.h.b16 %v735
        %v1291 = vunpack.c.l.b16 %v736
        %v1292 = vunpack.c.h.b16 %v736
        %v1293 = vunpack.c.l.b16 %v737
        %v1294 = vunpack.c.h.b16 %v737
        %v1295 = vunpack.c.l.b16 %v738
        %v1296 = vunpack.c.h.b16 %v738
        %v1297 = vunpack.c.l.b16 %v739
        %v1298 = vunpack.c.h.b16 %v739
        %v1299 = vunpack.c.l.b16 %v740
        %v1300 = vunpack.c.h.b16 %v740
        %v1301 = vunpack.c.l.b16 %v741
        %v1302 = vunpack.c.h.b16 %v741
        %v1303 = vunpack.c.l.b16 %v742
        %v1304 = vunpack.c.h.b16 %v742
        %v1305 = vunpack.c.l.b16 %v743
        %v1306 = vunpack.c.h.b16 %v743
        %v1307 = vunpack.c.l.b16 %v744
        %v1308 = vunpack.c.h.b16 %v744
        %v1309 = vunpack.c.l.b16 %v745
        %v1310 = vunpack.c.h.b16 %v745
        %v1311 = vunpack.c.l.b16 %v746
        %v1312 = vunpack.c.h.b16 %v746
        %v1313 = vunpack.c.l.b16 %v747
        %v1314 = vunpack.c.h.b16 %v747
        %v1315 = vunpack.c.l.b16 %v748
        %v1316 = vunpack.c.h.b16 %v748
        %v1317 = vunpack.c.l.b16 %v749
        %v1318 = vunpack.c.h.b16 %v749
        %v1319 = vunpack.c.l.b16 %v750
        %v1320 = vunpack.c.h.b16 %v750
        %v1321 = vunpack.c.l.b16 %v751
        %v1322 = vunpack.c.h.b16 %v751
        %v1323 = vunpack.c.l.b16 %v752
        %v1324 = vunpack.c.h.b16 %v752
        %v1325 = vunpack.c.l.b16 %v753
        %v1326 = vunpack.c.h.b16 %v753
        %v1327 = vunpack.c.l.b16 %v754
        %v1328 = vunpack.c.h.b16 %v754
        %v1329 = vunpack.c.l.b16 %v755
        %v1330 = vunpack.c.h.b16 %v755
        %v1331 = vunpack.c.l.b16 %v756
        %v1332 = vunpack.c.h.b16 %v756
        %v1333 = vunpack.c.l.b16 %v757
        %v1334 = vunpack.c.h.b16 %v757
        %v1335 = vunpack.c.l.b16 %v758
        %v1336 = vunpack.c.h.b16 %v758
        %v1337 = vunpack.c.l.b16 %v759
        %v1338 = vunpack.c.h.b16 %v759
        %v1339 = vunpack.c.l.b16 %v760
        %v1340 = vunpack.c.h.b16 %v760
        %v1341 = vunpack.c.l.b16 %v761
        %v1342 = vunpack.c.h.b16 %v761
        %v1343 = vunpack.c.l.b16 %v762
        %v1344 = vunpack.c.h.b16 %v762
        %v1345 = vunpack.c.l.b16 %v763
        %v1346 = vunpack.c.h.b16 %v763
        %v1347 = vunpack.c.l.b16 %v764
        %v1348 = vunpack.c.h.b16 %v764
        %v1349 = vunpack.c.l.b16 %v765
        %v1350 = vunpack.c.h.b16 %v765
        %v1351 = vunpack.c.l.b16 %v766
        %v1352 = vunpack.c.h.b16 %v766
        %v1353 = vunpack.c.l.b16 %v767
        %v1354 = vunpack.c.h.b16 %v767
        %v1355 = vunpack.c.l.b16 %v768
        %v1356 = vunpack.c.h.b16 %v768
        %v1357 = vunpack.c.l.b16 %v769
        %v1358 = vunpack.c.h.b16 %v769
        %v1359 = vunpack.c.l.b16 %v770
        %v1360 = vunpack.c.h.b16 %v770
        %v1361 = vunpack.c.l.b16 %v771
        %v1362 = vunpack.c.h.b16 %v771
        %v1363 = vunpack.c.l.b16 %v772
        %v1364 = vunpack.c.h.b16 %v772
        %v1365 = vunpack.c.l.b16 %v773
        %v1366 = vunpack.c.h.b16 %v773
        %v1367 = vunpack.c.l.b16 %v774
        %v1368 = vunpack.c.h.b16 %v774
        %v1369 = vunpack.c.l.b16 %v775
        %v1370 = vunpack.c.h.b16 %v775
        %v1371 = vunpack.c.l.b16 %v776
        %v1372 = vunpack.c.h.b16 %v776
        %v1373 = vunpack.c.l.b16 %v777
        %v1374 = vunpack.c.h.b16 %v777
        %v1375 = vunpack.c.l.b16 %v778
        %v1376 = vunpack.c.h.b16 %v778
        %v1377 = vunpack.c.l.b16 %v779
        %v1378 = vunpack.c.h.b16 %v779
        %v1379 = vunpack.c.l.b16 %v780
        %v1380 = vunpack.c.h.b16 %v780
        %v1381 = vunpack.c.l.b16 %v781
        %v1382 = vunpack.c.h.b16 %v781
        %v1383 = vunpack.c.l.b16 %v782
        %v1384 = vunpack.c.h.b16 %v782
        %v1385 = vunpack.c.l.b16 %v783
        %v1386 = vunpack.c.h.b16 %v783
        %v1387 = vunpack.c.l.b16 %v784
        %v1388 = vunpack.c.h.b16 %v784
        %v1389 = vunpack.c.l.b16 %v785
        %v1390 = vunpack.c.h.b16 %v785
        %v1391 = vunpack.c.l.b16 %v786
        %v1392 = vunpack.c.h.b16 %v786
        %v1393 = vunpack.c.l.b16 %v787
        %v1394 = vunpack.c.h.b16 %v787
        %v1395 = vunpack.c.l.b16 %v788
        %v1396 = vunpack.c.h.b16 %v788
        %v1397 = vunpack.c.l.b16 %v789
        %v1398 = vunpack.c.h.b16 %v789
        %v1399 = vunpack.c.l.b16 %v790
        %v1400 = vunpack.c.h.b16 %v790
        %v1401 = vunpack.c.l.b16 %v791
        %v1402 = vunpack.c.h.b16 %v791
        %v1403 = vunpack.c.l.b16 %v792
        %v1404 = vunpack.c.h.b16 %v792
        %v1405 = vpack.c.b16 %v1021, %v1005
        %v1406 = vpack.c.b16 %v1022, %v1006
        %v1407 = vpack.c.b16 %v1023, %v1007
        %v1408 = vpack.c.b16 %v1024, %v1008
        %v1409 = vpack.c.b16 %v1025, %v1009
        %v1410 = vpack.c.b16 %v1026, %v1010
        %v1411 = vpack.c.b16 %v1027, %v1011
        %v1412 = vpack.c.b16 %v1028, %v1012
        %v1413 = vpack.c.b16 %v1029, %v1013
        %v1414 = vpack.c.b16 %v1030, %v1014
        %v1415 = vpack.c.b16 %v1031, %v1015
        %v1416 = vpack.c.b16 %v1032, %v1016
        %v1417 = vpack.c.b16 %v1033, %v1017
        %v1418 = vpack.c.b16 %v1034, %v1018
        %v1419 = vpack.c.b16 %v1035, %v1019
        %v1420 = vpack.c.b16 %v1036, %v1020
        %v1421 = vpack.c.b16 %v1053, %v1037
        %v1422 = vpack.c.b16 %v1054, %v1038
        %v1423 = vpack.c.b16 %v1055, %v1039
        %v1424 = vpack.c.b16 %v1056, %v1040
        %v1425 = vpack.c.b16 %v1057, %v1041
        %v1426 = vpack.c.b16 %v1058, %v1042
        %v1427 = vpack.c.b16 %v1059, %v1043
        %v1428 = vpack.c.b16 %v1060, %v1044
        %v1429 = vpack.c.b16 %v1061, %v1045
        %v1430 = vpack.c.b16 %v1062, %v1046
        %v1431 = vpack.c.b16 %v1063, %v1047
        %v1432 = vpack.c.b16 %v1064, %v1048
        %v1433 = vpack.c.b16 %v1065, %v1049
        %v1434 = vpack.c.b16 %v1066, %v1050
        %v1435 = vpack.c.b16 %v1067, %v1051
        %v1436 = vpack.c.b16 %v1068, %v1052
        %v1437 = vpack.c.b16 %v1085, %v1069
        %v1438 = vpack.c.b16 %v1086, %v1070
        %v1439 = vpack.c.b16 %v1087, %v1071
        %v1440 = vpack.c.b16 %v1088, %v1072
        %v1441 = vpack.c.b16 %v1089, %v1073
        %v1442 = vpack.c.b16 %v1090, %v1074
        %v1443 = vpack.c.b16 %v1091, %v1075
        %v1444 = vpack.c.b16 %v1092, %v1076
        %v1445 = vpack.c.b16 %v1093, %v1077
        %v1446 = vpack.c.b16 %v1094, %v1078
        %v1447 = vpack.c.b16 %v1095, %v1079
        %v1448 = vpack.c.b16 %v1096, %v1080
        %v1449 = vpack.c.b16 %v1097, %v1081
        %v1450 = vpack.c.b16 %v1098, %v1082
        %v1451 = vpack.c.b16 %v1099, %v1083
        %v1452 = vpack.c.b16 %v1100, %v1084
        %v1453 = vpack.c.b16 %v1117, %v1101
        %v1454 = vpack.c.b16 %v1118, %v1102
        %v1455 = vpack.c.b16 %v1119, %v1103
        %v1456 = vpack.c.b16 %v1120, %v1104
        %v1457 = vpack.c.b16 %v1121, %v1105
        %v1458 = vpack.c.b16 %v1122, %v1106
        %v1459 = vpack.c.b16 %v1123, %v1107
        %v1460 = vpack.c.b16 %v1124, %v1108
        %v1461 = vpack.c.b16 %v1125, %v1109
        %v1462 = vpack.c.b16 %v1126, %v1110
        %v1463 = vpack.c.b16 %v1127, %v1111
        %v1464 = vpack.c.b16 %v1128, %v1112
        %v1465 = vpack.c.b16 %v1129, %v1113
        %v1466 = vpack.c.b16 %v1130, %v1114
        %v1467 = vpack.c.b16 %v1131, %v1115
        %v1468 = vpack.c.b16 %v1132, %v1116
        %v1469 = vpack.c.b16 %v1149, %v1133
        %v1470 = vpack.c.b16 %v1150, %v1134
        %v1471 = vpack.c.b16 %v1151, %v1135
        %v1472 = vpack.c.b16 %v1152, %v1136
        %v1473 = vpack.c.b16 %v1153, %v1137
        %v1474 = vpack.c.b16 %v1154, %v1138
        %v1475 = vpack.c.b16 %v1155, %v1139
        %v1476 = vpack.c.b16 %v1156, %v1140
        %v1477 = vpack.c.b16 %v1157, %v1141
        %v1478 = vpack.c.b16 %v1158, %v1142
        %v1479 = vpack.c.b16 %v1159, %v1143
        %v1480 = vpack.c.b16 %v1160, %v1144
        %v1481 = vpack.c.b16 %v1161, %v1145
        %v1482 = vpack.c.b16 %v1162, %v1146
        %v1483 = vpack.c.b16 %v1163, %v1147
        %v1484 = vpack.c.b16 %v1164, %v1148
        %v1485 = vpack.c.b16 %v1181, %v1165
        %v1486 = vpack.c.b16 %v1182, %v1166
        %v1487 = vpack.c.b16 %v1183, %v1167
        %v1488 = vpack.c.b16 %v1184, %v1168
        %v1489 = vpack.c.b16 %v1185, %v1169
        %v1490 = vpack.c.b16 %v1186, %v1170
        %v1491 = vpack.c.b16 %v1187, %v1171
        %v1492 = vpack.c.b16 %v1188, %v1172
        %v1493 = vpack.c.b16 %v1189, %v1173
        %v1494 = vpack.c.b16 %v1190, %v1174
        %v1495 = vpack.c.b16 %v1191, %v1175
        %v1496 = vpack.c.b16 %v1192, %v1176
        %v1497 = vpack.c.b16 %v1193, %v1177
        %v1498 = vpack.c.b16 %v1194, %v1178
        %v1499 = vpack.c.b16 %v1195, %v1179
        %v1500 = vpack.c.b16 %v1196, %v1180
        %v1501 = vpack.c.b16 %v1213, %v1197
        %v1502 = vpack.c.b16 %v1214, %v1198
        %v1503 = vpack.c.b16 %v1215, %v1199
        %v1504 = vpack.c.b16 %v1216, %v1200
        %v1505 = vpack.c.b16 %v1217, %v1201
        %v1506 = vpack.c.b16 %v1218, %v1202
        %v1507 = vpack.c.b16 %v1219, %v1203
        %v1508 = vpack.c.b16 %v1220, %v1204
        %v1509 = vpack.c.b16 %v1221, %v1205
        %v1510 = vpack.c.b16 %v1222, %v1206
        %v1511 = vpack.c.b16 %v1223, %v1207
        %v1512 = vpack.c.b16 %v1224, %v1208
        %v1513 = vpack.c.b16 %v1225, %v1209
        %v1514 = vpack.c.b16 %v1226, %v1210
        %v1515 = vpack.c.b16 %v1227, %v1211
        %v1516 = vpack.c.b16 %v1228, %v1212
        %v1517 = vpack.c.b16 %v1245, %v1229
        %v1518 = vpack.c.b16 %v1246, %v1230
        %v1519 = vpack.c.b16 %v1247, %v1231
        %v1520 = vpack.c.b16 %v1248, %v1232
        %v1521 = vpack.c.b16 %v1249, %v1233
        %v1522 = vpack.c.b16 %v1250, %v1234
        %v1523 = vpack.c.b16 %v1251, %v1235
        %v1524 = vpack.c.b16 %v1252, %v1236
        %v1525 = vpack.c.b16 %v1253, %v1237
        %v1526 = vpack.c.b16 %v1254, %v1238
        %v1527 = vpack.c.b16 %v1255, %v1239
        %v1528 = vpack.c.b16 %v1256, %v1240
        %v1529 = vpack.c.b16 %v1257, %v1241
        %v1530 = vpack.c.b16 %v1258, %v1242
        %v1531 = vpack.c.b16 %v1259, %v1243
        %v1532 = vpack.c.b16 %v1260, %v1244
        %v1533 = vpack.c.b16 %v1277, %v1261
        %v1534 = vpack.c.b16 %v1278, %v1262
        %v1535 = vpack.c.b16 %v1279, %v1263
        %v1536 = vpack.c.b16 %v1280, %v1264
        %v1537 = vpack.c.b16 %v1281, %v1265
        %v1538 = vpack.c.b16 %v1282, %v1266
        %v1539 = vpack.c.b16 %v1283, %v1267
        %v1540 = vpack.c.b16 %v1284, %v1268
        %v1541 = vpack.c.b16 %v1285, %v1269
        %v1542 = vpack.c.b16 %v1286, %v1270
        %v1543 = vpack.c.b16 %v1287, %v1271
        %v1544 = vpack.c.b16 %v1288, %v1272
        %v1545 = vpack.c.b16 %v1289, %v1273
        %v1546 = vpack.c.b16 %v1290, %v1274
        %v1547 = vpack.c.b16 %v1291, %v1275
        %v1548 = vpack.c.b16 %v1292, %v1276
        %v1549 = vpack.c.b16 %v1309, %v1293
        %v1550 = vpack.c.b16 %v1310, %v1294
        %v1551 = vpack.c.b16 %v1311, %v1295
        %v1552 = vpack.c.b16 %v1312, %v1296
        %v1553 = vpack.c.b16 %v1313, %v1297
        %v1554 = vpack.c.b16 %v1314, %v1298
        %v1555 = vpack.c.b16 %v1315, %v1299
        %v1556 = vpack.c.b16 %v1316, %v1300
        %v1557 = vpack.c.b16 %v1317, %v1301
        %v1558 = vpack.c.b16 %v1318, %v1302
        %v1559 = vpack.c.b16 %v1319, %v1303
        %v1560 = vpack.c.b16 %v1320, %v1304
        %v1561 = vpack.c.b16 %v1321, %v1305
        %v1562 = vpack.c.b16 %v1322, %v1306
        %v1563 = vpack.c.b16 %v1323, %v1307
        %v1564 = vpack.c.b16 %v1324, %v1308
        %v1565 = vpack.c.b16 %v1341, %v1325
        %v1566 = vpack.c.b16 %v1342, %v1326
        %v1567 = vpack.c.b16 %v1343, %v1327
        %v1568 = vpack.c.b16 %v1344, %v1328
        %v1569 = vpack.c.b16 %v1345, %v1329
        %v1570 = vpack.c.b16 %v1346, %v1330
        %v1571 = vpack.c.b16 %v1347, %v1331
        %v1572 = vpack.c.b16 %v1348, %v1332
        %v1573 = vpack.c.b16 %v1349, %v1333
        %v1574 = vpack.c.b16 %v1350, %v1334
        %v1575 = vpack.c.b16 %v1351, %v1335
        %v1576 = vpack.c.b16 %v1352, %v1336
        %v1577 = vpack.c.b16 %v1353, %v1337
        %v1578 = vpack.c.b16 %v1354, %v1338
        %v1579 = vpack.c.b16 %v1355, %v1339
        %v1580 = vpack.c.b16 %v1356, %v1340
        %v1581 = vpack.c.b16 %v1373, %v1357
        %v1582 = vpack.c.b16 %v1374, %v1358
        %v1583 = vpack.c.b16 %v1375, %v1359
        %v1584 = vpack.c.b16 %v1376, %v1360
        %v1585 = vpack.c.b16 %v1377, %v1361
        %v1586 = vpack.c.b16 %v1378, %v1362
        %v1587 = vpack.c.b16 %v1379, %v1363
        %v1588 = vpack.c.b16 %v1380, %v1364
        %v1589 = vpack.c.b16 %v1381, %v1365
        %v1590 = vpack.c.b16 %v1382, %v1366
        %v1591 = vpack.c.b16 %v1383, %v1367
        %v1592 = vpack.c.b16 %v1384, %v1368
        %v1593 = vpack.c.b16 %v1385, %v1369
        %v1594 = vpack.c.b16 %v1386, %v1370
        %v1595 = vpack.c.b16 %v1387, %v1371
        %v1596 = vpack.c.b16 %v1388, %v1372
        %v1597 = vpack.c.b16 %v1389, %v1389
        %v1598 = vpack.c.b16 %v1390, %v1390
        %v1599 = vpack.c.b16 %v1391, %v1391
        %v1600 = vpack.c.b16 %v1392, %v1392
        %v1601 = vpack.c.b16 %v1393, %v1393
        %v1602 = vpack.c.b16 %v1394, %v1394
        %v1603 = vpack.c.b16 %v1395, %v1395
        %v1604 = vpack.c.b16 %v1396, %v1396
        %v1605 = vpack.c.b16 %v1397, %v1397
        %v1606 = vpack.c.b16 %v1398, %v1398
        %v1607 = vpack.c.b16 %v1399, %v1399
        %v1608 = vpack.c.b16 %v1400, %v1400
        %v1609 = vpack.c.b16 %v1401, %v1401
        %v1610 = vpack.c.b16 %v1402, %v1402
        %v1611 = vpack.c.b16 %v1403, %v1403
        %v1612 = vpack.c.b16 %v1404, %v1404
        %vm1805 = vcmask 556032
        %v1807 = vsel %vm1805, %v803, 0
        %vm1809 = vcmask 1041408
        %v1811 = vsel %vm1809, %v1597, 0
        %v1814 = vsel %vm1809, %v1598, 0
        %v1817 = vsel %vm1809, %v1599, 0
        %v1820 = vsel %vm1809, %v1600, 0
        %v1823 = vsel %vm1809, %v1601, 0
        %v1826 = vsel %vm1809, %v1602, 0
        %v1829 = vsel %vm1809, %v1603, 0
        %v1832 = vsel %vm1809, %v1604, 0
        %v1835 = vsel %vm1809, %v1605, 0
        %v1838 = vsel %vm1809, %v1606, 0
        %v1841 = vsel %vm1809, %v1607, 0
        %v1844 = vsel %vm1809, %v1608, 0
        %v1847 = vsel %vm1809, %v1609, 0
        %v1850 = vsel %vm1809, %v1610, 0
        %v1853 = vsel %vm1809, %v1611, 0
        %v1856 = vsel %vm1809, %v1612, 0
        %1858 = vmatprep.subr.bf16.mxu0 %v1406
        %1859 = vmatpush1.bf16.msra.mxu0 %v1405
        %1860 = vmatprep.subr.bf16.mxu0 %v1422
        %1861 = vmatpush1.bf16.msra.mxu0 %v1421
        %1862 = vmatprep.subr.bf16.mxu0 %v1438
        %1863 = vmatpush1.bf16.msra.mxu0 %v1437
        %1864 = vmatprep.subr.bf16.mxu0 %v1454
        %1865 = vmatpush1.bf16.msra.mxu0 %v1453
        %1866 = vmatprep.subr.bf16.mxu0 %v1470
        %1867 = vmatpush1.bf16.msra.mxu0 %v1469
        %1868 = vmatprep.subr.bf16.mxu0 %v1486
        %1869 = vmatpush1.bf16.msra.mxu0 %v1485
        %1870 = vmatprep.subr.bf16.mxu0 %v1502
        %1871 = vmatpush1.bf16.msra.mxu0 %v1501
        %1872 = vmatprep.subr.bf16.mxu0 %v1518
        %1873 = vmatpush1.bf16.msra.mxu0 %v1517
        %1874 = vmatprep.subr.bf16.mxu0 %v1534
        %1875 = vmatpush1.bf16.msra.mxu0 %v1533
        %1876 = vmatprep.subr.bf16.mxu0 %v1550
        %1877 = vmatpush1.bf16.msra.mxu0 %v1549
        %1878 = vmatprep.subr.bf16.mxu0 %v1566
        %1879 = vmatpush1.bf16.msra.mxu0 %v1565
        %1880 = vmatprep.subr.bf16.mxu0 %v1582
        %1881 = vmatpush1.bf16.msra.mxu0 %v1581
        %1882 = vmatprep.subr.bf16.mxu0 %v1814
        %1883 = vmatpush1.bf16.msra.mxu0 %v1811
        %1884 = vmatprep.subr.bf16.mxu0 0
        %1885 = vmatpush1.bf16.msra.mxu0 0
        %1886 = vmatprep.subr.bf16.mxu0 0
        %1887 = vmatpush1.bf16.msra.mxu0 0
        %1888 = vmatprep.subr.bf16.mxu0 0
        %1889 = vmatpush1.bf16.msra.mxu0 0
        %1890 = vmatprep.mubr.bf16.mxu0 %v1807
        %1891 = vmatmul.mubr.bf16.gmra.mrb[0].mxu0 %v802
        %v1892 = vpop.f32.mrb[0].mxu0
        %v1893 = vadd.f32 %v797, %v1892
        %v1894 = vpop.f32.mrb[0].mxu0
        %v1895 = vadd.f32 %v797, %v1894
        %v1896 = vpop.f32.mrb[0].mxu0
        %v1897 = vpop.f32.mrb[0].mxu0
        %1898 = vdwg.mxu0
        %1899 = vmatprep.subr.bf16.mxu0 %v1408
        %1900 = vmatpush1.bf16.msra.mxu0 %v1407
        %1901 = vmatprep.subr.bf16.mxu0 %v1424
        %1902 = vmatpush1.bf16.msra.mxu0 %v1423
        %1903 = vmatprep.subr.bf16.mxu0 %v1440
        %1904 = vmatpush1.bf16.msra.mxu0 %v1439
        %1905 = vmatprep.subr.bf16.mxu0 %v1456
        %1906 = vmatpush1.bf16.msra.mxu0 %v1455
        %1907 = vmatprep.subr.bf16.mxu0 %v1472
        %1908 = vmatpush1.bf16.msra.mxu0 %v1471
        %1909 = vmatprep.subr.bf16.mxu0 %v1488
        %1910 = vmatpush1.bf16.msra.mxu0 %v1487
        %1911 = vmatprep.subr.bf16.mxu0 %v1504
        %1912 = vmatpush1.bf16.msra.mxu0 %v1503
        %1913 = vmatprep.subr.bf16.mxu0 %v1520
        %1914 = vmatpush1.bf16.msra.mxu0 %v1519
        %1915 = vmatprep.subr.bf16.mxu0 %v1536
        %1916 = vmatpush1.bf16.msra.mxu0 %v1535
        %1917 = vmatprep.subr.bf16.mxu0 %v1552
        %1918 = vmatpush1.bf16.msra.mxu0 %v1551
        %1919 = vmatprep.subr.bf16.mxu0 %v1568
        %1920 = vmatpush1.bf16.msra.mxu0 %v1567
        %1921 = vmatprep.subr.bf16.mxu0 %v1584
        %1922 = vmatpush1.bf16.msra.mxu0 %v1583
        %1923 = vmatprep.subr.bf16.mxu0 %v1820
        %1924 = vmatpush1.bf16.msra.mxu0 %v1817
        %1925 = vmatprep.subr.bf16.mxu0 0
        %1926 = vmatpush1.bf16.msra.mxu0 0
        %1927 = vmatprep.subr.bf16.mxu0 0
        %1928 = vmatpush1.bf16.msra.mxu0 0
        %1929 = vmatprep.subr.bf16.mxu0 0
        %1930 = vmatpush1.bf16.msra.mxu0 0
        %1931 = vmatprep.mubr.bf16.mxu0 %v1807
        %1932 = vmatmul.mubr.bf16.gmra.mrb[0].mxu0 %v802
        %v1933 = vpop.f32.mrb[0].mxu0
        %v1934 = vadd.f32 %v797, %v1933
        %v1935 = vpop.f32.mrb[0].mxu0
        %v1936 = vadd.f32 %v797, %v1935
        %v1937 = vpop.f32.mrb[0].mxu0
        %v1938 = vpop.f32.mrb[0].mxu0
        %1939 = vdwg.mxu0
        %1940 = vmatprep.subr.bf16.mxu0 %v1410
        %1941 = vmatpush1.bf16.msra.mxu0 %v1409
        %1942 = vmatprep.subr.bf16.mxu0 %v1426
        %1943 = vmatpush1.bf16.msra.mxu0 %v1425
        %1944 = vmatprep.subr.bf16.mxu0 %v1442
        %1945 = vmatpush1.bf16.msra.mxu0 %v1441
        %1946 = vmatprep.subr.bf16.mxu0 %v1458
        %1947 = vmatpush1.bf16.msra.mxu0 %v1457
        %1948 = vmatprep.subr.bf16.mxu0 %v1474
        %1949 = vmatpush1.bf16.msra.mxu0 %v1473
        %1950 = vmatprep.subr.bf16.mxu0 %v1490
        %1951 = vmatpush1.bf16.msra.mxu0 %v1489
        %1952 = vmatprep.subr.bf16.mxu0 %v1506
        %1953 = vmatpush1.bf16.msra.mxu0 %v1505
        %1954 = vmatprep.subr.bf16.mxu0 %v1522
        %1955 = vmatpush1.bf16.msra.mxu0 %v1521
        %1956 = vmatprep.subr.bf16.mxu0 %v1538
        %1957 = vmatpush1.bf16.msra.mxu0 %v1537
        %1958 = vmatprep.subr.bf16.mxu0 %v1554
        %1959 = vmatpush1.bf16.msra.mxu0 %v1553
        %1960 = vmatprep.subr.bf16.mxu0 %v1570
        %1961 = vmatpush1.bf16.msra.mxu0 %v1569
        %1962 = vmatprep.subr.bf16.mxu0 %v1586
        %1963 = vmatpush1.bf16.msra.mxu0 %v1585
        %1964 = vmatprep.subr.bf16.mxu0 %v1826
        %1965 = vmatpush1.bf16.msra.mxu0 %v1823
        %1966 = vmatprep.subr.bf16.mxu0 0
        %1967 = vmatpush1.bf16.msra.mxu0 0
        %1968 = vmatprep.subr.bf16.mxu0 0
        %1969 = vmatpush1.bf16.msra.mxu0 0
        %1970 = vmatprep.subr.bf16.mxu0 0
        %1971 = vmatpush1.bf16.msra.mxu0 0
        %1972 = vmatprep.mubr.bf16.mxu0 %v1807
        %1973 = vmatmul.mubr.bf16.gmra.mrb[0].mxu0 %v802
        %v1974 = vpop.f32.mrb[0].mxu0
        %v1975 = vadd.f32 %v797, %v1974
        %v1976 = vpop.f32.mrb[0].mxu0
        %v1977 = vadd.f32 %v797, %v1976
        %v1978 = vpop.f32.mrb[0].mxu0
        %v1979 = vpop.f32.mrb[0].mxu0
        %1980 = vdwg.mxu0
        %1981 = vmatprep.subr.bf16.mxu0 %v1412
        %1982 = vmatpush1.bf16.msra.mxu0 %v1411
        %1983 = vmatprep.subr.bf16.mxu0 %v1428
        %1984 = vmatpush1.bf16.msra.mxu0 %v1427
        %1985 = vmatprep.subr.bf16.mxu0 %v1444
        %1986 = vmatpush1.bf16.msra.mxu0 %v1443
        %1987 = vmatprep.subr.bf16.mxu0 %v1460
        %1988 = vmatpush1.bf16.msra.mxu0 %v1459
        %1989 = vmatprep.subr.bf16.mxu0 %v1476
        %1990 = vmatpush1.bf16.msra.mxu0 %v1475
        %1991 = vmatprep.subr.bf16.mxu0 %v1492
        %1992 = vmatpush1.bf16.msra.mxu0 %v1491
        %1993 = vmatprep.subr.bf16.mxu0 %v1508
        %1994 = vmatpush1.bf16.msra.mxu0 %v1507
        %1995 = vmatprep.subr.bf16.mxu0 %v1524
        %1996 = vmatpush1.bf16.msra.mxu0 %v1523
        %1997 = vmatprep.subr.bf16.mxu0 %v1540
        %1998 = vmatpush1.bf16.msra.mxu0 %v1539
        %1999 = vmatprep.subr.bf16.mxu0 %v1556
        %2000 = vmatpush1.bf16.msra.mxu0 %v1555
        %2001 = vmatprep.subr.bf16.mxu0 %v1572
        %2002 = vmatpush1.bf16.msra.mxu0 %v1571
        %2003 = vmatprep.subr.bf16.mxu0 %v1588
        %2004 = vmatpush1.bf16.msra.mxu0 %v1587
        %2005 = vmatprep.subr.bf16.mxu0 %v1832
        %2006 = vmatpush1.bf16.msra.mxu0 %v1829
        %2007 = vmatprep.subr.bf16.mxu0 0
        %2008 = vmatpush1.bf16.msra.mxu0 0
        %2009 = vmatprep.subr.bf16.mxu0 0
        %2010 = vmatpush1.bf16.msra.mxu0 0
        %2011 = vmatprep.subr.bf16.mxu0 0
        %2012 = vmatpush1.bf16.msra.mxu0 0
        %2013 = vmatprep.mubr.bf16.mxu0 %v1807
        %2014 = vmatmul.mubr.bf16.gmra.mrb[0].mxu0 %v802
        %v2015 = vpop.f32.mrb[0].mxu0
        %v2016 = vadd.f32 %v797, %v2015
        %v2017 = vpop.f32.mrb[0].mxu0
        %v2018 = vadd.f32 %v797, %v2017
        %v2019 = vpop.f32.mrb[0].mxu0
        %v2020 = vpop.f32.mrb[0].mxu0
        %2021 = vdwg.mxu0
        %2022 = vmatprep.subr.bf16.mxu0 %v1414
        %2023 = vmatpush1.bf16.msra.mxu0 %v1413
        %2024 = vmatprep.subr.bf16.mxu0 %v1430
        %2025 = vmatpush1.bf16.msra.mxu0 %v1429
        %2026 = vmatprep.subr.bf16.mxu0 %v1446
        %2027 = vmatpush1.bf16.msra.mxu0 %v1445
        %2028 = vmatprep.subr.bf16.mxu0 %v1462
        %2029 = vmatpush1.bf16.msra.mxu0 %v1461
        %2030 = vmatprep.subr.bf16.mxu0 %v1478
        %2031 = vmatpush1.bf16.msra.mxu0 %v1477
        %2032 = vmatprep.subr.bf16.mxu0 %v1494
        %2033 = vmatpush1.bf16.msra.mxu0 %v1493
        %2034 = vmatprep.subr.bf16.mxu0 %v1510
        %2035 = vmatpush1.bf16.msra.mxu0 %v1509
        %2036 = vmatprep.subr.bf16.mxu0 %v1526
        %2037 = vmatpush1.bf16.msra.mxu0 %v1525
        %2038 = vmatprep.subr.bf16.mxu0 %v1542
        %2039 = vmatpush1.bf16.msra.mxu0 %v1541
        %2040 = vmatprep.subr.bf16.mxu0 %v1558
        %2041 = vmatpush1.bf16.msra.mxu0 %v1557
        %2042 = vmatprep.subr.bf16.mxu0 %v1574
        %2043 = vmatpush1.bf16.msra.mxu0 %v1573
        %2044 = vmatprep.subr.bf16.mxu0 %v1590
        %2045 = vmatpush1.bf16.msra.mxu0 %v1589
        %2046 = vmatprep.subr.bf16.mxu0 %v1838
        %2047 = vmatpush1.bf16.msra.mxu0 %v1835
        %2048 = vmatprep.subr.bf16.mxu0 0
        %2049 = vmatpush1.bf16.msra.mxu0 0
        %2050 = vmatprep.subr.bf16.mxu0 0
        %2051 = vmatpush1.bf16.msra.mxu0 0
        %2052 = vmatprep.subr.bf16.mxu0 0
        %2053 = vmatpush1.bf16.msra.mxu0 0
        %2054 = vmatprep.mubr.bf16.mxu0 %v1807
        %2055 = vmatmul.mubr.bf16.gmra.mrb[0].mxu0 %v802
        %v2056 = vpop.f32.mrb[0].mxu0
        %v2057 = vadd.f32 %v797, %v2056
        %v2058 = vpop.f32.mrb[0].mxu0
        %v2059 = vadd.f32 %v797, %v2058
        %v2060 = vpop.f32.mrb[0].mxu0
        %v2061 = vpop.f32.mrb[0].mxu0
        %2062 = vdwg.mxu0
        %2063 = vmatprep.subr.bf16.mxu0 %v1416
        %2064 = vmatpush1.bf16.msra.mxu0 %v1415
        %2065 = vmatprep.subr.bf16.mxu0 %v1432
        %2066 = vmatpush1.bf16.msra.mxu0 %v1431
        %2067 = vmatprep.subr.bf16.mxu0 %v1448
        %2068 = vmatpush1.bf16.msra.mxu0 %v1447
        %2069 = vmatprep.subr.bf16.mxu0 %v1464
        %2070 = vmatpush1.bf16.msra.mxu0 %v1463
        %2071 = vmatprep.subr.bf16.mxu0 %v1480
        %2072 = vmatpush1.bf16.msra.mxu0 %v1479
        %2073 = vmatprep.subr.bf16.mxu0 %v1496
        %2074 = vmatpush1.bf16.msra.mxu0 %v1495
        %2075 = vmatprep.subr.bf16.mxu0 %v1512
        %2076 = vmatpush1.bf16.msra.mxu0 %v1511
        %2077 = vmatprep.subr.bf16.mxu0 %v1528
        %2078 = vmatpush1.bf16.msra.mxu0 %v1527
        %2079 = vmatprep.subr.bf16.mxu0 %v1544
        %2080 = vmatpush1.bf16.msra.mxu0 %v1543
        %2081 = vmatprep.subr.bf16.mxu0 %v1560
        %2082 = vmatpush1.bf16.msra.mxu0 %v1559
        %2083 = vmatprep.subr.bf16.mxu0 %v1576
        %2084 = vmatpush1.bf16.msra.mxu0 %v1575
        %2085 = vmatprep.subr.bf16.mxu0 %v1592
        %2086 = vmatpush1.bf16.msra.mxu0 %v1591
        %2087 = vmatprep.subr.bf16.mxu0 %v1844
        %2088 = vmatpush1.bf16.msra.mxu0 %v1841
        %2089 = vmatprep.subr.bf16.mxu0 0
        %2090 = vmatpush1.bf16.msra.mxu0 0
        %2091 = vmatprep.subr.bf16.mxu0 0
        %2092 = vmatpush1.bf16.msra.mxu0 0
        %2093 = vmatprep.subr.bf16.mxu0 0
        %2094 = vmatpush1.bf16.msra.mxu0 0
        %2095 = vmatprep.mubr.bf16.mxu0 %v1807
        %2096 = vmatmul.mubr.bf16.gmra.mrb[0].mxu0 %v802
        %v2097 = vpop.f32.mrb[0].mxu0
        %v2098 = vadd.f32 %v797, %v2097
        %v2099 = vpop.f32.mrb[0].mxu0
        %v2100 = vadd.f32 %v797, %v2099
        %v2101 = vpop.f32.mrb[0].mxu0
        %v2102 = vpop.f32.mrb[0].mxu0
        %2103 = vdwg.mxu0
        %2104 = vmatprep.subr.bf16.mxu0 %v1418
        %2105 = vmatpush1.bf16.msra.mxu0 %v1417
        %2106 = vmatprep.subr.bf16.mxu0 %v1434
        %2107 = vmatpush1.bf16.msra.mxu0 %v1433
        %2108 = vmatprep.subr.bf16.mxu0 %v1450
        %2109 = vmatpush1.bf16.msra.mxu0 %v1449
        %2110 = vmatprep.subr.bf16.mxu0 %v1466
        %2111 = vmatpush1.bf16.msra.mxu0 %v1465
        %2112 = vmatprep.subr.bf16.mxu0 %v1482
        %2113 = vmatpush1.bf16.msra.mxu0 %v1481
        %2114 = vmatprep.subr.bf16.mxu0 %v1498
        %2115 = vmatpush1.bf16.msra.mxu0 %v1497
        %2116 = vmatprep.subr.bf16.mxu0 %v1514
        %2117 = vmatpush1.bf16.msra.mxu0 %v1513
        %2118 = vmatprep.subr.bf16.mxu0 %v1530
        %2119 = vmatpush1.bf16.msra.mxu0 %v1529
        %2120 = vmatprep.subr.bf16.mxu0 %v1546
        %2121 = vmatpush1.bf16.msra.mxu0 %v1545
        %2122 = vmatprep.subr.bf16.mxu0 %v1562
        %2123 = vmatpush1.bf16.msra.mxu0 %v1561
        %2124 = vmatprep.subr.bf16.mxu0 %v1578
        %2125 = vmatpush1.bf16.msra.mxu0 %v1577
        %2126 = vmatprep.subr.bf16.mxu0 %v1594
        %2127 = vmatpush1.bf16.msra.mxu0 %v1593
        %2128 = vmatprep.subr.bf16.mxu0 %v1850
        %2129 = vmatpush1.bf16.msra.mxu0 %v1847
        %2130 = vmatprep.subr.bf16.mxu0 0
        %2131 = vmatpush1.bf16.msra.mxu0 0
        %2132 = vmatprep.subr.bf16.mxu0 0
        %2133 = vmatpush1.bf16.msra.mxu0 0
        %2134 = vmatprep.subr.bf16.mxu0 0
        %2135 = vmatpush1.bf16.msra.mxu0 0
        %2136 = vmatprep.mubr.bf16.mxu0 %v1807
        %2137 = vmatmul.mubr.bf16.gmra.mrb[0].mxu0 %v802
        %v2138 = vpop.f32.mrb[0].mxu0
        %v2139 = vadd.f32 %v797, %v2138
        %v2140 = vpop.f32.mrb[0].mxu0
        %v2141 = vadd.f32 %v797, %v2140
        %v2142 = vpop.f32.mrb[0].mxu0
        %v2143 = vpop.f32.mrb[0].mxu0
        %2144 = vdwg.mxu0
        %2145 = vmatprep.subr.bf16.mxu0 %v1420
        %2146 = vmatpush1.bf16.msra.mxu0 %v1419
        %2147 = vmatprep.subr.bf16.mxu0 %v1436
        %2148 = vmatpush1.bf16.msra.mxu0 %v1435
        %2149 = vmatprep.subr.bf16.mxu0 %v1452
        %2150 = vmatpush1.bf16.msra.mxu0 %v1451
        %2151 = vmatprep.subr.bf16.mxu0 %v1468
        %2152 = vmatpush1.bf16.msra.mxu0 %v1467
        %2153 = vmatprep.subr.bf16.mxu0 %v1484
        %2154 = vmatpush1.bf16.msra.mxu0 %v1483
        %2155 = vmatprep.subr.bf16.mxu0 %v1500
        %2156 = vmatpush1.bf16.msra.mxu0 %v1499
        %2157 = vmatprep.subr.bf16.mxu0 %v1516
        %2158 = vmatpush1.bf16.msra.mxu0 %v1515
        %2159 = vmatprep.subr.bf16.mxu0 %v1532
        %2160 = vmatpush1.bf16.msra.mxu0 %v1531
        %2161 = vmatprep.subr.bf16.mxu0 %v1548
        %2162 = vmatpush1.bf16.msra.mxu0 %v1547
        %2163 = vmatprep.subr.bf16.mxu0 %v1564
        %2164 = vmatpush1.bf16.msra.mxu0 %v1563
        %2165 = vmatprep.subr.bf16.mxu0 %v1580
        %2166 = vmatpush1.bf16.msra.mxu0 %v1579
        %2167 = vmatprep.subr.bf16.mxu0 %v1596
        %2168 = vmatpush1.bf16.msra.mxu0 %v1595
        %2169 = vmatprep.subr.bf16.mxu0 %v1856
        %2170 = vmatpush1.bf16.msra.mxu0 %v1853
        %2171 = vmatprep.subr.bf16.mxu0 0
        %2172 = vmatpush1.bf16.msra.mxu0 0
        %2173 = vmatprep.subr.bf16.mxu0 0
        %2174 = vmatpush1.bf16.msra.mxu0 0
        %2175 = vmatprep.subr.bf16.mxu0 0
        %2176 = vmatpush1.bf16.msra.mxu0 0
        %2177 = vmatprep.mubr.bf16.mxu0 %v1807
        %2178 = vmatmul.mubr.bf16.gmra.mrb[0].mxu0 %v802
        %v2179 = vpop.f32.mrb[0].mxu0
        %v2180 = vadd.f32 %v797, %v2179
        %v2181 = vpop.f32.mrb[0].mxu0
        %v2182 = vadd.f32 %v797, %v2181
        %v2183 = vpop.f32.mrb[0].mxu0
        %v2184 = vpop.f32.mrb[0].mxu0
        %2185 = vdwg.mxu0
        %v2186 = vmax.f32 %v1893, 0.0
        %v2187 = vmax.f32 %v1895, 0.0
        %v2188 = vmax.f32 %v1934, 0.0
        %v2189 = vmax.f32 %v1936, 0.0
        %v2190 = vmax.f32 %v1975, 0.0
        %v2191 = vmax.f32 %v1977, 0.0
        %v2192 = vmax.f32 %v2016, 0.0
        %v2193 = vmax.f32 %v2018, 0.0
        %v2194 = vmax.f32 %v2057, 0.0
        %v2195 = vmax.f32 %v2059, 0.0
        %v2196 = vmax.f32 %v2098, 0.0
        %v2197 = vmax.f32 %v2100, 0.0
        %v2198 = vmax.f32 %v2139, 0.0
        %v2199 = vmax.f32 %v2141, 0.0
        %v2200 = vmax.f32 %v2180, 0.0
        %v2201 = vmax.f32 %v2182, 0.0
        %2202 = vst [vmem:[%s589] sm:$0xff] %v2186
        %2203 = vst [vmem:[%s589 + $0x8] sm:$0xff] %v2187
        %2204 = vst [vmem:[%s589 + $0x10] sm:$0xff] %v2188
        %2205 = vst [vmem:[%s589 + $0x18] sm:$0xff] %v2189
        %2206 = vst [vmem:[%s589 + $0x20] sm:$0xff] %v2190
        %2207 = vst [vmem:[%s589 + $0x28] sm:$0xff] %v2191
        %2208 = vst [vmem:[%s589 + $0x30] sm:$0xff] %v2192
        %2209 = vst [vmem:[%s589 + $0x38] sm:$0xff] %v2193
        %2210 = vst [vmem:[%s589 + $0x40] sm:$0xff] %v2194
        %2211 = vst [vmem:[%s589 + $0x48] sm:$0xff] %v2195
        %2212 = vst [vmem:[%s589 + $0x50] sm:$0xff] %v2196
        %2213 = vst [vmem:[%s589 + $0x58] sm:$0xff] %v2197
        %2214 = vst [vmem:[%s589 + $0x60] sm:$0xff] %v2198
        %2215 = vst [vmem:[%s589 + $0x68] sm:$0xff] %v2199
        %2216 = vst [vmem:[%s589 + $0x70] sm:$0xff] %v2200
        %2217 = vst [vmem:[%s589 + $0x78] sm:$0xff] %v2201
        %s2218 = smul.u32 16, %s14
        %p2219 = scmp.lt.s32.totalorder %s2218, 31
        %s2220 = scalar_select %p2219, %s2218, 31
        %s2221 = smul.addr %s2220, 8
        %s2222 = scalar_lea.vmem %s3, %s2221
        // Predicated region
        $region56: #{_lambda_.11} parent=50 // pred_check
          %p2223 = pneg %p100
        $region57: #{_lambda_.11} parent=50 // pred_check_branch
          %2225 = sbr.rel (%p2223) target = $region59
        $region58: #{_lambda_.11} parent=50 // pred_region
          %s2226 = smul.u32 16, %s14
        $region59: #{_lambda_.11} parent=50 // pred_fallthru
          _
      $region51: #{_lambda_.11} parent=5 // pred_fallthru
        _
      %p2227 = scmp.le.s32.totalorder 2, %s9
      // Predicated region
      $region60: #{_lambda_.11} parent=5 // pred_check
        %p2228 = pneg %p2227
      $region61: #{_lambda_.11} parent=5 // pred_check_branch
        %2230 = sbr.rel (%p2228) target = $region63
      $region62: #{_lambda_.11} parent=5 // pred_region
        %s2231 = ssub.s32 %s9, 2
        // Predicated region
        $region64: #{_lambda_.11} parent=62 // pred_check
          %p2232 = pneg %p106
        $region65: #{_lambda_.11} parent=62 // pred_check_branch
          %2234 = sbr.rel (%p2232) target = $region67
        $region66: #{_lambda_.11} parent=62 // pred_region
          %s2235 = smul.u32 16, %s15
          %p2236 = scmp.lt.s32.totalorder %s2235, 31
          %s2237 = scalar_select %p2236, %s2235, 31
          %s2238 = smul.addr %s2237, 8
          %s2239 = scalar_lea.vmem %s3, %s2238
        $region67: #{_lambda_.11} parent=62 // pred_fallthru
          _
      $region63: #{_lambda_.11} parent=5 // pred_fallthru
        _
    $region6: #{_lambda_.11} parent=1 // loop_footer
      %s13 = sadd.s32 1, %s9
    $region7: #{_lambda_.11} parent=1 // loop_footer_branch
      %8 = sbr.rel target = $region3
    $region8: #{_lambda_.11} parent=1 // loop_exit
      _

// kernel: _lambda_.12
$region0: #{_lambda_.12}
  #allocation0 [shape = 'u32[]', space=smem, size = 0x4, offset = 0x4, fixed_abs, tag = 'smem constant byte address 0x4 - core index']
  #allocation1 [shape = 'u32[144,128]{1,0:T(1,128)}', space=vmem, size = 0x12000, scoped, tag = 'internal scratch']
  %s0 = inlined_call_operand.vmem [shape: f32[128,18,18], index: 0, kind: input, shape index: {}]
  %s1 = inlined_call_operand.vmem [shape: f32[128,16,16], index: 1, kind: output, shape index: {}]
  %s2 = sld [smem:[#allocation0]]
  $region37: #{_lambda_.12} parent=0
    _
  %s4 = ssub.s32 1, %s2
  %s5 = scalar_select 0, %s4, %s2
  loop: start=0, step=1, limit=4
  $region2: #{_lambda_.12} parent=0 // loop_pre_header
    _
  $region3: #{_lambda_.12} parent=0 // loop_header
    %s7 = sphi 0, %s11
    %p8 = scmp.ge.s32.totalorder %s7, 4
    %s17 = sphi 0, %s19
    %s20 = sphi 0, %s17
    %s21 = sphi 0, %s20
    %s37 = sphi 0, %s21
    %s43 = sphi 0, %s45
    %s46 = sphi 0, %s43
    %s47 = sphi 0, %s46
    %s63 = sphi 0, %s47
  $region4: #{_lambda_.12} parent=0 // loop_header_branch
    %10 = sbr.rel (%p8) target = $region8
  $region5: #{_lambda_.12} parent=0 // loop_body
    %s12 = ssub.s32 %s7, 1
    %s13 = ssub.s32 %s7, 2
    %s14 = sadd.s32 %s7, 1
    %s15 = ssub.s32 %s7, %s14
    %p16 = scmp.eq.s32.totalorder %s15, 0
    %s18 = sadd.s32 %s17, 1
    %s19 = scalar_select %p16, %s17, %s18
    %p22 = pneg %p16
    %p23 = scmp.eq.s32.totalorder %s7, 1
    %p24 = por %p22, %p23
    %p25 = scmp.ne.s32.totalorder %s17, %s20
    %p26 = scmp.eq.s32.totalorder %s7, 0
    %p27 = por %p25, %p26
    %p28 = scmp.ne.s32.totalorder %s17, %s20
    %p29 = scmp.eq.s32.totalorder %s12, 1
    %p30 = por %p28, %p29
    %p31 = scmp.ne.s32.totalorder %s20, %s21
    %p32 = scmp.eq.s32.totalorder %s12, 0
    %p33 = por %p31, %p32
    %p34 = scmp.ne.s32.totalorder %s20, %s21
    %p35 = scmp.eq.s32.totalorder %s13, 1
    %p36 = por %p34, %p35
    %p38 = scmp.ne.s32.totalorder %s21, %s37
    %p39 = scmp.eq.s32.totalorder %s13, 0
    %p40 = por %p38, %p39
    %s41 = ssub.s32 %s7, %s14
    %p42 = scmp.eq.s32.totalorder %s41, 0
    %s44 = sadd.s32 %s43, 1
    %s45 = scalar_select %p42, %s43, %s44
    %p48 = pneg %p42
    %p49 = scmp.eq.s32.totalorder %s7, 1
    %p50 = por %p48, %p49
    %p51 = scmp.ne.s32.totalorder %s43, %s46
    %p52 = scmp.eq.s32.totalorder %s7, 0
    %p53 = por %p51, %p52
    %p54 = scmp.ne.s32.totalorder %s43, %s46
    %p55 = scmp.eq.s32.totalorder %s12, 1
    %p56 = por %p54, %p55
    %p57 = scmp.ne.s32.totalorder %s46, %s47
    %p58 = scmp.eq.s32.totalorder %s12, 0
    %p59 = por %p57, %p58
    %p60 = scmp.ne.s32.totalorder %s46, %s47
    %p61 = scmp.eq.s32.totalorder %s13, 1
    %p62 = por %p60, %p61
    %p64 = scmp.ne.s32.totalorder %s47, %s63
    %p65 = scmp.eq.s32.totalorder %s13, 0
    %p66 = por %p64, %p65
    %p67 = scmp.le.s32.totalorder 1, %s7
    %p68 = scmp.lt.s32.totalorder %s7, 3
    %p69 = pnand %p67, %p68
    %p70 = pneg %p69
    // Predicated region
    $region9: #{_lambda_.12} parent=5 // pred_check
      _
    $region10: #{_lambda_.12} parent=5 // pred_check_branch
      %72 = sbr.rel (%p69) target = $region12
    $region11: #{_lambda_.12} parent=5 // pred_region
      %s73 = ssub.s32 %s7, 1
    $region12: #{_lambda_.12} parent=5 // pred_fallthru
      _
    %p74 = scmp.lt.s32.totalorder %s7, 2
    // Predicated region
    $region13: #{_lambda_.12} parent=5 // pred_check
      %p75 = pneg %p74
    $region14: #{_lambda_.12} parent=5 // pred_check_branch
      %77 = sbr.rel (%p75) target = $region16
    $region15: #{_lambda_.12} parent=5 // pred_region
      // Predicated region
      $region17: #{_lambda_.12} parent=15 // pred_check
        %p78 = pneg %p27
      $region18: #{_lambda_.12} parent=15 // pred_check_branch
        %80 = sbr.rel (%p78) target = $region20
      $region19: #{_lambda_.12} parent=15 // pred_region
        %s81 = smul.u32 64, %s7
        %p82 = scmp.lt.s32.totalorder %s81, 127
        %s83 = scalar_select %p82, %s81, 127
        %s84 = smul.addr %s83, 3
        %s85 = smul.addr %s84, 8
        %s86 = scalar_lea.vmem %s0, %s85
        %s87 = smul.u32 64, %s7
      $region20: #{_lambda_.12} parent=15 // pred_fallthru
        _
    $region16: #{_lambda_.12} parent=5 // pred_fallthru
      _
    %p88 = scmp.le.s32.totalorder 1, %s7
    %p89 = scmp.lt.s32.totalorder %s7, 3
    %p90 = pnand %p88, %p89
    %p91 = pneg %p90
    // Predicated region
    $region21: #{_lambda_.12} parent=5 // pred_check
      _
    $region22: #{_lambda_.12} parent=5 // pred_check_branch
      %93 = sbr.rel (%p90) target = $region24
    $region23: #{_lambda_.12} parent=5 // pred_region
      %s94 = ssub.s32 %s7, 1
      %s95 = smul.u32 64, %s12
      %p96 = scmp.lt.s32.totalorder %s95, 127
      %s97 = scalar_select %p96, %s95, 127
      %s98 = smul.addr %s97, 3
      %s99 = smul.addr %s98, 8
      %s100 = scalar_lea.vmem %s0, %s99
      %p101 = pneg %p33
      %p102 = pneg %p30
      %p103 = pneg %p59
      %p104 = pneg %p56
      %s105 = smul.u32 64, %s12
      %p106 = scmp.lt.s32.totalorder %s105, 127
      %s107 = scalar_select %p106, %s105, 127
      %s108 = smul.addr %s107, 2
      %s109 = smul.addr %s108, 8
      %s110 = scalar_lea.vmem %s1, %s109
      %s111 = smul.u32 64, %s12
      %p112 = scmp.lt.s32.totalorder %s111, 127
      %s113 = scalar_select %p112, %s111, 127
      %s114 = smul.addr %s113, 3
      %s115 = smul.addr %s114, 8
      %s116 = scalar_lea.vmem %s0, %s115
      %s117 = smul.u32 64, %s12
      %s118 = smul.u32 64, %s12
      %p119 = scmp.lt.s32.totalorder %s118, 127
      %s120 = scalar_select %p119, %s118, 127
      %s121 = smul.addr %s120, 2
      %s122 = smul.addr %s121, 8
      %s123 = scalar_lea.vmem %s1, %s122
      %s124 = smul.u32 64, %s12
      %v125 = vld [vmem:[%s116] sm:$0xff]
      %v126 = vld [vmem:[%s116 + $0x8] sm:$0xff]
      %v127 = vld [vmem:[%s116 + $0x10] sm:$0x3]
      %v128 = vld [vmem:[%s116 + $0x18] sm:$0xff]
      %v129 = vld [vmem:[%s116 + $0x20] sm:$0xff]
      %v130 = vld [vmem:[%s116 + $0x28] sm:$0x3]
      %v131 = vld [vmem:[%s116 + $0x30] sm:$0xff]
      %v132 = vld [vmem:[%s116 + $0x38] sm:$0xff]
      %v133 = vld [vmem:[%s116 + $0x40] sm:$0x3]
      %v134 = vld [vmem:[%s116 + $0x48] sm:$0xff]
      %v135 = vld [vmem:[%s116 + $0x50] sm:$0xff]
      %v136 = vld [vmem:[%s116 + $0x58] sm:$0x3]
      %v137 = vld [vmem:[%s116 + $0x60] sm:$0xff]
      %v138 = vld [vmem:[%s116 + $0x68] sm:$0xff]
      %v139 = vld [vmem:[%s116 + $0x70] sm:$0x3]
      %v140 = vld [vmem:[%s116 + $0x78] sm:$0xff]
      %v141 = vld [vmem:[%s116 + $0x80] sm:$0xff]
      %v142 = vld [vmem:[%s116 + $0x88] sm:$0x3]
      %v143 = vld [vmem:[%s116 + $0x90] sm:$0xff]
      %v144 = vld [vmem:[%s116 + $0x98] sm:$0xff]
      %v145 = vld [vmem:[%s116 + $0xa0] sm:$0x3]
      %v146 = vld [vmem:[%s116 + $0xa8] sm:$0xff]
      %v147 = vld [vmem:[%s116 + $0xb0] sm:$0xff]
      %v148 = vld [vmem:[%s116 + $0xb8] sm:$0x3]
      %v149 = vld [vmem:[%s116 + $0xc0] sm:$0xff]
      %v150 = vld [vmem:[%s116 + $0xc8] sm:$0xff]
      %v151 = vld [vmem:[%s116 + $0xd0] sm:$0x3]
      %v152 = vld [vmem:[%s116 + $0xd8] sm:$0xff]
      %v153 = vld [vmem:[%s116 + $0xe0] sm:$0xff]
      %v154 = vld [vmem:[%s116 + $0xe8] sm:$0x3]
      %v155 = vld [vmem:[%s116 + $0xf0] sm:$0xff]
      %v156 = vld [vmem:[%s116 + $0xf8] sm:$0xff]
      %v157 = vld [vmem:[%s116 + $0x100] sm:$0x3]
      %v158 = vld [vmem:[%s116 + $0x108] sm:$0xff]
      %v159 = vld [vmem:[%s116 + $0x110] sm:$0xff]
      %v160 = vld [vmem:[%s116 + $0x118] sm:$0x3]
      %v161 = vld [vmem:[%s116 + $0x120] sm:$0xff]
      %v162 = vld [vmem:[%s116 + $0x128] sm:$0xff]
      %v163 = vld [vmem:[%s116 + $0x130] sm:$0x3]
      %v164 = vld [vmem:[%s116 + $0x138] sm:$0xff]
      %v165 = vld [vmem:[%s116 + $0x140] sm:$0xff]
      %v166 = vld [vmem:[%s116 + $0x148] sm:$0x3]
      %v167 = vld [vmem:[%s116 + $0x150] sm:$0xff]
      %v168 = vld [vmem:[%s116 + $0x158] sm:$0xff]
      %v169 = vld [vmem:[%s116 + $0x160] sm:$0x3]
      %v170 = vld [vmem:[%s116 + $0x168] sm:$0xff]
      %v171 = vld [vmem:[%s116 + $0x170] sm:$0xff]
      %v172 = vld [vmem:[%s116 + $0x178] sm:$0x3]
      %v173 = vld [vmem:[%s116 + $0x180] sm:$0xff]
      %v174 = vld [vmem:[%s116 + $0x188] sm:$0xff]
      %v175 = vld [vmem:[%s116 + $0x190] sm:$0x3]
      %v176 = vld [vmem:[%s116 + $0x198] sm:$0xff]
      %v177 = vld [vmem:[%s116 + $0x1a0] sm:$0xff]
      %v178 = vld [vmem:[%s116 + $0x1a8] sm:$0x3]
      %v179 = vld [vmem:[%s116 + $0x1b0] sm:$0xff]
      %v180 = vld [vmem:[%s116 + $0x1b8] sm:$0xff]
      %v181 = vld [vmem:[%s116 + $0x1c0] sm:$0x3]
      %v182 = vld [vmem:[%s116 + $0x1c8] sm:$0xff]
      %v183 = vld [vmem:[%s116 + $0x1d0] sm:$0xff]
      %v184 = vld [vmem:[%s116 + $0x1d8] sm:$0x3]
      %v185 = vld [vmem:[%s116 + $0x1e0] sm:$0xff]
      %v186 = vld [vmem:[%s116 + $0x1e8] sm:$0xff]
      %v187 = vld [vmem:[%s116 + $0x1f0] sm:$0x3]
      %v188 = vld [vmem:[%s116 + $0x1f8] sm:$0xff]
      %v189 = vld [vmem:[%s116 + $0x200] sm:$0xff]
      %v190 = vld [vmem:[%s116 + $0x208] sm:$0x3]
      %v191 = vld [vmem:[%s116 + $0x210] sm:$0xff]
      %v192 = vld [vmem:[%s116 + $0x218] sm:$0xff]
      %v193 = vld [vmem:[%s116 + $0x220] sm:$0x3]
      %v194 = vld [vmem:[%s116 + $0x228] sm:$0xff]
      %v195 = vld [vmem:[%s116 + $0x230] sm:$0xff]
      %v196 = vld [vmem:[%s116 + $0x238] sm:$0x3]
      %v197 = vld [vmem:[%s116 + $0x240] sm:$0xff]
      %v198 = vld [vmem:[%s116 + $0x248] sm:$0xff]
      %v199 = vld [vmem:[%s116 + $0x250] sm:$0x3]
      %v200 = vld [vmem:[%s116 + $0x258] sm:$0xff]
      %v201 = vld [vmem:[%s116 + $0x260] sm:$0xff]
      %v202 = vld [vmem:[%s116 + $0x268] sm:$0x3]
      %v203 = vld [vmem:[%s116 + $0x270] sm:$0xff]
      %v204 = vld [vmem:[%s116 + $0x278] sm:$0xff]
      %v205 = vld [vmem:[%s116 + $0x280] sm:$0x3]
      %v206 = vld [vmem:[%s116 + $0x288] sm:$0xff]
      %v207 = vld [vmem:[%s116 + $0x290] sm:$0xff]
      %v208 = vld [vmem:[%s116 + $0x298] sm:$0x3]
      %v209 = vld [vmem:[%s116 + $0x2a0] sm:$0xff]
      %v210 = vld [vmem:[%s116 + $0x2a8] sm:$0xff]
      %v211 = vld [vmem:[%s116 + $0x2b0] sm:$0x3]
      %v212 = vld [vmem:[%s116 + $0x2b8] sm:$0xff]
      %v213 = vld [vmem:[%s116 + $0x2c0] sm:$0xff]
      %v214 = vld [vmem:[%s116 + $0x2c8] sm:$0x3]
      %v215 = vld [vmem:[%s116 + $0x2d0] sm:$0xff]
      %v216 = vld [vmem:[%s116 + $0x2d8] sm:$0xff]
      %v217 = vld [vmem:[%s116 + $0x2e0] sm:$0x3]
      %v218 = vld [vmem:[%s116 + $0x2e8] sm:$0xff]
      %v219 = vld [vmem:[%s116 + $0x2f0] sm:$0xff]
      %v220 = vld [vmem:[%s116 + $0x2f8] sm:$0x3]
      %v221 = vld [vmem:[%s116 + $0x300] sm:$0xff]
      %v222 = vld [vmem:[%s116 + $0x308] sm:$0xff]
      %v223 = vld [vmem:[%s116 + $0x310] sm:$0x3]
      %v224 = vld [vmem:[%s116 + $0x318] sm:$0xff]
      %v225 = vld [vmem:[%s116 + $0x320] sm:$0xff]
      %v226 = vld [vmem:[%s116 + $0x328] sm:$0x3]
      %v227 = vld [vmem:[%s116 + $0x330] sm:$0xff]
      %v228 = vld [vmem:[%s116 + $0x338] sm:$0xff]
      %v229 = vld [vmem:[%s116 + $0x340] sm:$0x3]
      %v230 = vld [vmem:[%s116 + $0x348] sm:$0xff]
      %v231 = vld [vmem:[%s116 + $0x350] sm:$0xff]
      %v232 = vld [vmem:[%s116 + $0x358] sm:$0x3]
      %v233 = vld [vmem:[%s116 + $0x360] sm:$0xff]
      %v234 = vld [vmem:[%s116 + $0x368] sm:$0xff]
      %v235 = vld [vmem:[%s116 + $0x370] sm:$0x3]
      %v236 = vld [vmem:[%s116 + $0x378] sm:$0xff]
      %v237 = vld [vmem:[%s116 + $0x380] sm:$0xff]
      %v238 = vld [vmem:[%s116 + $0x388] sm:$0x3]
      %v239 = vld [vmem:[%s116 + $0x390] sm:$0xff]
      %v240 = vld [vmem:[%s116 + $0x398] sm:$0xff]
      %v241 = vld [vmem:[%s116 + $0x3a0] sm:$0x3]
      %v242 = vld [vmem:[%s116 + $0x3a8] sm:$0xff]
      %v243 = vld [vmem:[%s116 + $0x3b0] sm:$0xff]
      %v244 = vld [vmem:[%s116 + $0x3b8] sm:$0x3]
      %v245 = vld [vmem:[%s116 + $0x3c0] sm:$0xff]
      %v246 = vld [vmem:[%s116 + $0x3c8] sm:$0xff]
      %v247 = vld [vmem:[%s116 + $0x3d0] sm:$0x3]
      %v248 = vld [vmem:[%s116 + $0x3d8] sm:$0xff]
      %v249 = vld [vmem:[%s116 + $0x3e0] sm:$0xff]
      %v250 = vld [vmem:[%s116 + $0x3e8] sm:$0x3]
      %v251 = vld [vmem:[%s116 + $0x3f0] sm:$0xff]
      %v252 = vld [vmem:[%s116 + $0x3f8] sm:$0xff]
      %v253 = vld [vmem:[%s116 + $0x400] sm:$0x3]
      %v254 = vld [vmem:[%s116 + $0x408] sm:$0xff]
      %v255 = vld [vmem:[%s116 + $0x410] sm:$0xff]
      %v256 = vld [vmem:[%s116 + $0x418] sm:$0x3]
      %v257 = vld [vmem:[%s116 + $0x420] sm:$0xff]
      %v258 = vld [vmem:[%s116 + $0x428] sm:$0xff]
      %v259 = vld [vmem:[%s116 + $0x430] sm:$0x3]
      %v260 = vld [vmem:[%s116 + $0x438] sm:$0xff]
      %v261 = vld [vmem:[%s116 + $0x440] sm:$0xff]
      %v262 = vld [vmem:[%s116 + $0x448] sm:$0x3]
      %v263 = vld [vmem:[%s116 + $0x450] sm:$0xff]
      %v264 = vld [vmem:[%s116 + $0x458] sm:$0xff]
      %v265 = vld [vmem:[%s116 + $0x460] sm:$0x3]
      %v266 = vld [vmem:[%s116 + $0x468] sm:$0xff]
      %v267 = vld [vmem:[%s116 + $0x470] sm:$0xff]
      %v268 = vld [vmem:[%s116 + $0x478] sm:$0x3]
      %v269 = vld [vmem:[%s116 + $0x480] sm:$0xff]
      %v270 = vld [vmem:[%s116 + $0x488] sm:$0xff]
      %v271 = vld [vmem:[%s116 + $0x490] sm:$0x3]
      %v272 = vld [vmem:[%s116 + $0x498] sm:$0xff]
      %v273 = vld [vmem:[%s116 + $0x4a0] sm:$0xff]
      %v274 = vld [vmem:[%s116 + $0x4a8] sm:$0x3]
      %v275 = vld [vmem:[%s116 + $0x4b0] sm:$0xff]
      %v276 = vld [vmem:[%s116 + $0x4b8] sm:$0xff]
      %v277 = vld [vmem:[%s116 + $0x4c0] sm:$0x3]
      %v278 = vld [vmem:[%s116 + $0x4c8] sm:$0xff]
      %v279 = vld [vmem:[%s116 + $0x4d0] sm:$0xff]
      %v280 = vld [vmem:[%s116 + $0x4d8] sm:$0x3]
      %v281 = vld [vmem:[%s116 + $0x4e0] sm:$0xff]
      %v282 = vld [vmem:[%s116 + $0x4e8] sm:$0xff]
      %v283 = vld [vmem:[%s116 + $0x4f0] sm:$0x3]
      %v284 = vld [vmem:[%s116 + $0x4f8] sm:$0xff]
      %v285 = vld [vmem:[%s116 + $0x500] sm:$0xff]
      %v286 = vld [vmem:[%s116 + $0x508] sm:$0x3]
      %v287 = vld [vmem:[%s116 + $0x510] sm:$0xff]
      %v288 = vld [vmem:[%s116 + $0x518] sm:$0xff]
      %v289 = vld [vmem:[%s116 + $0x520] sm:$0x3]
      %v290 = vld [vmem:[%s116 + $0x528] sm:$0xff]
      %v291 = vld [vmem:[%s116 + $0x530] sm:$0xff]
      %v292 = vld [vmem:[%s116 + $0x538] sm:$0x3]
      %v293 = vld [vmem:[%s116 + $0x540] sm:$0xff]
      %v294 = vld [vmem:[%s116 + $0x548] sm:$0xff]
      %v295 = vld [vmem:[%s116 + $0x550] sm:$0x3]
      %v296 = vld [vmem:[%s116 + $0x558] sm:$0xff]
      %v297 = vld [vmem:[%s116 + $0x560] sm:$0xff]
      %v298 = vld [vmem:[%s116 + $0x568] sm:$0x3]
      %v299 = vld [vmem:[%s116 + $0x570] sm:$0xff]
      %v300 = vld [vmem:[%s116 + $0x578] sm:$0xff]
      %v301 = vld [vmem:[%s116 + $0x580] sm:$0x3]
      %v302 = vld [vmem:[%s116 + $0x588] sm:$0xff]
      %v303 = vld [vmem:[%s116 + $0x590] sm:$0xff]
      %v304 = vld [vmem:[%s116 + $0x598] sm:$0x3]
      %v305 = vld [vmem:[%s116 + $0x5a0] sm:$0xff]
      %v306 = vld [vmem:[%s116 + $0x5a8] sm:$0xff]
      %v307 = vld [vmem:[%s116 + $0x5b0] sm:$0x3]
      %v308 = vld [vmem:[%s116 + $0x5b8] sm:$0xff]
      %v309 = vld [vmem:[%s116 + $0x5c0] sm:$0xff]
      %v310 = vld [vmem:[%s116 + $0x5c8] sm:$0x3]
      %v311 = vld [vmem:[%s116 + $0x5d0] sm:$0xff]
      %v312 = vld [vmem:[%s116 + $0x5d8] sm:$0xff]
      %v313 = vld [vmem:[%s116 + $0x5e0] sm:$0x3]
      %v314 = vld [vmem:[%s116 + $0x5e8] sm:$0xff]
      %v315 = vld [vmem:[%s116 + $0x5f0] sm:$0xff]
      %v316 = vld [vmem:[%s116 + $0x5f8] sm:$0x3]
      %445 = vrot.lane.b32.xlu0 %v125, 127
      %v446 = vpop.permute.xlu0 %445
      %447 = vrot.lane.b32.xlu0 %v126, 127
      %v448 = vpop.permute.xlu0 %447
      %449 = vrot.lane.b32.xlu0 %v128, 127
      %v450 = vpop.permute.xlu0 %449
      %451 = vrot.lane.b32.xlu0 %v129, 127
      %v452 = vpop.permute.xlu0 %451
      %453 = vrot.lane.b32.xlu0 %v131, 127
      %v454 = vpop.permute.xlu0 %453
      %455 = vrot.lane.b32.xlu0 %v132, 127
      %v456 = vpop.permute.xlu0 %455
      %457 = vrot.lane.b32.xlu0 %v134, 127
      %v458 = vpop.permute.xlu0 %457
      %459 = vrot.lane.b32.xlu0 %v135, 127
      %v460 = vpop.permute.xlu0 %459
      %461 = vrot.lane.b32.xlu0 %v137, 127
      %v462 = vpop.permute.xlu0 %461
      %463 = vrot.lane.b32.xlu0 %v138, 127
      %v464 = vpop.permute.xlu0 %463
      %465 = vrot.lane.b32.xlu0 %v140, 127
      %v466 = vpop.permute.xlu0 %465
      %467 = vrot.lane.b32.xlu0 %v141, 127
      %v468 = vpop.permute.xlu0 %467
      %469 = vrot.lane.b32.xlu0 %v143, 127
      %v470 = vpop.permute.xlu0 %469
      %471 = vrot.lane.b32.xlu0 %v144, 127
      %v472 = vpop.permute.xlu0 %471
      %473 = vrot.lane.b32.xlu0 %v146, 127
      %v474 = vpop.permute.xlu0 %473
      %475 = vrot.lane.b32.xlu0 %v147, 127
      %v476 = vpop.permute.xlu0 %475
      %477 = vrot.lane.b32.xlu0 %v149, 127
      %v478 = vpop.permute.xlu0 %477
      %479 = vrot.lane.b32.xlu0 %v150, 127
      %v480 = vpop.permute.xlu0 %479
      %481 = vrot.lane.b32.xlu0 %v152, 127
      %v482 = vpop.permute.xlu0 %481
      %483 = vrot.lane.b32.xlu0 %v153, 127
      %v484 = vpop.permute.xlu0 %483
      %485 = vrot.lane.b32.xlu0 %v155, 127
      %v486 = vpop.permute.xlu0 %485
      %487 = vrot.lane.b32.xlu0 %v156, 127
      %v488 = vpop.permute.xlu0 %487
      %489 = vrot.lane.b32.xlu0 %v158, 127
      %v490 = vpop.permute.xlu0 %489
      %491 = vrot.lane.b32.xlu0 %v159, 127
      %v492 = vpop.permute.xlu0 %491
      %493 = vrot.lane.b32.xlu0 %v161, 127
      %v494 = vpop.permute.xlu0 %493
      %495 = vrot.lane.b32.xlu0 %v162, 127
      %v496 = vpop.permute.xlu0 %495
      %497 = vrot.lane.b32.xlu0 %v164, 127
      %v498 = vpop.permute.xlu0 %497
      %499 = vrot.lane.b32.xlu0 %v165, 127
      %v500 = vpop.permute.xlu0 %499
      %501 = vrot.lane.b32.xlu0 %v167, 127
      %v502 = vpop.permute.xlu0 %501
      %503 = vrot.lane.b32.xlu0 %v168, 127
      %v504 = vpop.permute.xlu0 %503
      %505 = vrot.lane.b32.xlu0 %v170, 127
      %v506 = vpop.permute.xlu0 %505
      %507 = vrot.lane.b32.xlu0 %v171, 127
      %v508 = vpop.permute.xlu0 %507
      %509 = vrot.lane.b32.xlu0 %v173, 127
      %v510 = vpop.permute.xlu0 %509
      %511 = vrot.lane.b32.xlu0 %v174, 127
      %v512 = vpop.permute.xlu0 %511
      %513 = vrot.lane.b32.xlu0 %v176, 127
      %v514 = vpop.permute.xlu0 %513
      %515 = vrot.lane.b32.xlu0 %v177, 127
      %v516 = vpop.permute.xlu0 %515
      %517 = vrot.lane.b32.xlu0 %v179, 127
      %v518 = vpop.permute.xlu0 %517
      %519 = vrot.lane.b32.xlu0 %v180, 127
      %v520 = vpop.permute.xlu0 %519
      %521 = vrot.lane.b32.xlu0 %v182, 127
      %v522 = vpop.permute.xlu0 %521
      %523 = vrot.lane.b32.xlu0 %v183, 127
      %v524 = vpop.permute.xlu0 %523
      %525 = vrot.lane.b32.xlu0 %v185, 127
      %v526 = vpop.permute.xlu0 %525
      %527 = vrot.lane.b32.xlu0 %v186, 127
      %v528 = vpop.permute.xlu0 %527
      %529 = vrot.lane.b32.xlu0 %v188, 127
      %v530 = vpop.permute.xlu0 %529
      %531 = vrot.lane.b32.xlu0 %v189, 127
      %v532 = vpop.permute.xlu0 %531
      %533 = vrot.lane.b32.xlu0 %v191, 127
      %v534 = vpop.permute.xlu0 %533
      %535 = vrot.lane.b32.xlu0 %v192, 127
      %v536 = vpop.permute.xlu0 %535
      %537 = vrot.lane.b32.xlu0 %v194, 127
      %v538 = vpop.permute.xlu0 %537
      %539 = vrot.lane.b32.xlu0 %v195, 127
      %v540 = vpop.permute.xlu0 %539
      %541 = vrot.lane.b32.xlu0 %v197, 127
      %v542 = vpop.permute.xlu0 %541
      %543 = vrot.lane.b32.xlu0 %v198, 127
      %v544 = vpop.permute.xlu0 %543
      %545 = vrot.lane.b32.xlu0 %v200, 127
      %v546 = vpop.permute.xlu0 %545
      %547 = vrot.lane.b32.xlu0 %v201, 127
      %v548 = vpop.permute.xlu0 %547
      %549 = vrot.lane.b32.xlu0 %v203, 127
      %v550 = vpop.permute.xlu0 %549
      %551 = vrot.lane.b32.xlu0 %v204, 127
      %v552 = vpop.permute.xlu0 %551
      %553 = vrot.lane.b32.xlu0 %v206, 127
      %v554 = vpop.permute.xlu0 %553
      %555 = vrot.lane.b32.xlu0 %v207, 127
      %v556 = vpop.permute.xlu0 %555
      %557 = vrot.lane.b32.xlu0 %v209, 127
      %v558 = vpop.permute.xlu0 %557
      %559 = vrot.lane.b32.xlu0 %v210, 127
      %v560 = vpop.permute.xlu0 %559
      %561 = vrot.lane.b32.xlu0 %v212, 127
      %v562 = vpop.permute.xlu0 %561
      %563 = vrot.lane.b32.xlu0 %v213, 127
      %v564 = vpop.permute.xlu0 %563
      %565 = vrot.lane.b32.xlu0 %v215, 127
      %v566 = vpop.permute.xlu0 %565
      %567 = vrot.lane.b32.xlu0 %v216, 127
      %v568 = vpop.permute.xlu0 %567
      %569 = vrot.lane.b32.xlu0 %v218, 127
      %v570 = vpop.permute.xlu0 %569
      %571 = vrot.lane.b32.xlu0 %v219, 127
      %v572 = vpop.permute.xlu0 %571
      %573 = vrot.lane.b32.xlu0 %v221, 127
      %v574 = vpop.permute.xlu0 %573
      %575 = vrot.lane.b32.xlu0 %v222, 127
      %v576 = vpop.permute.xlu0 %575
      %577 = vrot.lane.b32.xlu0 %v224, 127
      %v578 = vpop.permute.xlu0 %577
      %579 = vrot.lane.b32.xlu0 %v225, 127
      %v580 = vpop.permute.xlu0 %579
      %581 = vrot.lane.b32.xlu0 %v227, 127
      %v582 = vpop.permute.xlu0 %581
      %583 = vrot.lane.b32.xlu0 %v228, 127
      %v584 = vpop.permute.xlu0 %583
      %585 = vrot.lane.b32.xlu0 %v230, 127
      %v586 = vpop.permute.xlu0 %585
      %587 = vrot.lane.b32.xlu0 %v231, 127
      %v588 = vpop.permute.xlu0 %587
      %589 = vrot.lane.b32.xlu0 %v233, 127
      %v590 = vpop.permute.xlu0 %589
      %591 = vrot.lane.b32.xlu0 %v234, 127
      %v592 = vpop.permute.xlu0 %591
      %593 = vrot.lane.b32.xlu0 %v236, 127
      %v594 = vpop.permute.xlu0 %593
      %595 = vrot.lane.b32.xlu0 %v237, 127
      %v596 = vpop.permute.xlu0 %595
      %597 = vrot.lane.b32.xlu0 %v239, 127
      %v598 = vpop.permute.xlu0 %597
      %599 = vrot.lane.b32.xlu0 %v240, 127
      %v600 = vpop.permute.xlu0 %599
      %601 = vrot.lane.b32.xlu0 %v242, 127
      %v602 = vpop.permute.xlu0 %601
      %603 = vrot.lane.b32.xlu0 %v243, 127
      %v604 = vpop.permute.xlu0 %603
      %605 = vrot.lane.b32.xlu0 %v245, 127
      %v606 = vpop.permute.xlu0 %605
      %607 = vrot.lane.b32.xlu0 %v246, 127
      %v608 = vpop.permute.xlu0 %607
      %609 = vrot.lane.b32.xlu0 %v248, 127
      %v610 = vpop.permute.xlu0 %609
      %611 = vrot.lane.b32.xlu0 %v249, 127
      %v612 = vpop.permute.xlu0 %611
      %613 = vrot.lane.b32.xlu0 %v251, 127
      %v614 = vpop.permute.xlu0 %613
      %615 = vrot.lane.b32.xlu0 %v252, 127
      %v616 = vpop.permute.xlu0 %615
      %617 = vrot.lane.b32.xlu0 %v254, 127
      %v618 = vpop.permute.xlu0 %617
      %619 = vrot.lane.b32.xlu0 %v255, 127
      %v620 = vpop.permute.xlu0 %619
      %621 = vrot.lane.b32.xlu0 %v257, 127
      %v622 = vpop.permute.xlu0 %621
      %623 = vrot.lane.b32.xlu0 %v258, 127
      %v624 = vpop.permute.xlu0 %623
      %625 = vrot.lane.b32.xlu0 %v260, 127
      %v626 = vpop.permute.xlu0 %625
      %627 = vrot.lane.b32.xlu0 %v261, 127
      %v628 = vpop.permute.xlu0 %627
      %629 = vrot.lane.b32.xlu0 %v263, 127
      %v630 = vpop.permute.xlu0 %629
      %631 = vrot.lane.b32.xlu0 %v264, 127
      %v632 = vpop.permute.xlu0 %631
      %633 = vrot.lane.b32.xlu0 %v266, 127
      %v634 = vpop.permute.xlu0 %633
      %635 = vrot.lane.b32.xlu0 %v267, 127
      %v636 = vpop.permute.xlu0 %635
      %637 = vrot.lane.b32.xlu0 %v269, 127
      %v638 = vpop.permute.xlu0 %637
      %639 = vrot.lane.b32.xlu0 %v270, 127
      %v640 = vpop.permute.xlu0 %639
      %641 = vrot.lane.b32.xlu0 %v272, 127
      %v642 = vpop.permute.xlu0 %641
      %643 = vrot.lane.b32.xlu0 %v273, 127
      %v644 = vpop.permute.xlu0 %643
      %645 = vrot.lane.b32.xlu0 %v275, 127
      %v646 = vpop.permute.xlu0 %645
      %647 = vrot.lane.b32.xlu0 %v276, 127
      %v648 = vpop.permute.xlu0 %647
      %649 = vrot.lane.b32.xlu0 %v278, 127
      %v650 = vpop.permute.xlu0 %649
      %651 = vrot.lane.b32.xlu0 %v279, 127
      %v652 = vpop.permute.xlu0 %651
      %653 = vrot.lane.b32.xlu0 %v281, 127
      %v654 = vpop.permute.xlu0 %653
      %655 = vrot.lane.b32.xlu0 %v282, 127
      %v656 = vpop.permute.xlu0 %655
      %657 = vrot.lane.b32.xlu0 %v284, 127
      %v658 = vpop.permute.xlu0 %657
      %659 = vrot.lane.b32.xlu0 %v285, 127
      %v660 = vpop.permute.xlu0 %659
      %661 = vrot.lane.b32.xlu0 %v287, 127
      %v662 = vpop.permute.xlu0 %661
      %663 = vrot.lane.b32.xlu0 %v288, 127
      %v664 = vpop.permute.xlu0 %663
      %665 = vrot.lane.b32.xlu0 %v290, 127
      %v666 = vpop.permute.xlu0 %665
      %667 = vrot.lane.b32.xlu0 %v291, 127
      %v668 = vpop.permute.xlu0 %667
      %669 = vrot.lane.b32.xlu0 %v293, 127
      %v670 = vpop.permute.xlu0 %669
      %671 = vrot.lane.b32.xlu0 %v294, 127
      %v672 = vpop.permute.xlu0 %671
      %673 = vrot.lane.b32.xlu0 %v296, 127
      %v674 = vpop.permute.xlu0 %673
      %675 = vrot.lane.b32.xlu0 %v297, 127
      %v676 = vpop.permute.xlu0 %675
      %677 = vrot.lane.b32.xlu0 %v299, 127
      %v678 = vpop.permute.xlu0 %677
      %679 = vrot.lane.b32.xlu0 %v300, 127
      %v680 = vpop.permute.xlu0 %679
      %681 = vrot.lane.b32.xlu0 %v302, 127
      %v682 = vpop.permute.xlu0 %681
      %683 = vrot.lane.b32.xlu0 %v303, 127
      %v684 = vpop.permute.xlu0 %683
      %685 = vrot.lane.b32.xlu0 %v305, 127
      %v686 = vpop.permute.xlu0 %685
      %687 = vrot.lane.b32.xlu0 %v306, 127
      %v688 = vpop.permute.xlu0 %687
      %689 = vrot.lane.b32.xlu0 %v308, 127
      %v690 = vpop.permute.xlu0 %689
      %691 = vrot.lane.b32.xlu0 %v309, 127
      %v692 = vpop.permute.xlu0 %691
      %693 = vrot.lane.b32.xlu0 %v311, 127
      %v694 = vpop.permute.xlu0 %693
      %695 = vrot.lane.b32.xlu0 %v312, 127
      %v696 = vpop.permute.xlu0 %695
      %697 = vrot.lane.b32.xlu0 %v314, 127
      %v698 = vpop.permute.xlu0 %697
      %699 = vrot.lane.b32.xlu0 %v315, 127
      %v700 = vpop.permute.xlu0 %699
      %v829 = vmax.f32 %v125, %v446
      %v830 = vmax.f32 %v126, %v448
      %v831 = vmax.f32 %v128, %v450
      %v832 = vmax.f32 %v129, %v452
      %v833 = vmax.f32 %v131, %v454
      %v834 = vmax.f32 %v132, %v456
      %v835 = vmax.f32 %v134, %v458
      %v836 = vmax.f32 %v135, %v460
      %v837 = vmax.f32 %v137, %v462
      %v838 = vmax.f32 %v138, %v464
      %v839 = vmax.f32 %v140, %v466
      %v840 = vmax.f32 %v141, %v468
      %v841 = vmax.f32 %v143, %v470
      %v842 = vmax.f32 %v144, %v472
      %v843 = vmax.f32 %v146, %v474
      %v844 = vmax.f32 %v147, %v476
      %v845 = vmax.f32 %v149, %v478
      %v846 = vmax.f32 %v150, %v480
      %v847 = vmax.f32 %v152, %v482
      %v848 = vmax.f32 %v153, %v484
      %v849 = vmax.f32 %v155, %v486
      %v850 = vmax.f32 %v156, %v488
      %v851 = vmax.f32 %v158, %v490
      %v852 = vmax.f32 %v159, %v492
      %v853 = vmax.f32 %v161, %v494
      %v854 = vmax.f32 %v162, %v496
      %v855 = vmax.f32 %v164, %v498
      %v856 = vmax.f32 %v165, %v500
      %v857 = vmax.f32 %v167, %v502
      %v858 = vmax.f32 %v168, %v504
      %v859 = vmax.f32 %v170, %v506
      %v860 = vmax.f32 %v171, %v508
      %v861 = vmax.f32 %v173, %v510
      %v862 = vmax.f32 %v174, %v512
      %v863 = vmax.f32 %v176, %v514
      %v864 = vmax.f32 %v177, %v516
      %v865 = vmax.f32 %v179, %v518
      %v866 = vmax.f32 %v180, %v520
      %v867 = vmax.f32 %v182, %v522
      %v868 = vmax.f32 %v183, %v524
      %v869 = vmax.f32 %v185, %v526
      %v870 = vmax.f32 %v186, %v528
      %v871 = vmax.f32 %v188, %v530
      %v872 = vmax.f32 %v189, %v532
      %v873 = vmax.f32 %v191, %v534
      %v874 = vmax.f32 %v192, %v536
      %v875 = vmax.f32 %v194, %v538
      %v876 = vmax.f32 %v195, %v540
      %v877 = vmax.f32 %v197, %v542
      %v878 = vmax.f32 %v198, %v544
      %v879 = vmax.f32 %v200, %v546
      %v880 = vmax.f32 %v201, %v548
      %v881 = vmax.f32 %v203, %v550
      %v882 = vmax.f32 %v204, %v552
      %v883 = vmax.f32 %v206, %v554
      %v884 = vmax.f32 %v207, %v556
      %v885 = vmax.f32 %v209, %v558
      %v886 = vmax.f32 %v210, %v560
      %v887 = vmax.f32 %v212, %v562
      %v888 = vmax.f32 %v213, %v564
      %v889 = vmax.f32 %v215, %v566
      %v890 = vmax.f32 %v216, %v568
      %v891 = vmax.f32 %v218, %v570
      %v892 = vmax.f32 %v219, %v572
      %v893 = vmax.f32 %v221, %v574
      %v894 = vmax.f32 %v222, %v576
      %v895 = vmax.f32 %v224, %v578
      %v896 = vmax.f32 %v225, %v580
      %v897 = vmax.f32 %v227, %v582
      %v898 = vmax.f32 %v228, %v584
      %v899 = vmax.f32 %v230, %v586
      %v900 = vmax.f32 %v231, %v588
      %v901 = vmax.f32 %v233, %v590
      %v902 = vmax.f32 %v234, %v592
      %v903 = vmax.f32 %v236, %v594
      %v904 = vmax.f32 %v237, %v596
      %v905 = vmax.f32 %v239, %v598
      %v906 = vmax.f32 %v240, %v600
      %v907 = vmax.f32 %v242, %v602
      %v908 = vmax.f32 %v243, %v604
      %v909 = vmax.f32 %v245, %v606
      %v910 = vmax.f32 %v246, %v608
      %v911 = vmax.f32 %v248, %v610
      %v912 = vmax.f32 %v249, %v612
      %v913 = vmax.f32 %v251, %v614
      %v914 = vmax.f32 %v252, %v616
      %v915 = vmax.f32 %v254, %v618
      %v916 = vmax.f32 %v255, %v620
      %v917 = vmax.f32 %v257, %v622
      %v918 = vmax.f32 %v258, %v624
      %v919 = vmax.f32 %v260, %v626
      %v920 = vmax.f32 %v261, %v628
      %v921 = vmax.f32 %v263, %v630
      %v922 = vmax.f32 %v264, %v632
      %v923 = vmax.f32 %v266, %v634
      %v924 = vmax.f32 %v267, %v636
      %v925 = vmax.f32 %v269, %v638
      %v926 = vmax.f32 %v270, %v640
      %v927 = vmax.f32 %v272, %v642
      %v928 = vmax.f32 %v273, %v644
      %v929 = vmax.f32 %v275, %v646
      %v930 = vmax.f32 %v276, %v648
      %v931 = vmax.f32 %v278, %v650
      %v932 = vmax.f32 %v279, %v652
      %v933 = vmax.f32 %v281, %v654
      %v934 = vmax.f32 %v282, %v656
      %v935 = vmax.f32 %v284, %v658
      %v936 = vmax.f32 %v285, %v660
      %v937 = vmax.f32 %v287, %v662
      %v938 = vmax.f32 %v288, %v664
      %v939 = vmax.f32 %v290, %v666
      %v940 = vmax.f32 %v291, %v668
      %v941 = vmax.f32 %v293, %v670
      %v942 = vmax.f32 %v294, %v672
      %v943 = vmax.f32 %v296, %v674
      %v944 = vmax.f32 %v297, %v676
      %v945 = vmax.f32 %v299, %v678
      %v946 = vmax.f32 %v300, %v680
      %v947 = vmax.f32 %v302, %v682
      %v948 = vmax.f32 %v303, %v684
      %v949 = vmax.f32 %v305, %v686
      %v950 = vmax.f32 %v306, %v688
      %v951 = vmax.f32 %v308, %v690
      %v952 = vmax.f32 %v309, %v692
      %v953 = vmax.f32 %v311, %v694
      %v954 = vmax.f32 %v312, %v696
      %v955 = vmax.f32 %v314, %v698
      %v956 = vmax.f32 %v315, %v700
      %957 = vrot.lane.b32.xlu0 %v125, 126
      %v958 = vpop.permute.xlu0 %957
      %959 = vrot.lane.b32.xlu0 %v126, 126
      %v960 = vpop.permute.xlu0 %959
      %961 = vrot.lane.b32.xlu0 %v128, 126
      %v962 = vpop.permute.xlu0 %961
      %963 = vrot.lane.b32.xlu0 %v129, 126
      %v964 = vpop.permute.xlu0 %963
      %965 = vrot.lane.b32.xlu0 %v131, 126
      %v966 = vpop.permute.xlu0 %965
      %967 = vrot.lane.b32.xlu0 %v132, 126
      %v968 = vpop.permute.xlu0 %967
      %969 = vrot.lane.b32.xlu0 %v134, 126
      %v970 = vpop.permute.xlu0 %969
      %971 = vrot.lane.b32.xlu0 %v135, 126
      %v972 = vpop.permute.xlu0 %971
      %973 = vrot.lane.b32.xlu0 %v137, 126
      %v974 = vpop.permute.xlu0 %973
      %975 = vrot.lane.b32.xlu0 %v138, 126
      %v976 = vpop.permute.xlu0 %975
      %977 = vrot.lane.b32.xlu0 %v140, 126
      %v978 = vpop.permute.xlu0 %977
      %979 = vrot.lane.b32.xlu0 %v141, 126
      %v980 = vpop.permute.xlu0 %979
      %981 = vrot.lane.b32.xlu0 %v143, 126
      %v982 = vpop.permute.xlu0 %981
      %983 = vrot.lane.b32.xlu0 %v144, 126
      %v984 = vpop.permute.xlu0 %983
      %985 = vrot.lane.b32.xlu0 %v146, 126
      %v986 = vpop.permute.xlu0 %985
      %987 = vrot.lane.b32.xlu0 %v147, 126
      %v988 = vpop.permute.xlu0 %987
      %989 = vrot.lane.b32.xlu0 %v149, 126
      %v990 = vpop.permute.xlu0 %989
      %991 = vrot.lane.b32.xlu0 %v150, 126
      %v992 = vpop.permute.xlu0 %991
      %993 = vrot.lane.b32.xlu0 %v152, 126
      %v994 = vpop.permute.xlu0 %993
      %995 = vrot.lane.b32.xlu0 %v153, 126
      %v996 = vpop.permute.xlu0 %995
      %997 = vrot.lane.b32.xlu0 %v155, 126
      %v998 = vpop.permute.xlu0 %997
      %999 = vrot.lane.b32.xlu0 %v156, 126
      %v1000 = vpop.permute.xlu0 %999
      %1001 = vrot.lane.b32.xlu0 %v158, 126
      %v1002 = vpop.permute.xlu0 %1001
      %1003 = vrot.lane.b32.xlu0 %v159, 126
      %v1004 = vpop.permute.xlu0 %1003
      %1005 = vrot.lane.b32.xlu0 %v161, 126
      %v1006 = vpop.permute.xlu0 %1005
      %1007 = vrot.lane.b32.xlu0 %v162, 126
      %v1008 = vpop.permute.xlu0 %1007
      %1009 = vrot.lane.b32.xlu0 %v164, 126
      %v1010 = vpop.permute.xlu0 %1009
      %1011 = vrot.lane.b32.xlu0 %v165, 126
      %v1012 = vpop.permute.xlu0 %1011
      %1013 = vrot.lane.b32.xlu0 %v167, 126
      %v1014 = vpop.permute.xlu0 %1013
      %1015 = vrot.lane.b32.xlu0 %v168, 126
      %v1016 = vpop.permute.xlu0 %1015
      %1017 = vrot.lane.b32.xlu0 %v170, 126
      %v1018 = vpop.permute.xlu0 %1017
      %1019 = vrot.lane.b32.xlu0 %v171, 126
      %v1020 = vpop.permute.xlu0 %1019
      %1021 = vrot.lane.b32.xlu0 %v173, 126
      %v1022 = vpop.permute.xlu0 %1021
      %1023 = vrot.lane.b32.xlu0 %v174, 126
      %v1024 = vpop.permute.xlu0 %1023
      %1025 = vrot.lane.b32.xlu0 %v176, 126
      %v1026 = vpop.permute.xlu0 %1025
      %1027 = vrot.lane.b32.xlu0 %v177, 126
      %v1028 = vpop.permute.xlu0 %1027
      %1029 = vrot.lane.b32.xlu0 %v179, 126
      %v1030 = vpop.permute.xlu0 %1029
      %1031 = vrot.lane.b32.xlu0 %v180, 126
      %v1032 = vpop.permute.xlu0 %1031
      %1033 = vrot.lane.b32.xlu0 %v182, 126
      %v1034 = vpop.permute.xlu0 %1033
      %1035 = vrot.lane.b32.xlu0 %v183, 126
      %v1036 = vpop.permute.xlu0 %1035
      %1037 = vrot.lane.b32.xlu0 %v185, 126
      %v1038 = vpop.permute.xlu0 %1037
      %1039 = vrot.lane.b32.xlu0 %v186, 126
      %v1040 = vpop.permute.xlu0 %1039
      %1041 = vrot.lane.b32.xlu0 %v188, 126
      %v1042 = vpop.permute.xlu0 %1041
      %1043 = vrot.lane.b32.xlu0 %v189, 126
      %v1044 = vpop.permute.xlu0 %1043
      %1045 = vrot.lane.b32.xlu0 %v191, 126
      %v1046 = vpop.permute.xlu0 %1045
      %1047 = vrot.lane.b32.xlu0 %v192, 126
      %v1048 = vpop.permute.xlu0 %1047
      %1049 = vrot.lane.b32.xlu0 %v194, 126
      %v1050 = vpop.permute.xlu0 %1049
      %1051 = vrot.lane.b32.xlu0 %v195, 126
      %v1052 = vpop.permute.xlu0 %1051
      %1053 = vrot.lane.b32.xlu0 %v197, 126
      %v1054 = vpop.permute.xlu0 %1053
      %1055 = vrot.lane.b32.xlu0 %v198, 126
      %v1056 = vpop.permute.xlu0 %1055
      %1057 = vrot.lane.b32.xlu0 %v200, 126
      %v1058 = vpop.permute.xlu0 %1057
      %1059 = vrot.lane.b32.xlu0 %v201, 126
      %v1060 = vpop.permute.xlu0 %1059
      %1061 = vrot.lane.b32.xlu0 %v203, 126
      %v1062 = vpop.permute.xlu0 %1061
      %1063 = vrot.lane.b32.xlu0 %v204, 126
      %v1064 = vpop.permute.xlu0 %1063
      %1065 = vrot.lane.b32.xlu0 %v206, 126
      %v1066 = vpop.permute.xlu0 %1065
      %1067 = vrot.lane.b32.xlu0 %v207, 126
      %v1068 = vpop.permute.xlu0 %1067
      %1069 = vrot.lane.b32.xlu0 %v209, 126
      %v1070 = vpop.permute.xlu0 %1069
      %1071 = vrot.lane.b32.xlu0 %v210, 126
      %v1072 = vpop.permute.xlu0 %1071
      %1073 = vrot.lane.b32.xlu0 %v212, 126
      %v1074 = vpop.permute.xlu0 %1073
      %1075 = vrot.lane.b32.xlu0 %v213, 126
      %v1076 = vpop.permute.xlu0 %1075
      %1077 = vrot.lane.b32.xlu0 %v215, 126
      %v1078 = vpop.permute.xlu0 %1077
      %1079 = vrot.lane.b32.xlu0 %v216, 126
      %v1080 = vpop.permute.xlu0 %1079
      %1081 = vrot.lane.b32.xlu0 %v218, 126
      %v1082 = vpop.permute.xlu0 %1081
      %1083 = vrot.lane.b32.xlu0 %v219, 126
      %v1084 = vpop.permute.xlu0 %1083
      %1085 = vrot.lane.b32.xlu0 %v221, 126
      %v1086 = vpop.permute.xlu0 %1085
      %1087 = vrot.lane.b32.xlu0 %v222, 126
      %v1088 = vpop.permute.xlu0 %1087
      %1089 = vrot.lane.b32.xlu0 %v224, 126
      %v1090 = vpop.permute.xlu0 %1089
      %1091 = vrot.lane.b32.xlu0 %v225, 126
      %v1092 = vpop.permute.xlu0 %1091
      %1093 = vrot.lane.b32.xlu0 %v227, 126
      %v1094 = vpop.permute.xlu0 %1093
      %1095 = vrot.lane.b32.xlu0 %v228, 126
      %v1096 = vpop.permute.xlu0 %1095
      %1097 = vrot.lane.b32.xlu0 %v230, 126
      %v1098 = vpop.permute.xlu0 %1097
      %1099 = vrot.lane.b32.xlu0 %v231, 126
      %v1100 = vpop.permute.xlu0 %1099
      %1101 = vrot.lane.b32.xlu0 %v233, 126
      %v1102 = vpop.permute.xlu0 %1101
      %1103 = vrot.lane.b32.xlu0 %v234, 126
      %v1104 = vpop.permute.xlu0 %1103
      %1105 = vrot.lane.b32.xlu0 %v236, 126
      %v1106 = vpop.permute.xlu0 %1105
      %1107 = vrot.lane.b32.xlu0 %v237, 126
      %v1108 = vpop.permute.xlu0 %1107
      %1109 = vrot.lane.b32.xlu0 %v239, 126
      %v1110 = vpop.permute.xlu0 %1109
      %1111 = vrot.lane.b32.xlu0 %v240, 126
      %v1112 = vpop.permute.xlu0 %1111
      %1113 = vrot.lane.b32.xlu0 %v242, 126
      %v1114 = vpop.permute.xlu0 %1113
      %1115 = vrot.lane.b32.xlu0 %v243, 126
      %v1116 = vpop.permute.xlu0 %1115
      %1117 = vrot.lane.b32.xlu0 %v245, 126
      %v1118 = vpop.permute.xlu0 %1117
      %1119 = vrot.lane.b32.xlu0 %v246, 126
      %v1120 = vpop.permute.xlu0 %1119
      %1121 = vrot.lane.b32.xlu0 %v248, 126
      %v1122 = vpop.permute.xlu0 %1121
      %1123 = vrot.lane.b32.xlu0 %v249, 126
      %v1124 = vpop.permute.xlu0 %1123
      %1125 = vrot.lane.b32.xlu0 %v251, 126
      %v1126 = vpop.permute.xlu0 %1125
      %1127 = vrot.lane.b32.xlu0 %v252, 126
      %v1128 = vpop.permute.xlu0 %1127
      %1129 = vrot.lane.b32.xlu0 %v254, 126
      %v1130 = vpop.permute.xlu0 %1129
      %1131 = vrot.lane.b32.xlu0 %v255, 126
      %v1132 = vpop.permute.xlu0 %1131
      %1133 = vrot.lane.b32.xlu0 %v257, 126
      %v1134 = vpop.permute.xlu0 %1133
      %1135 = vrot.lane.b32.xlu0 %v258, 126
      %v1136 = vpop.permute.xlu0 %1135
      %1137 = vrot.lane.b32.xlu0 %v260, 126
      %v1138 = vpop.permute.xlu0 %1137
      %1139 = vrot.lane.b32.xlu0 %v261, 126
      %v1140 = vpop.permute.xlu0 %1139
      %1141 = vrot.lane.b32.xlu0 %v263, 126
      %v1142 = vpop.permute.xlu0 %1141
      %1143 = vrot.lane.b32.xlu0 %v264, 126
      %v1144 = vpop.permute.xlu0 %1143
      %1145 = vrot.lane.b32.xlu0 %v266, 126
      %v1146 = vpop.permute.xlu0 %1145
      %1147 = vrot.lane.b32.xlu0 %v267, 126
      %v1148 = vpop.permute.xlu0 %1147
      %1149 = vrot.lane.b32.xlu0 %v269, 126
      %v1150 = vpop.permute.xlu0 %1149
      %1151 = vrot.lane.b32.xlu0 %v270, 126
      %v1152 = vpop.permute.xlu0 %1151
      %1153 = vrot.lane.b32.xlu0 %v272, 126
      %v1154 = vpop.permute.xlu0 %1153
      %1155 = vrot.lane.b32.xlu0 %v273, 126
      %v1156 = vpop.permute.xlu0 %1155
      %1157 = vrot.lane.b32.xlu0 %v275, 126
      %v1158 = vpop.permute.xlu0 %1157
      %1159 = vrot.lane.b32.xlu0 %v276, 126
      %v1160 = vpop.permute.xlu0 %1159
      %1161 = vrot.lane.b32.xlu0 %v278, 126
      %v1162 = vpop.permute.xlu0 %1161
      %1163 = vrot.lane.b32.xlu0 %v279, 126
      %v1164 = vpop.permute.xlu0 %1163
      %1165 = vrot.lane.b32.xlu0 %v281, 126
      %v1166 = vpop.permute.xlu0 %1165
      %1167 = vrot.lane.b32.xlu0 %v282, 126
      %v1168 = vpop.permute.xlu0 %1167
      %1169 = vrot.lane.b32.xlu0 %v284, 126
      %v1170 = vpop.permute.xlu0 %1169
      %1171 = vrot.lane.b32.xlu0 %v285, 126
      %v1172 = vpop.permute.xlu0 %1171
      %1173 = vrot.lane.b32.xlu0 %v287, 126
      %v1174 = vpop.permute.xlu0 %1173
      %1175 = vrot.lane.b32.xlu0 %v288, 126
      %v1176 = vpop.permute.xlu0 %1175
      %1177 = vrot.lane.b32.xlu0 %v290, 126
      %v1178 = vpop.permute.xlu0 %1177
      %1179 = vrot.lane.b32.xlu0 %v291, 126
      %v1180 = vpop.permute.xlu0 %1179
      %1181 = vrot.lane.b32.xlu0 %v293, 126
      %v1182 = vpop.permute.xlu0 %1181
      %1183 = vrot.lane.b32.xlu0 %v294, 126
      %v1184 = vpop.permute.xlu0 %1183
      %1185 = vrot.lane.b32.xlu0 %v296, 126
      %v1186 = vpop.permute.xlu0 %1185
      %1187 = vrot.lane.b32.xlu0 %v297, 126
      %v1188 = vpop.permute.xlu0 %1187
      %1189 = vrot.lane.b32.xlu0 %v299, 126
      %v1190 = vpop.permute.xlu0 %1189
      %1191 = vrot.lane.b32.xlu0 %v300, 126
      %v1192 = vpop.permute.xlu0 %1191
      %1193 = vrot.lane.b32.xlu0 %v302, 126
      %v1194 = vpop.permute.xlu0 %1193
      %1195 = vrot.lane.b32.xlu0 %v303, 126
      %v1196 = vpop.permute.xlu0 %1195
      %1197 = vrot.lane.b32.xlu0 %v305, 126
      %v1198 = vpop.permute.xlu0 %1197
      %1199 = vrot.lane.b32.xlu0 %v306, 126
      %v1200 = vpop.permute.xlu0 %1199
      %1201 = vrot.lane.b32.xlu0 %v308, 126
      %v1202 = vpop.permute.xlu0 %1201
      %1203 = vrot.lane.b32.xlu0 %v309, 126
      %v1204 = vpop.permute.xlu0 %1203
      %1205 = vrot.lane.b32.xlu0 %v311, 126
      %v1206 = vpop.permute.xlu0 %1205
      %1207 = vrot.lane.b32.xlu0 %v312, 126
      %v1208 = vpop.permute.xlu0 %1207
      %1209 = vrot.lane.b32.xlu0 %v314, 126
      %v1210 = vpop.permute.xlu0 %1209
      %1211 = vrot.lane.b32.xlu0 %v315, 126
      %v1212 = vpop.permute.xlu0 %1211
      %v1341 = vmax.f32 %v829, %v958
      %v1342 = vmax.f32 %v830, %v960
      %v1343 = vmax.f32 %v831, %v962
      %v1344 = vmax.f32 %v832, %v964
      %v1345 = vmax.f32 %v833, %v966
      %v1346 = vmax.f32 %v834, %v968
      %v1347 = vmax.f32 %v835, %v970
      %v1348 = vmax.f32 %v836, %v972
      %v1349 = vmax.f32 %v837, %v974
      %v1350 = vmax.f32 %v838, %v976
      %v1351 = vmax.f32 %v839, %v978
      %v1352 = vmax.f32 %v840, %v980
      %v1353 = vmax.f32 %v841, %v982
      %v1354 = vmax.f32 %v842, %v984
      %v1355 = vmax.f32 %v843, %v986
      %v1356 = vmax.f32 %v844, %v988
      %v1357 = vmax.f32 %v845, %v990
      %v1358 = vmax.f32 %v846, %v992
      %v1359 = vmax.f32 %v847, %v994
      %v1360 = vmax.f32 %v848, %v996
      %v1361 = vmax.f32 %v849, %v998
      %v1362 = vmax.f32 %v850, %v1000
      %v1363 = vmax.f32 %v851, %v1002
      %v1364 = vmax.f32 %v852, %v1004
      %v1365 = vmax.f32 %v853, %v1006
      %v1366 = vmax.f32 %v854, %v1008
      %v1367 = vmax.f32 %v855, %v1010
      %v1368 = vmax.f32 %v856, %v1012
      %v1369 = vmax.f32 %v857, %v1014
      %v1370 = vmax.f32 %v858, %v1016
      %v1371 = vmax.f32 %v859, %v1018
      %v1372 = vmax.f32 %v860, %v1020
      %v1373 = vmax.f32 %v861, %v1022
      %v1374 = vmax.f32 %v862, %v1024
      %v1375 = vmax.f32 %v863, %v1026
      %v1376 = vmax.f32 %v864, %v1028
      %v1377 = vmax.f32 %v865, %v1030
      %v1378 = vmax.f32 %v866, %v1032
      %v1379 = vmax.f32 %v867, %v1034
      %v1380 = vmax.f32 %v868, %v1036
      %v1381 = vmax.f32 %v869, %v1038
      %v1382 = vmax.f32 %v870, %v1040
      %v1383 = vmax.f32 %v871, %v1042
      %v1384 = vmax.f32 %v872, %v1044
      %v1385 = vmax.f32 %v873, %v1046
      %v1386 = vmax.f32 %v874, %v1048
      %v1387 = vmax.f32 %v875, %v1050
      %v1388 = vmax.f32 %v876, %v1052
      %v1389 = vmax.f32 %v877, %v1054
      %v1390 = vmax.f32 %v878, %v1056
      %v1391 = vmax.f32 %v879, %v1058
      %v1392 = vmax.f32 %v880, %v1060
      %v1393 = vmax.f32 %v881, %v1062
      %v1394 = vmax.f32 %v882, %v1064
      %v1395 = vmax.f32 %v883, %v1066
      %v1396 = vmax.f32 %v884, %v1068
      %v1397 = vmax.f32 %v885, %v1070
      %v1398 = vmax.f32 %v886, %v1072
      %v1399 = vmax.f32 %v887, %v1074
      %v1400 = vmax.f32 %v888, %v1076
      %v1401 = vmax.f32 %v889, %v1078
      %v1402 = vmax.f32 %v890, %v1080
      %v1403 = vmax.f32 %v891, %v1082
      %v1404 = vmax.f32 %v892, %v1084
      %v1405 = vmax.f32 %v893, %v1086
      %v1406 = vmax.f32 %v894, %v1088
      %v1407 = vmax.f32 %v895, %v1090
      %v1408 = vmax.f32 %v896, %v1092
      %v1409 = vmax.f32 %v897, %v1094
      %v1410 = vmax.f32 %v898, %v1096
      %v1411 = vmax.f32 %v899, %v1098
      %v1412 = vmax.f32 %v900, %v1100
      %v1413 = vmax.f32 %v901, %v1102
      %v1414 = vmax.f32 %v902, %v1104
      %v1415 = vmax.f32 %v903, %v1106
      %v1416 = vmax.f32 %v904, %v1108
      %v1417 = vmax.f32 %v905, %v1110
      %v1418 = vmax.f32 %v906, %v1112
      %v1419 = vmax.f32 %v907, %v1114
      %v1420 = vmax.f32 %v908, %v1116
      %v1421 = vmax.f32 %v909, %v1118
      %v1422 = vmax.f32 %v910, %v1120
      %v1423 = vmax.f32 %v911, %v1122
      %v1424 = vmax.f32 %v912, %v1124
      %v1425 = vmax.f32 %v913, %v1126
      %v1426 = vmax.f32 %v914, %v1128
      %v1427 = vmax.f32 %v915, %v1130
      %v1428 = vmax.f32 %v916, %v1132
      %v1429 = vmax.f32 %v917, %v1134
      %v1430 = vmax.f32 %v918, %v1136
      %v1431 = vmax.f32 %v919, %v1138
      %v1432 = vmax.f32 %v920, %v1140
      %v1433 = vmax.f32 %v921, %v1142
      %v1434 = vmax.f32 %v922, %v1144
      %v1435 = vmax.f32 %v923, %v1146
      %v1436 = vmax.f32 %v924, %v1148
      %v1437 = vmax.f32 %v925, %v1150
      %v1438 = vmax.f32 %v926, %v1152
      %v1439 = vmax.f32 %v927, %v1154
      %v1440 = vmax.f32 %v928, %v1156
      %v1441 = vmax.f32 %v929, %v1158
      %v1442 = vmax.f32 %v930, %v1160
      %v1443 = vmax.f32 %v931, %v1162
      %v1444 = vmax.f32 %v932, %v1164
      %v1445 = vmax.f32 %v933, %v1166
      %v1446 = vmax.f32 %v934, %v1168
      %v1447 = vmax.f32 %v935, %v1170
      %v1448 = vmax.f32 %v936, %v1172
      %v1449 = vmax.f32 %v937, %v1174
      %v1450 = vmax.f32 %v938, %v1176
      %v1451 = vmax.f32 %v939, %v1178
      %v1452 = vmax.f32 %v940, %v1180
      %v1453 = vmax.f32 %v941, %v1182
      %v1454 = vmax.f32 %v942, %v1184
      %v1455 = vmax.f32 %v943, %v1186
      %v1456 = vmax.f32 %v944, %v1188
      %v1457 = vmax.f32 %v945, %v1190
      %v1458 = vmax.f32 %v946, %v1192
      %v1459 = vmax.f32 %v947, %v1194
      %v1460 = vmax.f32 %v948, %v1196
      %v1461 = vmax.f32 %v949, %v1198
      %v1462 = vmax.f32 %v950, %v1200
      %v1463 = vmax.f32 %v951, %v1202
      %v1464 = vmax.f32 %v952, %v1204
      %v1465 = vmax.f32 %v953, %v1206
      %v1466 = vmax.f32 %v954, %v1208
      %v1467 = vmax.f32 %v955, %v1210
      %v1468 = vmax.f32 %v956, %v1212
      %vm1533 = vcmask 1046528
      %v1534 = vrot.slane %v125, 1
      %v1535 = vrot.slane %v126, 1
      %v1536 = vsel %vm1533, %v1534, %v1535
      %v1537 = vrot.slane %v127, 1
      %v1538 = vsel %vm1533, %v1535, %v1537
      %v1539 = vrot.slane %v128, 1
      %v1540 = vrot.slane %v129, 1
      %v1541 = vsel %vm1533, %v1539, %v1540
      %v1542 = vrot.slane %v130, 1
      %v1543 = vsel %vm1533, %v1540, %v1542
      %v1544 = vrot.slane %v131, 1
      %v1545 = vrot.slane %v132, 1
      %v1546 = vsel %vm1533, %v1544, %v1545
      %v1547 = vrot.slane %v133, 1
      %v1548 = vsel %vm1533, %v1545, %v1547
      %v1549 = vrot.slane %v134, 1
      %v1550 = vrot.slane %v135, 1
      %v1551 = vsel %vm1533, %v1549, %v1550
      %v1552 = vrot.slane %v136, 1
      %v1553 = vsel %vm1533, %v1550, %v1552
      %v1554 = vrot.slane %v137, 1
      %v1555 = vrot.slane %v138, 1
      %v1556 = vsel %vm1533, %v1554, %v1555
      %v1557 = vrot.slane %v139, 1
      %v1558 = vsel %vm1533, %v1555, %v1557
      %v1559 = vrot.slane %v140, 1
      %v1560 = vrot.slane %v141, 1
      %v1561 = vsel %vm1533, %v1559, %v1560
      %v1562 = vrot.slane %v142, 1
      %v1563 = vsel %vm1533, %v1560, %v1562
      %v1564 = vrot.slane %v143, 1
      %v1565 = vrot.slane %v144, 1
      %v1566 = vsel %vm1533, %v1564, %v1565
      %v1567 = vrot.slane %v145, 1
      %v1568 = vsel %vm1533, %v1565, %v1567
      %v1569 = vrot.slane %v146, 1
      %v1570 = vrot.slane %v147, 1
      %v1571 = vsel %vm1533, %v1569, %v1570
      %v1572 = vrot.slane %v148, 1
      %v1573 = vsel %vm1533, %v1570, %v1572
      %v1574 = vrot.slane %v149, 1
      %v1575 = vrot.slane %v150, 1
      %v1576 = vsel %vm1533, %v1574, %v1575
      %v1577 = vrot.slane %v151, 1
      %v1578 = vsel %vm1533, %v1575, %v1577
      %v1579 = vrot.slane %v152, 1
      %v1580 = vrot.slane %v153, 1
      %v1581 = vsel %vm1533, %v1579, %v1580
      %v1582 = vrot.slane %v154, 1
      %v1583 = vsel %vm1533, %v1580, %v1582
      %v1584 = vrot.slane %v155, 1
      %v1585 = vrot.slane %v156, 1
      %v1586 = vsel %vm1533, %v1584, %v1585
      %v1587 = vrot.slane %v157, 1
      %v1588 = vsel %vm1533, %v1585, %v1587
      %v1589 = vrot.slane %v158, 1
      %v1590 = vrot.slane %v159, 1
      %v1591 = vsel %vm1533, %v1589, %v1590
      %v1592 = vrot.slane %v160, 1
      %v1593 = vsel %vm1533, %v1590, %v1592
      %v1594 = vrot.slane %v161, 1
      %v1595 = vrot.slane %v162, 1
      %v1596 = vsel %vm1533, %v1594, %v1595
      %v1597 = vrot.slane %v163, 1
      %v1598 = vsel %vm1533, %v1595, %v1597
      %v1599 = vrot.slane %v164, 1
      %v1600 = vrot.slane %v165, 1
      %v1601 = vsel %vm1533, %v1599, %v1600
      %v1602 = vrot.slane %v166, 1
      %v1603 = vsel %vm1533, %v1600, %v1602
      %v1604 = vrot.slane %v167, 1
      %v1605 = vrot.slane %v168, 1
      %v1606 = vsel %vm1533, %v1604, %v1605
      %v1607 = vrot.slane %v169, 1
      %v1608 = vsel %vm1533, %v1605, %v1607
      %v1609 = vrot.slane %v170, 1
      %v1610 = vrot.slane %v171, 1
      %v1611 = vsel %vm1533, %v1609, %v1610
      %v1612 = vrot.slane %v172, 1
      %v1613 = vsel %vm1533, %v1610, %v1612
      %v1614 = vrot.slane %v173, 1
      %v1615 = vrot.slane %v174, 1
      %v1616 = vsel %vm1533, %v1614, %v1615
      %v1617 = vrot.slane %v175, 1
      %v1618 = vsel %vm1533, %v1615, %v1617
      %v1619 = vrot.slane %v176, 1
      %v1620 = vrot.slane %v177, 1
      %v1621 = vsel %vm1533, %v1619, %v1620
      %v1622 = vrot.slane %v178, 1
      %v1623 = vsel %vm1533, %v1620, %v1622
      %v1624 = vrot.slane %v179, 1
      %v1625 = vrot.slane %v180, 1
      %v1626 = vsel %vm1533, %v1624, %v1625
      %v1627 = vrot.slane %v181, 1
      %v1628 = vsel %vm1533, %v1625, %v1627
      %v1629 = vrot.slane %v182, 1
      %v1630 = vrot.slane %v183, 1
      %v1631 = vsel %vm1533, %v1629, %v1630
      %v1632 = vrot.slane %v184, 1
      %v1633 = vsel %vm1533, %v1630, %v1632
      %v1634 = vrot.slane %v185, 1
      %v1635 = vrot.slane %v186, 1
      %v1636 = vsel %vm1533, %v1634, %v1635
      %v1637 = vrot.slane %v187, 1
      %v1638 = vsel %vm1533, %v1635, %v1637
      %v1639 = vrot.slane %v188, 1
      %v1640 = vrot.slane %v189, 1
      %v1641 = vsel %vm1533, %v1639, %v1640
      %v1642 = vrot.slane %v190, 1
      %v1643 = vsel %vm1533, %v1640, %v1642
      %v1644 = vrot.slane %v191, 1
      %v1645 = vrot.slane %v192, 1
      %v1646 = vsel %vm1533, %v1644, %v1645
      %v1647 = vrot.slane %v193, 1
      %v1648 = vsel %vm1533, %v1645, %v1647
      %v1649 = vrot.slane %v194, 1
      %v1650 = vrot.slane %v195, 1
      %v1651 = vsel %vm1533, %v1649, %v1650
      %v1652 = vrot.slane %v196, 1
      %v1653 = vsel %vm1533, %v1650, %v1652
      %v1654 = vrot.slane %v197, 1
      %v1655 = vrot.slane %v198, 1
      %v1656 = vsel %vm1533, %v1654, %v1655
      %v1657 = vrot.slane %v199, 1
      %v1658 = vsel %vm1533, %v1655, %v1657
      %v1659 = vrot.slane %v200, 1
      %v1660 = vrot.slane %v201, 1
      %v1661 = vsel %vm1533, %v1659, %v1660
      %v1662 = vrot.slane %v202, 1
      %v1663 = vsel %vm1533, %v1660, %v1662
      %v1664 = vrot.slane %v203, 1
      %v1665 = vrot.slane %v204, 1
      %v1666 = vsel %vm1533, %v1664, %v1665
      %v1667 = vrot.slane %v205, 1
      %v1668 = vsel %vm1533, %v1665, %v1667
      %v1669 = vrot.slane %v206, 1
      %v1670 = vrot.slane %v207, 1
      %v1671 = vsel %vm1533, %v1669, %v1670
      %v1672 = vrot.slane %v208, 1
      %v1673 = vsel %vm1533, %v1670, %v1672
      %v1674 = vrot.slane %v209, 1
      %v1675 = vrot.slane %v210, 1
      %v1676 = vsel %vm1533, %v1674, %v1675
      %v1677 = vrot.slane %v211, 1
      %v1678 = vsel %vm1533, %v1675, %v1677
      %v1679 = vrot.slane %v212, 1
      %v1680 = vrot.slane %v213, 1
      %v1681 = vsel %vm1533, %v1679, %v1680
      %v1682 = vrot.slane %v214, 1
      %v1683 = vsel %vm1533, %v1680, %v1682
      %v1684 = vrot.slane %v215, 1
      %v1685 = vrot.slane %v216, 1
      %v1686 = vsel %vm1533, %v1684, %v1685
      %v1687 = vrot.slane %v217, 1
      %v1688 = vsel %vm1533, %v1685, %v1687
      %v1689 = vrot.slane %v218, 1
      %v1690 = vrot.slane %v219, 1
      %v1691 = vsel %vm1533, %v1689, %v1690
      %v1692 = vrot.slane %v220, 1
      %v1693 = vsel %vm1533, %v1690, %v1692
      %v1694 = vrot.slane %v221, 1
      %v1695 = vrot.slane %v222, 1
      %v1696 = vsel %vm1533, %v1694, %v1695
      %v1697 = vrot.slane %v223, 1
      %v1698 = vsel %vm1533, %v1695, %v1697
      %v1699 = vrot.slane %v224, 1
      %v1700 = vrot.slane %v225, 1
      %v1701 = vsel %vm1533, %v1699, %v1700
      %v1702 = vrot.slane %v226, 1
      %v1703 = vsel %vm1533, %v1700, %v1702
      %v1704 = vrot.slane %v227, 1
      %v1705 = vrot.slane %v228, 1
      %v1706 = vsel %vm1533, %v1704, %v1705
      %v1707 = vrot.slane %v229, 1
      %v1708 = vsel %vm1533, %v1705, %v1707
      %v1709 = vrot.slane %v230, 1
      %v1710 = vrot.slane %v231, 1
      %v1711 = vsel %vm1533, %v1709, %v1710
      %v1712 = vrot.slane %v232, 1
      %v1713 = vsel %vm1533, %v1710, %v1712
      %v1714 = vrot.slane %v233, 1
      %v1715 = vrot.slane %v234, 1
      %v1716 = vsel %vm1533, %v1714, %v1715
      %v1717 = vrot.slane %v235, 1
      %v1718 = vsel %vm1533, %v1715, %v1717
      %v1719 = vrot.slane %v236, 1
      %v1720 = vrot.slane %v237, 1
      %v1721 = vsel %vm1533, %v1719, %v1720
      %v1722 = vrot.slane %v238, 1
      %v1723 = vsel %vm1533, %v1720, %v1722
      %v1724 = vrot.slane %v239, 1
      %v1725 = vrot.slane %v240, 1
      %v1726 = vsel %vm1533, %v1724, %v1725
      %v1727 = vrot.slane %v241, 1
      %v1728 = vsel %vm1533, %v1725, %v1727
      %v1729 = vrot.slane %v242, 1
      %v1730 = vrot.slane %v243, 1
      %v1731 = vsel %vm1533, %v1729, %v1730
      %v1732 = vrot.slane %v244, 1
      %v1733 = vsel %vm1533, %v1730, %v1732
      %v1734 = vrot.slane %v245, 1
      %v1735 = vrot.slane %v246, 1
      %v1736 = vsel %vm1533, %v1734, %v1735
      %v1737 = vrot.slane %v247, 1
      %v1738 = vsel %vm1533, %v1735, %v1737
      %v1739 = vrot.slane %v248, 1
      %v1740 = vrot.slane %v249, 1
      %v1741 = vsel %vm1533, %v1739, %v1740
      %v1742 = vrot.slane %v250, 1
      %v1743 = vsel %vm1533, %v1740, %v1742
      %v1744 = vrot.slane %v251, 1
      %v1745 = vrot.slane %v252, 1
      %v1746 = vsel %vm1533, %v1744, %v1745
      %v1747 = vrot.slane %v253, 1
      %v1748 = vsel %vm1533, %v1745, %v1747
      %v1749 = vrot.slane %v254, 1
      %v1750 = vrot.slane %v255, 1
      %v1751 = vsel %vm1533, %v1749, %v1750
      %v1752 = vrot.slane %v256, 1
      %v1753 = vsel %vm1533, %v1750, %v1752
      %v1754 = vrot.slane %v257, 1
      %v1755 = vrot.slane %v258, 1
      %v1756 = vsel %vm1533, %v1754, %v1755
      %v1757 = vrot.slane %v259, 1
      %v1758 = vsel %vm1533, %v1755, %v1757
      %v1759 = vrot.slane %v260, 1
      %v1760 = vrot.slane %v261, 1
      %v1761 = vsel %vm1533, %v1759, %v1760
      %v1762 = vrot.slane %v262, 1
      %v1763 = vsel %vm1533, %v1760, %v1762
      %v1764 = vrot.slane %v263, 1
      %v1765 = vrot.slane %v264, 1
      %v1766 = vsel %vm1533, %v1764, %v1765
      %v1767 = vrot.slane %v265, 1
      %v1768 = vsel %vm1533, %v1765, %v1767
      %v1769 = vrot.slane %v266, 1
      %v1770 = vrot.slane %v267, 1
      %v1771 = vsel %vm1533, %v1769, %v1770
      %v1772 = vrot.slane %v268, 1
      %v1773 = vsel %vm1533, %v1770, %v1772
      %v1774 = vrot.slane %v269, 1
      %v1775 = vrot.slane %v270, 1
      %v1776 = vsel %vm1533, %v1774, %v1775
      %v1777 = vrot.slane %v271, 1
      %v1778 = vsel %vm1533, %v1775, %v1777
      %v1779 = vrot.slane %v272, 1
      %v1780 = vrot.slane %v273, 1
      %v1781 = vsel %vm1533, %v1779, %v1780
      %v1782 = vrot.slane %v274, 1
      %v1783 = vsel %vm1533, %v1780, %v1782
      %v1784 = vrot.slane %v275, 1
      %v1785 = vrot.slane %v276, 1
      %v1786 = vsel %vm1533, %v1784, %v1785
      %v1787 = vrot.slane %v277, 1
      %v1788 = vsel %vm1533, %v1785, %v1787
      %v1789 = vrot.slane %v278, 1
      %v1790 = vrot.slane %v279, 1
      %v1791 = vsel %vm1533, %v1789, %v1790
      %v1792 = vrot.slane %v280, 1
      %v1793 = vsel %vm1533, %v1790, %v1792
      %v1794 = vrot.slane %v281, 1
      %v1795 = vrot.slane %v282, 1
      %v1796 = vsel %vm1533, %v1794, %v1795
      %v1797 = vrot.slane %v283, 1
      %v1798 = vsel %vm1533, %v1795, %v1797
      %v1799 = vrot.slane %v284, 1
      %v1800 = vrot.slane %v285, 1
      %v1801 = vsel %vm1533, %v1799, %v1800
      %v1802 = vrot.slane %v286, 1
      %v1803 = vsel %vm1533, %v1800, %v1802
      %v1804 = vrot.slane %v287, 1
      %v1805 = vrot.slane %v288, 1
      %v1806 = vsel %vm1533, %v1804, %v1805
      %v1807 = vrot.slane %v289, 1
      %v1808 = vsel %vm1533, %v1805, %v1807
      %v1809 = vrot.slane %v290, 1
      %v1810 = vrot.slane %v291, 1
      %v1811 = vsel %vm1533, %v1809, %v1810
      %v1812 = vrot.slane %v292, 1
      %v1813 = vsel %vm1533, %v1810, %v1812
      %v1814 = vrot.slane %v293, 1
      %v1815 = vrot.slane %v294, 1
      %v1816 = vsel %vm1533, %v1814, %v1815
      %v1817 = vrot.slane %v295, 1
      %v1818 = vsel %vm1533, %v1815, %v1817
      %v1819 = vrot.slane %v296, 1
      %v1820 = vrot.slane %v297, 1
      %v1821 = vsel %vm1533, %v1819, %v1820
      %v1822 = vrot.slane %v298, 1
      %v1823 = vsel %vm1533, %v1820, %v1822
      %v1824 = vrot.slane %v299, 1
      %v1825 = vrot.slane %v300, 1
      %v1826 = vsel %vm1533, %v1824, %v1825
      %v1827 = vrot.slane %v301, 1
      %v1828 = vsel %vm1533, %v1825, %v1827
      %v1829 = vrot.slane %v302, 1
      %v1830 = vrot.slane %v303, 1
      %v1831 = vsel %vm1533, %v1829, %v1830
      %v1832 = vrot.slane %v304, 1
      %v1833 = vsel %vm1533, %v1830, %v1832
      %v1834 = vrot.slane %v305, 1
      %v1835 = vrot.slane %v306, 1
      %v1836 = vsel %vm1533, %v1834, %v1835
      %v1837 = vrot.slane %v307, 1
      %v1838 = vsel %vm1533, %v1835, %v1837
      %v1839 = vrot.slane %v308, 1
      %v1840 = vrot.slane %v309, 1
      %v1841 = vsel %vm1533, %v1839, %v1840
      %v1842 = vrot.slane %v310, 1
      %v1843 = vsel %vm1533, %v1840, %v1842
      %v1844 = vrot.slane %v311, 1
      %v1845 = vrot.slane %v312, 1
      %v1846 = vsel %vm1533, %v1844, %v1845
      %v1847 = vrot.slane %v313, 1
      %v1848 = vsel %vm1533, %v1845, %v1847
      %v1849 = vrot.slane %v314, 1
      %v1850 = vrot.slane %v315, 1
      %v1851 = vsel %vm1533, %v1849, %v1850
      %v1852 = vrot.slane %v316, 1
      %v1853 = vsel %vm1533, %v1850, %v1852
      %v1982 = vmax.f32 %v1341, %v1536
      %v1983 = vmax.f32 %v1342, %v1538
      %v1984 = vmax.f32 %v1343, %v1541
      %v1985 = vmax.f32 %v1344, %v1543
      %v1986 = vmax.f32 %v1345, %v1546
      %v1987 = vmax.f32 %v1346, %v1548
      %v1988 = vmax.f32 %v1347, %v1551
      %v1989 = vmax.f32 %v1348, %v1553
      %v1990 = vmax.f32 %v1349, %v1556
      %v1991 = vmax.f32 %v1350, %v1558
      %v1992 = vmax.f32 %v1351, %v1561
      %v1993 = vmax.f32 %v1352, %v1563
      %v1994 = vmax.f32 %v1353, %v1566
      %v1995 = vmax.f32 %v1354, %v1568
      %v1996 = vmax.f32 %v1355, %v1571
      %v1997 = vmax.f32 %v1356, %v1573
      %v1998 = vmax.f32 %v1357, %v1576
      %v1999 = vmax.f32 %v1358, %v1578
      %v2000 = vmax.f32 %v1359, %v1581
      %v2001 = vmax.f32 %v1360, %v1583
      %v2002 = vmax.f32 %v1361, %v1586
      %v2003 = vmax.f32 %v1362, %v1588
      %v2004 = vmax.f32 %v1363, %v1591
      %v2005 = vmax.f32 %v1364, %v1593
      %v2006 = vmax.f32 %v1365, %v1596
      %v2007 = vmax.f32 %v1366, %v1598
      %v2008 = vmax.f32 %v1367, %v1601
      %v2009 = vmax.f32 %v1368, %v1603
      %v2010 = vmax.f32 %v1369, %v1606
      %v2011 = vmax.f32 %v1370, %v1608
      %v2012 = vmax.f32 %v1371, %v1611
      %v2013 = vmax.f32 %v1372, %v1613
      %v2014 = vmax.f32 %v1373, %v1616
      %v2015 = vmax.f32 %v1374, %v1618
      %v2016 = vmax.f32 %v1375, %v1621
      %v2017 = vmax.f32 %v1376, %v1623
      %v2018 = vmax.f32 %v1377, %v1626
      %v2019 = vmax.f32 %v1378, %v1628
      %v2020 = vmax.f32 %v1379, %v1631
      %v2021 = vmax.f32 %v1380, %v1633
      %v2022 = vmax.f32 %v1381, %v1636
      %v2023 = vmax.f32 %v1382, %v1638
      %v2024 = vmax.f32 %v1383, %v1641
      %v2025 = vmax.f32 %v1384, %v1643
      %v2026 = vmax.f32 %v1385, %v1646
      %v2027 = vmax.f32 %v1386, %v1648
      %v2028 = vmax.f32 %v1387, %v1651
      %v2029 = vmax.f32 %v1388, %v1653
      %v2030 = vmax.f32 %v1389, %v1656
      %v2031 = vmax.f32 %v1390, %v1658
      %v2032 = vmax.f32 %v1391, %v1661
      %v2033 = vmax.f32 %v1392, %v1663
      %v2034 = vmax.f32 %v1393, %v1666
      %v2035 = vmax.f32 %v1394, %v1668
      %v2036 = vmax.f32 %v1395, %v1671
      %v2037 = vmax.f32 %v1396, %v1673
      %v2038 = vmax.f32 %v1397, %v1676
      %v2039 = vmax.f32 %v1398, %v1678
      %v2040 = vmax.f32 %v1399, %v1681
      %v2041 = vmax.f32 %v1400, %v1683
      %v2042 = vmax.f32 %v1401, %v1686
      %v2043 = vmax.f32 %v1402, %v1688
      %v2044 = vmax.f32 %v1403, %v1691
      %v2045 = vmax.f32 %v1404, %v1693
      %v2046 = vmax.f32 %v1405, %v1696
      %v2047 = vmax.f32 %v1406, %v1698
      %v2048 = vmax.f32 %v1407, %v1701
      %v2049 = vmax.f32 %v1408, %v1703
      %v2050 = vmax.f32 %v1409, %v1706
      %v2051 = vmax.f32 %v1410, %v1708
      %v2052 = vmax.f32 %v1411, %v1711
      %v2053 = vmax.f32 %v1412, %v1713
      %v2054 = vmax.f32 %v1413, %v1716
      %v2055 = vmax.f32 %v1414, %v1718
      %v2056 = vmax.f32 %v1415, %v1721
      %v2057 = vmax.f32 %v1416, %v1723
      %v2058 = vmax.f32 %v1417, %v1726
      %v2059 = vmax.f32 %v1418, %v1728
      %v2060 = vmax.f32 %v1419, %v1731
      %v2061 = vmax.f32 %v1420, %v1733
      %v2062 = vmax.f32 %v1421, %v1736
      %v2063 = vmax.f32 %v1422, %v1738
      %v2064 = vmax.f32 %v1423, %v1741
      %v2065 = vmax.f32 %v1424, %v1743
      %v2066 = vmax.f32 %v1425, %v1746
      %v2067 = vmax.f32 %v1426, %v1748
      %v2068 = vmax.f32 %v1427, %v1751
      %v2069 = vmax.f32 %v1428, %v1753
      %v2070 = vmax.f32 %v1429, %v1756
      %v2071 = vmax.f32 %v1430, %v1758
      %v2072 = vmax.f32 %v1431, %v1761
      %v2073 = vmax.f32 %v1432, %v1763
      %v2074 = vmax.f32 %v1433, %v1766
      %v2075 = vmax.f32 %v1434, %v1768
      %v2076 = vmax.f32 %v1435, %v1771
      %v2077 = vmax.f32 %v1436, %v1773
      %v2078 = vmax.f32 %v1437, %v1776
      %v2079 = vmax.f32 %v1438, %v1778
      %v2080 = vmax.f32 %v1439, %v1781
      %v2081 = vmax.f32 %v1440, %v1783
      %v2082 = vmax.f32 %v1441, %v1786
      %v2083 = vmax.f32 %v1442, %v1788
      %v2084 = vmax.f32 %v1443, %v1791
      %v2085 = vmax.f32 %v1444, %v1793
      %v2086 = vmax.f32 %v1445, %v1796
      %v2087 = vmax.f32 %v1446, %v1798
      %v2088 = vmax.f32 %v1447, %v1801
      %v2089 = vmax.f32 %v1448, %v1803
      %v2090 = vmax.f32 %v1449, %v1806
      %v2091 = vmax.f32 %v1450, %v1808
      %v2092 = vmax.f32 %v1451, %v1811
      %v2093 = vmax.f32 %v1452, %v1813
      %v2094 = vmax.f32 %v1453, %v1816
      %v2095 = vmax.f32 %v1454, %v1818
      %v2096 = vmax.f32 %v1455, %v1821
      %v2097 = vmax.f32 %v1456, %v1823
      %v2098 = vmax.f32 %v1457, %v1826
      %v2099 = vmax.f32 %v1458, %v1828
      %v2100 = vmax.f32 %v1459, %v1831
      %v2101 = vmax.f32 %v1460, %v1833
      %v2102 = vmax.f32 %v1461, %v1836
      %v2103 = vmax.f32 %v1462, %v1838
      %v2104 = vmax.f32 %v1463, %v1841
      %v2105 = vmax.f32 %v1464, %v1843
      %v2106 = vmax.f32 %v1465, %v1846
      %v2107 = vmax.f32 %v1466, %v1848
      %v2108 = vmax.f32 %v1467, %v1851
      %v2109 = vmax.f32 %v1468, %v1853
      %2110 = vrot.lane.b32.xlu0 %v1536, 127
      %v2111 = vpop.permute.xlu0 %2110
      %2112 = vrot.lane.b32.xlu0 %v1538, 127
      %v2113 = vpop.permute.xlu0 %2112
      %2114 = vrot.lane.b32.xlu0 %v1541, 127
      %v2115 = vpop.permute.xlu0 %2114
      %2116 = vrot.lane.b32.xlu0 %v1543, 127
      %v2117 = vpop.permute.xlu0 %2116
      %2118 = vrot.lane.b32.xlu0 %v1546, 127
      %v2119 = vpop.permute.xlu0 %2118
      %2120 = vrot.lane.b32.xlu0 %v1548, 127
      %v2121 = vpop.permute.xlu0 %2120
      %2122 = vrot.lane.b32.xlu0 %v1551, 127
      %v2123 = vpop.permute.xlu0 %2122
      %2124 = vrot.lane.b32.xlu0 %v1553, 127
      %v2125 = vpop.permute.xlu0 %2124
      %2126 = vrot.lane.b32.xlu0 %v1556, 127
      %v2127 = vpop.permute.xlu0 %2126
      %2128 = vrot.lane.b32.xlu0 %v1558, 127
      %v2129 = vpop.permute.xlu0 %2128
      %2130 = vrot.lane.b32.xlu0 %v1561, 127
      %v2131 = vpop.permute.xlu0 %2130
      %2132 = vrot.lane.b32.xlu0 %v1563, 127
      %v2133 = vpop.permute.xlu0 %2132
      %2134 = vrot.lane.b32.xlu0 %v1566, 127
      %v2135 = vpop.permute.xlu0 %2134
      %2136 = vrot.lane.b32.xlu0 %v1568, 127
      %v2137 = vpop.permute.xlu0 %2136
      %2138 = vrot.lane.b32.xlu0 %v1571, 127
      %v2139 = vpop.permute.xlu0 %2138
      %2140 = vrot.lane.b32.xlu0 %v1573, 127
      %v2141 = vpop.permute.xlu0 %2140
      %2142 = vrot.lane.b32.xlu0 %v1576, 127
      %v2143 = vpop.permute.xlu0 %2142
      %2144 = vrot.lane.b32.xlu0 %v1578, 127
      %v2145 = vpop.permute.xlu0 %2144
      %2146 = vrot.lane.b32.xlu0 %v1581, 127
      %v2147 = vpop.permute.xlu0 %2146
      %2148 = vrot.lane.b32.xlu0 %v1583, 127
      %v2149 = vpop.permute.xlu0 %2148
      %2150 = vrot.lane.b32.xlu0 %v1586, 127
      %v2151 = vpop.permute.xlu0 %2150
      %2152 = vrot.lane.b32.xlu0 %v1588, 127
      %v2153 = vpop.permute.xlu0 %2152
      %2154 = vrot.lane.b32.xlu0 %v1591, 127
      %v2155 = vpop.permute.xlu0 %2154
      %2156 = vrot.lane.b32.xlu0 %v1593, 127
      %v2157 = vpop.permute.xlu0 %2156
      %2158 = vrot.lane.b32.xlu0 %v1596, 127
      %v2159 = vpop.permute.xlu0 %2158
      %2160 = vrot.lane.b32.xlu0 %v1598, 127
      %v2161 = vpop.permute.xlu0 %2160
      %2162 = vrot.lane.b32.xlu0 %v1601, 127
      %v2163 = vpop.permute.xlu0 %2162
      %2164 = vrot.lane.b32.xlu0 %v1603, 127
      %v2165 = vpop.permute.xlu0 %2164
      %2166 = vrot.lane.b32.xlu0 %v1606, 127
      %v2167 = vpop.permute.xlu0 %2166
      %2168 = vrot.lane.b32.xlu0 %v1608, 127
      %v2169 = vpop.permute.xlu0 %2168
      %2170 = vrot.lane.b32.xlu0 %v1611, 127
      %v2171 = vpop.permute.xlu0 %2170
      %2172 = vrot.lane.b32.xlu0 %v1613, 127
      %v2173 = vpop.permute.xlu0 %2172
      %2174 = vrot.lane.b32.xlu0 %v1616, 127
      %v2175 = vpop.permute.xlu0 %2174
      %2176 = vrot.lane.b32.xlu0 %v1618, 127
      %v2177 = vpop.permute.xlu0 %2176
      %2178 = vrot.lane.b32.xlu0 %v1621, 127
      %v2179 = vpop.permute.xlu0 %2178
      %2180 = vrot.lane.b32.xlu0 %v1623, 127
      %v2181 = vpop.permute.xlu0 %2180
      %2182 = vrot.lane.b32.xlu0 %v1626, 127
      %v2183 = vpop.permute.xlu0 %2182
      %2184 = vrot.lane.b32.xlu0 %v1628, 127
      %v2185 = vpop.permute.xlu0 %2184
      %2186 = vrot.lane.b32.xlu0 %v1631, 127
      %v2187 = vpop.permute.xlu0 %2186
      %2188 = vrot.lane.b32.xlu0 %v1633, 127
      %v2189 = vpop.permute.xlu0 %2188
      %2190 = vrot.lane.b32.xlu0 %v1636, 127
      %v2191 = vpop.permute.xlu0 %2190
      %2192 = vrot.lane.b32.xlu0 %v1638, 127
      %v2193 = vpop.permute.xlu0 %2192
      %2194 = vrot.lane.b32.xlu0 %v1641, 127
      %v2195 = vpop.permute.xlu0 %2194
      %2196 = vrot.lane.b32.xlu0 %v1643, 127
      %v2197 = vpop.permute.xlu0 %2196
      %2198 = vrot.lane.b32.xlu0 %v1646, 127
      %v2199 = vpop.permute.xlu0 %2198
      %2200 = vrot.lane.b32.xlu0 %v1648, 127
      %v2201 = vpop.permute.xlu0 %2200
      %2202 = vrot.lane.b32.xlu0 %v1651, 127
      %v2203 = vpop.permute.xlu0 %2202
      %2204 = vrot.lane.b32.xlu0 %v1653, 127
      %v2205 = vpop.permute.xlu0 %2204
      %2206 = vrot.lane.b32.xlu0 %v1656, 127
      %v2207 = vpop.permute.xlu0 %2206
      %2208 = vrot.lane.b32.xlu0 %v1658, 127
      %v2209 = vpop.permute.xlu0 %2208
      %2210 = vrot.lane.b32.xlu0 %v1661, 127
      %v2211 = vpop.permute.xlu0 %2210
      %2212 = vrot.lane.b32.xlu0 %v1663, 127
      %v2213 = vpop.permute.xlu0 %2212
      %2214 = vrot.lane.b32.xlu0 %v1666, 127
      %v2215 = vpop.permute.xlu0 %2214
      %2216 = vrot.lane.b32.xlu0 %v1668, 127
      %v2217 = vpop.permute.xlu0 %2216
      %2218 = vrot.lane.b32.xlu0 %v1671, 127
      %v2219 = vpop.permute.xlu0 %2218
      %2220 = vrot.lane.b32.xlu0 %v1673, 127
      %v2221 = vpop.permute.xlu0 %2220
      %2222 = vrot.lane.b32.xlu0 %v1676, 127
      %v2223 = vpop.permute.xlu0 %2222
      %2224 = vrot.lane.b32.xlu0 %v1678, 127
      %v2225 = vpop.permute.xlu0 %2224
      %2226 = vrot.lane.b32.xlu0 %v1681, 127
      %v2227 = vpop.permute.xlu0 %2226
      %2228 = vrot.lane.b32.xlu0 %v1683, 127
      %v2229 = vpop.permute.xlu0 %2228
      %2230 = vrot.lane.b32.xlu0 %v1686, 127
      %v2231 = vpop.permute.xlu0 %2230
      %2232 = vrot.lane.b32.xlu0 %v1688, 127
      %v2233 = vpop.permute.xlu0 %2232
      %2234 = vrot.lane.b32.xlu0 %v1691, 127
      %v2235 = vpop.permute.xlu0 %2234
      %2236 = vrot.lane.b32.xlu0 %v1693, 127
      %v2237 = vpop.permute.xlu0 %2236
      %2238 = vrot.lane.b32.xlu0 %v1696, 127
      %v2239 = vpop.permute.xlu0 %2238
      %2240 = vrot.lane.b32.xlu0 %v1698, 127
      %v2241 = vpop.permute.xlu0 %2240
      %2242 = vrot.lane.b32.xlu0 %v1701, 127
      %v2243 = vpop.permute.xlu0 %2242
      %2244 = vrot.lane.b32.xlu0 %v1703, 127
      %v2245 = vpop.permute.xlu0 %2244
      %2246 = vrot.lane.b32.xlu0 %v1706, 127
      %v2247 = vpop.permute.xlu0 %2246
      %2248 = vrot.lane.b32.xlu0 %v1708, 127
      %v2249 = vpop.permute.xlu0 %2248
      %2250 = vrot.lane.b32.xlu0 %v1711, 127
      %v2251 = vpop.permute.xlu0 %2250
      %2252 = vrot.lane.b32.xlu0 %v1713, 127
      %v2253 = vpop.permute.xlu0 %2252
      %2254 = vrot.lane.b32.xlu0 %v1716, 127
      %v2255 = vpop.permute.xlu0 %2254
      %2256 = vrot.lane.b32.xlu0 %v1718, 127
      %v2257 = vpop.permute.xlu0 %2256
      %2258 = vrot.lane.b32.xlu0 %v1721, 127
      %v2259 = vpop.permute.xlu0 %2258
      %2260 = vrot.lane.b32.xlu0 %v1723, 127
      %v2261 = vpop.permute.xlu0 %2260
      %2262 = vrot.lane.b32.xlu0 %v1726, 127
      %v2263 = vpop.permute.xlu0 %2262
      %2264 = vrot.lane.b32.xlu0 %v1728, 127
      %v2265 = vpop.permute.xlu0 %2264
      %2266 = vrot.lane.b32.xlu0 %v1731, 127
      %v2267 = vpop.permute.xlu0 %2266
      %2268 = vrot.lane.b32.xlu0 %v1733, 127
      %v2269 = vpop.permute.xlu0 %2268
      %2270 = vrot.lane.b32.xlu0 %v1736, 127
      %v2271 = vpop.permute.xlu0 %2270
      %2272 = vrot.lane.b32.xlu0 %v1738, 127
      %v2273 = vpop.permute.xlu0 %2272
      %2274 = vrot.lane.b32.xlu0 %v1741, 127
      %v2275 = vpop.permute.xlu0 %2274
      %2276 = vrot.lane.b32.xlu0 %v1743, 127
      %v2277 = vpop.permute.xlu0 %2276
      %2278 = vrot.lane.b32.xlu0 %v1746, 127
      %v2279 = vpop.permute.xlu0 %2278
      %2280 = vrot.lane.b32.xlu0 %v1748, 127
      %v2281 = vpop.permute.xlu0 %2280
      %2282 = vrot.lane.b32.xlu0 %v1751, 127
      %v2283 = vpop.permute.xlu0 %2282
      %2284 = vrot.lane.b32.xlu0 %v1753, 127
      %v2285 = vpop.permute.xlu0 %2284
      %2286 = vrot.lane.b32.xlu0 %v1756, 127
      %v2287 = vpop.permute.xlu0 %2286
      %2288 = vrot.lane.b32.xlu0 %v1758, 127
      %v2289 = vpop.permute.xlu0 %2288
      %2290 = vrot.lane.b32.xlu0 %v1761, 127
      %v2291 = vpop.permute.xlu0 %2290
      %2292 = vrot.lane.b32.xlu0 %v1763, 127
      %v2293 = vpop.permute.xlu0 %2292
      %2294 = vrot.lane.b32.xlu0 %v1766, 127
      %v2295 = vpop.permute.xlu0 %2294
      %2296 = vrot.lane.b32.xlu0 %v1768, 127
      %v2297 = vpop.permute.xlu0 %2296
      %2298 = vrot.lane.b32.xlu0 %v1771, 127
      %v2299 = vpop.permute.xlu0 %2298
      %2300 = vrot.lane.b32.xlu0 %v1773, 127
      %v2301 = vpop.permute.xlu0 %2300
      %2302 = vrot.lane.b32.xlu0 %v1776, 127
      %v2303 = vpop.permute.xlu0 %2302
      %2304 = vrot.lane.b32.xlu0 %v1778, 127
      %v2305 = vpop.permute.xlu0 %2304
      %2306 = vrot.lane.b32.xlu0 %v1781, 127
      %v2307 = vpop.permute.xlu0 %2306
      %2308 = vrot.lane.b32.xlu0 %v1783, 127
      %v2309 = vpop.permute.xlu0 %2308
      %2310 = vrot.lane.b32.xlu0 %v1786, 127
      %v2311 = vpop.permute.xlu0 %2310
      %2312 = vrot.lane.b32.xlu0 %v1788, 127
      %v2313 = vpop.permute.xlu0 %2312
      %2314 = vrot.lane.b32.xlu0 %v1791, 127
      %v2315 = vpop.permute.xlu0 %2314
      %2316 = vrot.lane.b32.xlu0 %v1793, 127
      %v2317 = vpop.permute.xlu0 %2316
      %2318 = vrot.lane.b32.xlu0 %v1796, 127
      %v2319 = vpop.permute.xlu0 %2318
      %2320 = vrot.lane.b32.xlu0 %v1798, 127
      %v2321 = vpop.permute.xlu0 %2320
      %2322 = vrot.lane.b32.xlu0 %v1801, 127
      %v2323 = vpop.permute.xlu0 %2322
      %2324 = vrot.lane.b32.xlu0 %v1803, 127
      %v2325 = vpop.permute.xlu0 %2324
      %2326 = vrot.lane.b32.xlu0 %v1806, 127
      %v2327 = vpop.permute.xlu0 %2326
      %2328 = vrot.lane.b32.xlu0 %v1808, 127
      %v2329 = vpop.permute.xlu0 %2328
      %2330 = vrot.lane.b32.xlu0 %v1811, 127
      %v2331 = vpop.permute.xlu0 %2330
      %2332 = vrot.lane.b32.xlu0 %v1813, 127
      %v2333 = vpop.permute.xlu0 %2332
      %2334 = vrot.lane.b32.xlu0 %v1816, 127
      %v2335 = vpop.permute.xlu0 %2334
      %2336 = vrot.lane.b32.xlu0 %v1818, 127
      %v2337 = vpop.permute.xlu0 %2336
      %2338 = vrot.lane.b32.xlu0 %v1821, 127
      %v2339 = vpop.permute.xlu0 %2338
      %2340 = vrot.lane.b32.xlu0 %v1823, 127
      %v2341 = vpop.permute.xlu0 %2340
      %2342 = vrot.lane.b32.xlu0 %v1826, 127
      %v2343 = vpop.permute.xlu0 %2342
      %2344 = vrot.lane.b32.xlu0 %v1828, 127
      %v2345 = vpop.permute.xlu0 %2344
      %2346 = vrot.lane.b32.xlu0 %v1831, 127
      %v2347 = vpop.permute.xlu0 %2346
      %2348 = vrot.lane.b32.xlu0 %v1833, 127
      %v2349 = vpop.permute.xlu0 %2348
      %2350 = vrot.lane.b32.xlu0 %v1836, 127
      %v2351 = vpop.permute.xlu0 %2350
      %2352 = vrot.lane.b32.xlu0 %v1838, 127
      %v2353 = vpop.permute.xlu0 %2352
      %2354 = vrot.lane.b32.xlu0 %v1841, 127
      %v2355 = vpop.permute.xlu0 %2354
      %2356 = vrot.lane.b32.xlu0 %v1843, 127
      %v2357 = vpop.permute.xlu0 %2356
      %2358 = vrot.lane.b32.xlu0 %v1846, 127
      %v2359 = vpop.permute.xlu0 %2358
      %2360 = vrot.lane.b32.xlu0 %v1848, 127
      %v2361 = vpop.permute.xlu0 %2360
      %2362 = vrot.lane.b32.xlu0 %v1851, 127
      %v2363 = vpop.permute.xlu0 %2362
      %2364 = vrot.lane.b32.xlu0 %v1853, 127
      %v2365 = vpop.permute.xlu0 %2364
      %v2494 = vmax.f32 %v1982, %v2111
      %v2495 = vmax.f32 %v1983, %v2113
      %v2496 = vmax.f32 %v1984, %v2115
      %v2497 = vmax.f32 %v1985, %v2117
      %v2498 = vmax.f32 %v1986, %v2119
      %v2499 = vmax.f32 %v1987, %v2121
      %v2500 = vmax.f32 %v1988, %v2123
      %v2501 = vmax.f32 %v1989, %v2125
      %v2502 = vmax.f32 %v1990, %v2127
      %v2503 = vmax.f32 %v1991, %v2129
      %v2504 = vmax.f32 %v1992, %v2131
      %v2505 = vmax.f32 %v1993, %v2133
      %v2506 = vmax.f32 %v1994, %v2135
      %v2507 = vmax.f32 %v1995, %v2137
      %v2508 = vmax.f32 %v1996, %v2139
      %v2509 = vmax.f32 %v1997, %v2141
      %v2510 = vmax.f32 %v1998, %v2143
      %v2511 = vmax.f32 %v1999, %v2145
      %v2512 = vmax.f32 %v2000, %v2147
      %v2513 = vmax.f32 %v2001, %v2149
      %v2514 = vmax.f32 %v2002, %v2151
      %v2515 = vmax.f32 %v2003, %v2153
      %v2516 = vmax.f32 %v2004, %v2155
      %v2517 = vmax.f32 %v2005, %v2157
      %v2518 = vmax.f32 %v2006, %v2159
      %v2519 = vmax.f32 %v2007, %v2161
      %v2520 = vmax.f32 %v2008, %v2163
      %v2521 = vmax.f32 %v2009, %v2165
      %v2522 = vmax.f32 %v2010, %v2167
      %v2523 = vmax.f32 %v2011, %v2169
      %v2524 = vmax.f32 %v2012, %v2171
      %v2525 = vmax.f32 %v2013, %v2173
      %v2526 = vmax.f32 %v2014, %v2175
      %v2527 = vmax.f32 %v2015, %v2177
      %v2528 = vmax.f32 %v2016, %v2179
      %v2529 = vmax.f32 %v2017, %v2181
      %v2530 = vmax.f32 %v2018, %v2183
      %v2531 = vmax.f32 %v2019, %v2185
      %v2532 = vmax.f32 %v2020, %v2187
      %v2533 = vmax.f32 %v2021, %v2189
      %v2534 = vmax.f32 %v2022, %v2191
      %v2535 = vmax.f32 %v2023, %v2193
      %v2536 = vmax.f32 %v2024, %v2195
      %v2537 = vmax.f32 %v2025, %v2197
      %v2538 = vmax.f32 %v2026, %v2199
      %v2539 = vmax.f32 %v2027, %v2201
      %v2540 = vmax.f32 %v2028, %v2203
      %v2541 = vmax.f32 %v2029, %v2205
      %v2542 = vmax.f32 %v2030, %v2207
      %v2543 = vmax.f32 %v2031, %v2209
      %v2544 = vmax.f32 %v2032, %v2211
      %v2545 = vmax.f32 %v2033, %v2213
      %v2546 = vmax.f32 %v2034, %v2215
      %v2547 = vmax.f32 %v2035, %v2217
      %v2548 = vmax.f32 %v2036, %v2219
      %v2549 = vmax.f32 %v2037, %v2221
      %v2550 = vmax.f32 %v2038, %v2223
      %v2551 = vmax.f32 %v2039, %v2225
      %v2552 = vmax.f32 %v2040, %v2227
      %v2553 = vmax.f32 %v2041, %v2229
      %v2554 = vmax.f32 %v2042, %v2231
      %v2555 = vmax.f32 %v2043, %v2233
      %v2556 = vmax.f32 %v2044, %v2235
      %v2557 = vmax.f32 %v2045, %v2237
      %v2558 = vmax.f32 %v2046, %v2239
      %v2559 = vmax.f32 %v2047, %v2241
      %v2560 = vmax.f32 %v2048, %v2243
      %v2561 = vmax.f32 %v2049, %v2245
      %v2562 = vmax.f32 %v2050, %v2247
      %v2563 = vmax.f32 %v2051, %v2249
      %v2564 = vmax.f32 %v2052, %v2251
      %v2565 = vmax.f32 %v2053, %v2253
      %v2566 = vmax.f32 %v2054, %v2255
      %v2567 = vmax.f32 %v2055, %v2257
      %v2568 = vmax.f32 %v2056, %v2259
      %v2569 = vmax.f32 %v2057, %v2261
      %v2570 = vmax.f32 %v2058, %v2263
      %v2571 = vmax.f32 %v2059, %v2265
      %v2572 = vmax.f32 %v2060, %v2267
      %v2573 = vmax.f32 %v2061, %v2269
      %v2574 = vmax.f32 %v2062, %v2271
      %v2575 = vmax.f32 %v2063, %v2273
      %v2576 = vmax.f32 %v2064, %v2275
      %v2577 = vmax.f32 %v2065, %v2277
      %v2578 = vmax.f32 %v2066, %v2279
      %v2579 = vmax.f32 %v2067, %v2281
      %v2580 = vmax.f32 %v2068, %v2283
      %v2581 = vmax.f32 %v2069, %v2285
      %v2582 = vmax.f32 %v2070, %v2287
      %v2583 = vmax.f32 %v2071, %v2289
      %v2584 = vmax.f32 %v2072, %v2291
      %v2585 = vmax.f32 %v2073, %v2293
      %v2586 = vmax.f32 %v2074, %v2295
      %v2587 = vmax.f32 %v2075, %v2297
      %v2588 = vmax.f32 %v2076, %v2299
      %v2589 = vmax.f32 %v2077, %v2301
      %v2590 = vmax.f32 %v2078, %v2303
      %v2591 = vmax.f32 %v2079, %v2305
      %v2592 = vmax.f32 %v2080, %v2307
      %v2593 = vmax.f32 %v2081, %v2309
      %v2594 = vmax.f32 %v2082, %v2311
      %v2595 = vmax.f32 %v2083, %v2313
      %v2596 = vmax.f32 %v2084, %v2315
      %v2597 = vmax.f32 %v2085, %v2317
      %v2598 = vmax.f32 %v2086, %v2319
      %v2599 = vmax.f32 %v2087, %v2321
      %v2600 = vmax.f32 %v2088, %v2323
      %v2601 = vmax.f32 %v2089, %v2325
      %v2602 = vmax.f32 %v2090, %v2327
      %v2603 = vmax.f32 %v2091, %v2329
      %v2604 = vmax.f32 %v2092, %v2331
      %v2605 = vmax.f32 %v2093, %v2333
      %v2606 = vmax.f32 %v2094, %v2335
      %v2607 = vmax.f32 %v2095, %v2337
      %v2608 = vmax.f32 %v2096, %v2339
      %v2609 = vmax.f32 %v2097, %v2341
      %v2610 = vmax.f32 %v2098, %v2343
      %v2611 = vmax.f32 %v2099, %v2345
      %v2612 = vmax.f32 %v2100, %v2347
      %v2613 = vmax.f32 %v2101, %v2349
      %v2614 = vmax.f32 %v2102, %v2351
      %v2615 = vmax.f32 %v2103, %v2353
      %v2616 = vmax.f32 %v2104, %v2355
      %v2617 = vmax.f32 %v2105, %v2357
      %v2618 = vmax.f32 %v2106, %v2359
      %v2619 = vmax.f32 %v2107, %v2361
      %v2620 = vmax.f32 %v2108, %v2363
      %v2621 = vmax.f32 %v2109, %v2365
      %2622 = vrot.lane.b32.xlu0 %v1536, 126
      %v2623 = vpop.permute.xlu0 %2622
      %2624 = vrot.lane.b32.xlu0 %v1538, 126
      %v2625 = vpop.permute.xlu0 %2624
      %2626 = vrot.lane.b32.xlu0 %v1541, 126
      %v2627 = vpop.permute.xlu0 %2626
      %2628 = vrot.lane.b32.xlu0 %v1543, 126
      %v2629 = vpop.permute.xlu0 %2628
      %2630 = vrot.lane.b32.xlu0 %v1546, 126
      %v2631 = vpop.permute.xlu0 %2630
      %2632 = vrot.lane.b32.xlu0 %v1548, 126
      %v2633 = vpop.permute.xlu0 %2632
      %2634 = vrot.lane.b32.xlu0 %v1551, 126
      %v2635 = vpop.permute.xlu0 %2634
      %2636 = vrot.lane.b32.xlu0 %v1553, 126
      %v2637 = vpop.permute.xlu0 %2636
      %2638 = vrot.lane.b32.xlu0 %v1556, 126
      %v2639 = vpop.permute.xlu0 %2638
      %2640 = vrot.lane.b32.xlu0 %v1558, 126
      %v2641 = vpop.permute.xlu0 %2640
      %2642 = vrot.lane.b32.xlu0 %v1561, 126
      %v2643 = vpop.permute.xlu0 %2642
      %2644 = vrot.lane.b32.xlu0 %v1563, 126
      %v2645 = vpop.permute.xlu0 %2644
      %2646 = vrot.lane.b32.xlu0 %v1566, 126
      %v2647 = vpop.permute.xlu0 %2646
      %2648 = vrot.lane.b32.xlu0 %v1568, 126
      %v2649 = vpop.permute.xlu0 %2648
      %2650 = vrot.lane.b32.xlu0 %v1571, 126
      %v2651 = vpop.permute.xlu0 %2650
      %2652 = vrot.lane.b32.xlu0 %v1573, 126
      %v2653 = vpop.permute.xlu0 %2652
      %2654 = vrot.lane.b32.xlu0 %v1576, 126
      %v2655 = vpop.permute.xlu0 %2654
      %2656 = vrot.lane.b32.xlu0 %v1578, 126
      %v2657 = vpop.permute.xlu0 %2656
      %2658 = vrot.lane.b32.xlu0 %v1581, 126
      %v2659 = vpop.permute.xlu0 %2658
      %2660 = vrot.lane.b32.xlu0 %v1583, 126
      %v2661 = vpop.permute.xlu0 %2660
      %2662 = vrot.lane.b32.xlu0 %v1586, 126
      %v2663 = vpop.permute.xlu0 %2662
      %2664 = vrot.lane.b32.xlu0 %v1588, 126
      %v2665 = vpop.permute.xlu0 %2664
      %2666 = vrot.lane.b32.xlu0 %v1591, 126
      %v2667 = vpop.permute.xlu0 %2666
      %2668 = vrot.lane.b32.xlu0 %v1593, 126
      %v2669 = vpop.permute.xlu0 %2668
      %2670 = vrot.lane.b32.xlu0 %v1596, 126
      %v2671 = vpop.permute.xlu0 %2670
      %2672 = vrot.lane.b32.xlu0 %v1598, 126
      %v2673 = vpop.permute.xlu0 %2672
      %2674 = vrot.lane.b32.xlu0 %v1601, 126
      %v2675 = vpop.permute.xlu0 %2674
      %2676 = vrot.lane.b32.xlu0 %v1603, 126
      %v2677 = vpop.permute.xlu0 %2676
      %2678 = vrot.lane.b32.xlu0 %v1606, 126
      %v2679 = vpop.permute.xlu0 %2678
      %2680 = vrot.lane.b32.xlu0 %v1608, 126
      %v2681 = vpop.permute.xlu0 %2680
      %2682 = vrot.lane.b32.xlu0 %v1611, 126
      %v2683 = vpop.permute.xlu0 %2682
      %2684 = vrot.lane.b32.xlu0 %v1613, 126
      %v2685 = vpop.permute.xlu0 %2684
      %2686 = vrot.lane.b32.xlu0 %v1616, 126
      %v2687 = vpop.permute.xlu0 %2686
      %2688 = vrot.lane.b32.xlu0 %v1618, 126
      %v2689 = vpop.permute.xlu0 %2688
      %2690 = vrot.lane.b32.xlu0 %v1621, 126
      %v2691 = vpop.permute.xlu0 %2690
      %2692 = vrot.lane.b32.xlu0 %v1623, 126
      %v2693 = vpop.permute.xlu0 %2692
      %2694 = vrot.lane.b32.xlu0 %v1626, 126
      %v2695 = vpop.permute.xlu0 %2694
      %2696 = vrot.lane.b32.xlu0 %v1628, 126
      %v2697 = vpop.permute.xlu0 %2696
      %2698 = vrot.lane.b32.xlu0 %v1631, 126
      %v2699 = vpop.permute.xlu0 %2698
      %2700 = vrot.lane.b32.xlu0 %v1633, 126
      %v2701 = vpop.permute.xlu0 %2700
      %2702 = vrot.lane.b32.xlu0 %v1636, 126
      %v2703 = vpop.permute.xlu0 %2702
      %2704 = vrot.lane.b32.xlu0 %v1638, 126
      %v2705 = vpop.permute.xlu0 %2704
      %2706 = vrot.lane.b32.xlu0 %v1641, 126
      %v2707 = vpop.permute.xlu0 %2706
      %2708 = vrot.lane.b32.xlu0 %v1643, 126
      %v2709 = vpop.permute.xlu0 %2708
      %2710 = vrot.lane.b32.xlu0 %v1646, 126
      %v2711 = vpop.permute.xlu0 %2710
      %2712 = vrot.lane.b32.xlu0 %v1648, 126
      %v2713 = vpop.permute.xlu0 %2712
      %2714 = vrot.lane.b32.xlu0 %v1651, 126
      %v2715 = vpop.permute.xlu0 %2714
      %2716 = vrot.lane.b32.xlu0 %v1653, 126
      %v2717 = vpop.permute.xlu0 %2716
      %2718 = vrot.lane.b32.xlu0 %v1656, 126
      %v2719 = vpop.permute.xlu0 %2718
      %2720 = vrot.lane.b32.xlu0 %v1658, 126
      %v2721 = vpop.permute.xlu0 %2720
      %2722 = vrot.lane.b32.xlu0 %v1661, 126
      %v2723 = vpop.permute.xlu0 %2722
      %2724 = vrot.lane.b32.xlu0 %v1663, 126
      %v2725 = vpop.permute.xlu0 %2724
      %2726 = vrot.lane.b32.xlu0 %v1666, 126
      %v2727 = vpop.permute.xlu0 %2726
      %2728 = vrot.lane.b32.xlu0 %v1668, 126
      %v2729 = vpop.permute.xlu0 %2728
      %2730 = vrot.lane.b32.xlu0 %v1671, 126
      %v2731 = vpop.permute.xlu0 %2730
      %2732 = vrot.lane.b32.xlu0 %v1673, 126
      %v2733 = vpop.permute.xlu0 %2732
      %2734 = vrot.lane.b32.xlu0 %v1676, 126
      %v2735 = vpop.permute.xlu0 %2734
      %2736 = vrot.lane.b32.xlu0 %v1678, 126
      %v2737 = vpop.permute.xlu0 %2736
      %2738 = vrot.lane.b32.xlu0 %v1681, 126
      %v2739 = vpop.permute.xlu0 %2738
      %2740 = vrot.lane.b32.xlu0 %v1683, 126
      %v2741 = vpop.permute.xlu0 %2740
      %2742 = vrot.lane.b32.xlu0 %v1686, 126
      %v2743 = vpop.permute.xlu0 %2742
      %2744 = vrot.lane.b32.xlu0 %v1688, 126
      %v2745 = vpop.permute.xlu0 %2744
      %2746 = vrot.lane.b32.xlu0 %v1691, 126
      %v2747 = vpop.permute.xlu0 %2746
      %2748 = vrot.lane.b32.xlu0 %v1693, 126
      %v2749 = vpop.permute.xlu0 %2748
      %2750 = vrot.lane.b32.xlu0 %v1696, 126
      %v2751 = vpop.permute.xlu0 %2750
      %2752 = vrot.lane.b32.xlu0 %v1698, 126
      %v2753 = vpop.permute.xlu0 %2752
      %2754 = vrot.lane.b32.xlu0 %v1701, 126
      %v2755 = vpop.permute.xlu0 %2754
      %2756 = vrot.lane.b32.xlu0 %v1703, 126
      %v2757 = vpop.permute.xlu0 %2756
      %2758 = vrot.lane.b32.xlu0 %v1706, 126
      %v2759 = vpop.permute.xlu0 %2758
      %2760 = vrot.lane.b32.xlu0 %v1708, 126
      %v2761 = vpop.permute.xlu0 %2760
      %2762 = vrot.lane.b32.xlu0 %v1711, 126
      %v2763 = vpop.permute.xlu0 %2762
      %2764 = vrot.lane.b32.xlu0 %v1713, 126
      %v2765 = vpop.permute.xlu0 %2764
      %2766 = vrot.lane.b32.xlu0 %v1716, 126
      %v2767 = vpop.permute.xlu0 %2766
      %2768 = vrot.lane.b32.xlu0 %v1718, 126
      %v2769 = vpop.permute.xlu0 %2768
      %2770 = vrot.lane.b32.xlu0 %v1721, 126
      %v2771 = vpop.permute.xlu0 %2770
      %2772 = vrot.lane.b32.xlu0 %v1723, 126
      %v2773 = vpop.permute.xlu0 %2772
      %2774 = vrot.lane.b32.xlu0 %v1726, 126
      %v2775 = vpop.permute.xlu0 %2774
      %2776 = vrot.lane.b32.xlu0 %v1728, 126
      %v2777 = vpop.permute.xlu0 %2776
      %2778 = vrot.lane.b32.xlu0 %v1731, 126
      %v2779 = vpop.permute.xlu0 %2778
      %2780 = vrot.lane.b32.xlu0 %v1733, 126
      %v2781 = vpop.permute.xlu0 %2780
      %2782 = vrot.lane.b32.xlu0 %v1736, 126
      %v2783 = vpop.permute.xlu0 %2782
      %2784 = vrot.lane.b32.xlu0 %v1738, 126
      %v2785 = vpop.permute.xlu0 %2784
      %2786 = vrot.lane.b32.xlu0 %v1741, 126
      %v2787 = vpop.permute.xlu0 %2786
      %2788 = vrot.lane.b32.xlu0 %v1743, 126
      %v2789 = vpop.permute.xlu0 %2788
      %2790 = vrot.lane.b32.xlu0 %v1746, 126
      %v2791 = vpop.permute.xlu0 %2790
      %2792 = vrot.lane.b32.xlu0 %v1748, 126
      %v2793 = vpop.permute.xlu0 %2792
      %2794 = vrot.lane.b32.xlu0 %v1751, 126
      %v2795 = vpop.permute.xlu0 %2794
      %2796 = vrot.lane.b32.xlu0 %v1753, 126
      %v2797 = vpop.permute.xlu0 %2796
      %2798 = vrot.lane.b32.xlu0 %v1756, 126
      %v2799 = vpop.permute.xlu0 %2798
      %2800 = vrot.lane.b32.xlu0 %v1758, 126
      %v2801 = vpop.permute.xlu0 %2800
      %2802 = vrot.lane.b32.xlu0 %v1761, 126
      %v2803 = vpop.permute.xlu0 %2802
      %2804 = vrot.lane.b32.xlu0 %v1763, 126
      %v2805 = vpop.permute.xlu0 %2804
      %2806 = vrot.lane.b32.xlu0 %v1766, 126
      %v2807 = vpop.permute.xlu0 %2806
      %2808 = vrot.lane.b32.xlu0 %v1768, 126
      %v2809 = vpop.permute.xlu0 %2808
      %2810 = vrot.lane.b32.xlu0 %v1771, 126
      %v2811 = vpop.permute.xlu0 %2810
      %2812 = vrot.lane.b32.xlu0 %v1773, 126
      %v2813 = vpop.permute.xlu0 %2812
      %2814 = vrot.lane.b32.xlu0 %v1776, 126
      %v2815 = vpop.permute.xlu0 %2814
      %2816 = vrot.lane.b32.xlu0 %v1778, 126
      %v2817 = vpop.permute.xlu0 %2816
      %2818 = vrot.lane.b32.xlu0 %v1781, 126
      %v2819 = vpop.permute.xlu0 %2818
      %2820 = vrot.lane.b32.xlu0 %v1783, 126
      %v2821 = vpop.permute.xlu0 %2820
      %2822 = vrot.lane.b32.xlu0 %v1786, 126
      %v2823 = vpop.permute.xlu0 %2822
      %2824 = vrot.lane.b32.xlu0 %v1788, 126
      %v2825 = vpop.permute.xlu0 %2824
      %2826 = vrot.lane.b32.xlu0 %v1791, 126
      %v2827 = vpop.permute.xlu0 %2826
      %2828 = vrot.lane.b32.xlu0 %v1793, 126
      %v2829 = vpop.permute.xlu0 %2828
      %2830 = vrot.lane.b32.xlu0 %v1796, 126
      %v2831 = vpop.permute.xlu0 %2830
      %2832 = vrot.lane.b32.xlu0 %v1798, 126
      %v2833 = vpop.permute.xlu0 %2832
      %2834 = vrot.lane.b32.xlu0 %v1801, 126
      %v2835 = vpop.permute.xlu0 %2834
      %2836 = vrot.lane.b32.xlu0 %v1803, 126
      %v2837 = vpop.permute.xlu0 %2836
      %2838 = vrot.lane.b32.xlu0 %v1806, 126
      %v2839 = vpop.permute.xlu0 %2838
      %2840 = vrot.lane.b32.xlu0 %v1808, 126
      %v2841 = vpop.permute.xlu0 %2840
      %2842 = vrot.lane.b32.xlu0 %v1811, 126
      %v2843 = vpop.permute.xlu0 %2842
      %2844 = vrot.lane.b32.xlu0 %v1813, 126
      %v2845 = vpop.permute.xlu0 %2844
      %2846 = vrot.lane.b32.xlu0 %v1816, 126
      %v2847 = vpop.permute.xlu0 %2846
      %2848 = vrot.lane.b32.xlu0 %v1818, 126
      %v2849 = vpop.permute.xlu0 %2848
      %2850 = vrot.lane.b32.xlu0 %v1821, 126
      %v2851 = vpop.permute.xlu0 %2850
      %2852 = vrot.lane.b32.xlu0 %v1823, 126
      %v2853 = vpop.permute.xlu0 %2852
      %2854 = vrot.lane.b32.xlu0 %v1826, 126
      %v2855 = vpop.permute.xlu0 %2854
      %2856 = vrot.lane.b32.xlu0 %v1828, 126
      %v2857 = vpop.permute.xlu0 %2856
      %2858 = vrot.lane.b32.xlu0 %v1831, 126
      %v2859 = vpop.permute.xlu0 %2858
      %2860 = vrot.lane.b32.xlu0 %v1833, 126
      %v2861 = vpop.permute.xlu0 %2860
      %2862 = vrot.lane.b32.xlu0 %v1836, 126
      %v2863 = vpop.permute.xlu0 %2862
      %2864 = vrot.lane.b32.xlu0 %v1838, 126
      %v2865 = vpop.permute.xlu0 %2864
      %2866 = vrot.lane.b32.xlu0 %v1841, 126
      %v2867 = vpop.permute.xlu0 %2866
      %2868 = vrot.lane.b32.xlu0 %v1843, 126
      %v2869 = vpop.permute.xlu0 %2868
      %2870 = vrot.lane.b32.xlu0 %v1846, 126
      %v2871 = vpop.permute.xlu0 %2870
      %2872 = vrot.lane.b32.xlu0 %v1848, 126
      %v2873 = vpop.permute.xlu0 %2872
      %2874 = vrot.lane.b32.xlu0 %v1851, 126
      %v2875 = vpop.permute.xlu0 %2874
      %2876 = vrot.lane.b32.xlu0 %v1853, 126
      %v2877 = vpop.permute.xlu0 %2876
      %v3006 = vmax.f32 %v2494, %v2623
      %v3007 = vmax.f32 %v2495, %v2625
      %v3008 = vmax.f32 %v2496, %v2627
      %v3009 = vmax.f32 %v2497, %v2629
      %v3010 = vmax.f32 %v2498, %v2631
      %v3011 = vmax.f32 %v2499, %v2633
      %v3012 = vmax.f32 %v2500, %v2635
      %v3013 = vmax.f32 %v2501, %v2637
      %v3014 = vmax.f32 %v2502, %v2639
      %v3015 = vmax.f32 %v2503, %v2641
      %v3016 = vmax.f32 %v2504, %v2643
      %v3017 = vmax.f32 %v2505, %v2645
      %v3018 = vmax.f32 %v2506, %v2647
      %v3019 = vmax.f32 %v2507, %v2649
      %v3020 = vmax.f32 %v2508, %v2651
      %v3021 = vmax.f32 %v2509, %v2653
      %v3022 = vmax.f32 %v2510, %v2655
      %v3023 = vmax.f32 %v2511, %v2657
      %v3024 = vmax.f32 %v2512, %v2659
      %v3025 = vmax.f32 %v2513, %v2661
      %v3026 = vmax.f32 %v2514, %v2663
      %v3027 = vmax.f32 %v2515, %v2665
      %v3028 = vmax.f32 %v2516, %v2667
      %v3029 = vmax.f32 %v2517, %v2669
      %v3030 = vmax.f32 %v2518, %v2671
      %v3031 = vmax.f32 %v2519, %v2673
      %v3032 = vmax.f32 %v2520, %v2675
      %v3033 = vmax.f32 %v2521, %v2677
      %v3034 = vmax.f32 %v2522, %v2679
      %v3035 = vmax.f32 %v2523, %v2681
      %v3036 = vmax.f32 %v2524, %v2683
      %v3037 = vmax.f32 %v2525, %v2685
      %v3038 = vmax.f32 %v2526, %v2687
      %v3039 = vmax.f32 %v2527, %v2689
      %v3040 = vmax.f32 %v2528, %v2691
      %v3041 = vmax.f32 %v2529, %v2693
      %v3042 = vmax.f32 %v2530, %v2695
      %v3043 = vmax.f32 %v2531, %v2697
      %v3044 = vmax.f32 %v2532, %v2699
      %v3045 = vmax.f32 %v2533, %v2701
      %v3046 = vmax.f32 %v2534, %v2703
      %v3047 = vmax.f32 %v2535, %v2705
      %v3048 = vmax.f32 %v2536, %v2707
      %v3049 = vmax.f32 %v2537, %v2709
      %v3050 = vmax.f32 %v2538, %v2711
      %v3051 = vmax.f32 %v2539, %v2713
      %v3052 = vmax.f32 %v2540, %v2715
      %v3053 = vmax.f32 %v2541, %v2717
      %v3054 = vmax.f32 %v2542, %v2719
      %v3055 = vmax.f32 %v2543, %v2721
      %v3056 = vmax.f32 %v2544, %v2723
      %v3057 = vmax.f32 %v2545, %v2725
      %v3058 = vmax.f32 %v2546, %v2727
      %v3059 = vmax.f32 %v2547, %v2729
      %v3060 = vmax.f32 %v2548, %v2731
      %v3061 = vmax.f32 %v2549, %v2733
      %v3062 = vmax.f32 %v2550, %v2735
      %v3063 = vmax.f32 %v2551, %v2737
      %v3064 = vmax.f32 %v2552, %v2739
      %v3065 = vmax.f32 %v2553, %v2741
      %v3066 = vmax.f32 %v2554, %v2743
      %v3067 = vmax.f32 %v2555, %v2745
      %v3068 = vmax.f32 %v2556, %v2747
      %v3069 = vmax.f32 %v2557, %v2749
      %v3070 = vmax.f32 %v2558, %v2751
      %v3071 = vmax.f32 %v2559, %v2753
      %v3072 = vmax.f32 %v2560, %v2755
      %v3073 = vmax.f32 %v2561, %v2757
      %v3074 = vmax.f32 %v2562, %v2759
      %v3075 = vmax.f32 %v2563, %v2761
      %v3076 = vmax.f32 %v2564, %v2763
      %v3077 = vmax.f32 %v2565, %v2765
      %v3078 = vmax.f32 %v2566, %v2767
      %v3079 = vmax.f32 %v2567, %v2769
      %v3080 = vmax.f32 %v2568, %v2771
      %v3081 = vmax.f32 %v2569, %v2773
      %v3082 = vmax.f32 %v2570, %v2775
      %v3083 = vmax.f32 %v2571, %v2777
      %v3084 = vmax.f32 %v2572, %v2779
      %v3085 = vmax.f32 %v2573, %v2781
      %v3086 = vmax.f32 %v2574, %v2783
      %v3087 = vmax.f32 %v2575, %v2785
      %v3088 = vmax.f32 %v2576, %v2787
      %v3089 = vmax.f32 %v2577, %v2789
      %v3090 = vmax.f32 %v2578, %v2791
      %v3091 = vmax.f32 %v2579, %v2793
      %v3092 = vmax.f32 %v2580, %v2795
      %v3093 = vmax.f32 %v2581, %v2797
      %v3094 = vmax.f32 %v2582, %v2799
      %v3095 = vmax.f32 %v2583, %v2801
      %v3096 = vmax.f32 %v2584, %v2803
      %v3097 = vmax.f32 %v2585, %v2805
      %v3098 = vmax.f32 %v2586, %v2807
      %v3099 = vmax.f32 %v2587, %v2809
      %v3100 = vmax.f32 %v2588, %v2811
      %v3101 = vmax.f32 %v2589, %v2813
      %v3102 = vmax.f32 %v2590, %v2815
      %v3103 = vmax.f32 %v2591, %v2817
      %v3104 = vmax.f32 %v2592, %v2819
      %v3105 = vmax.f32 %v2593, %v2821
      %v3106 = vmax.f32 %v2594, %v2823
      %v3107 = vmax.f32 %v2595, %v2825
      %v3108 = vmax.f32 %v2596, %v2827
      %v3109 = vmax.f32 %v2597, %v2829
      %v3110 = vmax.f32 %v2598, %v2831
      %v3111 = vmax.f32 %v2599, %v2833
      %v3112 = vmax.f32 %v2600, %v2835
      %v3113 = vmax.f32 %v2601, %v2837
      %v3114 = vmax.f32 %v2602, %v2839
      %v3115 = vmax.f32 %v2603, %v2841
      %v3116 = vmax.f32 %v2604, %v2843
      %v3117 = vmax.f32 %v2605, %v2845
      %v3118 = vmax.f32 %v2606, %v2847
      %v3119 = vmax.f32 %v2607, %v2849
      %v3120 = vmax.f32 %v2608, %v2851
      %v3121 = vmax.f32 %v2609, %v2853
      %v3122 = vmax.f32 %v2610, %v2855
      %v3123 = vmax.f32 %v2611, %v2857
      %v3124 = vmax.f32 %v2612, %v2859
      %v3125 = vmax.f32 %v2613, %v2861
      %v3126 = vmax.f32 %v2614, %v2863
      %v3127 = vmax.f32 %v2615, %v2865
      %v3128 = vmax.f32 %v2616, %v2867
      %v3129 = vmax.f32 %v2617, %v2869
      %v3130 = vmax.f32 %v2618, %v2871
      %v3131 = vmax.f32 %v2619, %v2873
      %v3132 = vmax.f32 %v2620, %v2875
      %v3133 = vmax.f32 %v2621, %v2877
      %vm3134 = vcmask 1045504
      %v3135 = vrot.slane %v125, 2
      %v3136 = vrot.slane %v126, 2
      %v3137 = vsel %vm3134, %v3135, %v3136
      %v3138 = vrot.slane %v127, 2
      %v3139 = vsel %vm3134, %v3136, %v3138
      %v3140 = vrot.slane %v128, 2
      %v3141 = vrot.slane %v129, 2
      %v3142 = vsel %vm3134, %v3140, %v3141
      %v3143 = vrot.slane %v130, 2
      %v3144 = vsel %vm3134, %v3141, %v3143
      %v3145 = vrot.slane %v131, 2
      %v3146 = vrot.slane %v132, 2
      %v3147 = vsel %vm3134, %v3145, %v3146
      %v3148 = vrot.slane %v133, 2
      %v3149 = vsel %vm3134, %v3146, %v3148
      %v3150 = vrot.slane %v134, 2
      %v3151 = vrot.slane %v135, 2
      %v3152 = vsel %vm3134, %v3150, %v3151
      %v3153 = vrot.slane %v136, 2
      %v3154 = vsel %vm3134, %v3151, %v3153
      %v3155 = vrot.slane %v137, 2
      %v3156 = vrot.slane %v138, 2
      %v3157 = vsel %vm3134, %v3155, %v3156
      %v3158 = vrot.slane %v139, 2
      %v3159 = vsel %vm3134, %v3156, %v3158
      %v3160 = vrot.slane %v140, 2
      %v3161 = vrot.slane %v141, 2
      %v3162 = vsel %vm3134, %v3160, %v3161
      %v3163 = vrot.slane %v142, 2
      %v3164 = vsel %vm3134, %v3161, %v3163
      %v3165 = vrot.slane %v143, 2
      %v3166 = vrot.slane %v144, 2
      %v3167 = vsel %vm3134, %v3165, %v3166
      %v3168 = vrot.slane %v145, 2
      %v3169 = vsel %vm3134, %v3166, %v3168
      %v3170 = vrot.slane %v146, 2
      %v3171 = vrot.slane %v147, 2
      %v3172 = vsel %vm3134, %v3170, %v3171
      %v3173 = vrot.slane %v148, 2
      %v3174 = vsel %vm3134, %v3171, %v3173
      %v3175 = vrot.slane %v149, 2
      %v3176 = vrot.slane %v150, 2
      %v3177 = vsel %vm3134, %v3175, %v3176
      %v3178 = vrot.slane %v151, 2
      %v3179 = vsel %vm3134, %v3176, %v3178
      %v3180 = vrot.slane %v152, 2
      %v3181 = vrot.slane %v153, 2
      %v3182 = vsel %vm3134, %v3180, %v3181
      %v3183 = vrot.slane %v154, 2
      %v3184 = vsel %vm3134, %v3181, %v3183
      %v3185 = vrot.slane %v155, 2
      %v3186 = vrot.slane %v156, 2
      %v3187 = vsel %vm3134, %v3185, %v3186
      %v3188 = vrot.slane %v157, 2
      %v3189 = vsel %vm3134, %v3186, %v3188
      %v3190 = vrot.slane %v158, 2
      %v3191 = vrot.slane %v159, 2
      %v3192 = vsel %vm3134, %v3190, %v3191
      %v3193 = vrot.slane %v160, 2
      %v3194 = vsel %vm3134, %v3191, %v3193
      %v3195 = vrot.slane %v161, 2
      %v3196 = vrot.slane %v162, 2
      %v3197 = vsel %vm3134, %v3195, %v3196
      %v3198 = vrot.slane %v163, 2
      %v3199 = vsel %vm3134, %v3196, %v3198
      %v3200 = vrot.slane %v164, 2
      %v3201 = vrot.slane %v165, 2
      %v3202 = vsel %vm3134, %v3200, %v3201
      %v3203 = vrot.slane %v166, 2
      %v3204 = vsel %vm3134, %v3201, %v3203
      %v3205 = vrot.slane %v167, 2
      %v3206 = vrot.slane %v168, 2
      %v3207 = vsel %vm3134, %v3205, %v3206
      %v3208 = vrot.slane %v169, 2
      %v3209 = vsel %vm3134, %v3206, %v3208
      %v3210 = vrot.slane %v170, 2
      %v3211 = vrot.slane %v171, 2
      %v3212 = vsel %vm3134, %v3210, %v3211
      %v3213 = vrot.slane %v172, 2
      %v3214 = vsel %vm3134, %v3211, %v3213
      %v3215 = vrot.slane %v173, 2
      %v3216 = vrot.slane %v174, 2
      %v3217 = vsel %vm3134, %v3215, %v3216
      %v3218 = vrot.slane %v175, 2
      %v3219 = vsel %vm3134, %v3216, %v3218
      %v3220 = vrot.slane %v176, 2
      %v3221 = vrot.slane %v177, 2
      %v3222 = vsel %vm3134, %v3220, %v3221
      %v3223 = vrot.slane %v178, 2
      %v3224 = vsel %vm3134, %v3221, %v3223
      %v3225 = vrot.slane %v179, 2
      %v3226 = vrot.slane %v180, 2
      %v3227 = vsel %vm3134, %v3225, %v3226
      %v3228 = vrot.slane %v181, 2
      %v3229 = vsel %vm3134, %v3226, %v3228
      %v3230 = vrot.slane %v182, 2
      %v3231 = vrot.slane %v183, 2
      %v3232 = vsel %vm3134, %v3230, %v3231
      %v3233 = vrot.slane %v184, 2
      %v3234 = vsel %vm3134, %v3231, %v3233
      %v3235 = vrot.slane %v185, 2
      %v3236 = vrot.slane %v186, 2
      %v3237 = vsel %vm3134, %v3235, %v3236
      %v3238 = vrot.slane %v187, 2
      %v3239 = vsel %vm3134, %v3236, %v3238
      %v3240 = vrot.slane %v188, 2
      %v3241 = vrot.slane %v189, 2
      %v3242 = vsel %vm3134, %v3240, %v3241
      %v3243 = vrot.slane %v190, 2
      %v3244 = vsel %vm3134, %v3241, %v3243
      %v3245 = vrot.slane %v191, 2
      %v3246 = vrot.slane %v192, 2
      %v3247 = vsel %vm3134, %v3245, %v3246
      %v3248 = vrot.slane %v193, 2
      %v3249 = vsel %vm3134, %v3246, %v3248
      %v3250 = vrot.slane %v194, 2
      %v3251 = vrot.slane %v195, 2
      %v3252 = vsel %vm3134, %v3250, %v3251
      %v3253 = vrot.slane %v196, 2
      %v3254 = vsel %vm3134, %v3251, %v3253
      %v3255 = vrot.slane %v197, 2
      %v3256 = vrot.slane %v198, 2
      %v3257 = vsel %vm3134, %v3255, %v3256
      %v3258 = vrot.slane %v199, 2
      %v3259 = vsel %vm3134, %v3256, %v3258
      %v3260 = vrot.slane %v200, 2
      %v3261 = vrot.slane %v201, 2
      %v3262 = vsel %vm3134, %v3260, %v3261
      %v3263 = vrot.slane %v202, 2
      %v3264 = vsel %vm3134, %v3261, %v3263
      %v3265 = vrot.slane %v203, 2
      %v3266 = vrot.slane %v204, 2
      %v3267 = vsel %vm3134, %v3265, %v3266
      %v3268 = vrot.slane %v205, 2
      %v3269 = vsel %vm3134, %v3266, %v3268
      %v3270 = vrot.slane %v206, 2
      %v3271 = vrot.slane %v207, 2
      %v3272 = vsel %vm3134, %v3270, %v3271
      %v3273 = vrot.slane %v208, 2
      %v3274 = vsel %vm3134, %v3271, %v3273
      %v3275 = vrot.slane %v209, 2
      %v3276 = vrot.slane %v210, 2
      %v3277 = vsel %vm3134, %v3275, %v3276
      %v3278 = vrot.slane %v211, 2
      %v3279 = vsel %vm3134, %v3276, %v3278
      %v3280 = vrot.slane %v212, 2
      %v3281 = vrot.slane %v213, 2
      %v3282 = vsel %vm3134, %v3280, %v3281
      %v3283 = vrot.slane %v214, 2
      %v3284 = vsel %vm3134, %v3281, %v3283
      %v3285 = vrot.slane %v215, 2
      %v3286 = vrot.slane %v216, 2
      %v3287 = vsel %vm3134, %v3285, %v3286
      %v3288 = vrot.slane %v217, 2
      %v3289 = vsel %vm3134, %v3286, %v3288
      %v3290 = vrot.slane %v218, 2
      %v3291 = vrot.slane %v219, 2
      %v3292 = vsel %vm3134, %v3290, %v3291
      %v3293 = vrot.slane %v220, 2
      %v3294 = vsel %vm3134, %v3291, %v3293
      %v3295 = vrot.slane %v221, 2
      %v3296 = vrot.slane %v222, 2
      %v3297 = vsel %vm3134, %v3295, %v3296
      %v3298 = vrot.slane %v223, 2
      %v3299 = vsel %vm3134, %v3296, %v3298
      %v3300 = vrot.slane %v224, 2
      %v3301 = vrot.slane %v225, 2
      %v3302 = vsel %vm3134, %v3300, %v3301
      %v3303 = vrot.slane %v226, 2
      %v3304 = vsel %vm3134, %v3301, %v3303
      %v3305 = vrot.slane %v227, 2
      %v3306 = vrot.slane %v228, 2
      %v3307 = vsel %vm3134, %v3305, %v3306
      %v3308 = vrot.slane %v229, 2
      %v3309 = vsel %vm3134, %v3306, %v3308
      %v3310 = vrot.slane %v230, 2
      %v3311 = vrot.slane %v231, 2
      %v3312 = vsel %vm3134, %v3310, %v3311
      %v3313 = vrot.slane %v232, 2
      %v3314 = vsel %vm3134, %v3311, %v3313
      %v3315 = vrot.slane %v233, 2
      %v3316 = vrot.slane %v234, 2
      %v3317 = vsel %vm3134, %v3315, %v3316
      %v3318 = vrot.slane %v235, 2
      %v3319 = vsel %vm3134, %v3316, %v3318
      %v3320 = vrot.slane %v236, 2
      %v3321 = vrot.slane %v237, 2
      %v3322 = vsel %vm3134, %v3320, %v3321
      %v3323 = vrot.slane %v238, 2
      %v3324 = vsel %vm3134, %v3321, %v3323
      %v3325 = vrot.slane %v239, 2
      %v3326 = vrot.slane %v240, 2
      %v3327 = vsel %vm3134, %v3325, %v3326
      %v3328 = vrot.slane %v241, 2
      %v3329 = vsel %vm3134, %v3326, %v3328
      %v3330 = vrot.slane %v242, 2
      %v3331 = vrot.slane %v243, 2
      %v3332 = vsel %vm3134, %v3330, %v3331
      %v3333 = vrot.slane %v244, 2
      %v3334 = vsel %vm3134, %v3331, %v3333
      %v3335 = vrot.slane %v245, 2
      %v3336 = vrot.slane %v246, 2
      %v3337 = vsel %vm3134, %v3335, %v3336
      %v3338 = vrot.slane %v247, 2
      %v3339 = vsel %vm3134, %v3336, %v3338
      %v3340 = vrot.slane %v248, 2
      %v3341 = vrot.slane %v249, 2
      %v3342 = vsel %vm3134, %v3340, %v3341
      %v3343 = vrot.slane %v250, 2
      %v3344 = vsel %vm3134, %v3341, %v3343
      %v3345 = vrot.slane %v251, 2
      %v3346 = vrot.slane %v252, 2
      %v3347 = vsel %vm3134, %v3345, %v3346
      %v3348 = vrot.slane %v253, 2
      %v3349 = vsel %vm3134, %v3346, %v3348
      %v3350 = vrot.slane %v254, 2
      %v3351 = vrot.slane %v255, 2
      %v3352 = vsel %vm3134, %v3350, %v3351
      %v3353 = vrot.slane %v256, 2
      %v3354 = vsel %vm3134, %v3351, %v3353
      %v3355 = vrot.slane %v257, 2
      %v3356 = vrot.slane %v258, 2
      %v3357 = vsel %vm3134, %v3355, %v3356
      %v3358 = vrot.slane %v259, 2
      %v3359 = vsel %vm3134, %v3356, %v3358
      %v3360 = vrot.slane %v260, 2
      %v3361 = vrot.slane %v261, 2
      %v3362 = vsel %vm3134, %v3360, %v3361
      %v3363 = vrot.slane %v262, 2
      %v3364 = vsel %vm3134, %v3361, %v3363
      %v3365 = vrot.slane %v263, 2
      %v3366 = vrot.slane %v264, 2
      %v3367 = vsel %vm3134, %v3365, %v3366
      %v3368 = vrot.slane %v265, 2
      %v3369 = vsel %vm3134, %v3366, %v3368
      %v3370 = vrot.slane %v266, 2
      %v3371 = vrot.slane %v267, 2
      %v3372 = vsel %vm3134, %v3370, %v3371
      %v3373 = vrot.slane %v268, 2
      %v3374 = vsel %vm3134, %v3371, %v3373
      %v3375 = vrot.slane %v269, 2
      %v3376 = vrot.slane %v270, 2
      %v3377 = vsel %vm3134, %v3375, %v3376
      %v3378 = vrot.slane %v271, 2
      %v3379 = vsel %vm3134, %v3376, %v3378
      %v3380 = vrot.slane %v272, 2
      %v3381 = vrot.slane %v273, 2
      %v3382 = vsel %vm3134, %v3380, %v3381
      %v3383 = vrot.slane %v274, 2
      %v3384 = vsel %vm3134, %v3381, %v3383
      %v3385 = vrot.slane %v275, 2
      %v3386 = vrot.slane %v276, 2
      %v3387 = vsel %vm3134, %v3385, %v3386
      %v3388 = vrot.slane %v277, 2
      %v3389 = vsel %vm3134, %v3386, %v3388
      %v3390 = vrot.slane %v278, 2
      %v3391 = vrot.slane %v279, 2
      %v3392 = vsel %vm3134, %v3390, %v3391
      %v3393 = vrot.slane %v280, 2
      %v3394 = vsel %vm3134, %v3391, %v3393
      %v3395 = vrot.slane %v281, 2
      %v3396 = vrot.slane %v282, 2
      %v3397 = vsel %vm3134, %v3395, %v3396
      %v3398 = vrot.slane %v283, 2
      %v3399 = vsel %vm3134, %v3396, %v3398
      %v3400 = vrot.slane %v284, 2
      %v3401 = vrot.slane %v285, 2
      %v3402 = vsel %vm3134, %v3400, %v3401
      %v3403 = vrot.slane %v286, 2
      %v3404 = vsel %vm3134, %v3401, %v3403
      %v3405 = vrot.slane %v287, 2
      %v3406 = vrot.slane %v288, 2
      %v3407 = vsel %vm3134, %v3405, %v3406
      %v3408 = vrot.slane %v289, 2
      %v3409 = vsel %vm3134, %v3406, %v3408
      %v3410 = vrot.slane %v290, 2
      %v3411 = vrot.slane %v291, 2
      %v3412 = vsel %vm3134, %v3410, %v3411
      %v3413 = vrot.slane %v292, 2
      %v3414 = vsel %vm3134, %v3411, %v3413
      %v3415 = vrot.slane %v293, 2
      %v3416 = vrot.slane %v294, 2
      %v3417 = vsel %vm3134, %v3415, %v3416
      %v3418 = vrot.slane %v295, 2
      %v3419 = vsel %vm3134, %v3416, %v3418
      %v3420 = vrot.slane %v296, 2
      %v3421 = vrot.slane %v297, 2
      %v3422 = vsel %vm3134, %v3420, %v3421
      %v3423 = vrot.slane %v298, 2
      %v3424 = vsel %vm3134, %v3421, %v3423
      %v3425 = vrot.slane %v299, 2
      %v3426 = vrot.slane %v300, 2
      %v3427 = vsel %vm3134, %v3425, %v3426
      %v3428 = vrot.slane %v301, 2
      %v3429 = vsel %vm3134, %v3426, %v3428
      %v3430 = vrot.slane %v302, 2
      %v3431 = vrot.slane %v303, 2
      %v3432 = vsel %vm3134, %v3430, %v3431
      %v3433 = vrot.slane %v304, 2
      %v3434 = vsel %vm3134, %v3431, %v3433
      %v3435 = vrot.slane %v305, 2
      %v3436 = vrot.slane %v306, 2
      %v3437 = vsel %vm3134, %v3435, %v3436
      %v3438 = vrot.slane %v307, 2
      %v3439 = vsel %vm3134, %v3436, %v3438
      %v3440 = vrot.slane %v308, 2
      %v3441 = vrot.slane %v309, 2
      %v3442 = vsel %vm3134, %v3440, %v3441
      %v3443 = vrot.slane %v310, 2
      %v3444 = vsel %vm3134, %v3441, %v3443
      %v3445 = vrot.slane %v311, 2
      %v3446 = vrot.slane %v312, 2
      %v3447 = vsel %vm3134, %v3445, %v3446
      %v3448 = vrot.slane %v313, 2
      %v3449 = vsel %vm3134, %v3446, %v3448
      %v3450 = vrot.slane %v314, 2
      %v3451 = vrot.slane %v315, 2
      %v3452 = vsel %vm3134, %v3450, %v3451
      %v3453 = vrot.slane %v316, 2
      %v3454 = vsel %vm3134, %v3451, %v3453
      %v3583 = vmax.f32 %v3006, %v3137
      %v3584 = vmax.f32 %v3007, %v3139
      %v3585 = vmax.f32 %v3008, %v3142
      %v3586 = vmax.f32 %v3009, %v3144
      %v3587 = vmax.f32 %v3010, %v3147
      %v3588 = vmax.f32 %v3011, %v3149
      %v3589 = vmax.f32 %v3012, %v3152
      %v3590 = vmax.f32 %v3013, %v3154
      %v3591 = vmax.f32 %v3014, %v3157
      %v3592 = vmax.f32 %v3015, %v3159
      %v3593 = vmax.f32 %v3016, %v3162
      %v3594 = vmax.f32 %v3017, %v3164
      %v3595 = vmax.f32 %v3018, %v3167
      %v3596 = vmax.f32 %v3019, %v3169
      %v3597 = vmax.f32 %v3020, %v3172
      %v3598 = vmax.f32 %v3021, %v3174
      %v3599 = vmax.f32 %v3022, %v3177
      %v3600 = vmax.f32 %v3023, %v3179
      %v3601 = vmax.f32 %v3024, %v3182
      %v3602 = vmax.f32 %v3025, %v3184
      %v3603 = vmax.f32 %v3026, %v3187
      %v3604 = vmax.f32 %v3027, %v3189
      %v3605 = vmax.f32 %v3028, %v3192
      %v3606 = vmax.f32 %v3029, %v3194
      %v3607 = vmax.f32 %v3030, %v3197
      %v3608 = vmax.f32 %v3031, %v3199
      %v3609 = vmax.f32 %v3032, %v3202
      %v3610 = vmax.f32 %v3033, %v3204
      %v3611 = vmax.f32 %v3034, %v3207
      %v3612 = vmax.f32 %v3035, %v3209
      %v3613 = vmax.f32 %v3036, %v3212
      %v3614 = vmax.f32 %v3037, %v3214
      %v3615 = vmax.f32 %v3038, %v3217
      %v3616 = vmax.f32 %v3039, %v3219
      %v3617 = vmax.f32 %v3040, %v3222
      %v3618 = vmax.f32 %v3041, %v3224
      %v3619 = vmax.f32 %v3042, %v3227
      %v3620 = vmax.f32 %v3043, %v3229
      %v3621 = vmax.f32 %v3044, %v3232
      %v3622 = vmax.f32 %v3045, %v3234
      %v3623 = vmax.f32 %v3046, %v3237
      %v3624 = vmax.f32 %v3047, %v3239
      %v3625 = vmax.f32 %v3048, %v3242
      %v3626 = vmax.f32 %v3049, %v3244
      %v3627 = vmax.f32 %v3050, %v3247
      %v3628 = vmax.f32 %v3051, %v3249
      %v3629 = vmax.f32 %v3052, %v3252
      %v3630 = vmax.f32 %v3053, %v3254
      %v3631 = vmax.f32 %v3054, %v3257
      %v3632 = vmax.f32 %v3055, %v3259
      %v3633 = vmax.f32 %v3056, %v3262
      %v3634 = vmax.f32 %v3057, %v3264
      %v3635 = vmax.f32 %v3058, %v3267
      %v3636 = vmax.f32 %v3059, %v3269
      %v3637 = vmax.f32 %v3060, %v3272
      %v3638 = vmax.f32 %v3061, %v3274
      %v3639 = vmax.f32 %v3062, %v3277
      %v3640 = vmax.f32 %v3063, %v3279
      %v3641 = vmax.f32 %v3064, %v3282
      %v3642 = vmax.f32 %v3065, %v3284
      %v3643 = vmax.f32 %v3066, %v3287
      %v3644 = vmax.f32 %v3067, %v3289
      %v3645 = vmax.f32 %v3068, %v3292
      %v3646 = vmax.f32 %v3069, %v3294
      %v3647 = vmax.f32 %v3070, %v3297
      %v3648 = vmax.f32 %v3071, %v3299
      %v3649 = vmax.f32 %v3072, %v3302
      %v3650 = vmax.f32 %v3073, %v3304
      %v3651 = vmax.f32 %v3074, %v3307
      %v3652 = vmax.f32 %v3075, %v3309
      %v3653 = vmax.f32 %v3076, %v3312
      %v3654 = vmax.f32 %v3077, %v3314
      %v3655 = vmax.f32 %v3078, %v3317
      %v3656 = vmax.f32 %v3079, %v3319
      %v3657 = vmax.f32 %v3080, %v3322
      %v3658 = vmax.f32 %v3081, %v3324
      %v3659 = vmax.f32 %v3082, %v3327
      %v3660 = vmax.f32 %v3083, %v3329
      %v3661 = vmax.f32 %v3084, %v3332
      %v3662 = vmax.f32 %v3085, %v3334
      %v3663 = vmax.f32 %v3086, %v3337
      %v3664 = vmax.f32 %v3087, %v3339
      %v3665 = vmax.f32 %v3088, %v3342
      %v3666 = vmax.f32 %v3089, %v3344
      %v3667 = vmax.f32 %v3090, %v3347
      %v3668 = vmax.f32 %v3091, %v3349
      %v3669 = vmax.f32 %v3092, %v3352
      %v3670 = vmax.f32 %v3093, %v3354
      %v3671 = vmax.f32 %v3094, %v3357
      %v3672 = vmax.f32 %v3095, %v3359
      %v3673 = vmax.f32 %v3096, %v3362
      %v3674 = vmax.f32 %v3097, %v3364
      %v3675 = vmax.f32 %v3098, %v3367
      %v3676 = vmax.f32 %v3099, %v3369
      %v3677 = vmax.f32 %v3100, %v3372
      %v3678 = vmax.f32 %v3101, %v3374
      %v3679 = vmax.f32 %v3102, %v3377
      %v3680 = vmax.f32 %v3103, %v3379
      %v3681 = vmax.f32 %v3104, %v3382
      %v3682 = vmax.f32 %v3105, %v3384
      %v3683 = vmax.f32 %v3106, %v3387
      %v3684 = vmax.f32 %v3107, %v3389
      %v3685 = vmax.f32 %v3108, %v3392
      %v3686 = vmax.f32 %v3109, %v3394
      %v3687 = vmax.f32 %v3110, %v3397
      %v3688 = vmax.f32 %v3111, %v3399
      %v3689 = vmax.f32 %v3112, %v3402
      %v3690 = vmax.f32 %v3113, %v3404
      %v3691 = vmax.f32 %v3114, %v3407
      %v3692 = vmax.f32 %v3115, %v3409
      %v3693 = vmax.f32 %v3116, %v3412
      %v3694 = vmax.f32 %v3117, %v3414
      %v3695 = vmax.f32 %v3118, %v3417
      %v3696 = vmax.f32 %v3119, %v3419
      %v3697 = vmax.f32 %v3120, %v3422
      %v3698 = vmax.f32 %v3121, %v3424
      %v3699 = vmax.f32 %v3122, %v3427
      %v3700 = vmax.f32 %v3123, %v3429
      %v3701 = vmax.f32 %v3124, %v3432
      %v3702 = vmax.f32 %v3125, %v3434
      %v3703 = vmax.f32 %v3126, %v3437
      %v3704 = vmax.f32 %v3127, %v3439
      %v3705 = vmax.f32 %v3128, %v3442
      %v3706 = vmax.f32 %v3129, %v3444
      %v3707 = vmax.f32 %v3130, %v3447
      %v3708 = vmax.f32 %v3131, %v3449
      %v3709 = vmax.f32 %v3132, %v3452
      %v3710 = vmax.f32 %v3133, %v3454
      %3711 = vrot.lane.b32.xlu0 %v3137, 127
      %v3712 = vpop.permute.xlu0 %3711
      %3713 = vrot.lane.b32.xlu0 %v3139, 127
      %v3714 = vpop.permute.xlu0 %3713
      %3715 = vrot.lane.b32.xlu0 %v3142, 127
      %v3716 = vpop.permute.xlu0 %3715
      %3717 = vrot.lane.b32.xlu0 %v3144, 127
      %v3718 = vpop.permute.xlu0 %3717
      %3719 = vrot.lane.b32.xlu0 %v3147, 127
      %v3720 = vpop.permute.xlu0 %3719
      %3721 = vrot.lane.b32.xlu0 %v3149, 127
      %v3722 = vpop.permute.xlu0 %3721
      %3723 = vrot.lane.b32.xlu0 %v3152, 127
      %v3724 = vpop.permute.xlu0 %3723
      %3725 = vrot.lane.b32.xlu0 %v3154, 127
      %v3726 = vpop.permute.xlu0 %3725
      %3727 = vrot.lane.b32.xlu0 %v3157, 127
      %v3728 = vpop.permute.xlu0 %3727
      %3729 = vrot.lane.b32.xlu0 %v3159, 127
      %v3730 = vpop.permute.xlu0 %3729
      %3731 = vrot.lane.b32.xlu0 %v3162, 127
      %v3732 = vpop.permute.xlu0 %3731
      %3733 = vrot.lane.b32.xlu0 %v3164, 127
      %v3734 = vpop.permute.xlu0 %3733
      %3735 = vrot.lane.b32.xlu0 %v3167, 127
      %v3736 = vpop.permute.xlu0 %3735
      %3737 = vrot.lane.b32.xlu0 %v3169, 127
      %v3738 = vpop.permute.xlu0 %3737
      %3739 = vrot.lane.b32.xlu0 %v3172, 127
      %v3740 = vpop.permute.xlu0 %3739
      %3741 = vrot.lane.b32.xlu0 %v3174, 127
      %v3742 = vpop.permute.xlu0 %3741
      %3743 = vrot.lane.b32.xlu0 %v3177, 127
      %v3744 = vpop.permute.xlu0 %3743
      %3745 = vrot.lane.b32.xlu0 %v3179, 127
      %v3746 = vpop.permute.xlu0 %3745
      %3747 = vrot.lane.b32.xlu0 %v3182, 127
      %v3748 = vpop.permute.xlu0 %3747
      %3749 = vrot.lane.b32.xlu0 %v3184, 127
      %v3750 = vpop.permute.xlu0 %3749
      %3751 = vrot.lane.b32.xlu0 %v3187, 127
      %v3752 = vpop.permute.xlu0 %3751
      %3753 = vrot.lane.b32.xlu0 %v3189, 127
      %v3754 = vpop.permute.xlu0 %3753
      %3755 = vrot.lane.b32.xlu0 %v3192, 127
      %v3756 = vpop.permute.xlu0 %3755
      %3757 = vrot.lane.b32.xlu0 %v3194, 127
      %v3758 = vpop.permute.xlu0 %3757
      %3759 = vrot.lane.b32.xlu0 %v3197, 127
      %v3760 = vpop.permute.xlu0 %3759
      %3761 = vrot.lane.b32.xlu0 %v3199, 127
      %v3762 = vpop.permute.xlu0 %3761
      %3763 = vrot.lane.b32.xlu0 %v3202, 127
      %v3764 = vpop.permute.xlu0 %3763
      %3765 = vrot.lane.b32.xlu0 %v3204, 127
      %v3766 = vpop.permute.xlu0 %3765
      %3767 = vrot.lane.b32.xlu0 %v3207, 127
      %v3768 = vpop.permute.xlu0 %3767
      %3769 = vrot.lane.b32.xlu0 %v3209, 127
      %v3770 = vpop.permute.xlu0 %3769
      %3771 = vrot.lane.b32.xlu0 %v3212, 127
      %v3772 = vpop.permute.xlu0 %3771
      %3773 = vrot.lane.b32.xlu0 %v3214, 127
      %v3774 = vpop.permute.xlu0 %3773
      %3775 = vrot.lane.b32.xlu0 %v3217, 127
      %v3776 = vpop.permute.xlu0 %3775
      %3777 = vrot.lane.b32.xlu0 %v3219, 127
      %v3778 = vpop.permute.xlu0 %3777
      %3779 = vrot.lane.b32.xlu0 %v3222, 127
      %v3780 = vpop.permute.xlu0 %3779
      %3781 = vrot.lane.b32.xlu0 %v3224, 127
      %v3782 = vpop.permute.xlu0 %3781
      %3783 = vrot.lane.b32.xlu0 %v3227, 127
      %v3784 = vpop.permute.xlu0 %3783
      %3785 = vrot.lane.b32.xlu0 %v3229, 127
      %v3786 = vpop.permute.xlu0 %3785
      %3787 = vrot.lane.b32.xlu0 %v3232, 127
      %v3788 = vpop.permute.xlu0 %3787
      %3789 = vrot.lane.b32.xlu0 %v3234, 127
      %v3790 = vpop.permute.xlu0 %3789
      %3791 = vrot.lane.b32.xlu0 %v3237, 127
      %v3792 = vpop.permute.xlu0 %3791
      %3793 = vrot.lane.b32.xlu0 %v3239, 127
      %v3794 = vpop.permute.xlu0 %3793
      %3795 = vrot.lane.b32.xlu0 %v3242, 127
      %v3796 = vpop.permute.xlu0 %3795
      %3797 = vrot.lane.b32.xlu0 %v3244, 127
      %v3798 = vpop.permute.xlu0 %3797
      %3799 = vrot.lane.b32.xlu0 %v3247, 127
      %v3800 = vpop.permute.xlu0 %3799
      %3801 = vrot.lane.b32.xlu0 %v3249, 127
      %v3802 = vpop.permute.xlu0 %3801
      %3803 = vrot.lane.b32.xlu0 %v3252, 127
      %v3804 = vpop.permute.xlu0 %3803
      %3805 = vrot.lane.b32.xlu0 %v3254, 127
      %v3806 = vpop.permute.xlu0 %3805
      %3807 = vrot.lane.b32.xlu0 %v3257, 127
      %v3808 = vpop.permute.xlu0 %3807
      %3809 = vrot.lane.b32.xlu0 %v3259, 127
      %v3810 = vpop.permute.xlu0 %3809
      %3811 = vrot.lane.b32.xlu0 %v3262, 127
      %v3812 = vpop.permute.xlu0 %3811
      %3813 = vrot.lane.b32.xlu0 %v3264, 127
      %v3814 = vpop.permute.xlu0 %3813
      %3815 = vrot.lane.b32.xlu0 %v3267, 127
      %v3816 = vpop.permute.xlu0 %3815
      %3817 = vrot.lane.b32.xlu0 %v3269, 127
      %v3818 = vpop.permute.xlu0 %3817
      %3819 = vrot.lane.b32.xlu0 %v3272, 127
      %v3820 = vpop.permute.xlu0 %3819
      %3821 = vrot.lane.b32.xlu0 %v3274, 127
      %v3822 = vpop.permute.xlu0 %3821
      %3823 = vrot.lane.b32.xlu0 %v3277, 127
      %v3824 = vpop.permute.xlu0 %3823
      %3825 = vrot.lane.b32.xlu0 %v3279, 127
      %v3826 = vpop.permute.xlu0 %3825
      %3827 = vrot.lane.b32.xlu0 %v3282, 127
      %v3828 = vpop.permute.xlu0 %3827
      %3829 = vrot.lane.b32.xlu0 %v3284, 127
      %v3830 = vpop.permute.xlu0 %3829
      %3831 = vrot.lane.b32.xlu0 %v3287, 127
      %v3832 = vpop.permute.xlu0 %3831
      %3833 = vrot.lane.b32.xlu0 %v3289, 127
      %v3834 = vpop.permute.xlu0 %3833
      %3835 = vrot.lane.b32.xlu0 %v3292, 127
      %v3836 = vpop.permute.xlu0 %3835
      %3837 = vrot.lane.b32.xlu0 %v3294, 127
      %v3838 = vpop.permute.xlu0 %3837
      %3839 = vrot.lane.b32.xlu0 %v3297, 127
      %v3840 = vpop.permute.xlu0 %3839
      %3841 = vrot.lane.b32.xlu0 %v3299, 127
      %v3842 = vpop.permute.xlu0 %3841
      %3843 = vrot.lane.b32.xlu0 %v3302, 127
      %v3844 = vpop.permute.xlu0 %3843
      %3845 = vrot.lane.b32.xlu0 %v3304, 127
      %v3846 = vpop.permute.xlu0 %3845
      %3847 = vrot.lane.b32.xlu0 %v3307, 127
      %v3848 = vpop.permute.xlu0 %3847
      %3849 = vrot.lane.b32.xlu0 %v3309, 127
      %v3850 = vpop.permute.xlu0 %3849
      %3851 = vrot.lane.b32.xlu0 %v3312, 127
      %v3852 = vpop.permute.xlu0 %3851
      %3853 = vrot.lane.b32.xlu0 %v3314, 127
      %v3854 = vpop.permute.xlu0 %3853
      %3855 = vrot.lane.b32.xlu0 %v3317, 127
      %v3856 = vpop.permute.xlu0 %3855
      %3857 = vrot.lane.b32.xlu0 %v3319, 127
      %v3858 = vpop.permute.xlu0 %3857
      %3859 = vrot.lane.b32.xlu0 %v3322, 127
      %v3860 = vpop.permute.xlu0 %3859
      %3861 = vrot.lane.b32.xlu0 %v3324, 127
      %v3862 = vpop.permute.xlu0 %3861
      %3863 = vrot.lane.b32.xlu0 %v3327, 127
      %v3864 = vpop.permute.xlu0 %3863
      %3865 = vrot.lane.b32.xlu0 %v3329, 127
      %v3866 = vpop.permute.xlu0 %3865
      %3867 = vrot.lane.b32.xlu0 %v3332, 127
      %v3868 = vpop.permute.xlu0 %3867
      %3869 = vrot.lane.b32.xlu0 %v3334, 127
      %v3870 = vpop.permute.xlu0 %3869
      %3871 = vrot.lane.b32.xlu0 %v3337, 127
      %v3872 = vpop.permute.xlu0 %3871
      %3873 = vrot.lane.b32.xlu0 %v3339, 127
      %v3874 = vpop.permute.xlu0 %3873
      %3875 = vrot.lane.b32.xlu0 %v3342, 127
      %v3876 = vpop.permute.xlu0 %3875
      %3877 = vrot.lane.b32.xlu0 %v3344, 127
      %v3878 = vpop.permute.xlu0 %3877
      %3879 = vrot.lane.b32.xlu0 %v3347, 127
      %v3880 = vpop.permute.xlu0 %3879
      %3881 = vrot.lane.b32.xlu0 %v3349, 127
      %v3882 = vpop.permute.xlu0 %3881
      %3883 = vrot.lane.b32.xlu0 %v3352, 127
      %v3884 = vpop.permute.xlu0 %3883
      %3885 = vrot.lane.b32.xlu0 %v3354, 127
      %v3886 = vpop.permute.xlu0 %3885
      %3887 = vrot.lane.b32.xlu0 %v3357, 127
      %v3888 = vpop.permute.xlu0 %3887
      %3889 = vrot.lane.b32.xlu0 %v3359, 127
      %v3890 = vpop.permute.xlu0 %3889
      %3891 = vrot.lane.b32.xlu0 %v3362, 127
      %v3892 = vpop.permute.xlu0 %3891
      %3893 = vrot.lane.b32.xlu0 %v3364, 127
      %v3894 = vpop.permute.xlu0 %3893
      %3895 = vrot.lane.b32.xlu0 %v3367, 127
      %v3896 = vpop.permute.xlu0 %3895
      %3897 = vrot.lane.b32.xlu0 %v3369, 127
      %v3898 = vpop.permute.xlu0 %3897
      %3899 = vrot.lane.b32.xlu0 %v3372, 127
      %v3900 = vpop.permute.xlu0 %3899
      %3901 = vrot.lane.b32.xlu0 %v3374, 127
      %v3902 = vpop.permute.xlu0 %3901
      %3903 = vrot.lane.b32.xlu0 %v3377, 127
      %v3904 = vpop.permute.xlu0 %3903
      %3905 = vrot.lane.b32.xlu0 %v3379, 127
      %v3906 = vpop.permute.xlu0 %3905
      %3907 = vrot.lane.b32.xlu0 %v3382, 127
      %v3908 = vpop.permute.xlu0 %3907
      %3909 = vrot.lane.b32.xlu0 %v3384, 127
      %v3910 = vpop.permute.xlu0 %3909
      %3911 = vrot.lane.b32.xlu0 %v3387, 127
      %v3912 = vpop.permute.xlu0 %3911
      %3913 = vrot.lane.b32.xlu0 %v3389, 127
      %v3914 = vpop.permute.xlu0 %3913
      %3915 = vrot.lane.b32.xlu0 %v3392, 127
      %v3916 = vpop.permute.xlu0 %3915
      %3917 = vrot.lane.b32.xlu0 %v3394, 127
      %v3918 = vpop.permute.xlu0 %3917
      %3919 = vrot.lane.b32.xlu0 %v3397, 127
      %v3920 = vpop.permute.xlu0 %3919
      %3921 = vrot.lane.b32.xlu0 %v3399, 127
      %v3922 = vpop.permute.xlu0 %3921
      %3923 = vrot.lane.b32.xlu0 %v3402, 127
      %v3924 = vpop.permute.xlu0 %3923
      %3925 = vrot.lane.b32.xlu0 %v3404, 127
      %v3926 = vpop.permute.xlu0 %3925
      %3927 = vrot.lane.b32.xlu0 %v3407, 127
      %v3928 = vpop.permute.xlu0 %3927
      %3929 = vrot.lane.b32.xlu0 %v3409, 127
      %v3930 = vpop.permute.xlu0 %3929
      %3931 = vrot.lane.b32.xlu0 %v3412, 127
      %v3932 = vpop.permute.xlu0 %3931
      %3933 = vrot.lane.b32.xlu0 %v3414, 127
      %v3934 = vpop.permute.xlu0 %3933
      %3935 = vrot.lane.b32.xlu0 %v3417, 127
      %v3936 = vpop.permute.xlu0 %3935
      %3937 = vrot.lane.b32.xlu0 %v3419, 127
      %v3938 = vpop.permute.xlu0 %3937
      %3939 = vrot.lane.b32.xlu0 %v3422, 127
      %v3940 = vpop.permute.xlu0 %3939
      %3941 = vrot.lane.b32.xlu0 %v3424, 127
      %v3942 = vpop.permute.xlu0 %3941
      %3943 = vrot.lane.b32.xlu0 %v3427, 127
      %v3944 = vpop.permute.xlu0 %3943
      %3945 = vrot.lane.b32.xlu0 %v3429, 127
      %v3946 = vpop.permute.xlu0 %3945
      %3947 = vrot.lane.b32.xlu0 %v3432, 127
      %v3948 = vpop.permute.xlu0 %3947
      %3949 = vrot.lane.b32.xlu0 %v3434, 127
      %v3950 = vpop.permute.xlu0 %3949
      %3951 = vrot.lane.b32.xlu0 %v3437, 127
      %v3952 = vpop.permute.xlu0 %3951
      %3953 = vrot.lane.b32.xlu0 %v3439, 127
      %v3954 = vpop.permute.xlu0 %3953
      %3955 = vrot.lane.b32.xlu0 %v3442, 127
      %v3956 = vpop.permute.xlu0 %3955
      %3957 = vrot.lane.b32.xlu0 %v3444, 127
      %v3958 = vpop.permute.xlu0 %3957
      %3959 = vrot.lane.b32.xlu0 %v3447, 127
      %v3960 = vpop.permute.xlu0 %3959
      %3961 = vrot.lane.b32.xlu0 %v3449, 127
      %v3962 = vpop.permute.xlu0 %3961
      %3963 = vrot.lane.b32.xlu0 %v3452, 127
      %v3964 = vpop.permute.xlu0 %3963
      %3965 = vrot.lane.b32.xlu0 %v3454, 127
      %v3966 = vpop.permute.xlu0 %3965
      %v4095 = vmax.f32 %v3583, %v3712
      %v4096 = vmax.f32 %v3584, %v3714
      %v4097 = vmax.f32 %v3585, %v3716
      %v4098 = vmax.f32 %v3586, %v3718
      %v4099 = vmax.f32 %v3587, %v3720
      %v4100 = vmax.f32 %v3588, %v3722
      %v4101 = vmax.f32 %v3589, %v3724
      %v4102 = vmax.f32 %v3590, %v3726
      %v4103 = vmax.f32 %v3591, %v3728
      %v4104 = vmax.f32 %v3592, %v3730
      %v4105 = vmax.f32 %v3593, %v3732
      %v4106 = vmax.f32 %v3594, %v3734
      %v4107 = vmax.f32 %v3595, %v3736
      %v4108 = vmax.f32 %v3596, %v3738
      %v4109 = vmax.f32 %v3597, %v3740
      %v4110 = vmax.f32 %v3598, %v3742
      %v4111 = vmax.f32 %v3599, %v3744
      %v4112 = vmax.f32 %v3600, %v3746
      %v4113 = vmax.f32 %v3601, %v3748
      %v4114 = vmax.f32 %v3602, %v3750
      %v4115 = vmax.f32 %v3603, %v3752
      %v4116 = vmax.f32 %v3604, %v3754
      %v4117 = vmax.f32 %v3605, %v3756
      %v4118 = vmax.f32 %v3606, %v3758
      %v4119 = vmax.f32 %v3607, %v3760
      %v4120 = vmax.f32 %v3608, %v3762
      %v4121 = vmax.f32 %v3609, %v3764
      %v4122 = vmax.f32 %v3610, %v3766
      %v4123 = vmax.f32 %v3611, %v3768
      %v4124 = vmax.f32 %v3612, %v3770
      %v4125 = vmax.f32 %v3613, %v3772
      %v4126 = vmax.f32 %v3614, %v3774
      %v4127 = vmax.f32 %v3615, %v3776
      %v4128 = vmax.f32 %v3616, %v3778
      %v4129 = vmax.f32 %v3617, %v3780
      %v4130 = vmax.f32 %v3618, %v3782
      %v4131 = vmax.f32 %v3619, %v3784
      %v4132 = vmax.f32 %v3620, %v3786
      %v4133 = vmax.f32 %v3621, %v3788
      %v4134 = vmax.f32 %v3622, %v3790
      %v4135 = vmax.f32 %v3623, %v3792
      %v4136 = vmax.f32 %v3624, %v3794
      %v4137 = vmax.f32 %v3625, %v3796
      %v4138 = vmax.f32 %v3626, %v3798
      %v4139 = vmax.f32 %v3627, %v3800
      %v4140 = vmax.f32 %v3628, %v3802
      %v4141 = vmax.f32 %v3629, %v3804
      %v4142 = vmax.f32 %v3630, %v3806
      %v4143 = vmax.f32 %v3631, %v3808
      %v4144 = vmax.f32 %v3632, %v3810
      %v4145 = vmax.f32 %v3633, %v3812
      %v4146 = vmax.f32 %v3634, %v3814
      %v4147 = vmax.f32 %v3635, %v3816
      %v4148 = vmax.f32 %v3636, %v3818
      %v4149 = vmax.f32 %v3637, %v3820
      %v4150 = vmax.f32 %v3638, %v3822
      %v4151 = vmax.f32 %v3639, %v3824
      %v4152 = vmax.f32 %v3640, %v3826
      %v4153 = vmax.f32 %v3641, %v3828
      %v4154 = vmax.f32 %v3642, %v3830
      %v4155 = vmax.f32 %v3643, %v3832
      %v4156 = vmax.f32 %v3644, %v3834
      %v4157 = vmax.f32 %v3645, %v3836
      %v4158 = vmax.f32 %v3646, %v3838
      %v4159 = vmax.f32 %v3647, %v3840
      %v4160 = vmax.f32 %v3648, %v3842
      %v4161 = vmax.f32 %v3649, %v3844
      %v4162 = vmax.f32 %v3650, %v3846
      %v4163 = vmax.f32 %v3651, %v3848
      %v4164 = vmax.f32 %v3652, %v3850
      %v4165 = vmax.f32 %v3653, %v3852
      %v4166 = vmax.f32 %v3654, %v3854
      %v4167 = vmax.f32 %v3655, %v3856
      %v4168 = vmax.f32 %v3656, %v3858
      %v4169 = vmax.f32 %v3657, %v3860
      %v4170 = vmax.f32 %v3658, %v3862
      %v4171 = vmax.f32 %v3659, %v3864
      %v4172 = vmax.f32 %v3660, %v3866
      %v4173 = vmax.f32 %v3661, %v3868
      %v4174 = vmax.f32 %v3662, %v3870
      %v4175 = vmax.f32 %v3663, %v3872
      %v4176 = vmax.f32 %v3664, %v3874
      %v4177 = vmax.f32 %v3665, %v3876
      %v4178 = vmax.f32 %v3666, %v3878
      %v4179 = vmax.f32 %v3667, %v3880
      %v4180 = vmax.f32 %v3668, %v3882
      %v4181 = vmax.f32 %v3669, %v3884
      %v4182 = vmax.f32 %v3670, %v3886
      %v4183 = vmax.f32 %v3671, %v3888
      %v4184 = vmax.f32 %v3672, %v3890
      %v4185 = vmax.f32 %v3673, %v3892
      %v4186 = vmax.f32 %v3674, %v3894
      %v4187 = vmax.f32 %v3675, %v3896
      %v4188 = vmax.f32 %v3676, %v3898
      %v4189 = vmax.f32 %v3677, %v3900
      %v4190 = vmax.f32 %v3678, %v3902
      %v4191 = vmax.f32 %v3679, %v3904
      %v4192 = vmax.f32 %v3680, %v3906
      %v4193 = vmax.f32 %v3681, %v3908
      %v4194 = vmax.f32 %v3682, %v3910
      %v4195 = vmax.f32 %v3683, %v3912
      %v4196 = vmax.f32 %v3684, %v3914
      %v4197 = vmax.f32 %v3685, %v3916
      %v4198 = vmax.f32 %v3686, %v3918
      %v4199 = vmax.f32 %v3687, %v3920
      %v4200 = vmax.f32 %v3688, %v3922
      %v4201 = vmax.f32 %v3689, %v3924
      %v4202 = vmax.f32 %v3690, %v3926
      %v4203 = vmax.f32 %v3691, %v3928
      %v4204 = vmax.f32 %v3692, %v3930
      %v4205 = vmax.f32 %v3693, %v3932
      %v4206 = vmax.f32 %v3694, %v3934
      %v4207 = vmax.f32 %v3695, %v3936
      %v4208 = vmax.f32 %v3696, %v3938
      %v4209 = vmax.f32 %v3697, %v3940
      %v4210 = vmax.f32 %v3698, %v3942
      %v4211 = vmax.f32 %v3699, %v3944
      %v4212 = vmax.f32 %v3700, %v3946
      %v4213 = vmax.f32 %v3701, %v3948
      %v4214 = vmax.f32 %v3702, %v3950
      %v4215 = vmax.f32 %v3703, %v3952
      %v4216 = vmax.f32 %v3704, %v3954
      %v4217 = vmax.f32 %v3705, %v3956
      %v4218 = vmax.f32 %v3706, %v3958
      %v4219 = vmax.f32 %v3707, %v3960
      %v4220 = vmax.f32 %v3708, %v3962
      %v4221 = vmax.f32 %v3709, %v3964
      %v4222 = vmax.f32 %v3710, %v3966
      %4223 = vrot.lane.b32.xlu0 %v3137, 126
      %v4224 = vpop.permute.xlu0 %4223
      %4225 = vrot.lane.b32.xlu0 %v3139, 126
      %v4226 = vpop.permute.xlu0 %4225
      %4227 = vrot.lane.b32.xlu0 %v3142, 126
      %v4228 = vpop.permute.xlu0 %4227
      %4229 = vrot.lane.b32.xlu0 %v3144, 126
      %v4230 = vpop.permute.xlu0 %4229
      %4231 = vrot.lane.b32.xlu0 %v3147, 126
      %v4232 = vpop.permute.xlu0 %4231
      %4233 = vrot.lane.b32.xlu0 %v3149, 126
      %v4234 = vpop.permute.xlu0 %4233
      %4235 = vrot.lane.b32.xlu0 %v3152, 126
      %v4236 = vpop.permute.xlu0 %4235
      %4237 = vrot.lane.b32.xlu0 %v3154, 126
      %v4238 = vpop.permute.xlu0 %4237
      %4239 = vrot.lane.b32.xlu0 %v3157, 126
      %v4240 = vpop.permute.xlu0 %4239
      %4241 = vrot.lane.b32.xlu0 %v3159, 126
      %v4242 = vpop.permute.xlu0 %4241
      %4243 = vrot.lane.b32.xlu0 %v3162, 126
      %v4244 = vpop.permute.xlu0 %4243
      %4245 = vrot.lane.b32.xlu0 %v3164, 126
      %v4246 = vpop.permute.xlu0 %4245
      %4247 = vrot.lane.b32.xlu0 %v3167, 126
      %v4248 = vpop.permute.xlu0 %4247
      %4249 = vrot.lane.b32.xlu0 %v3169, 126
      %v4250 = vpop.permute.xlu0 %4249
      %4251 = vrot.lane.b32.xlu0 %v3172, 126
      %v4252 = vpop.permute.xlu0 %4251
      %4253 = vrot.lane.b32.xlu0 %v3174, 126
      %v4254 = vpop.permute.xlu0 %4253
      %4255 = vrot.lane.b32.xlu0 %v3177, 126
      %v4256 = vpop.permute.xlu0 %4255
      %4257 = vrot.lane.b32.xlu0 %v3179, 126
      %v4258 = vpop.permute.xlu0 %4257
      %4259 = vrot.lane.b32.xlu0 %v3182, 126
      %v4260 = vpop.permute.xlu0 %4259
      %4261 = vrot.lane.b32.xlu0 %v3184, 126
      %v4262 = vpop.permute.xlu0 %4261
      %4263 = vrot.lane.b32.xlu0 %v3187, 126
      %v4264 = vpop.permute.xlu0 %4263
      %4265 = vrot.lane.b32.xlu0 %v3189, 126
      %v4266 = vpop.permute.xlu0 %4265
      %4267 = vrot.lane.b32.xlu0 %v3192, 126
      %v4268 = vpop.permute.xlu0 %4267
      %4269 = vrot.lane.b32.xlu0 %v3194, 126
      %v4270 = vpop.permute.xlu0 %4269
      %4271 = vrot.lane.b32.xlu0 %v3197, 126
      %v4272 = vpop.permute.xlu0 %4271
      %4273 = vrot.lane.b32.xlu0 %v3199, 126
      %v4274 = vpop.permute.xlu0 %4273
      %4275 = vrot.lane.b32.xlu0 %v3202, 126
      %v4276 = vpop.permute.xlu0 %4275
      %4277 = vrot.lane.b32.xlu0 %v3204, 126
      %v4278 = vpop.permute.xlu0 %4277
      %4279 = vrot.lane.b32.xlu0 %v3207, 126
      %v4280 = vpop.permute.xlu0 %4279
      %4281 = vrot.lane.b32.xlu0 %v3209, 126
      %v4282 = vpop.permute.xlu0 %4281
      %4283 = vrot.lane.b32.xlu0 %v3212, 126
      %v4284 = vpop.permute.xlu0 %4283
      %4285 = vrot.lane.b32.xlu0 %v3214, 126
      %v4286 = vpop.permute.xlu0 %4285
      %4287 = vrot.lane.b32.xlu0 %v3217, 126
      %v4288 = vpop.permute.xlu0 %4287
      %4289 = vrot.lane.b32.xlu0 %v3219, 126
      %v4290 = vpop.permute.xlu0 %4289
      %4291 = vrot.lane.b32.xlu0 %v3222, 126
      %v4292 = vpop.permute.xlu0 %4291
      %4293 = vrot.lane.b32.xlu0 %v3224, 126
      %v4294 = vpop.permute.xlu0 %4293
      %4295 = vrot.lane.b32.xlu0 %v3227, 126
      %v4296 = vpop.permute.xlu0 %4295
      %4297 = vrot.lane.b32.xlu0 %v3229, 126
      %v4298 = vpop.permute.xlu0 %4297
      %4299 = vrot.lane.b32.xlu0 %v3232, 126
      %v4300 = vpop.permute.xlu0 %4299
      %4301 = vrot.lane.b32.xlu0 %v3234, 126
      %v4302 = vpop.permute.xlu0 %4301
      %4303 = vrot.lane.b32.xlu0 %v3237, 126
      %v4304 = vpop.permute.xlu0 %4303
      %4305 = vrot.lane.b32.xlu0 %v3239, 126
      %v4306 = vpop.permute.xlu0 %4305
      %4307 = vrot.lane.b32.xlu0 %v3242, 126
      %v4308 = vpop.permute.xlu0 %4307
      %4309 = vrot.lane.b32.xlu0 %v3244, 126
      %v4310 = vpop.permute.xlu0 %4309
      %4311 = vrot.lane.b32.xlu0 %v3247, 126
      %v4312 = vpop.permute.xlu0 %4311
      %4313 = vrot.lane.b32.xlu0 %v3249, 126
      %v4314 = vpop.permute.xlu0 %4313
      %4315 = vrot.lane.b32.xlu0 %v3252, 126
      %v4316 = vpop.permute.xlu0 %4315
      %4317 = vrot.lane.b32.xlu0 %v3254, 126
      %v4318 = vpop.permute.xlu0 %4317
      %4319 = vrot.lane.b32.xlu0 %v3257, 126
      %v4320 = vpop.permute.xlu0 %4319
      %4321 = vrot.lane.b32.xlu0 %v3259, 126
      %v4322 = vpop.permute.xlu0 %4321
      %4323 = vrot.lane.b32.xlu0 %v3262, 126
      %v4324 = vpop.permute.xlu0 %4323
      %4325 = vrot.lane.b32.xlu0 %v3264, 126
      %v4326 = vpop.permute.xlu0 %4325
      %4327 = vrot.lane.b32.xlu0 %v3267, 126
      %v4328 = vpop.permute.xlu0 %4327
      %4329 = vrot.lane.b32.xlu0 %v3269, 126
      %v4330 = vpop.permute.xlu0 %4329
      %4331 = vrot.lane.b32.xlu0 %v3272, 126
      %v4332 = vpop.permute.xlu0 %4331
      %4333 = vrot.lane.b32.xlu0 %v3274, 126
      %v4334 = vpop.permute.xlu0 %4333
      %4335 = vrot.lane.b32.xlu0 %v3277, 126
      %v4336 = vpop.permute.xlu0 %4335
      %4337 = vrot.lane.b32.xlu0 %v3279, 126
      %v4338 = vpop.permute.xlu0 %4337
      %4339 = vrot.lane.b32.xlu0 %v3282, 126
      %v4340 = vpop.permute.xlu0 %4339
      %4341 = vrot.lane.b32.xlu0 %v3284, 126
      %v4342 = vpop.permute.xlu0 %4341
      %4343 = vrot.lane.b32.xlu0 %v3287, 126
      %v4344 = vpop.permute.xlu0 %4343
      %4345 = vrot.lane.b32.xlu0 %v3289, 126
      %v4346 = vpop.permute.xlu0 %4345
      %4347 = vrot.lane.b32.xlu0 %v3292, 126
      %v4348 = vpop.permute.xlu0 %4347
      %4349 = vrot.lane.b32.xlu0 %v3294, 126
      %v4350 = vpop.permute.xlu0 %4349
      %4351 = vrot.lane.b32.xlu0 %v3297, 126
      %v4352 = vpop.permute.xlu0 %4351
      %4353 = vrot.lane.b32.xlu0 %v3299, 126
      %v4354 = vpop.permute.xlu0 %4353
      %4355 = vrot.lane.b32.xlu0 %v3302, 126
      %v4356 = vpop.permute.xlu0 %4355
      %4357 = vrot.lane.b32.xlu0 %v3304, 126
      %v4358 = vpop.permute.xlu0 %4357
      %4359 = vrot.lane.b32.xlu0 %v3307, 126
      %v4360 = vpop.permute.xlu0 %4359
      %4361 = vrot.lane.b32.xlu0 %v3309, 126
      %v4362 = vpop.permute.xlu0 %4361
      %4363 = vrot.lane.b32.xlu0 %v3312, 126
      %v4364 = vpop.permute.xlu0 %4363
      %4365 = vrot.lane.b32.xlu0 %v3314, 126
      %v4366 = vpop.permute.xlu0 %4365
      %4367 = vrot.lane.b32.xlu0 %v3317, 126
      %v4368 = vpop.permute.xlu0 %4367
      %4369 = vrot.lane.b32.xlu0 %v3319, 126
      %v4370 = vpop.permute.xlu0 %4369
      %4371 = vrot.lane.b32.xlu0 %v3322, 126
      %v4372 = vpop.permute.xlu0 %4371
      %4373 = vrot.lane.b32.xlu0 %v3324, 126
      %v4374 = vpop.permute.xlu0 %4373
      %4375 = vrot.lane.b32.xlu0 %v3327, 126
      %v4376 = vpop.permute.xlu0 %4375
      %4377 = vrot.lane.b32.xlu0 %v3329, 126
      %v4378 = vpop.permute.xlu0 %4377
      %4379 = vrot.lane.b32.xlu0 %v3332, 126
      %v4380 = vpop.permute.xlu0 %4379
      %4381 = vrot.lane.b32.xlu0 %v3334, 126
      %v4382 = vpop.permute.xlu0 %4381
      %4383 = vrot.lane.b32.xlu0 %v3337, 126
      %v4384 = vpop.permute.xlu0 %4383
      %4385 = vrot.lane.b32.xlu0 %v3339, 126
      %v4386 = vpop.permute.xlu0 %4385
      %4387 = vrot.lane.b32.xlu0 %v3342, 126
      %v4388 = vpop.permute.xlu0 %4387
      %4389 = vrot.lane.b32.xlu0 %v3344, 126
      %v4390 = vpop.permute.xlu0 %4389
      %4391 = vrot.lane.b32.xlu0 %v3347, 126
      %v4392 = vpop.permute.xlu0 %4391
      %4393 = vrot.lane.b32.xlu0 %v3349, 126
      %v4394 = vpop.permute.xlu0 %4393
      %4395 = vrot.lane.b32.xlu0 %v3352, 126
      %v4396 = vpop.permute.xlu0 %4395
      %4397 = vrot.lane.b32.xlu0 %v3354, 126
      %v4398 = vpop.permute.xlu0 %4397
      %4399 = vrot.lane.b32.xlu0 %v3357, 126
      %v4400 = vpop.permute.xlu0 %4399
      %4401 = vrot.lane.b32.xlu0 %v3359, 126
      %v4402 = vpop.permute.xlu0 %4401
      %4403 = vrot.lane.b32.xlu0 %v3362, 126
      %v4404 = vpop.permute.xlu0 %4403
      %4405 = vrot.lane.b32.xlu0 %v3364, 126
      %v4406 = vpop.permute.xlu0 %4405
      %4407 = vrot.lane.b32.xlu0 %v3367, 126
      %v4408 = vpop.permute.xlu0 %4407
      %4409 = vrot.lane.b32.xlu0 %v3369, 126
      %v4410 = vpop.permute.xlu0 %4409
      %4411 = vrot.lane.b32.xlu0 %v3372, 126
      %v4412 = vpop.permute.xlu0 %4411
      %4413 = vrot.lane.b32.xlu0 %v3374, 126
      %v4414 = vpop.permute.xlu0 %4413
      %4415 = vrot.lane.b32.xlu0 %v3377, 126
      %v4416 = vpop.permute.xlu0 %4415
      %4417 = vrot.lane.b32.xlu0 %v3379, 126
      %v4418 = vpop.permute.xlu0 %4417
      %4419 = vrot.lane.b32.xlu0 %v3382, 126
      %v4420 = vpop.permute.xlu0 %4419
      %4421 = vrot.lane.b32.xlu0 %v3384, 126
      %v4422 = vpop.permute.xlu0 %4421
      %4423 = vrot.lane.b32.xlu0 %v3387, 126
      %v4424 = vpop.permute.xlu0 %4423
      %4425 = vrot.lane.b32.xlu0 %v3389, 126
      %v4426 = vpop.permute.xlu0 %4425
      %4427 = vrot.lane.b32.xlu0 %v3392, 126
      %v4428 = vpop.permute.xlu0 %4427
      %4429 = vrot.lane.b32.xlu0 %v3394, 126
      %v4430 = vpop.permute.xlu0 %4429
      %4431 = vrot.lane.b32.xlu0 %v3397, 126
      %v4432 = vpop.permute.xlu0 %4431
      %4433 = vrot.lane.b32.xlu0 %v3399, 126
      %v4434 = vpop.permute.xlu0 %4433
      %4435 = vrot.lane.b32.xlu0 %v3402, 126
      %v4436 = vpop.permute.xlu0 %4435
      %4437 = vrot.lane.b32.xlu0 %v3404, 126
      %v4438 = vpop.permute.xlu0 %4437
      %4439 = vrot.lane.b32.xlu0 %v3407, 126
      %v4440 = vpop.permute.xlu0 %4439
      %4441 = vrot.lane.b32.xlu0 %v3409, 126
      %v4442 = vpop.permute.xlu0 %4441
      %4443 = vrot.lane.b32.xlu0 %v3412, 126
      %v4444 = vpop.permute.xlu0 %4443
      %4445 = vrot.lane.b32.xlu0 %v3414, 126
      %v4446 = vpop.permute.xlu0 %4445
      %4447 = vrot.lane.b32.xlu0 %v3417, 126
      %v4448 = vpop.permute.xlu0 %4447
      %4449 = vrot.lane.b32.xlu0 %v3419, 126
      %v4450 = vpop.permute.xlu0 %4449
      %4451 = vrot.lane.b32.xlu0 %v3422, 126
      %v4452 = vpop.permute.xlu0 %4451
      %4453 = vrot.lane.b32.xlu0 %v3424, 126
      %v4454 = vpop.permute.xlu0 %4453
      %4455 = vrot.lane.b32.xlu0 %v3427, 126
      %v4456 = vpop.permute.xlu0 %4455
      %4457 = vrot.lane.b32.xlu0 %v3429, 126
      %v4458 = vpop.permute.xlu0 %4457
      %4459 = vrot.lane.b32.xlu0 %v3432, 126
      %v4460 = vpop.permute.xlu0 %4459
      %4461 = vrot.lane.b32.xlu0 %v3434, 126
      %v4462 = vpop.permute.xlu0 %4461
      %4463 = vrot.lane.b32.xlu0 %v3437, 126
      %v4464 = vpop.permute.xlu0 %4463
      %4465 = vrot.lane.b32.xlu0 %v3439, 126
      %v4466 = vpop.permute.xlu0 %4465
      %4467 = vrot.lane.b32.xlu0 %v3442, 126
      %v4468 = vpop.permute.xlu0 %4467
      %4469 = vrot.lane.b32.xlu0 %v3444, 126
      %v4470 = vpop.permute.xlu0 %4469
      %4471 = vrot.lane.b32.xlu0 %v3447, 126
      %v4472 = vpop.permute.xlu0 %4471
      %4473 = vrot.lane.b32.xlu0 %v3449, 126
      %v4474 = vpop.permute.xlu0 %4473
      %4475 = vrot.lane.b32.xlu0 %v3452, 126
      %v4476 = vpop.permute.xlu0 %4475
      %4477 = vrot.lane.b32.xlu0 %v3454, 126
      %v4478 = vpop.permute.xlu0 %4477
      %v4607 = vmax.f32 %v4095, %v4224
      %v4608 = vmax.f32 %v4096, %v4226
      %v4609 = vmax.f32 %v4097, %v4228
      %v4610 = vmax.f32 %v4098, %v4230
      %v4611 = vmax.f32 %v4099, %v4232
      %v4612 = vmax.f32 %v4100, %v4234
      %v4613 = vmax.f32 %v4101, %v4236
      %v4614 = vmax.f32 %v4102, %v4238
      %v4615 = vmax.f32 %v4103, %v4240
      %v4616 = vmax.f32 %v4104, %v4242
      %v4617 = vmax.f32 %v4105, %v4244
      %v4618 = vmax.f32 %v4106, %v4246
      %v4619 = vmax.f32 %v4107, %v4248
      %v4620 = vmax.f32 %v4108, %v4250
      %v4621 = vmax.f32 %v4109, %v4252
      %v4622 = vmax.f32 %v4110, %v4254
      %v4623 = vmax.f32 %v4111, %v4256
      %v4624 = vmax.f32 %v4112, %v4258
      %v4625 = vmax.f32 %v4113, %v4260
      %v4626 = vmax.f32 %v4114, %v4262
      %v4627 = vmax.f32 %v4115, %v4264
      %v4628 = vmax.f32 %v4116, %v4266
      %v4629 = vmax.f32 %v4117, %v4268
      %v4630 = vmax.f32 %v4118, %v4270
      %v4631 = vmax.f32 %v4119, %v4272
      %v4632 = vmax.f32 %v4120, %v4274
      %v4633 = vmax.f32 %v4121, %v4276
      %v4634 = vmax.f32 %v4122, %v4278
      %v4635 = vmax.f32 %v4123, %v4280
      %v4636 = vmax.f32 %v4124, %v4282
      %v4637 = vmax.f32 %v4125, %v4284
      %v4638 = vmax.f32 %v4126, %v4286
      %v4639 = vmax.f32 %v4127, %v4288
      %v4640 = vmax.f32 %v4128, %v4290
      %v4641 = vmax.f32 %v4129, %v4292
      %v4642 = vmax.f32 %v4130, %v4294
      %v4643 = vmax.f32 %v4131, %v4296
      %v4644 = vmax.f32 %v4132, %v4298
      %v4645 = vmax.f32 %v4133, %v4300
      %v4646 = vmax.f32 %v4134, %v4302
      %v4647 = vmax.f32 %v4135, %v4304
      %v4648 = vmax.f32 %v4136, %v4306
      %v4649 = vmax.f32 %v4137, %v4308
      %v4650 = vmax.f32 %v4138, %v4310
      %v4651 = vmax.f32 %v4139, %v4312
      %v4652 = vmax.f32 %v4140, %v4314
      %v4653 = vmax.f32 %v4141, %v4316
      %v4654 = vmax.f32 %v4142, %v4318
      %v4655 = vmax.f32 %v4143, %v4320
      %v4656 = vmax.f32 %v4144, %v4322
      %v4657 = vmax.f32 %v4145, %v4324
      %v4658 = vmax.f32 %v4146, %v4326
      %v4659 = vmax.f32 %v4147, %v4328
      %v4660 = vmax.f32 %v4148, %v4330
      %v4661 = vmax.f32 %v4149, %v4332
      %v4662 = vmax.f32 %v4150, %v4334
      %v4663 = vmax.f32 %v4151, %v4336
      %v4664 = vmax.f32 %v4152, %v4338
      %v4665 = vmax.f32 %v4153, %v4340
      %v4666 = vmax.f32 %v4154, %v4342
      %v4667 = vmax.f32 %v4155, %v4344
      %v4668 = vmax.f32 %v4156, %v4346
      %v4669 = vmax.f32 %v4157, %v4348
      %v4670 = vmax.f32 %v4158, %v4350
      %v4671 = vmax.f32 %v4159, %v4352
      %v4672 = vmax.f32 %v4160, %v4354
      %v4673 = vmax.f32 %v4161, %v4356
      %v4674 = vmax.f32 %v4162, %v4358
      %v4675 = vmax.f32 %v4163, %v4360
      %v4676 = vmax.f32 %v4164, %v4362
      %v4677 = vmax.f32 %v4165, %v4364
      %v4678 = vmax.f32 %v4166, %v4366
      %v4679 = vmax.f32 %v4167, %v4368
      %v4680 = vmax.f32 %v4168, %v4370
      %v4681 = vmax.f32 %v4169, %v4372
      %v4682 = vmax.f32 %v4170, %v4374
      %v4683 = vmax.f32 %v4171, %v4376
      %v4684 = vmax.f32 %v4172, %v4378
      %v4685 = vmax.f32 %v4173, %v4380
      %v4686 = vmax.f32 %v4174, %v4382
      %v4687 = vmax.f32 %v4175, %v4384
      %v4688 = vmax.f32 %v4176, %v4386
      %v4689 = vmax.f32 %v4177, %v4388
      %v4690 = vmax.f32 %v4178, %v4390
      %v4691 = vmax.f32 %v4179, %v4392
      %v4692 = vmax.f32 %v4180, %v4394
      %v4693 = vmax.f32 %v4181, %v4396
      %v4694 = vmax.f32 %v4182, %v4398
      %v4695 = vmax.f32 %v4183, %v4400
      %v4696 = vmax.f32 %v4184, %v4402
      %v4697 = vmax.f32 %v4185, %v4404
      %v4698 = vmax.f32 %v4186, %v4406
      %v4699 = vmax.f32 %v4187, %v4408
      %v4700 = vmax.f32 %v4188, %v4410
      %v4701 = vmax.f32 %v4189, %v4412
      %v4702 = vmax.f32 %v4190, %v4414
      %v4703 = vmax.f32 %v4191, %v4416
      %v4704 = vmax.f32 %v4192, %v4418
      %v4705 = vmax.f32 %v4193, %v4420
      %v4706 = vmax.f32 %v4194, %v4422
      %v4707 = vmax.f32 %v4195, %v4424
      %v4708 = vmax.f32 %v4196, %v4426
      %v4709 = vmax.f32 %v4197, %v4428
      %v4710 = vmax.f32 %v4198, %v4430
      %v4711 = vmax.f32 %v4199, %v4432
      %v4712 = vmax.f32 %v4200, %v4434
      %v4713 = vmax.f32 %v4201, %v4436
      %v4714 = vmax.f32 %v4202, %v4438
      %v4715 = vmax.f32 %v4203, %v4440
      %v4716 = vmax.f32 %v4204, %v4442
      %v4717 = vmax.f32 %v4205, %v4444
      %v4718 = vmax.f32 %v4206, %v4446
      %v4719 = vmax.f32 %v4207, %v4448
      %v4720 = vmax.f32 %v4208, %v4450
      %v4721 = vmax.f32 %v4209, %v4452
      %v4722 = vmax.f32 %v4210, %v4454
      %v4723 = vmax.f32 %v4211, %v4456
      %v4724 = vmax.f32 %v4212, %v4458
      %v4725 = vmax.f32 %v4213, %v4460
      %v4726 = vmax.f32 %v4214, %v4462
      %v4727 = vmax.f32 %v4215, %v4464
      %v4728 = vmax.f32 %v4216, %v4466
      %v4729 = vmax.f32 %v4217, %v4468
      %v4730 = vmax.f32 %v4218, %v4470
      %v4731 = vmax.f32 %v4219, %v4472
      %v4732 = vmax.f32 %v4220, %v4474
      %v4733 = vmax.f32 %v4221, %v4476
      %v4734 = vmax.f32 %v4222, %v4478
      %vm4735 = vcmask 130048
      %4736 = vst.msk [vmem:[%s123] sm:$0xff] %vm4735, %v4607
      %4737 = vst.msk [vmem:[%s123 + $0x8] sm:$0xff] %vm4735, %v4608
      %4738 = vst.msk [vmem:[%s123 + $0x10] sm:$0xff] %vm4735, %v4609
      %4739 = vst.msk [vmem:[%s123 + $0x18] sm:$0xff] %vm4735, %v4610
      %4740 = vst.msk [vmem:[%s123 + $0x20] sm:$0xff] %vm4735, %v4611
      %4741 = vst.msk [vmem:[%s123 + $0x28] sm:$0xff] %vm4735, %v4612
      %4742 = vst.msk [vmem:[%s123 + $0x30] sm:$0xff] %vm4735, %v4613
      %4743 = vst.msk [vmem:[%s123 + $0x38] sm:$0xff] %vm4735, %v4614
      %4744 = vst.msk [vmem:[%s123 + $0x40] sm:$0xff] %vm4735, %v4615
      %4745 = vst.msk [vmem:[%s123 + $0x48] sm:$0xff] %vm4735, %v4616
      %4746 = vst.msk [vmem:[%s123 + $0x50] sm:$0xff] %vm4735, %v4617
      %4747 = vst.msk [vmem:[%s123 + $0x58] sm:$0xff] %vm4735, %v4618
      %4748 = vst.msk [vmem:[%s123 + $0x60] sm:$0xff] %vm4735, %v4619
      %4749 = vst.msk [vmem:[%s123 + $0x68] sm:$0xff] %vm4735, %v4620
      %4750 = vst.msk [vmem:[%s123 + $0x70] sm:$0xff] %vm4735, %v4621
      %4751 = vst.msk [vmem:[%s123 + $0x78] sm:$0xff] %vm4735, %v4622
      %4752 = vst.msk [vmem:[%s123 + $0x80] sm:$0xff] %vm4735, %v4623
      %4753 = vst.msk [vmem:[%s123 + $0x88] sm:$0xff] %vm4735, %v4624
      %4754 = vst.msk [vmem:[%s123 + $0x90] sm:$0xff] %vm4735, %v4625
      %4755 = vst.msk [vmem:[%s123 + $0x98] sm:$0xff] %vm4735, %v4626
      %4756 = vst.msk [vmem:[%s123 + $0xa0] sm:$0xff] %vm4735, %v4627
      %4757 = vst.msk [vmem:[%s123 + $0xa8] sm:$0xff] %vm4735, %v4628
      %4758 = vst.msk [vmem:[%s123 + $0xb0] sm:$0xff] %vm4735, %v4629
      %4759 = vst.msk [vmem:[%s123 + $0xb8] sm:$0xff] %vm4735, %v4630
      %4760 = vst.msk [vmem:[%s123 + $0xc0] sm:$0xff] %vm4735, %v4631
      %4761 = vst.msk [vmem:[%s123 + $0xc8] sm:$0xff] %vm4735, %v4632
      %4762 = vst.msk [vmem:[%s123 + $0xd0] sm:$0xff] %vm4735, %v4633
      %4763 = vst.msk [vmem:[%s123 + $0xd8] sm:$0xff] %vm4735, %v4634
      %4764 = vst.msk [vmem:[%s123 + $0xe0] sm:$0xff] %vm4735, %v4635
      %4765 = vst.msk [vmem:[%s123 + $0xe8] sm:$0xff] %vm4735, %v4636
      %4766 = vst.msk [vmem:[%s123 + $0xf0] sm:$0xff] %vm4735, %v4637
      %4767 = vst.msk [vmem:[%s123 + $0xf8] sm:$0xff] %vm4735, %v4638
      %4768 = vst.msk [vmem:[%s123 + $0x100] sm:$0xff] %vm4735, %v4639
      %4769 = vst.msk [vmem:[%s123 + $0x108] sm:$0xff] %vm4735, %v4640
      %4770 = vst.msk [vmem:[%s123 + $0x110] sm:$0xff] %vm4735, %v4641
      %4771 = vst.msk [vmem:[%s123 + $0x118] sm:$0xff] %vm4735, %v4642
      %4772 = vst.msk [vmem:[%s123 + $0x120] sm:$0xff] %vm4735, %v4643
      %4773 = vst.msk [vmem:[%s123 + $0x128] sm:$0xff] %vm4735, %v4644
      %4774 = vst.msk [vmem:[%s123 + $0x130] sm:$0xff] %vm4735, %v4645
      %4775 = vst.msk [vmem:[%s123 + $0x138] sm:$0xff] %vm4735, %v4646
      %4776 = vst.msk [vmem:[%s123 + $0x140] sm:$0xff] %vm4735, %v4647
      %4777 = vst.msk [vmem:[%s123 + $0x148] sm:$0xff] %vm4735, %v4648
      %4778 = vst.msk [vmem:[%s123 + $0x150] sm:$0xff] %vm4735, %v4649
      %4779 = vst.msk [vmem:[%s123 + $0x158] sm:$0xff] %vm4735, %v4650
      %4780 = vst.msk [vmem:[%s123 + $0x160] sm:$0xff] %vm4735, %v4651
      %4781 = vst.msk [vmem:[%s123 + $0x168] sm:$0xff] %vm4735, %v4652
      %4782 = vst.msk [vmem:[%s123 + $0x170] sm:$0xff] %vm4735, %v4653
      %4783 = vst.msk [vmem:[%s123 + $0x178] sm:$0xff] %vm4735, %v4654
      %4784 = vst.msk [vmem:[%s123 + $0x180] sm:$0xff] %vm4735, %v4655
      %4785 = vst.msk [vmem:[%s123 + $0x188] sm:$0xff] %vm4735, %v4656
      %4786 = vst.msk [vmem:[%s123 + $0x190] sm:$0xff] %vm4735, %v4657
      %4787 = vst.msk [vmem:[%s123 + $0x198] sm:$0xff] %vm4735, %v4658
      %4788 = vst.msk [vmem:[%s123 + $0x1a0] sm:$0xff] %vm4735, %v4659
      %4789 = vst.msk [vmem:[%s123 + $0x1a8] sm:$0xff] %vm4735, %v4660
      %4790 = vst.msk [vmem:[%s123 + $0x1b0] sm:$0xff] %vm4735, %v4661
      %4791 = vst.msk [vmem:[%s123 + $0x1b8] sm:$0xff] %vm4735, %v4662
      %4792 = vst.msk [vmem:[%s123 + $0x1c0] sm:$0xff] %vm4735, %v4663
      %4793 = vst.msk [vmem:[%s123 + $0x1c8] sm:$0xff] %vm4735, %v4664
      %4794 = vst.msk [vmem:[%s123 + $0x1d0] sm:$0xff] %vm4735, %v4665
      %4795 = vst.msk [vmem:[%s123 + $0x1d8] sm:$0xff] %vm4735, %v4666
      %4796 = vst.msk [vmem:[%s123 + $0x1e0] sm:$0xff] %vm4735, %v4667
      %4797 = vst.msk [vmem:[%s123 + $0x1e8] sm:$0xff] %vm4735, %v4668
      %4798 = vst.msk [vmem:[%s123 + $0x1f0] sm:$0xff] %vm4735, %v4669
      %4799 = vst.msk [vmem:[%s123 + $0x1f8] sm:$0xff] %vm4735, %v4670
      %4800 = vst.msk [vmem:[%s123 + $0x200] sm:$0xff] %vm4735, %v4671
      %4801 = vst.msk [vmem:[%s123 + $0x208] sm:$0xff] %vm4735, %v4672
      %4802 = vst.msk [vmem:[%s123 + $0x210] sm:$0xff] %vm4735, %v4673
      %4803 = vst.msk [vmem:[%s123 + $0x218] sm:$0xff] %vm4735, %v4674
      %4804 = vst.msk [vmem:[%s123 + $0x220] sm:$0xff] %vm4735, %v4675
      %4805 = vst.msk [vmem:[%s123 + $0x228] sm:$0xff] %vm4735, %v4676
      %4806 = vst.msk [vmem:[%s123 + $0x230] sm:$0xff] %vm4735, %v4677
      %4807 = vst.msk [vmem:[%s123 + $0x238] sm:$0xff] %vm4735, %v4678
      %4808 = vst.msk [vmem:[%s123 + $0x240] sm:$0xff] %vm4735, %v4679
      %4809 = vst.msk [vmem:[%s123 + $0x248] sm:$0xff] %vm4735, %v4680
      %4810 = vst.msk [vmem:[%s123 + $0x250] sm:$0xff] %vm4735, %v4681
      %4811 = vst.msk [vmem:[%s123 + $0x258] sm:$0xff] %vm4735, %v4682
      %4812 = vst.msk [vmem:[%s123 + $0x260] sm:$0xff] %vm4735, %v4683
      %4813 = vst.msk [vmem:[%s123 + $0x268] sm:$0xff] %vm4735, %v4684
      %4814 = vst.msk [vmem:[%s123 + $0x270] sm:$0xff] %vm4735, %v4685
      %4815 = vst.msk [vmem:[%s123 + $0x278] sm:$0xff] %vm4735, %v4686
      %4816 = vst.msk [vmem:[%s123 + $0x280] sm:$0xff] %vm4735, %v4687
      %4817 = vst.msk [vmem:[%s123 + $0x288] sm:$0xff] %vm4735, %v4688
      %4818 = vst.msk [vmem:[%s123 + $0x290] sm:$0xff] %vm4735, %v4689
      %4819 = vst.msk [vmem:[%s123 + $0x298] sm:$0xff] %vm4735, %v4690
      %4820 = vst.msk [vmem:[%s123 + $0x2a0] sm:$0xff] %vm4735, %v4691
      %4821 = vst.msk [vmem:[%s123 + $0x2a8] sm:$0xff] %vm4735, %v4692
      %4822 = vst.msk [vmem:[%s123 + $0x2b0] sm:$0xff] %vm4735, %v4693
      %4823 = vst.msk [vmem:[%s123 + $0x2b8] sm:$0xff] %vm4735, %v4694
      %4824 = vst.msk [vmem:[%s123 + $0x2c0] sm:$0xff] %vm4735, %v4695
      %4825 = vst.msk [vmem:[%s123 + $0x2c8] sm:$0xff] %vm4735, %v4696
      %4826 = vst.msk [vmem:[%s123 + $0x2d0] sm:$0xff] %vm4735, %v4697
      %4827 = vst.msk [vmem:[%s123 + $0x2d8] sm:$0xff] %vm4735, %v4698
      %4828 = vst.msk [vmem:[%s123 + $0x2e0] sm:$0xff] %vm4735, %v4699
      %4829 = vst.msk [vmem:[%s123 + $0x2e8] sm:$0xff] %vm4735, %v4700
      %4830 = vst.msk [vmem:[%s123 + $0x2f0] sm:$0xff] %vm4735, %v4701
      %4831 = vst.msk [vmem:[%s123 + $0x2f8] sm:$0xff] %vm4735, %v4702
      %4832 = vst.msk [vmem:[%s123 + $0x300] sm:$0xff] %vm4735, %v4703
      %4833 = vst.msk [vmem:[%s123 + $0x308] sm:$0xff] %vm4735, %v4704
      %4834 = vst.msk [vmem:[%s123 + $0x310] sm:$0xff] %vm4735, %v4705
      %4835 = vst.msk [vmem:[%s123 + $0x318] sm:$0xff] %vm4735, %v4706
      %4836 = vst.msk [vmem:[%s123 + $0x320] sm:$0xff] %vm4735, %v4707
      %4837 = vst.msk [vmem:[%s123 + $0x328] sm:$0xff] %vm4735, %v4708
      %4838 = vst.msk [vmem:[%s123 + $0x330] sm:$0xff] %vm4735, %v4709
      %4839 = vst.msk [vmem:[%s123 + $0x338] sm:$0xff] %vm4735, %v4710
      %4840 = vst.msk [vmem:[%s123 + $0x340] sm:$0xff] %vm4735, %v4711
      %4841 = vst.msk [vmem:[%s123 + $0x348] sm:$0xff] %vm4735, %v4712
      %4842 = vst.msk [vmem:[%s123 + $0x350] sm:$0xff] %vm4735, %v4713
      %4843 = vst.msk [vmem:[%s123 + $0x358] sm:$0xff] %vm4735, %v4714
      %4844 = vst.msk [vmem:[%s123 + $0x360] sm:$0xff] %vm4735, %v4715
      %4845 = vst.msk [vmem:[%s123 + $0x368] sm:$0xff] %vm4735, %v4716
      %4846 = vst.msk [vmem:[%s123 + $0x370] sm:$0xff] %vm4735, %v4717
      %4847 = vst.msk [vmem:[%s123 + $0x378] sm:$0xff] %vm4735, %v4718
      %4848 = vst.msk [vmem:[%s123 + $0x380] sm:$0xff] %vm4735, %v4719
      %4849 = vst.msk [vmem:[%s123 + $0x388] sm:$0xff] %vm4735, %v4720
      %4850 = vst.msk [vmem:[%s123 + $0x390] sm:$0xff] %vm4735, %v4721
      %4851 = vst.msk [vmem:[%s123 + $0x398] sm:$0xff] %vm4735, %v4722
      %4852 = vst.msk [vmem:[%s123 + $0x3a0] sm:$0xff] %vm4735, %v4723
      %4853 = vst.msk [vmem:[%s123 + $0x3a8] sm:$0xff] %vm4735, %v4724
      %4854 = vst.msk [vmem:[%s123 + $0x3b0] sm:$0xff] %vm4735, %v4725
      %4855 = vst.msk [vmem:[%s123 + $0x3b8] sm:$0xff] %vm4735, %v4726
      %4856 = vst.msk [vmem:[%s123 + $0x3c0] sm:$0xff] %vm4735, %v4727
      %4857 = vst.msk [vmem:[%s123 + $0x3c8] sm:$0xff] %vm4735, %v4728
      %4858 = vst.msk [vmem:[%s123 + $0x3d0] sm:$0xff] %vm4735, %v4729
      %4859 = vst.msk [vmem:[%s123 + $0x3d8] sm:$0xff] %vm4735, %v4730
      %4860 = vst.msk [vmem:[%s123 + $0x3e0] sm:$0xff] %vm4735, %v4731
      %4861 = vst.msk [vmem:[%s123 + $0x3e8] sm:$0xff] %vm4735, %v4732
      %4862 = vst.msk [vmem:[%s123 + $0x3f0] sm:$0xff] %vm4735, %v4733
      %4863 = vst.msk [vmem:[%s123 + $0x3f8] sm:$0xff] %vm4735, %v4734
      %s4864 = smul.u32 64, %s12
      %p4865 = scmp.lt.s32.totalorder %s4864, 127
      %s4866 = scalar_select %p4865, %s4864, 127
      %s4867 = smul.addr %s4866, 2
      %s4868 = smul.addr %s4867, 8
      %s4869 = scalar_lea.vmem %s1, %s4868
      // Predicated region
      $region25: #{_lambda_.12} parent=23 // pred_check
        %p4870 = pneg %p56
      $region26: #{_lambda_.12} parent=23 // pred_check_branch
        %4872 = sbr.rel (%p4870) target = $region28
      $region27: #{_lambda_.12} parent=23 // pred_region
        %s4873 = smul.u32 64, %s12
      $region28: #{_lambda_.12} parent=23 // pred_fallthru
        _
    $region24: #{_lambda_.12} parent=5 // pred_fallthru
      _
    %p4874 = scmp.le.s32.totalorder 2, %s7
    // Predicated region
    $region29: #{_lambda_.12} parent=5 // pred_check
      %p4875 = pneg %p4874
    $region30: #{_lambda_.12} parent=5 // pred_check_branch
      %4877 = sbr.rel (%p4875) target = $region32
    $region31: #{_lambda_.12} parent=5 // pred_region
      %s4878 = ssub.s32 %s7, 2
      // Predicated region
      $region33: #{_lambda_.12} parent=31 // pred_check
        %p4879 = pneg %p62
      $region34: #{_lambda_.12} parent=31 // pred_check_branch
        %4881 = sbr.rel (%p4879) target = $region36
      $region35: #{_lambda_.12} parent=31 // pred_region
        %s4882 = smul.u32 64, %s13
        %p4883 = scmp.lt.s32.totalorder %s4882, 127
        %s4884 = scalar_select %p4883, %s4882, 127
        %s4885 = smul.addr %s4884, 2
        %s4886 = smul.addr %s4885, 8
        %s4887 = scalar_lea.vmem %s1, %s4886
      $region36: #{_lambda_.12} parent=31 // pred_fallthru
        _
    $region32: #{_lambda_.12} parent=5 // pred_fallthru
      _
  $region6: #{_lambda_.12} parent=0 // loop_footer
    %s11 = sadd.s32 1, %s7
  $region7: #{_lambda_.12} parent=0 // loop_footer_branch
    %6 = sbr.rel target = $region3
  $region8: #{_lambda_.12} parent=0 // loop_exit
    _

// kernel: _lambda_.13
$region0: #{_lambda_.13}
  #allocation0 [shape = 'u32[]', space=smem, size = 0x4, offset = 0x4, fixed_abs, tag = 'smem constant byte address 0x4 - core index']
  #allocation1 [shape = 'u32[144,128]{1,0:T(1,128)}', space=vmem, size = 0x12000, scoped, tag = 'internal scratch']
  %s0 = inlined_call_operand.vmem [shape: bf16[8,8], index: 0, kind: input, shape index: {}]
  %s1 = inlined_call_operand.vmem [shape: bf16[8,4096], index: 1, kind: input, shape index: {}]
  %s2 = inlined_call_operand.vmem [shape: f32[8,1], index: 2, kind: input, shape index: {}]
  %s3 = inlined_call_operand.vmem [shape: f32[8,4096], index: 3, kind: output, shape index: {}]
  %s4 = sld [smem:[#allocation0]]
  $region45: #{_lambda_.13} parent=0
    _
  %s6 = ssub.s32 1, %s4
  %s7 = scalar_select 0, %s6, %s4
  loop: start=0, step=1, limit=4
  $region2: #{_lambda_.13} parent=0 // loop_pre_header
    _
  $region3: #{_lambda_.13} parent=0 // loop_header
    %s9 = sphi 0, %s13
    %p10 = scmp.ge.s32.totalorder %s9, 4
    %s17 = sphi 0, %s17
    %s19 = sphi 0, %s17
    %s20 = sphi 0, %s19
    %s34 = sphi 0, %s20
    %s40 = sphi 0, %s42
    %s43 = sphi 0, %s40
    %s44 = sphi 0, %s43
    %s60 = sphi 0, %s44
    %s64 = sphi 0, %s64
    %s66 = sphi 0, %s64
    %s67 = sphi 0, %s66
    %s81 = sphi 0, %s67
    %s87 = sphi 0, %s89
    %s90 = sphi 0, %s87
    %s91 = sphi 0, %s90
    %s107 = sphi 0, %s91
  $region4: #{_lambda_.13} parent=0 // loop_header_branch
    %12 = sbr.rel (%p10) target = $region8
  $region5: #{_lambda_.13} parent=0 // loop_body
    %s14 = ssub.s32 %s9, 1
    %s15 = ssub.s32 %s9, 2
    %s16 = sadd.s32 %s9, 1
    %s18 = sadd.s32 %s17, 1
    %p21 = scmp.eq.s32.totalorder %s9, 1
    %p22 = scmp.ne.s32.totalorder %s17, %s19
    %p23 = scmp.eq.s32.totalorder %s9, 0
    %p24 = por %p22, %p23
    %p25 = scmp.ne.s32.totalorder %s17, %s19
    %p26 = scmp.eq.s32.totalorder %s14, 1
    %p27 = por %p25, %p26
    %p28 = scmp.ne.s32.totalorder %s19, %s20
    %p29 = scmp.eq.s32.totalorder %s14, 0
    %p30 = por %p28, %p29
    %p31 = scmp.ne.s32.totalorder %s19, %s20
    %p32 = scmp.eq.s32.totalorder %s15, 1
    %p33 = por %p31, %p32
    %p35 = scmp.ne.s32.totalorder %s20, %s34
    %p36 = scmp.eq.s32.totalorder %s15, 0
    %p37 = por %p35, %p36
    %s38 = ssub.s32 %s9, %s16
    %p39 = scmp.eq.s32.totalorder %s38, 0
    %s41 = sadd.s32 %s40, 1
    %s42 = scalar_select %p39, %s40, %s41
    %p45 = pneg %p39
    %p46 = scmp.eq.s32.totalorder %s9, 1
    %p47 = por %p45, %p46
    %p48 = scmp.ne.s32.totalorder %s40, %s43
    %p49 = scmp.eq.s32.totalorder %s9, 0
    %p50 = por %p48, %p49
    %p51 = scmp.ne.s32.totalorder %s40, %s43
    %p52 = scmp.eq.s32.totalorder %s14, 1
    %p53 = por %p51, %p52
    %p54 = scmp.ne.s32.totalorder %s43, %s44
    %p55 = scmp.eq.s32.totalorder %s14, 0
    %p56 = por %p54, %p55
    %p57 = scmp.ne.s32.totalorder %s43, %s44
    %p58 = scmp.eq.s32.totalorder %s15, 1
    %p59 = por %p57, %p58
    %p61 = scmp.ne.s32.totalorder %s44, %s60
    %p62 = scmp.eq.s32.totalorder %s15, 0
    %p63 = por %p61, %p62
    %s65 = sadd.s32 %s64, 1
    %p68 = scmp.eq.s32.totalorder %s9, 1
    %p69 = scmp.ne.s32.totalorder %s64, %s66
    %p70 = scmp.eq.s32.totalorder %s9, 0
    %p71 = por %p69, %p70
    %p72 = scmp.ne.s32.totalorder %s64, %s66
    %p73 = scmp.eq.s32.totalorder %s14, 1
    %p74 = por %p72, %p73
    %p75 = scmp.ne.s32.totalorder %s66, %s67
    %p76 = scmp.eq.s32.totalorder %s14, 0
    %p77 = por %p75, %p76
    %p78 = scmp.ne.s32.totalorder %s66, %s67
    %p79 = scmp.eq.s32.totalorder %s15, 1
    %p80 = por %p78, %p79
    %p82 = scmp.ne.s32.totalorder %s67, %s81
    %p83 = scmp.eq.s32.totalorder %s15, 0
    %p84 = por %p82, %p83
    %s85 = ssub.s32 %s9, %s16
    %p86 = scmp.eq.s32.totalorder %s85, 0
    %s88 = sadd.s32 %s87, 1
    %s89 = scalar_select %p86, %s87, %s88
    %p92 = pneg %p86
    %p93 = scmp.eq.s32.totalorder %s9, 1
    %p94 = por %p92, %p93
    %p95 = scmp.ne.s32.totalorder %s87, %s90
    %p96 = scmp.eq.s32.totalorder %s9, 0
    %p97 = por %p95, %p96
    %p98 = scmp.ne.s32.totalorder %s87, %s90
    %p99 = scmp.eq.s32.totalorder %s14, 1
    %p100 = por %p98, %p99
    %p101 = scmp.ne.s32.totalorder %s90, %s91
    %p102 = scmp.eq.s32.totalorder %s14, 0
    %p103 = por %p101, %p102
    %p104 = scmp.ne.s32.totalorder %s90, %s91
    %p105 = scmp.eq.s32.totalorder %s15, 1
    %p106 = por %p104, %p105
    %p108 = scmp.ne.s32.totalorder %s91, %s107
    %p109 = scmp.eq.s32.totalorder %s15, 0
    %p110 = por %p108, %p109
    %p111 = scmp.le.s32.totalorder 1, %s9
    %p112 = scmp.lt.s32.totalorder %s9, 3
    %p113 = pnand %p111, %p112
    %p114 = pneg %p113
    // Predicated region
    $region9: #{_lambda_.13} parent=5 // pred_check
      _
    $region10: #{_lambda_.13} parent=5 // pred_check_branch
      %116 = sbr.rel (%p113) target = $region12
    $region11: #{_lambda_.13} parent=5 // pred_region
      %s117 = ssub.s32 %s9, 1
      // Predicated region
      $region13: #{_lambda_.13} parent=11 // pred_check
        %p118 = pneg %p30
      $region14: #{_lambda_.13} parent=11 // pred_check_branch
        %120 = sbr.rel (%p118) target = $region16
      $region15: #{_lambda_.13} parent=11 // pred_region
        _
      $region16: #{_lambda_.13} parent=11 // pred_fallthru
        _
      // Predicated region
      $region17: #{_lambda_.13} parent=11 // pred_check
        %p121 = pneg %p77
      $region18: #{_lambda_.13} parent=11 // pred_check_branch
        %123 = sbr.rel (%p121) target = $region20
      $region19: #{_lambda_.13} parent=11 // pred_region
        _
      $region20: #{_lambda_.13} parent=11 // pred_fallthru
        _
    $region12: #{_lambda_.13} parent=5 // pred_fallthru
      _
    %p124 = scmp.lt.s32.totalorder %s9, 2
    // Predicated region
    $region21: #{_lambda_.13} parent=5 // pred_check
      %p125 = pneg %p124
    $region22: #{_lambda_.13} parent=5 // pred_check_branch
      %127 = sbr.rel (%p125) target = $region24
    $region23: #{_lambda_.13} parent=5 // pred_region
      // Predicated region
      $region25: #{_lambda_.13} parent=23 // pred_check
        %p128 = pneg %p50
      $region26: #{_lambda_.13} parent=23 // pred_check_branch
        %130 = sbr.rel (%p128) target = $region28
      $region27: #{_lambda_.13} parent=23 // pred_region
        %s131 = smul.u32 16, %s9
        %p132 = scmp.lt.s32.totalorder %s131, 31
        %s133 = scalar_select %p132, %s131, 31
        %s134 = smul.addr %s133, 4
        %s135 = scalar_lea.vmem %s1, %s134
        %s136 = smul.u32 16, %s9
      $region28: #{_lambda_.13} parent=23 // pred_fallthru
        _
    $region24: #{_lambda_.13} parent=5 // pred_fallthru
      _
    %p137 = scmp.le.s32.totalorder 1, %s9
    %p138 = scmp.lt.s32.totalorder %s9, 3
    %p139 = pnand %p137, %p138
    %p140 = pneg %p139
    // Predicated region
    $region29: #{_lambda_.13} parent=5 // pred_check
      _
    $region30: #{_lambda_.13} parent=5 // pred_check_branch
      %142 = sbr.rel (%p139) target = $region32
    $region31: #{_lambda_.13} parent=5 // pred_region
      %s143 = ssub.s32 %s9, 1
      %p144 = pneg %p30
      %p145 = pneg %p27
      %s146 = smul.u32 16, %s14
      %p147 = scmp.lt.s32.totalorder %s146, 31
      %s148 = scalar_select %p147, %s146, 31
      %s149 = smul.addr %s148, 4
      %s150 = scalar_lea.vmem %s1, %s149
      %p151 = pneg %p56
      %p152 = pneg %p53
      %p153 = pneg %p77
      %p154 = pneg %p74
      %p155 = pneg %p103
      %p156 = pneg %p100
      %s157 = smul.u32 16, %s14
      %p158 = scmp.lt.s32.totalorder %s157, 31
      %s159 = scalar_select %p158, %s157, 31
      %s160 = smul.addr %s159, 8
      %s161 = scalar_lea.vmem %s3, %s160
      %s162 = smul.u32 16, %s14
      %p163 = scmp.lt.s32.totalorder %s162, 31
      %s164 = scalar_select %p163, %s162, 31
      %s165 = smul.addr %s164, 4
      %s166 = scalar_lea.vmem %s1, %s165
      %s167 = smul.u32 16, %s14
      %s168 = smul.u32 16, %s14
      %p169 = scmp.lt.s32.totalorder %s168, 31
      %s170 = scalar_select %p169, %s168, 31
      %s171 = smul.addr %s170, 8
      %s172 = scalar_lea.vmem %s3, %s171
      %s173 = smul.u32 16, %s14
      %v175 = vld [vmem:[%s0] sm:$0xf]
      %v176 = vld [vmem:[%s166] sm:$0xff]
      %v177 = vld [vmem:[%s166 + $0x8] sm:$0xff]
      %v178 = vld [vmem:[%s166 + $0x10] sm:$0xff]
      %v179 = vld [vmem:[%s166 + $0x18] sm:$0xff]
      %v180 = vld [vmem:[%s166 + $0x20] sm:$0xff]
      %v181 = vld [vmem:[%s166 + $0x28] sm:$0xff]
      %v182 = vld [vmem:[%s166 + $0x30] sm:$0xff]
      %v183 = vld [vmem:[%s166 + $0x38] sm:$0xff]
      %v184 = vld [vmem:[%s2] sm:$0xff]
      %186 = vset.pattern.permute.xlu0 0
      %187 = vperm.xlu0 %186, %v184
      %v188 = vpop.permute.xlu0 %187
      %v198 = vunpack.c.l.b16 %v176
      %v199 = vunpack.c.h.b16 %v176
      %v200 = vunpack.c.l.b16 %v177
      %v201 = vunpack.c.h.b16 %v177
      %v202 = vunpack.c.l.b16 %v178
      %v203 = vunpack.c.h.b16 %v178
      %v204 = vunpack.c.l.b16 %v179
      %v205 = vunpack.c.h.b16 %v179
      %v206 = vunpack.c.l.b16 %v180
      %v207 = vunpack.c.h.b16 %v180
      %v208 = vunpack.c.l.b16 %v181
      %v209 = vunpack.c.h.b16 %v181
      %v210 = vunpack.c.l.b16 %v182
      %v211 = vunpack.c.h.b16 %v182
      %v212 = vunpack.c.l.b16 %v183
      %v213 = vunpack.c.h.b16 %v183
      %v214 = vpack.c.b16 %v198, %v198
      %v215 = vpack.c.b16 %v199, %v199
      %v216 = vpack.c.b16 %v200, %v200
      %v217 = vpack.c.b16 %v201, %v201
      %v218 = vpack.c.b16 %v202, %v202
      %v219 = vpack.c.b16 %v203, %v203
      %v220 = vpack.c.b16 %v204, %v204
      %v221 = vpack.c.b16 %v205, %v205
      %v222 = vpack.c.b16 %v206, %v206
      %v223 = vpack.c.b16 %v207, %v207
      %v224 = vpack.c.b16 %v208, %v208
      %v225 = vpack.c.b16 %v209, %v209
      %v226 = vpack.c.b16 %v210, %v210
      %v227 = vpack.c.b16 %v211, %v211
      %v228 = vpack.c.b16 %v212, %v212
      %v229 = vpack.c.b16 %v213, %v213
      %vm230 = vcmask 64512
      %v232 = vsel %vm230, %v175, 0
      %vm234 = vcmask 1043456
      %v236 = vsel %vm234, %v214, 0
      %v239 = vsel %vm234, %v215, 0
      %v242 = vsel %vm234, %v216, 0
      %v245 = vsel %vm234, %v217, 0
      %v248 = vsel %vm234, %v218, 0
      %v251 = vsel %vm234, %v219, 0
      %v254 = vsel %vm234, %v220, 0
      %v257 = vsel %vm234, %v221, 0
      %v260 = vsel %vm234, %v222, 0
      %v263 = vsel %vm234, %v223, 0
      %v266 = vsel %vm234, %v224, 0
      %v269 = vsel %vm234, %v225, 0
      %v272 = vsel %vm234, %v226, 0
      %v275 = vsel %vm234, %v227, 0
      %v278 = vsel %vm234, %v228, 0
      %v281 = vsel %vm234, %v229, 0
      %283 = vmatprep.subr.bf16.mxu0 %v239
      %284 = vmatpush1.bf16.msra.mxu0 %v236
      %285 = vmatprep.subr.bf16.mxu0 0
      %286 = vmatpush1.bf16.msra.mxu0 0
      %287 = vmatprep.subr.bf16.mxu0 0
      %288 = vmatpush1.bf16.msra.mxu0 0
      %289 = vmatprep.subr.bf16.mxu0 0
      %290 = vmatpush1.bf16.msra.mxu0 0
      %291 = vmatprep.subr.bf16.mxu0 0
      %292 = vmatpush1.bf16.msra.mxu0 0
      %293 = vmatprep.subr.bf16.mxu0 0
      %294 = vmatpush1.bf16.msra.mxu0 0
      %295 = vmatprep.subr.bf16.mxu0 0
      %296 = vmatpush1.bf16.msra.mxu0 0
      %297 = vmatprep.subr.bf16.mxu0 0
      %298 = vmatpush1.bf16.msra.mxu0 0
      %299 = vmatprep.subr.bf16.mxu0 0
      %300 = vmatpush1.bf16.msra.mxu0 0
      %301 = vmatprep.subr.bf16.mxu0 0
      %302 = vmatpush1.bf16.msra.mxu0 0
      %303 = vmatprep.subr.bf16.mxu0 0
      %304 = vmatpush1.bf16.msra.mxu0 0
      %305 = vmatprep.subr.bf16.mxu0 0
      %306 = vmatpush1.bf16.msra.mxu0 0
      %307 = vmatprep.subr.bf16.mxu0 0
      %308 = vmatpush1.bf16.msra.mxu0 0
      %309 = vmatprep.subr.bf16.mxu0 0
      %310 = vmatpush1.bf16.msra.mxu0 0
      %311 = vmatprep.subr.bf16.mxu0 0
      %312 = vmatpush1.bf16.msra.mxu0 0
      %313 = vmatprep.subr.bf16.mxu0 0
      %314 = vmatpush1.bf16.msra.mxu0 0
      %315 = vmatprep.mubr.bf16.mxu0 0
      %316 = vmatmul.mubr.bf16.gmra.mrb[0].mxu0 %v232
      %v317 = vpop.f32.mrb[0].mxu0
      %v318 = vadd.f32 %v188, %v317
      %v319 = vpop.f32.mrb[0].mxu0
      %v320 = vadd.f32 %v188, %v319
      %v321 = vpop.f32.mrb[0].mxu0
      %v322 = vpop.f32.mrb[0].mxu0
      %323 = vdwg.mxu0
      %324 = vmatprep.subr.bf16.mxu0 %v245
      %325 = vmatpush1.bf16.msra.mxu0 %v242
      %326 = vmatprep.subr.bf16.mxu0 0
      %327 = vmatpush1.bf16.msra.mxu0 0
      %328 = vmatprep.subr.bf16.mxu0 0
      %329 = vmatpush1.bf16.msra.mxu0 0
      %330 = vmatprep.subr.bf16.mxu0 0
      %331 = vmatpush1.bf16.msra.mxu0 0
      %332 = vmatprep.subr.bf16.mxu0 0
      %333 = vmatpush1.bf16.msra.mxu0 0
      %334 = vmatprep.subr.bf16.mxu0 0
      %335 = vmatpush1.bf16.msra.mxu0 0
      %336 = vmatprep.subr.bf16.mxu0 0
      %337 = vmatpush1.bf16.msra.mxu0 0
      %338 = vmatprep.subr.bf16.mxu0 0
      %339 = vmatpush1.bf16.msra.mxu0 0
      %340 = vmatprep.subr.bf16.mxu0 0
      %341 = vmatpush1.bf16.msra.mxu0 0
      %342 = vmatprep.subr.bf16.mxu0 0
      %343 = vmatpush1.bf16.msra.mxu0 0
      %344 = vmatprep.subr.bf16.mxu0 0
      %345 = vmatpush1.bf16.msra.mxu0 0
      %346 = vmatprep.subr.bf16.mxu0 0
      %347 = vmatpush1.bf16.msra.mxu0 0
      %348 = vmatprep.subr.bf16.mxu0 0
      %349 = vmatpush1.bf16.msra.mxu0 0
      %350 = vmatprep.subr.bf16.mxu0 0
      %351 = vmatpush1.bf16.msra.mxu0 0
      %352 = vmatprep.subr.bf16.mxu0 0
      %353 = vmatpush1.bf16.msra.mxu0 0
      %354 = vmatprep.subr.bf16.mxu0 0
      %355 = vmatpush1.bf16.msra.mxu0 0
      %356 = vmatprep.mubr.bf16.mxu0 0
      %357 = vmatmul.mubr.bf16.gmra.mrb[0].mxu0 %v232
      %v358 = vpop.f32.mrb[0].mxu0
      %v359 = vadd.f32 %v188, %v358
      %v360 = vpop.f32.mrb[0].mxu0
      %v361 = vadd.f32 %v188, %v360
      %v362 = vpop.f32.mrb[0].mxu0
      %v363 = vpop.f32.mrb[0].mxu0
      %364 = vdwg.mxu0
      %365 = vmatprep.subr.bf16.mxu0 %v251
      %366 = vmatpush1.bf16.msra.mxu0 %v248
      %367 = vmatprep.subr.bf16.mxu0 0
      %368 = vmatpush1.bf16.msra.mxu0 0
      %369 = vmatprep.subr.bf16.mxu0 0
      %370 = vmatpush1.bf16.msra.mxu0 0
      %371 = vmatprep.subr.bf16.mxu0 0
      %372 = vmatpush1.bf16.msra.mxu0 0
      %373 = vmatprep.subr.bf16.mxu0 0
      %374 = vmatpush1.bf16.msra.mxu0 0
      %375 = vmatprep.subr.bf16.mxu0 0
      %376 = vmatpush1.bf16.msra.mxu0 0
      %377 = vmatprep.subr.bf16.mxu0 0
      %378 = vmatpush1.bf16.msra.mxu0 0
      %379 = vmatprep.subr.bf16.mxu0 0
      %380 = vmatpush1.bf16.msra.mxu0 0
      %381 = vmatprep.subr.bf16.mxu0 0
      %382 = vmatpush1.bf16.msra.mxu0 0
      %383 = vmatprep.subr.bf16.mxu0 0
      %384 = vmatpush1.bf16.msra.mxu0 0
      %385 = vmatprep.subr.bf16.mxu0 0
      %386 = vmatpush1.bf16.msra.mxu0 0
      %387 = vmatprep.subr.bf16.mxu0 0
      %388 = vmatpush1.bf16.msra.mxu0 0
      %389 = vmatprep.subr.bf16.mxu0 0
      %390 = vmatpush1.bf16.msra.mxu0 0
      %391 = vmatprep.subr.bf16.mxu0 0
      %392 = vmatpush1.bf16.msra.mxu0 0
      %393 = vmatprep.subr.bf16.mxu0 0
      %394 = vmatpush1.bf16.msra.mxu0 0
      %395 = vmatprep.subr.bf16.mxu0 0
      %396 = vmatpush1.bf16.msra.mxu0 0
      %397 = vmatprep.mubr.bf16.mxu0 0
      %398 = vmatmul.mubr.bf16.gmra.mrb[0].mxu0 %v232
      %v399 = vpop.f32.mrb[0].mxu0
      %v400 = vadd.f32 %v188, %v399
      %v401 = vpop.f32.mrb[0].mxu0
      %v402 = vadd.f32 %v188, %v401
      %v403 = vpop.f32.mrb[0].mxu0
      %v404 = vpop.f32.mrb[0].mxu0
      %405 = vdwg.mxu0
      %406 = vmatprep.subr.bf16.mxu0 %v257
      %407 = vmatpush1.bf16.msra.mxu0 %v254
      %408 = vmatprep.subr.bf16.mxu0 0
      %409 = vmatpush1.bf16.msra.mxu0 0
      %410 = vmatprep.subr.bf16.mxu0 0
      %411 = vmatpush1.bf16.msra.mxu0 0
      %412 = vmatprep.subr.bf16.mxu0 0
      %413 = vmatpush1.bf16.msra.mxu0 0
      %414 = vmatprep.subr.bf16.mxu0 0
      %415 = vmatpush1.bf16.msra.mxu0 0
      %416 = vmatprep.subr.bf16.mxu0 0
      %417 = vmatpush1.bf16.msra.mxu0 0
      %418 = vmatprep.subr.bf16.mxu0 0
      %419 = vmatpush1.bf16.msra.mxu0 0
      %420 = vmatprep.subr.bf16.mxu0 0
      %421 = vmatpush1.bf16.msra.mxu0 0
      %422 = vmatprep.subr.bf16.mxu0 0
      %423 = vmatpush1.bf16.msra.mxu0 0
      %424 = vmatprep.subr.bf16.mxu0 0
      %425 = vmatpush1.bf16.msra.mxu0 0
      %426 = vmatprep.subr.bf16.mxu0 0
      %427 = vmatpush1.bf16.msra.mxu0 0
      %428 = vmatprep.subr.bf16.mxu0 0
      %429 = vmatpush1.bf16.msra.mxu0 0
      %430 = vmatprep.subr.bf16.mxu0 0
      %431 = vmatpush1.bf16.msra.mxu0 0
      %432 = vmatprep.subr.bf16.mxu0 0
      %433 = vmatpush1.bf16.msra.mxu0 0
      %434 = vmatprep.subr.bf16.mxu0 0
      %435 = vmatpush1.bf16.msra.mxu0 0
      %436 = vmatprep.subr.bf16.mxu0 0
      %437 = vmatpush1.bf16.msra.mxu0 0
      %438 = vmatprep.mubr.bf16.mxu0 0
      %439 = vmatmul.mubr.bf16.gmra.mrb[0].mxu0 %v232
      %v440 = vpop.f32.mrb[0].mxu0
      %v441 = vadd.f32 %v188, %v440
      %v442 = vpop.f32.mrb[0].mxu0
      %v443 = vadd.f32 %v188, %v442
      %v444 = vpop.f32.mrb[0].mxu0
      %v445 = vpop.f32.mrb[0].mxu0
      %446 = vdwg.mxu0
      %447 = vmatprep.subr.bf16.mxu0 %v263
      %448 = vmatpush1.bf16.msra.mxu0 %v260
      %449 = vmatprep.subr.bf16.mxu0 0
      %450 = vmatpush1.bf16.msra.mxu0 0
      %451 = vmatprep.subr.bf16.mxu0 0
      %452 = vmatpush1.bf16.msra.mxu0 0
      %453 = vmatprep.subr.bf16.mxu0 0
      %454 = vmatpush1.bf16.msra.mxu0 0
      %455 = vmatprep.subr.bf16.mxu0 0
      %456 = vmatpush1.bf16.msra.mxu0 0
      %457 = vmatprep.subr.bf16.mxu0 0
      %458 = vmatpush1.bf16.msra.mxu0 0
      %459 = vmatprep.subr.bf16.mxu0 0
      %460 = vmatpush1.bf16.msra.mxu0 0
      %461 = vmatprep.subr.bf16.mxu0 0
      %462 = vmatpush1.bf16.msra.mxu0 0
      %463 = vmatprep.subr.bf16.mxu0 0
      %464 = vmatpush1.bf16.msra.mxu0 0
      %465 = vmatprep.subr.bf16.mxu0 0
      %466 = vmatpush1.bf16.msra.mxu0 0
      %467 = vmatprep.subr.bf16.mxu0 0
      %468 = vmatpush1.bf16.msra.mxu0 0
      %469 = vmatprep.subr.bf16.mxu0 0
      %470 = vmatpush1.bf16.msra.mxu0 0
      %471 = vmatprep.subr.bf16.mxu0 0
      %472 = vmatpush1.bf16.msra.mxu0 0
      %473 = vmatprep.subr.bf16.mxu0 0
      %474 = vmatpush1.bf16.msra.mxu0 0
      %475 = vmatprep.subr.bf16.mxu0 0
      %476 = vmatpush1.bf16.msra.mxu0 0
      %477 = vmatprep.subr.bf16.mxu0 0
      %478 = vmatpush1.bf16.msra.mxu0 0
      %479 = vmatprep.mubr.bf16.mxu0 0
      %480 = vmatmul.mubr.bf16.gmra.mrb[0].mxu0 %v232
      %v481 = vpop.f32.mrb[0].mxu0
      %v482 = vadd.f32 %v188, %v481
      %v483 = vpop.f32.mrb[0].mxu0
      %v484 = vadd.f32 %v188, %v483
      %v485 = vpop.f32.mrb[0].mxu0
      %v486 = vpop.f32.mrb[0].mxu0
      %487 = vdwg.mxu0
      %488 = vmatprep.subr.bf16.mxu0 %v269
      %489 = vmatpush1.bf16.msra.mxu0 %v266
      %490 = vmatprep.subr.bf16.mxu0 0
      %491 = vmatpush1.bf16.msra.mxu0 0
      %492 = vmatprep.subr.bf16.mxu0 0
      %493 = vmatpush1.bf16.msra.mxu0 0
      %494 = vmatprep.subr.bf16.mxu0 0
      %495 = vmatpush1.bf16.msra.mxu0 0
      %496 = vmatprep.subr.bf16.mxu0 0
      %497 = vmatpush1.bf16.msra.mxu0 0
      %498 = vmatprep.subr.bf16.mxu0 0
      %499 = vmatpush1.bf16.msra.mxu0 0
      %500 = vmatprep.subr.bf16.mxu0 0
      %501 = vmatpush1.bf16.msra.mxu0 0
      %502 = vmatprep.subr.bf16.mxu0 0
      %503 = vmatpush1.bf16.msra.mxu0 0
      %504 = vmatprep.subr.bf16.mxu0 0
      %505 = vmatpush1.bf16.msra.mxu0 0
      %506 = vmatprep.subr.bf16.mxu0 0
      %507 = vmatpush1.bf16.msra.mxu0 0
      %508 = vmatprep.subr.bf16.mxu0 0
      %509 = vmatpush1.bf16.msra.mxu0 0
      %510 = vmatprep.subr.bf16.mxu0 0
      %511 = vmatpush1.bf16.msra.mxu0 0
      %512 = vmatprep.subr.bf16.mxu0 0
      %513 = vmatpush1.bf16.msra.mxu0 0
      %514 = vmatprep.subr.bf16.mxu0 0
      %515 = vmatpush1.bf16.msra.mxu0 0
      %516 = vmatprep.subr.bf16.mxu0 0
      %517 = vmatpush1.bf16.msra.mxu0 0
      %518 = vmatprep.subr.bf16.mxu0 0
      %519 = vmatpush1.bf16.msra.mxu0 0
      %520 = vmatprep.mubr.bf16.mxu0 0
      %521 = vmatmul.mubr.bf16.gmra.mrb[0].mxu0 %v232
      %v522 = vpop.f32.mrb[0].mxu0
      %v523 = vadd.f32 %v188, %v522
      %v524 = vpop.f32.mrb[0].mxu0
      %v525 = vadd.f32 %v188, %v524
      %v526 = vpop.f32.mrb[0].mxu0
      %v527 = vpop.f32.mrb[0].mxu0
      %528 = vdwg.mxu0
      %529 = vmatprep.subr.bf16.mxu0 %v275
      %530 = vmatpush1.bf16.msra.mxu0 %v272
      %531 = vmatprep.subr.bf16.mxu0 0
      %532 = vmatpush1.bf16.msra.mxu0 0
      %533 = vmatprep.subr.bf16.mxu0 0
      %534 = vmatpush1.bf16.msra.mxu0 0
      %535 = vmatprep.subr.bf16.mxu0 0
      %536 = vmatpush1.bf16.msra.mxu0 0
      %537 = vmatprep.subr.bf16.mxu0 0
      %538 = vmatpush1.bf16.msra.mxu0 0
      %539 = vmatprep.subr.bf16.mxu0 0
      %540 = vmatpush1.bf16.msra.mxu0 0
      %541 = vmatprep.subr.bf16.mxu0 0
      %542 = vmatpush1.bf16.msra.mxu0 0
      %543 = vmatprep.subr.bf16.mxu0 0
      %544 = vmatpush1.bf16.msra.mxu0 0
      %545 = vmatprep.subr.bf16.mxu0 0
      %546 = vmatpush1.bf16.msra.mxu0 0
      %547 = vmatprep.subr.bf16.mxu0 0
      %548 = vmatpush1.bf16.msra.mxu0 0
      %549 = vmatprep.subr.bf16.mxu0 0
      %550 = vmatpush1.bf16.msra.mxu0 0
      %551 = vmatprep.subr.bf16.mxu0 0
      %552 = vmatpush1.bf16.msra.mxu0 0
      %553 = vmatprep.subr.bf16.mxu0 0
      %554 = vmatpush1.bf16.msra.mxu0 0
      %555 = vmatprep.subr.bf16.mxu0 0
      %556 = vmatpush1.bf16.msra.mxu0 0
      %557 = vmatprep.subr.bf16.mxu0 0
      %558 = vmatpush1.bf16.msra.mxu0 0
      %559 = vmatprep.subr.bf16.mxu0 0
      %560 = vmatpush1.bf16.msra.mxu0 0
      %561 = vmatprep.mubr.bf16.mxu0 0
      %562 = vmatmul.mubr.bf16.gmra.mrb[0].mxu0 %v232
      %v563 = vpop.f32.mrb[0].mxu0
      %v564 = vadd.f32 %v188, %v563
      %v565 = vpop.f32.mrb[0].mxu0
      %v566 = vadd.f32 %v188, %v565
      %v567 = vpop.f32.mrb[0].mxu0
      %v568 = vpop.f32.mrb[0].mxu0
      %569 = vdwg.mxu0
      %570 = vmatprep.subr.bf16.mxu0 %v281
      %571 = vmatpush1.bf16.msra.mxu0 %v278
      %572 = vmatprep.subr.bf16.mxu0 0
      %573 = vmatpush1.bf16.msra.mxu0 0
      %574 = vmatprep.subr.bf16.mxu0 0
      %575 = vmatpush1.bf16.msra.mxu0 0
      %576 = vmatprep.subr.bf16.mxu0 0
      %577 = vmatpush1.bf16.msra.mxu0 0
      %578 = vmatprep.subr.bf16.mxu0 0
      %579 = vmatpush1.bf16.msra.mxu0 0
      %580 = vmatprep.subr.bf16.mxu0 0
      %581 = vmatpush1.bf16.msra.mxu0 0
      %582 = vmatprep.subr.bf16.mxu0 0
      %583 = vmatpush1.bf16.msra.mxu0 0
      %584 = vmatprep.subr.bf16.mxu0 0
      %585 = vmatpush1.bf16.msra.mxu0 0
      %586 = vmatprep.subr.bf16.mxu0 0
      %587 = vmatpush1.bf16.msra.mxu0 0
      %588 = vmatprep.subr.bf16.mxu0 0
      %589 = vmatpush1.bf16.msra.mxu0 0
      %590 = vmatprep.subr.bf16.mxu0 0
      %591 = vmatpush1.bf16.msra.mxu0 0
      %592 = vmatprep.subr.bf16.mxu0 0
      %593 = vmatpush1.bf16.msra.mxu0 0
      %594 = vmatprep.subr.bf16.mxu0 0
      %595 = vmatpush1.bf16.msra.mxu0 0
      %596 = vmatprep.subr.bf16.mxu0 0
      %597 = vmatpush1.bf16.msra.mxu0 0
      %598 = vmatprep.subr.bf16.mxu0 0
      %599 = vmatpush1.bf16.msra.mxu0 0
      %600 = vmatprep.subr.bf16.mxu0 0
      %601 = vmatpush1.bf16.msra.mxu0 0
      %602 = vmatprep.mubr.bf16.mxu0 0
      %603 = vmatmul.mubr.bf16.gmra.mrb[0].mxu0 %v232
      %v604 = vpop.f32.mrb[0].mxu0
      %v605 = vadd.f32 %v188, %v604
      %v606 = vpop.f32.mrb[0].mxu0
      %v607 = vadd.f32 %v188, %v606
      %v608 = vpop.f32.mrb[0].mxu0
      %v609 = vpop.f32.mrb[0].mxu0
      %610 = vdwg.mxu0
      %v611 = vmax.f32 %v318, 0.0
      %v612 = vmax.f32 %v320, 0.0
      %v613 = vmax.f32 %v359, 0.0
      %v614 = vmax.f32 %v361, 0.0
      %v615 = vmax.f32 %v400, 0.0
      %v616 = vmax.f32 %v402, 0.0
      %v617 = vmax.f32 %v441, 0.0
      %v618 = vmax.f32 %v443, 0.0
      %v619 = vmax.f32 %v482, 0.0
      %v620 = vmax.f32 %v484, 0.0
      %v621 = vmax.f32 %v523, 0.0
      %v622 = vmax.f32 %v525, 0.0
      %v623 = vmax.f32 %v564, 0.0
      %v624 = vmax.f32 %v566, 0.0
      %v625 = vmax.f32 %v605, 0.0
      %v626 = vmax.f32 %v607, 0.0
      %627 = vst [vmem:[%s172] sm:$0xff] %v611
      %628 = vst [vmem:[%s172 + $0x8] sm:$0xff] %v612
      %629 = vst [vmem:[%s172 + $0x10] sm:$0xff] %v613
      %630 = vst [vmem:[%s172 + $0x18] sm:$0xff] %v614
      %631 = vst [vmem:[%s172 + $0x20] sm:$0xff] %v615
      %632 = vst [vmem:[%s172 + $0x28] sm:$0xff] %v616
      %633 = vst [vmem:[%s172 + $0x30] sm:$0xff] %v617
      %634 = vst [vmem:[%s172 + $0x38] sm:$0xff] %v618
      %635 = vst [vmem:[%s172 + $0x40] sm:$0xff] %v619
      %636 = vst [vmem:[%s172 + $0x48] sm:$0xff] %v620
      %637 = vst [vmem:[%s172 + $0x50] sm:$0xff] %v621
      %638 = vst [vmem:[%s172 + $0x58] sm:$0xff] %v622
      %639 = vst [vmem:[%s172 + $0x60] sm:$0xff] %v623
      %640 = vst [vmem:[%s172 + $0x68] sm:$0xff] %v624
      %641 = vst [vmem:[%s172 + $0x70] sm:$0xff] %v625
      %642 = vst [vmem:[%s172 + $0x78] sm:$0xff] %v626
      %s643 = smul.u32 16, %s14
      %p644 = scmp.lt.s32.totalorder %s643, 31
      %s645 = scalar_select %p644, %s643, 31
      %s646 = smul.addr %s645, 8
      %s647 = scalar_lea.vmem %s3, %s646
      // Predicated region
      $region33: #{_lambda_.13} parent=31 // pred_check
        %p648 = pneg %p100
      $region34: #{_lambda_.13} parent=31 // pred_check_branch
        %650 = sbr.rel (%p648) target = $region36
      $region35: #{_lambda_.13} parent=31 // pred_region
        %s651 = smul.u32 16, %s14
      $region36: #{_lambda_.13} parent=31 // pred_fallthru
        _
    $region32: #{_lambda_.13} parent=5 // pred_fallthru
      _
    %p652 = scmp.le.s32.totalorder 2, %s9
    // Predicated region
    $region37: #{_lambda_.13} parent=5 // pred_check
      %p653 = pneg %p652
    $region38: #{_lambda_.13} parent=5 // pred_check_branch
      %655 = sbr.rel (%p653) target = $region40
    $region39: #{_lambda_.13} parent=5 // pred_region
      %s656 = ssub.s32 %s9, 2
      // Predicated region
      $region41: #{_lambda_.13} parent=39 // pred_check
        %p657 = pneg %p106
      $region42: #{_lambda_.13} parent=39 // pred_check_branch
        %659 = sbr.rel (%p657) target = $region44
      $region43: #{_lambda_.13} parent=39 // pred_region
        %s660 = smul.u32 16, %s15
        %p661 = scmp.lt.s32.totalorder %s660, 31
        %s662 = scalar_select %p661, %s660, 31
        %s663 = smul.addr %s662, 8
        %s664 = scalar_lea.vmem %s3, %s663
      $region44: #{_lambda_.13} parent=39 // pred_fallthru
        _
    $region40: #{_lambda_.13} parent=5 // pred_fallthru
      _
  $region6: #{_lambda_.13} parent=0 // loop_footer
    %s13 = sadd.s32 1, %s9
  $region7: #{_lambda_.13} parent=0 // loop_footer_branch
    %8 = sbr.rel target = $region3
  $region8: #{_lambda_.13} parent=0 // loop_exit
    _

// kernel: _lambda_.14
$region0: #{_lambda_.14}
  #allocation0 [shape = 'u32[]', space=smem, size = 0x4, offset = 0x4, fixed_abs, tag = 'smem constant byte address 0x4 - core index']
  #allocation1 [shape = 'u32[144,128]{1,0:T(1,128)}', space=vmem, size = 0x12000, scoped, tag = 'internal scratch']
  %s0 = inlined_call_operand.vmem [shape: bf16[8,72], index: 0, kind: input, shape index: {}]
  %s1 = inlined_call_operand.vmem [shape: bf16[72,1024], index: 1, kind: input, shape index: {}]
  %s2 = inlined_call_operand.vmem [shape: f32[8,1], index: 2, kind: input, shape index: {}]
  %s3 = inlined_call_operand.vmem [shape: f32[8,1024], index: 3, kind: output, shape index: {}]
  %s4 = sld [smem:[#allocation0]]
  $region68: #{_lambda_.14} parent=0
    _
  %s6 = ssub.s32 1, %s4
  %s7 = scalar_select 0, %s6, %s4
  $region1: #{_lambda_.14} parent=0
    #allocation2 [shape = 'u8[147456]{0}', space=vmem, size = 0x24000, scoped, tag = 'input window, operand 1']
    loop: start=0, step=1, limit=4
    $region2: #{_lambda_.14} parent=1 // loop_pre_header
      _
    $region3: #{_lambda_.14} parent=1 // loop_header
      %s9 = sphi 0, %s13
      %p10 = scmp.ge.s32.totalorder %s9, 4
      %s17 = sphi 0, %s17
      %s19 = sphi 0, %s17
      %s20 = sphi 0, %s19
      %s34 = sphi 0, %s20
      %s40 = sphi 0, %s42
      %s43 = sphi 0, %s40
      %s44 = sphi 0, %s43
      %s60 = sphi 0, %s44
      %s64 = sphi 0, %s64
      %s66 = sphi 0, %s64
      %s67 = sphi 0, %s66
      %s81 = sphi 0, %s67
      %s87 = sphi 0, %s89
      %s90 = sphi 0, %s87
      %s91 = sphi 0, %s90
      %s107 = sphi 0, %s91
    $region4: #{_lambda_.14} parent=1 // loop_header_branch
      %12 = sbr.rel (%p10) target = $region8
    $region5: #{_lambda_.14} parent=1 // loop_body
      %s14 = ssub.s32 %s9, 1
      %s15 = ssub.s32 %s9, 2
      %s16 = sadd.s32 %s9, 1
      %s18 = sadd.s32 %s17, 1
      %p21 = scmp.eq.s32.totalorder %s9, 1
      %p22 = scmp.ne.s32.totalorder %s17, %s19
      %p23 = scmp.eq.s32.totalorder %s9, 0
      %p24 = por %p22, %p23
      %p25 = scmp.ne.s32.totalorder %s17, %s19
      %p26 = scmp.eq.s32.totalorder %s14, 1
      %p27 = por %p25, %p26
      %p28 = scmp.ne.s32.totalorder %s19, %s20
      %p29 = scmp.eq.s32.totalorder %s14, 0
      %p30 = por %p28, %p29
      %p31 = scmp.ne.s32.totalorder %s19, %s20
      %p32 = scmp.eq.s32.totalorder %s15, 1
      %p33 = por %p31, %p32
      %p35 = scmp.ne.s32.totalorder %s20, %s34
      %p36 = scmp.eq.s32.totalorder %s15, 0
      %p37 = por %p35, %p36
      %s38 = ssub.s32 %s9, %s16
      %p39 = scmp.eq.s32.totalorder %s38, 0
      %s41 = sadd.s32 %s40, 1
      %s42 = scalar_select %p39, %s40, %s41
      %p45 = pneg %p39
      %p46 = scmp.eq.s32.totalorder %s9, 1
      %p47 = por %p45, %p46
      %p48 = scmp.ne.s32.totalorder %s40, %s43
      %p49 = scmp.eq.s32.totalorder %s9, 0
      %p50 = por %p48, %p49
      %p51 = scmp.ne.s32.totalorder %s40, %s43
      %p52 = scmp.eq.s32.totalorder %s14, 1
      %p53 = por %p51, %p52
      %p54 = scmp.ne.s32.totalorder %s43, %s44
      %p55 = scmp.eq.s32.totalorder %s14, 0
      %p56 = por %p54, %p55
      %p57 = scmp.ne.s32.totalorder %s43, %s44
      %p58 = scmp.eq.s32.totalorder %s15, 1
      %p59 = por %p57, %p58
      %p61 = scmp.ne.s32.totalorder %s44, %s60
      %p62 = scmp.eq.s32.totalorder %s15, 0
      %p63 = por %p61, %p62
      %s65 = sadd.s32 %s64, 1
      %p68 = scmp.eq.s32.totalorder %s9, 1
      %p69 = scmp.ne.s32.totalorder %s64, %s66
      %p70 = scmp.eq.s32.totalorder %s9, 0
      %p71 = por %p69, %p70
      %p72 = scmp.ne.s32.totalorder %s64, %s66
      %p73 = scmp.eq.s32.totalorder %s14, 1
      %p74 = por %p72, %p73
      %p75 = scmp.ne.s32.totalorder %s66, %s67
      %p76 = scmp.eq.s32.totalorder %s14, 0
      %p77 = por %p75, %p76
      %p78 = scmp.ne.s32.totalorder %s66, %s67
      %p79 = scmp.eq.s32.totalorder %s15, 1
      %p80 = por %p78, %p79
      %p82 = scmp.ne.s32.totalorder %s67, %s81
      %p83 = scmp.eq.s32.totalorder %s15, 0
      %p84 = por %p82, %p83
      %s85 = ssub.s32 %s9, %s16
      %p86 = scmp.eq.s32.totalorder %s85, 0
      %s88 = sadd.s32 %s87, 1
      %s89 = scalar_select %p86, %s87, %s88
      %p92 = pneg %p86
      %p93 = scmp.eq.s32.totalorder %s9, 1
      %p94 = por %p92, %p93
      %p95 = scmp.ne.s32.totalorder %s87, %s90
      %p96 = scmp.eq.s32.totalorder %s9, 0
      %p97 = por %p95, %p96
      %p98 = scmp.ne.s32.totalorder %s87, %s90
      %p99 = scmp.eq.s32.totalorder %s14, 1
      %p100 = por %p98, %p99
      %p101 = scmp.ne.s32.totalorder %s90, %s91
      %p102 = scmp.eq.s32.totalorder %s14, 0
      %p103 = por %p101, %p102
      %p104 = scmp.ne.s32.totalorder %s90, %s91
      %p105 = scmp.eq.s32.totalorder %s15, 1
      %p106 = por %p104, %p105
      %p108 = scmp.ne.s32.totalorder %s91, %s107
      %p109 = scmp.eq.s32.totalorder %s15, 0
      %p110 = por %p108, %p109
      %p111 = scmp.le.s32.totalorder 1, %s9
      %p112 = scmp.lt.s32.totalorder %s9, 3
      %p113 = pnand %p111, %p112
      %p114 = pneg %p113
      // Predicated region
      $region9: #{_lambda_.14} parent=5 // pred_check
        _
      $region10: #{_lambda_.14} parent=5 // pred_check_branch
        %116 = sbr.rel (%p113) target = $region12
      $region11: #{_lambda_.14} parent=5 // pred_region
        %s117 = ssub.s32 %s9, 1
        // Predicated region
        $region13: #{_lambda_.14} parent=11 // pred_check
          %p118 = pneg %p30
        $region14: #{_lambda_.14} parent=11 // pred_check_branch
          %120 = sbr.rel (%p118) target = $region16
        $region15: #{_lambda_.14} parent=11 // pred_region
          _
        $region16: #{_lambda_.14} parent=11 // pred_fallthru
          _
        // Predicated region
        $region17: #{_lambda_.14} parent=11 // pred_check
          %p121 = pneg %p77
        $region18: #{_lambda_.14} parent=11 // pred_check_branch
          %123 = sbr.rel (%p121) target = $region20
        $region19: #{_lambda_.14} parent=11 // pred_region
          _
        $region20: #{_lambda_.14} parent=11 // pred_fallthru
          _
      $region12: #{_lambda_.14} parent=5 // pred_fallthru
        _
      %p124 = scmp.lt.s32.totalorder %s9, 2
      // Predicated region
      $region21: #{_lambda_.14} parent=5 // pred_check
        %p125 = pneg %p124
      $region22: #{_lambda_.14} parent=5 // pred_check_branch
        %127 = sbr.rel (%p125) target = $region24
      $region23: #{_lambda_.14} parent=5 // pred_region
        // Predicated region
        $region25: #{_lambda_.14} parent=23 // pred_check
          %p128 = pneg %p50
        $region26: #{_lambda_.14} parent=23 // pred_check_branch
          %130 = sbr.rel (%p128) target = $region28
        $region27: #{_lambda_.14} parent=23 // pred_region
          %s131 = sand.u32 %s40, 1
          %s132 = sand.u32 %s40, 1
          %s133 = smul.addr %s132, 144
          %s134 = scalar_lea.vmem [#allocation2], %s133
          %s135 = smul.u32 4, %s9
          %s136 = smul.addr %s135, 4
          %s137 = scalar_lea.vmem %s1, %s136
          // Predicated region
          $region29: #{_lambda_.14} parent=27 // pred_check
            _
          $region30: #{_lambda_.14} parent=27 // pred_check_branch
            %139 = sbr.rel (0) target = $region32
          $region31: #{_lambda_.14} parent=27 // pred_region
            // Predicated region
            $region33: #{_lambda_.14} parent=31 // pred_check
              _
            $region34: #{_lambda_.14} parent=31 // pred_check_branch
              %141 = sbr.rel (0) target = $region36
            $region35: #{_lambda_.14} parent=31 // pred_region
              loop: start=0, step=1, limit=1
              $region37: #{_lambda_.14} parent=35 // loop_pre_header
                _
              $region38: #{_lambda_.14} parent=35 // loop_header
                %s143 = sphi 0, %s147
                %p144 = scmp.ge.s32.totalorder %s143, 1
                %s148 = sphi %s137, %s137
                %s149 = sphi %s134, %s134
              $region39: #{_lambda_.14} parent=35 // loop_header_branch
                %146 = sbr.rel (%p144) target = $region43
              $region40: #{_lambda_.14} parent=35 // loop_body
                %v150 = vld [vmem:[%s148] sm:$0xff]
                %151 = vst [vmem:[%s149] sm:$0xff] %v150
                %v152 = vld [vmem:[%s148 + $0x8] sm:$0xff]
                %153 = vst [vmem:[%s149 + $0x8] sm:$0xff] %v152
                %v154 = vld [vmem:[%s148 + $0x20] sm:$0xff]
                %155 = vst [vmem:[%s149 + $0x10] sm:$0xff] %v154
                %v156 = vld [vmem:[%s148 + $0x28] sm:$0xff]
                %157 = vst [vmem:[%s149 + $0x18] sm:$0xff] %v156
                %v158 = vld [vmem:[%s148 + $0x40] sm:$0xff]
                %159 = vst [vmem:[%s149 + $0x20] sm:$0xff] %v158
                %v160 = vld [vmem:[%s148 + $0x48] sm:$0xff]
                %161 = vst [vmem:[%s149 + $0x28] sm:$0xff] %v160
                %v162 = vld [vmem:[%s148 + $0x60] sm:$0xff]
                %163 = vst [vmem:[%s149 + $0x30] sm:$0xff] %v162
                %v164 = vld [vmem:[%s148 + $0x68] sm:$0xff]
                %165 = vst [vmem:[%s149 + $0x38] sm:$0xff] %v164
                %v166 = vld [vmem:[%s148 + $0x80] sm:$0xff]
                %167 = vst [vmem:[%s149 + $0x40] sm:$0xff] %v166
                %v168 = vld [vmem:[%s148 + $0x88] sm:$0xff]
                %169 = vst [vmem:[%s149 + $0x48] sm:$0xff] %v168
                %v170 = vld [vmem:[%s148 + $0xa0] sm:$0xff]
                %171 = vst [vmem:[%s149 + $0x50] sm:$0xff] %v170
                %v172 = vld [vmem:[%s148 + $0xa8] sm:$0xff]
                %173 = vst [vmem:[%s149 + $0x58] sm:$0xff] %v172
                %v174 = vld [vmem:[%s148 + $0xc0] sm:$0xff]
                %175 = vst [vmem:[%s149 + $0x60] sm:$0xff] %v174
                %v176 = vld [vmem:[%s148 + $0xc8] sm:$0xff]
                %177 = vst [vmem:[%s149 + $0x68] sm:$0xff] %v176
                %v178 = vld [vmem:[%s148 + $0xe0] sm:$0xff]
                %179 = vst [vmem:[%s149 + $0x70] sm:$0xff] %v178
                %v180 = vld [vmem:[%s148 + $0xe8] sm:$0xff]
                %181 = vst [vmem:[%s149 + $0x78] sm:$0xff] %v180
                %v182 = vld [vmem:[%s148 + $0x100] sm:$0xff]
                %183 = vst [vmem:[%s149 + $0x80] sm:$0xff] %v182
                %v184 = vld [vmem:[%s148 + $0x108] sm:$0xff]
                %185 = vst [vmem:[%s149 + $0x88] sm:$0xff] %v184
              $region41: #{_lambda_.14} parent=35 // loop_footer
                %s147 = sadd.s32 1, %s143
              $region42: #{_lambda_.14} parent=35 // loop_footer_branch
                %142 = sbr.rel target = $region38
              $region43: #{_lambda_.14} parent=35 // loop_exit
                _
            $region36: #{_lambda_.14} parent=31 // pred_fallthru
              _
            // Predicated region
            $region44: #{_lambda_.14} parent=31 // pred_check
              _
            $region45: #{_lambda_.14} parent=31 // pred_check_branch
              %187 = sbr.rel target = $region47
            $region46: #{_lambda_.14} parent=31 // pred_region
              _
            $region47: #{_lambda_.14} parent=31 // pred_fallthru
              _
          $region32: #{_lambda_.14} parent=27 // pred_fallthru
            _
          %188 = vnop
        $region28: #{_lambda_.14} parent=23 // pred_fallthru
          _
      $region24: #{_lambda_.14} parent=5 // pred_fallthru
        _
      %p189 = scmp.le.s32.totalorder 1, %s9
      %p190 = scmp.lt.s32.totalorder %s9, 3
      %p191 = pnand %p189, %p190
      %p192 = pneg %p191
      // Predicated region
      $region48: #{_lambda_.14} parent=5 // pred_check
        _
      $region49: #{_lambda_.14} parent=5 // pred_check_branch
        %194 = sbr.rel (%p191) target = $region51
      $region50: #{_lambda_.14} parent=5 // pred_region
        %s195 = ssub.s32 %s9, 1
        %s196 = sand.u32 %s43, 1
        %s197 = sand.u32 %s43, 1
        %s198 = smul.addr %s197, 144
        %s199 = scalar_lea.vmem [#allocation2], %s198
        // Predicated region
        $region52: #{_lambda_.14} parent=50 // pred_check
          %p200 = pneg %p56
        $region53: #{_lambda_.14} parent=50 // pred_check_branch
          %202 = sbr.rel (%p200) target = $region55
        $region54: #{_lambda_.14} parent=50 // pred_region
          _
        $region55: #{_lambda_.14} parent=50 // pred_fallthru
          _
        %p203 = pneg %p30
        %p204 = pneg %p27
        %s205 = sand.u32 %s43, 1
        %s206 = sand.u32 %s43, 1
        %s207 = smul.addr %s206, 144
        %s208 = scalar_lea.vmem [#allocation2], %s207
        %p209 = pneg %p56
        %p210 = pneg %p53
        %p211 = pneg %p77
        %p212 = pneg %p74
        %p213 = pneg %p103
        %p214 = pneg %p100
        %s215 = smul.u32 4, %s14
        %p216 = scmp.lt.s32.totalorder %s215, 7
        %s217 = scalar_select %p216, %s215, 7
        %s218 = smul.addr %s217, 8
        %s219 = scalar_lea.vmem %s3, %s218
        %s220 = smul.u32 4, %s14
        %s221 = smul.u32 4, %s14
        %p222 = scmp.lt.s32.totalorder %s221, 7
        %s223 = scalar_select %p222, %s221, 7
        %s224 = smul.addr %s223, 8
        %s225 = scalar_lea.vmem %s3, %s224
        %s226 = smul.u32 4, %s14
        %v228 = vld [vmem:[%s0] sm:$0xf]
        %v229 = vld [vmem:[%s199] sm:$0xff]
        %v230 = vld [vmem:[%s199 + $0x8] sm:$0xff]
        %v231 = vld [vmem:[%s199 + $0x10] sm:$0xff]
        %v232 = vld [vmem:[%s199 + $0x18] sm:$0xff]
        %v233 = vld [vmem:[%s199 + $0x20] sm:$0xff]
        %v234 = vld [vmem:[%s199 + $0x28] sm:$0xff]
        %v235 = vld [vmem:[%s199 + $0x30] sm:$0xff]
        %v236 = vld [vmem:[%s199 + $0x38] sm:$0xff]
        %v237 = vld [vmem:[%s199 + $0x40] sm:$0xff]
        %v238 = vld [vmem:[%s199 + $0x48] sm:$0xff]
        %v239 = vld [vmem:[%s199 + $0x50] sm:$0xff]
        %v240 = vld [vmem:[%s199 + $0x58] sm:$0xff]
        %v241 = vld [vmem:[%s199 + $0x60] sm:$0xff]
        %v242 = vld [vmem:[%s199 + $0x68] sm:$0xff]
        %v243 = vld [vmem:[%s199 + $0x70] sm:$0xff]
        %v244 = vld [vmem:[%s199 + $0x78] sm:$0xff]
        %v245 = vld [vmem:[%s199 + $0x80] sm:$0xff]
        %v246 = vld [vmem:[%s199 + $0x88] sm:$0xff]
        %v247 = vld [vmem:[%s2] sm:$0xff]
        %249 = vset.pattern.permute.xlu0 0
        %250 = vperm.xlu0 %249, %v247
        %v251 = vpop.permute.xlu0 %250
        %v271 = vunpack.c.l.b16 %v229
        %v272 = vunpack.c.h.b16 %v229
        %v273 = vunpack.c.l.b16 %v230
        %v274 = vunpack.c.h.b16 %v230
        %v275 = vunpack.c.l.b16 %v231
        %v276 = vunpack.c.h.b16 %v231
        %v277 = vunpack.c.l.b16 %v232
        %v278 = vunpack.c.h.b16 %v232
        %v279 = vunpack.c.l.b16 %v233
        %v280 = vunpack.c.h.b16 %v233
        %v281 = vunpack.c.l.b16 %v234
        %v282 = vunpack.c.h.b16 %v234
        %v283 = vunpack.c.l.b16 %v235
        %v284 = vunpack.c.h.b16 %v235
        %v285 = vunpack.c.l.b16 %v236
        %v286 = vunpack.c.h.b16 %v236
        %v287 = vunpack.c.l.b16 %v237
        %v288 = vunpack.c.h.b16 %v237
        %v289 = vunpack.c.l.b16 %v238
        %v290 = vunpack.c.h.b16 %v238
        %v291 = vunpack.c.l.b16 %v239
        %v292 = vunpack.c.h.b16 %v239
        %v293 = vunpack.c.l.b16 %v240
        %v294 = vunpack.c.h.b16 %v240
        %v295 = vunpack.c.l.b16 %v241
        %v296 = vunpack.c.h.b16 %v241
        %v297 = vunpack.c.l.b16 %v242
        %v298 = vunpack.c.h.b16 %v242
        %v299 = vunpack.c.l.b16 %v243
        %v300 = vunpack.c.h.b16 %v243
        %v301 = vunpack.c.l.b16 %v244
        %v302 = vunpack.c.h.b16 %v244
        %v303 = vunpack.c.l.b16 %v245
        %v304 = vunpack.c.h.b16 %v245
        %v305 = vunpack.c.l.b16 %v246
        %v306 = vunpack.c.h.b16 %v246
        %v307 = vpack.c.b16 %v275, %v271
        %v308 = vpack.c.b16 %v276, %v272
        %v309 = vpack.c.b16 %v277, %v273
        %v310 = vpack.c.b16 %v278, %v274
        %v311 = vpack.c.b16 %v283, %v279
        %v312 = vpack.c.b16 %v284, %v280
        %v313 = vpack.c.b16 %v285, %v281
        %v314 = vpack.c.b16 %v286, %v282
        %v315 = vpack.c.b16 %v291, %v287
        %v316 = vpack.c.b16 %v292, %v288
        %v317 = vpack.c.b16 %v293, %v289
        %v318 = vpack.c.b16 %v294, %v290
        %v319 = vpack.c.b16 %v299, %v295
        %v320 = vpack.c.b16 %v300, %v296
        %v321 = vpack.c.b16 %v301, %v297
        %v322 = vpack.c.b16 %v302, %v298
        %v323 = vpack.c.b16 %v303, %v303
        %v324 = vpack.c.b16 %v304, %v304
        %v325 = vpack.c.b16 %v305, %v305
        %v326 = vpack.c.b16 %v306, %v306
        %vm343 = vcmask 588800
        %v345 = vsel %vm343, %v228, 0
        %vm347 = vcmask 1043456
        %v349 = vsel %vm347, %v323, 0
        %v352 = vsel %vm347, %v324, 0
        %v355 = vsel %vm347, %v325, 0
        %v358 = vsel %vm347, %v326, 0
        %360 = vmatprep.subr.bf16.mxu0 %v308
        %361 = vmatpush1.bf16.msra.mxu0 %v307
        %362 = vmatprep.subr.bf16.mxu0 %v312
        %363 = vmatpush1.bf16.msra.mxu0 %v311
        %364 = vmatprep.subr.bf16.mxu0 %v316
        %365 = vmatpush1.bf16.msra.mxu0 %v315
        %366 = vmatprep.subr.bf16.mxu0 %v320
        %367 = vmatpush1.bf16.msra.mxu0 %v319
        %368 = vmatprep.subr.bf16.mxu0 %v352
        %369 = vmatpush1.bf16.msra.mxu0 %v349
        %370 = vmatprep.subr.bf16.mxu0 0
        %371 = vmatpush1.bf16.msra.mxu0 0
        %372 = vmatprep.subr.bf16.mxu0 0
        %373 = vmatpush1.bf16.msra.mxu0 0
        %374 = vmatprep.subr.bf16.mxu0 0
        %375 = vmatpush1.bf16.msra.mxu0 0
        %376 = vmatprep.subr.bf16.mxu0 0
        %377 = vmatpush1.bf16.msra.mxu0 0
        %378 = vmatprep.subr.bf16.mxu0 0
        %379 = vmatpush1.bf16.msra.mxu0 0
        %380 = vmatprep.subr.bf16.mxu0 0
        %381 = vmatpush1.bf16.msra.mxu0 0
        %382 = vmatprep.subr.bf16.mxu0 0
        %383 = vmatpush1.bf16.msra.mxu0 0
        %384 = vmatprep.subr.bf16.mxu0 0
        %385 = vmatpush1.bf16.msra.mxu0 0
        %386 = vmatprep.subr.bf16.mxu0 0
        %387 = vmatpush1.bf16.msra.mxu0 0
        %388 = vmatprep.subr.bf16.mxu0 0
        %389 = vmatpush1.bf16.msra.mxu0 0
        %390 = vmatprep.subr.bf16.mxu0 0
        %391 = vmatpush1.bf16.msra.mxu0 0
        %392 = vmatprep.mubr.bf16.mxu0 0
        %393 = vmatmul.mubr.bf16.gmra.mrb[0].mxu0 %v345
        %v394 = vpop.f32.mrb[0].mxu0
        %v395 = vadd.f32 %v251, %v394
        %v396 = vpop.f32.mrb[0].mxu0
        %v397 = vadd.f32 %v251, %v396
        %v398 = vpop.f32.mrb[0].mxu0
        %v399 = vpop.f32.mrb[0].mxu0
        %400 = vdwg.mxu0
        %401 = vmatprep.subr.bf16.mxu0 %v310
        %402 = vmatpush1.bf16.msra.mxu0 %v309
        %403 = vmatprep.subr.bf16.mxu0 %v314
        %404 = vmatpush1.bf16.msra.mxu0 %v313
        %405 = vmatprep.subr.bf16.mxu0 %v318
        %406 = vmatpush1.bf16.msra.mxu0 %v317
        %407 = vmatprep.subr.bf16.mxu0 %v322
        %408 = vmatpush1.bf16.msra.mxu0 %v321
        %409 = vmatprep.subr.bf16.mxu0 %v358
        %410 = vmatpush1.bf16.msra.mxu0 %v355
        %411 = vmatprep.subr.bf16.mxu0 0
        %412 = vmatpush1.bf16.msra.mxu0 0
        %413 = vmatprep.subr.bf16.mxu0 0
        %414 = vmatpush1.bf16.msra.mxu0 0
        %415 = vmatprep.subr.bf16.mxu0 0
        %416 = vmatpush1.bf16.msra.mxu0 0
        %417 = vmatprep.subr.bf16.mxu0 0
        %418 = vmatpush1.bf16.msra.mxu0 0
        %419 = vmatprep.subr.bf16.mxu0 0
        %420 = vmatpush1.bf16.msra.mxu0 0
        %421 = vmatprep.subr.bf16.mxu0 0
        %422 = vmatpush1.bf16.msra.mxu0 0
        %423 = vmatprep.subr.bf16.mxu0 0
        %424 = vmatpush1.bf16.msra.mxu0 0
        %425 = vmatprep.subr.bf16.mxu0 0
        %426 = vmatpush1.bf16.msra.mxu0 0
        %427 = vmatprep.subr.bf16.mxu0 0
        %428 = vmatpush1.bf16.msra.mxu0 0
        %429 = vmatprep.subr.bf16.mxu0 0
        %430 = vmatpush1.bf16.msra.mxu0 0
        %431 = vmatprep.subr.bf16.mxu0 0
        %432 = vmatpush1.bf16.msra.mxu0 0
        %433 = vmatprep.mubr.bf16.mxu0 0
        %434 = vmatmul.mubr.bf16.gmra.mrb[0].mxu0 %v345
        %v435 = vpop.f32.mrb[0].mxu0
        %v436 = vadd.f32 %v251, %v435
        %v437 = vpop.f32.mrb[0].mxu0
        %v438 = vadd.f32 %v251, %v437
        %v439 = vpop.f32.mrb[0].mxu0
        %v440 = vpop.f32.mrb[0].mxu0
        %441 = vdwg.mxu0
        %v442 = vmax.f32 %v395, 0.0
        %v443 = vmax.f32 %v397, 0.0
        %v444 = vmax.f32 %v436, 0.0
        %v445 = vmax.f32 %v438, 0.0
        %446 = vst [vmem:[%s225] sm:$0xff] %v442
        %447 = vst [vmem:[%s225 + $0x8] sm:$0xff] %v443
        %448 = vst [vmem:[%s225 + $0x10] sm:$0xff] %v444
        %449 = vst [vmem:[%s225 + $0x18] sm:$0xff] %v445
        %s450 = smul.u32 4, %s14
        %p451 = scmp.lt.s32.totalorder %s450, 7
        %s452 = scalar_select %p451, %s450, 7
        %s453 = smul.addr %s452, 8
        %s454 = scalar_lea.vmem %s3, %s453
        // Predicated region
        $region56: #{_lambda_.14} parent=50 // pred_check
          %p455 = pneg %p100
        $region57: #{_lambda_.14} parent=50 // pred_check_branch
          %457 = sbr.rel (%p455) target = $region59
        $region58: #{_lambda_.14} parent=50 // pred_region
          %s458 = smul.u32 4, %s14
        $region59: #{_lambda_.14} parent=50 // pred_fallthru
          _
      $region51: #{_lambda_.14} parent=5 // pred_fallthru
        _
      %p459 = scmp.le.s32.totalorder 2, %s9
      // Predicated region
      $region60: #{_lambda_.14} parent=5 // pred_check
        %p460 = pneg %p459
      $region61: #{_lambda_.14} parent=5 // pred_check_branch
        %462 = sbr.rel (%p460) target = $region63
      $region62: #{_lambda_.14} parent=5 // pred_region
        %s463 = ssub.s32 %s9, 2
        // Predicated region
        $region64: #{_lambda_.14} parent=62 // pred_check
          %p464 = pneg %p106
        $region65: #{_lambda_.14} parent=62 // pred_check_branch
          %466 = sbr.rel (%p464) target = $region67
        $region66: #{_lambda_.14} parent=62 // pred_region
          %s467 = smul.u32 4, %s15
          %p468 = scmp.lt.s32.totalorder %s467, 7
          %s469 = scalar_select %p468, %s467, 7
          %s470 = smul.addr %s469, 8
          %s471 = scalar_lea.vmem %s3, %s470
        $region67: #{_lambda_.14} parent=62 // pred_fallthru
          _
      $region63: #{_lambda_.14} parent=5 // pred_fallthru
        _
    $region6: #{_lambda_.14} parent=1 // loop_footer
      %s13 = sadd.s32 1, %s9
    $region7: #{_lambda_.14} parent=1 // loop_footer_branch
      %8 = sbr.rel target = $region3
    $region8: #{_lambda_.14} parent=1 // loop_exit
      _

// kernel: _lambda_.15
$region0: #{_lambda_.15}
  #allocation0 [shape = 'u32[]', space=smem, size = 0x4, offset = 0x4, fixed_abs, tag = 'smem constant byte address 0x4 - core index']
  #allocation1 [shape = 'u32[144,128]{1,0:T(1,128)}', space=vmem, size = 0x12000, scoped, tag = 'internal scratch']
  %s0 = inlined_call_operand.vmem [shape: bf16[32,8], index: 0, kind: input, shape index: {}]
  %s1 = inlined_call_operand.vmem [shape: bf16[8,1024], index: 1, kind: input, shape index: {}]
  %s2 = inlined_call_operand.vmem [shape: f32[32,1], index: 2, kind: input, shape index: {}]
  %s3 = inlined_call_operand.vmem [shape: f32[32,1024], index: 3, kind: output, shape index: {}]
  %s4 = sld [smem:[#allocation0]]
  $region64: #{_lambda_.15} parent=0
    _
  %s6 = ssub.s32 1, %s4
  %s7 = scalar_select 0, %s6, %s4
  $region1: #{_lambda_.15} parent=0
    #allocation2 [shape = 'u8[131072]{0}', space=vmem, size = 0x20000, scoped, tag = 'output window, operand 0']
    loop: start=0, step=1, limit=4
    $region2: #{_lambda_.15} parent=1 // loop_pre_header
      _
    $region3: #{_lambda_.15} parent=1 // loop_header
      %s9 = sphi 0, %s13
      %p10 = scmp.ge.s32.totalorder %s9, 4
      %s17 = sphi 0, %s17
      %s19 = sphi 0, %s17
      %s20 = sphi 0, %s19
      %s34 = sphi 0, %s20
      %s40 = sphi 0, %s42
      %s43 = sphi 0, %s40
      %s44 = sphi 0, %s43
      %s60 = sphi 0, %s44
      %s64 = sphi 0, %s64
      %s66 = sphi 0, %s64
      %s67 = sphi 0, %s66
      %s81 = sphi 0, %s67
      %s87 = sphi 0, %s89
      %s90 = sphi 0, %s87
      %s91 = sphi 0, %s90
      %s107 = sphi 0, %s91
    $region4: #{_lambda_.15} parent=1 // loop_header_branch
      %12 = sbr.rel (%p10) target = $region8
    $region5: #{_lambda_.15} parent=1 // loop_body
      %s14 = ssub.s32 %s9, 1
      %s15 = ssub.s32 %s9, 2
      %s16 = sadd.s32 %s9, 1
      %s18 = sadd.s32 %s17, 1
      %p21 = scmp.eq.s32.totalorder %s9, 1
      %p22 = scmp.ne.s32.totalorder %s17, %s19
      %p23 = scmp.eq.s32.totalorder %s9, 0
      %p24 = por %p22, %p23
      %p25 = scmp.ne.s32.totalorder %s17, %s19
      %p26 = scmp.eq.s32.totalorder %s14, 1
      %p27 = por %p25, %p26
      %p28 = scmp.ne.s32.totalorder %s19, %s20
      %p29 = scmp.eq.s32.totalorder %s14, 0
      %p30 = por %p28, %p29
      %p31 = scmp.ne.s32.totalorder %s19, %s20
      %p32 = scmp.eq.s32.totalorder %s15, 1
      %p33 = por %p31, %p32
      %p35 = scmp.ne.s32.totalorder %s20, %s34
      %p36 = scmp.eq.s32.totalorder %s15, 0
      %p37 = por %p35, %p36
      %s38 = ssub.s32 %s9, %s16
      %p39 = scmp.eq.s32.totalorder %s38, 0
      %s41 = sadd.s32 %s40, 1
      %s42 = scalar_select %p39, %s40, %s41
      %p45 = pneg %p39
      %p46 = scmp.eq.s32.totalorder %s9, 1
      %p47 = por %p45, %p46
      %p48 = scmp.ne.s32.totalorder %s40, %s43
      %p49 = scmp.eq.s32.totalorder %s9, 0
      %p50 = por %p48, %p49
      %p51 = scmp.ne.s32.totalorder %s40, %s43
      %p52 = scmp.eq.s32.totalorder %s14, 1
      %p53 = por %p51, %p52
      %p54 = scmp.ne.s32.totalorder %s43, %s44
      %p55 = scmp.eq.s32.totalorder %s14, 0
      %p56 = por %p54, %p55
      %p57 = scmp.ne.s32.totalorder %s43, %s44
      %p58 = scmp.eq.s32.totalorder %s15, 1
      %p59 = por %p57, %p58
      %p61 = scmp.ne.s32.totalorder %s44, %s60
      %p62 = scmp.eq.s32.totalorder %s15, 0
      %p63 = por %p61, %p62
      %s65 = sadd.s32 %s64, 1
      %p68 = scmp.eq.s32.totalorder %s9, 1
      %p69 = scmp.ne.s32.totalorder %s64, %s66
      %p70 = scmp.eq.s32.totalorder %s9, 0
      %p71 = por %p69, %p70
      %p72 = scmp.ne.s32.totalorder %s64, %s66
      %p73 = scmp.eq.s32.totalorder %s14, 1
      %p74 = por %p72, %p73
      %p75 = scmp.ne.s32.totalorder %s66, %s67
      %p76 = scmp.eq.s32.totalorder %s14, 0
      %p77 = por %p75, %p76
      %p78 = scmp.ne.s32.totalorder %s66, %s67
      %p79 = scmp.eq.s32.totalorder %s15, 1
      %p80 = por %p78, %p79
      %p82 = scmp.ne.s32.totalorder %s67, %s81
      %p83 = scmp.eq.s32.totalorder %s15, 0
      %p84 = por %p82, %p83
      %s85 = ssub.s32 %s9, %s16
      %p86 = scmp.eq.s32.totalorder %s85, 0
      %s88 = sadd.s32 %s87, 1
      %s89 = scalar_select %p86, %s87, %s88
      %p92 = pneg %p86
      %p93 = scmp.eq.s32.totalorder %s9, 1
      %p94 = por %p92, %p93
      %p95 = scmp.ne.s32.totalorder %s87, %s90
      %p96 = scmp.eq.s32.totalorder %s9, 0
      %p97 = por %p95, %p96
      %p98 = scmp.ne.s32.totalorder %s87, %s90
      %p99 = scmp.eq.s32.totalorder %s14, 1
      %p100 = por %p98, %p99
      %p101 = scmp.ne.s32.totalorder %s90, %s91
      %p102 = scmp.eq.s32.totalorder %s14, 0
      %p103 = por %p101, %p102
      %p104 = scmp.ne.s32.totalorder %s90, %s91
      %p105 = scmp.eq.s32.totalorder %s15, 1
      %p106 = por %p104, %p105
      %p108 = scmp.ne.s32.totalorder %s91, %s107
      %p109 = scmp.eq.s32.totalorder %s15, 0
      %p110 = por %p108, %p109
      %p111 = scmp.le.s32.totalorder 1, %s9
      %p112 = scmp.lt.s32.totalorder %s9, 3
      %p113 = pnand %p111, %p112
      %p114 = pneg %p113
      // Predicated region
      $region9: #{_lambda_.15} parent=5 // pred_check
        _
      $region10: #{_lambda_.15} parent=5 // pred_check_branch
        %116 = sbr.rel (%p113) target = $region12
      $region11: #{_lambda_.15} parent=5 // pred_region
        %s117 = ssub.s32 %s9, 1
        // Predicated region
        $region13: #{_lambda_.15} parent=11 // pred_check
          %p118 = pneg %p30
        $region14: #{_lambda_.15} parent=11 // pred_check_branch
          %120 = sbr.rel (%p118) target = $region16
        $region15: #{_lambda_.15} parent=11 // pred_region
          _
        $region16: #{_lambda_.15} parent=11 // pred_fallthru
          _
        // Predicated region
        $region17: #{_lambda_.15} parent=11 // pred_check
          %p121 = pneg %p77
        $region18: #{_lambda_.15} parent=11 // pred_check_branch
          %123 = sbr.rel (%p121) target = $region20
        $region19: #{_lambda_.15} parent=11 // pred_region
          _
        $region20: #{_lambda_.15} parent=11 // pred_fallthru
          _
      $region12: #{_lambda_.15} parent=5 // pred_fallthru
        _
      %p124 = scmp.lt.s32.totalorder %s9, 2
      // Predicated region
      $region21: #{_lambda_.15} parent=5 // pred_check
        %p125 = pneg %p124
      $region22: #{_lambda_.15} parent=5 // pred_check_branch
        %127 = sbr.rel (%p125) target = $region24
      $region23: #{_lambda_.15} parent=5 // pred_region
        // Predicated region
        $region25: #{_lambda_.15} parent=23 // pred_check
          %p128 = pneg %p50
        $region26: #{_lambda_.15} parent=23 // pred_check_branch
          %130 = sbr.rel (%p128) target = $region28
        $region27: #{_lambda_.15} parent=23 // pred_region
          %s131 = smul.u32 4, %s9
          %p132 = scmp.lt.s32.totalorder %s131, 7
          %s133 = scalar_select %p132, %s131, 7
          %s134 = smul.addr %s133, 4
          %s135 = scalar_lea.vmem %s1, %s134
          %s136 = smul.u32 4, %s9
        $region28: #{_lambda_.15} parent=23 // pred_fallthru
          _
      $region24: #{_lambda_.15} parent=5 // pred_fallthru
        _
      %p137 = scmp.le.s32.totalorder 1, %s9
      %p138 = scmp.lt.s32.totalorder %s9, 3
      %p139 = pnand %p137, %p138
      %p140 = pneg %p139
      // Predicated region
      $region29: #{_lambda_.15} parent=5 // pred_check
        _
      $region30: #{_lambda_.15} parent=5 // pred_check_branch
        %142 = sbr.rel (%p139) target = $region32
      $region31: #{_lambda_.15} parent=5 // pred_region
        %s143 = ssub.s32 %s9, 1
        %p144 = pneg %p30
        %p145 = pneg %p27
        %s146 = smul.u32 4, %s14
        %p147 = scmp.lt.s32.totalorder %s146, 7
        %s148 = scalar_select %p147, %s146, 7
        %s149 = smul.addr %s148, 4
        %s150 = scalar_lea.vmem %s1, %s149
        %p151 = pneg %p56
        %p152 = pneg %p53
        %p153 = pneg %p77
        %p154 = pneg %p74
        %p155 = pneg %p103
        %p156 = pneg %p100
        %s157 = sand.u32 %s90, 1
        %s158 = sand.u32 %s90, 1
        %s159 = smul.addr %s158, 128
        %s160 = scalar_lea.vmem [#allocation2], %s159
        %s161 = smul.u32 4, %s14
        %p162 = scmp.lt.s32.totalorder %s161, 7
        %s163 = scalar_select %p162, %s161, 7
        %s164 = smul.addr %s163, 4
        %s165 = scalar_lea.vmem %s1, %s164
        %s166 = smul.u32 4, %s14
        %s167 = smul.u32 4, %s14
        %v169 = vld [vmem:[%s0] sm:$0xf]
        %v170 = vld [vmem:[%s0 + $0x4] sm:$0xf]
        %v171 = vld [vmem:[%s0 + $0x8] sm:$0xf]
        %v172 = vld [vmem:[%s0 + $0xc] sm:$0xf]
        %v173 = vld [vmem:[%s165] sm:$0xff]
        %v174 = vld [vmem:[%s165 + $0x8] sm:$0xff]
        %v175 = vld [vmem:[%s2] sm:$0xff]
        %v176 = vld [vmem:[%s2 + $0x8] sm:$0xff]
        %v177 = vld [vmem:[%s2 + $0x10] sm:$0xff]
        %v178 = vld [vmem:[%s2 + $0x18] sm:$0xff]
        %180 = vset.pattern.permute.xlu0 0
        %181 = vperm.xlu0 %180, %v175
        %v182 = vpop.permute.xlu0 %181
        %185 = vset.pattern.permute.xlu0 0
        %186 = vperm.xlu0 %185, %v176
        %v187 = vpop.permute.xlu0 %186
        %190 = vset.pattern.permute.xlu0 0
        %191 = vperm.xlu0 %190, %v177
        %v192 = vpop.permute.xlu0 %191
        %195 = vset.pattern.permute.xlu0 0
        %196 = vperm.xlu0 %195, %v178
        %v197 = vpop.permute.xlu0 %196
        %v203 = vunpack.c.l.b16 %v169
        %v204 = vunpack.c.l.b16 %v170
        %v205 = vunpack.c.l.b16 %v171
        %v206 = vunpack.c.l.b16 %v172
        %v207 = vpack.c.b16 %v204, %v203
        %v208 = vpack.c.b16 %v206, %v205
        %v211 = vunpack.c.l.b16 %v173
        %v212 = vunpack.c.h.b16 %v173
        %v213 = vunpack.c.l.b16 %v174
        %v214 = vunpack.c.h.b16 %v174
        %v215 = vpack.c.b16 %v211, %v211
        %v216 = vpack.c.b16 %v212, %v212
        %v217 = vpack.c.b16 %v213, %v213
        %v218 = vpack.c.b16 %v214, %v214
        %vm219 = vcmask 64512
        %v221 = vsel %vm219, %v207, 0
        %v224 = vsel %vm219, %v208, 0
        %vm226 = vcmask 1043456
        %v228 = vsel %vm226, %v215, 0
        %v231 = vsel %vm226, %v216, 0
        %v234 = vsel %vm226, %v217, 0
        %v237 = vsel %vm226, %v218, 0
        %239 = vmatprep.subr.bf16.mxu0 %v231
        %240 = vmatpush1.bf16.msra.mxu0 %v228
        %241 = vmatprep.subr.bf16.mxu0 0
        %242 = vmatpush1.bf16.msra.mxu0 0
        %243 = vmatprep.subr.bf16.mxu0 0
        %244 = vmatpush1.bf16.msra.mxu0 0
        %245 = vmatprep.subr.bf16.mxu0 0
        %246 = vmatpush1.bf16.msra.mxu0 0
        %247 = vmatprep.subr.bf16.mxu0 0
        %248 = vmatpush1.bf16.msra.mxu0 0
        %249 = vmatprep.subr.bf16.mxu0 0
        %250 = vmatpush1.bf16.msra.mxu0 0
        %251 = vmatprep.subr.bf16.mxu0 0
        %252 = vmatpush1.bf16.msra.mxu0 0
        %253 = vmatprep.subr.bf16.mxu0 0
        %254 = vmatpush1.bf16.msra.mxu0 0
        %255 = vmatprep.subr.bf16.mxu0 0
        %256 = vmatpush1.bf16.msra.mxu0 0
        %257 = vmatprep.subr.bf16.mxu0 0
        %258 = vmatpush1.bf16.msra.mxu0 0
        %259 = vmatprep.subr.bf16.mxu0 0
        %260 = vmatpush1.bf16.msra.mxu0 0
        %261 = vmatprep.subr.bf16.mxu0 0
        %262 = vmatpush1.bf16.msra.mxu0 0
        %263 = vmatprep.subr.bf16.mxu0 0
        %264 = vmatpush1.bf16.msra.mxu0 0
        %265 = vmatprep.subr.bf16.mxu0 0
        %266 = vmatpush1.bf16.msra.mxu0 0
        %267 = vmatprep.subr.bf16.mxu0 0
        %268 = vmatpush1.bf16.msra.mxu0 0
        %269 = vmatprep.subr.bf16.mxu0 0
        %270 = vmatpush1.bf16.msra.mxu0 0
        %271 = vmatprep.mubr.bf16.mxu0 0
        %272 = vmatmul.mubr.bf16.gmra.mrb[0].mxu0 %v221
        %v273 = vpop.f32.mrb[0].mxu0
        %v274 = vadd.f32 %v182, %v273
        %v275 = vpop.f32.mrb[0].mxu0
        %v276 = vadd.f32 %v182, %v275
        %v277 = vpop.f32.mrb[0].mxu0
        %v278 = vadd.f32 %v187, %v277
        %v279 = vpop.f32.mrb[0].mxu0
        %v280 = vadd.f32 %v187, %v279
        %281 = vmatprep.mubr.bf16.mxu0 0
        %282 = vmatmul.mubr.bf16.gmra.mrb[0].mxu0 %v224
        %v283 = vpop.f32.mrb[0].mxu0
        %v284 = vadd.f32 %v192, %v283
        %v285 = vpop.f32.mrb[0].mxu0
        %v286 = vadd.f32 %v192, %v285
        %v287 = vpop.f32.mrb[0].mxu0
        %v288 = vadd.f32 %v197, %v287
        %v289 = vpop.f32.mrb[0].mxu0
        %v290 = vadd.f32 %v197, %v289
        %291 = vdwg.mxu0
        %292 = vmatprep.subr.bf16.mxu0 %v237
        %293 = vmatpush1.bf16.msra.mxu0 %v234
        %294 = vmatprep.subr.bf16.mxu0 0
        %295 = vmatpush1.bf16.msra.mxu0 0
        %296 = vmatprep.subr.bf16.mxu0 0
        %297 = vmatpush1.bf16.msra.mxu0 0
        %298 = vmatprep.subr.bf16.mxu0 0
        %299 = vmatpush1.bf16.msra.mxu0 0
        %300 = vmatprep.subr.bf16.mxu0 0
        %301 = vmatpush1.bf16.msra.mxu0 0
        %302 = vmatprep.subr.bf16.mxu0 0
        %303 = vmatpush1.bf16.msra.mxu0 0
        %304 = vmatprep.subr.bf16.mxu0 0
        %305 = vmatpush1.bf16.msra.mxu0 0
        %306 = vmatprep.subr.bf16.mxu0 0
        %307 = vmatpush1.bf16.msra.mxu0 0
        %308 = vmatprep.subr.bf16.mxu0 0
        %309 = vmatpush1.bf16.msra.mxu0 0
        %310 = vmatprep.subr.bf16.mxu0 0
        %311 = vmatpush1.bf16.msra.mxu0 0
        %312 = vmatprep.subr.bf16.mxu0 0
        %313 = vmatpush1.bf16.msra.mxu0 0
        %314 = vmatprep.subr.bf16.mxu0 0
        %315 = vmatpush1.bf16.msra.mxu0 0
        %316 = vmatprep.subr.bf16.mxu0 0
        %317 = vmatpush1.bf16.msra.mxu0 0
        %318 = vmatprep.subr.bf16.mxu0 0
        %319 = vmatpush1.bf16.msra.mxu0 0
        %320 = vmatprep.subr.bf16.mxu0 0
        %321 = vmatpush1.bf16.msra.mxu0 0
        %322 = vmatprep.subr.bf16.mxu0 0
        %323 = vmatpush1.bf16.msra.mxu0 0
        %324 = vmatprep.mubr.bf16.mxu0 0
        %325 = vmatmul.mubr.bf16.gmra.mrb[0].mxu0 %v221
        %v326 = vpop.f32.mrb[0].mxu0
        %v327 = vadd.f32 %v182, %v326
        %v328 = vpop.f32.mrb[0].mxu0
        %v329 = vadd.f32 %v182, %v328
        %v330 = vpop.f32.mrb[0].mxu0
        %v331 = vadd.f32 %v187, %v330
        %v332 = vpop.f32.mrb[0].mxu0
        %v333 = vadd.f32 %v187, %v332
        %334 = vmatprep.mubr.bf16.mxu0 0
        %335 = vmatmul.mubr.bf16.gmra.mrb[0].mxu0 %v224
        %v336 = vpop.f32.mrb[0].mxu0
        %v337 = vadd.f32 %v192, %v336
        %v338 = vpop.f32.mrb[0].mxu0
        %v339 = vadd.f32 %v192, %v338
        %v340 = vpop.f32.mrb[0].mxu0
        %v341 = vadd.f32 %v197, %v340
        %v342 = vpop.f32.mrb[0].mxu0
        %v343 = vadd.f32 %v197, %v342
        %344 = vdwg.mxu0
        %345 = vst [vmem:[%s160] sm:$0xff] %v274
        %346 = vst [vmem:[%s160 + $0x8] sm:$0xff] %v276
        %347 = vst [vmem:[%s160 + $0x10] sm:$0xff] %v327
        %348 = vst [vmem:[%s160 + $0x18] sm:$0xff] %v329
        %349 = vst [vmem:[%s160 + $0x20] sm:$0xff] %v278
        %350 = vst [vmem:[%s160 + $0x28] sm:$0xff] %v280
        %351 = vst [vmem:[%s160 + $0x30] sm:$0xff] %v331
        %352 = vst [vmem:[%s160 + $0x38] sm:$0xff] %v333
        %353 = vst [vmem:[%s160 + $0x40] sm:$0xff] %v284
        %354 = vst [vmem:[%s160 + $0x48] sm:$0xff] %v286
        %355 = vst [vmem:[%s160 + $0x50] sm:$0xff] %v337
        %356 = vst [vmem:[%s160 + $0x58] sm:$0xff] %v339
        %357 = vst [vmem:[%s160 + $0x60] sm:$0xff] %v288
        %358 = vst [vmem:[%s160 + $0x68] sm:$0xff] %v290
        %359 = vst [vmem:[%s160 + $0x70] sm:$0xff] %v341
        %360 = vst [vmem:[%s160 + $0x78] sm:$0xff] %v343
        %s361 = sand.u32 %s90, 1
        %s362 = sand.u32 %s90, 1
        %s363 = smul.addr %s362, 128
        %s364 = scalar_lea.vmem [#allocation2], %s363
        // Predicated region
        $region33: #{_lambda_.15} parent=31 // pred_check
          %p365 = pneg %p100
        $region34: #{_lambda_.15} parent=31 // pred_check_branch
          %367 = sbr.rel (%p365) target = $region36
        $region35: #{_lambda_.15} parent=31 // pred_region
          %s368 = smul.u32 4, %s14
          %s369 = smul.addr %s368, 8
          %s370 = scalar_lea.vmem %s3, %s369
          // Predicated region
          $region37: #{_lambda_.15} parent=35 // pred_check
            _
          $region38: #{_lambda_.15} parent=35 // pred_check_branch
            %372 = sbr.rel (0) target = $region40
          $region39: #{_lambda_.15} parent=35 // pred_region
            // Predicated region
            $region41: #{_lambda_.15} parent=39 // pred_check
              _
            $region42: #{_lambda_.15} parent=39 // pred_check_branch
              %374 = sbr.rel (0) target = $region44
            $region43: #{_lambda_.15} parent=39 // pred_region
              loop: start=0, step=1, limit=1
              $region45: #{_lambda_.15} parent=43 // loop_pre_header
                _
              $region46: #{_lambda_.15} parent=43 // loop_header
                %s376 = sphi 0, %s380
                %p377 = scmp.ge.s32.totalorder %s376, 1
                %s381 = sphi %s364, %s364
                %s382 = sphi %s370, %s370
              $region47: #{_lambda_.15} parent=43 // loop_header_branch
                %379 = sbr.rel (%p377) target = $region51
              $region48: #{_lambda_.15} parent=43 // loop_body
                %v383 = vld [vmem:[%s381] sm:$0xff]
                %384 = vst [vmem:[%s382] sm:$0xff] %v383
                %v385 = vld [vmem:[%s381 + $0x8] sm:$0xff]
                %386 = vst [vmem:[%s382 + $0x8] sm:$0xff] %v385
                %v387 = vld [vmem:[%s381 + $0x10] sm:$0xff]
                %388 = vst [vmem:[%s382 + $0x10] sm:$0xff] %v387
                %v389 = vld [vmem:[%s381 + $0x18] sm:$0xff]
                %390 = vst [vmem:[%s382 + $0x18] sm:$0xff] %v389
                %v391 = vld [vmem:[%s381 + $0x20] sm:$0xff]
                %392 = vst [vmem:[%s382 + $0x40] sm:$0xff] %v391
                %v393 = vld [vmem:[%s381 + $0x28] sm:$0xff]
                %394 = vst [vmem:[%s382 + $0x48] sm:$0xff] %v393
                %v395 = vld [vmem:[%s381 + $0x30] sm:$0xff]
                %396 = vst [vmem:[%s382 + $0x50] sm:$0xff] %v395
                %v397 = vld [vmem:[%s381 + $0x38] sm:$0xff]
                %398 = vst [vmem:[%s382 + $0x58] sm:$0xff] %v397
                %v399 = vld [vmem:[%s381 + $0x40] sm:$0xff]
                %400 = vst [vmem:[%s382 + $0x80] sm:$0xff] %v399
                %v401 = vld [vmem:[%s381 + $0x48] sm:$0xff]
                %402 = vst [vmem:[%s382 + $0x88] sm:$0xff] %v401
                %v403 = vld [vmem:[%s381 + $0x50] sm:$0xff]
                %404 = vst [vmem:[%s382 + $0x90] sm:$0xff] %v403
                %v405 = vld [vmem:[%s381 + $0x58] sm:$0xff]
                %406 = vst [vmem:[%s382 + $0x98] sm:$0xff] %v405
                %v407 = vld [vmem:[%s381 + $0x60] sm:$0xff]
                %408 = vst [vmem:[%s382 + $0xc0] sm:$0xff] %v407
                %v409 = vld [vmem:[%s381 + $0x68] sm:$0xff]
                %410 = vst [vmem:[%s382 + $0xc8] sm:$0xff] %v409
                %v411 = vld [vmem:[%s381 + $0x70] sm:$0xff]
                %412 = vst [vmem:[%s382 + $0xd0] sm:$0xff] %v411
                %v413 = vld [vmem:[%s381 + $0x78] sm:$0xff]
                %414 = vst [vmem:[%s382 + $0xd8] sm:$0xff] %v413
              $region49: #{_lambda_.15} parent=43 // loop_footer
                %s380 = sadd.s32 1, %s376
              $region50: #{_lambda_.15} parent=43 // loop_footer_branch
                %375 = sbr.rel target = $region46
              $region51: #{_lambda_.15} parent=43 // loop_exit
                _
            $region44: #{_lambda_.15} parent=39 // pred_fallthru
              _
            // Predicated region
            $region52: #{_lambda_.15} parent=39 // pred_check
              _
            $region53: #{_lambda_.15} parent=39 // pred_check_branch
              %416 = sbr.rel target = $region55
            $region54: #{_lambda_.15} parent=39 // pred_region
              _
            $region55: #{_lambda_.15} parent=39 // pred_fallthru
              _
          $region40: #{_lambda_.15} parent=35 // pred_fallthru
            _
          %417 = vnop
        $region36: #{_lambda_.15} parent=31 // pred_fallthru
          _
      $region32: #{_lambda_.15} parent=5 // pred_fallthru
        _
      %p418 = scmp.le.s32.totalorder 2, %s9
      // Predicated region
      $region56: #{_lambda_.15} parent=5 // pred_check
        %p419 = pneg %p418
      $region57: #{_lambda_.15} parent=5 // pred_check_branch
        %421 = sbr.rel (%p419) target = $region59
      $region58: #{_lambda_.15} parent=5 // pred_region
        %s422 = ssub.s32 %s9, 2
        // Predicated region
        $region60: #{_lambda_.15} parent=58 // pred_check
          %p423 = pneg %p106
        $region61: #{_lambda_.15} parent=58 // pred_check_branch
          %425 = sbr.rel (%p423) target = $region63
        $region62: #{_lambda_.15} parent=58 // pred_region
          %s426 = sand.u32 %s91, 1
          %s427 = sand.u32 %s91, 1
          %s428 = smul.addr %s427, 128
          %s429 = scalar_lea.vmem [#allocation2], %s428
        $region63: #{_lambda_.15} parent=58 // pred_fallthru
          _
      $region59: #{_lambda_.15} parent=5 // pred_fallthru
        _
    $region6: #{_lambda_.15} parent=1 // loop_footer
      %s13 = sadd.s32 1, %s9
    $region7: #{_lambda_.15} parent=1 // loop_footer_branch
      %8 = sbr.rel target = $region3
    $region8: #{_lambda_.15} parent=1 // loop_exit
      _

// kernel: _lambda_.16
$region0: #{_lambda_.16}
  #allocation0 [shape = 'u32[]', space=smem, size = 0x4, offset = 0x4, fixed_abs, tag = 'smem constant byte address 0x4 - core index']
  #allocation1 [shape = 'u32[144,128]{1,0:T(1,128)}', space=vmem, size = 0x12000, scoped, tag = 'internal scratch']
  %s0 = inlined_call_operand.vmem [shape: bf16[32,8], index: 0, kind: input, shape index: {}]
  %s1 = inlined_call_operand.vmem [shape: bf16[8,1024], index: 1, kind: input, shape index: {}]
  %s2 = inlined_call_operand.vmem [shape: f32[32,1], index: 2, kind: input, shape index: {}]
  %s3 = inlined_call_operand.vmem [shape: f32[32,1024], index: 3, kind: input, shape index: {}]
  %s4 = inlined_call_operand.vmem [shape: f32[32,1024], index: 4, kind: output, shape index: {}]
  %s5 = sld [smem:[#allocation0]]
  $region91: #{_lambda_.16} parent=0
    _
  %s7 = ssub.s32 1, %s5
  %s8 = scalar_select 0, %s7, %s5
  $region1: #{_lambda_.16} parent=0
    #allocation2 [shape = 'u8[131072]{0}', space=vmem, size = 0x20000, scoped, tag = 'input window, operand 3']
    #allocation3 [shape = 'u8[131072]{0}', space=vmem, size = 0x20000, scoped, tag = 'output window, operand 0']
    loop: start=0, step=1, limit=4
    $region2: #{_lambda_.16} parent=1 // loop_pre_header
      _
    $region3: #{_lambda_.16} parent=1 // loop_header
      %s10 = sphi 0, %s14
      %p11 = scmp.ge.s32.totalorder %s10, 4
      %s18 = sphi 0, %s18
      %s20 = sphi 0, %s18
      %s21 = sphi 0, %s20
      %s35 = sphi 0, %s21
      %s41 = sphi 0, %s43
      %s44 = sphi 0, %s41
      %s45 = sphi 0, %s44
      %s61 = sphi 0, %s45
      %s65 = sphi 0, %s65
      %s67 = sphi 0, %s65
      %s68 = sphi 0, %s67
      %s82 = sphi 0, %s68
      %s88 = sphi 0, %s90
      %s91 = sphi 0, %s88
      %s92 = sphi 0, %s91
      %s108 = sphi 0, %s92
      %s114 = sphi 0, %s116
      %s117 = sphi 0, %s114
      %s118 = sphi 0, %s117
      %s134 = sphi 0, %s118
    $region4: #{_lambda_.16} parent=1 // loop_header_branch
      %13 = sbr.rel (%p11) target = $region8
    $region5: #{_lambda_.16} parent=1 // loop_body
      %s15 = ssub.s32 %s10, 1
      %s16 = ssub.s32 %s10, 2
      %s17 = sadd.s32 %s10, 1
      %s19 = sadd.s32 %s18, 1
      %p22 = scmp.eq.s32.totalorder %s10, 1
      %p23 = scmp.ne.s32.totalorder %s18, %s20
      %p24 = scmp.eq.s32.totalorder %s10, 0
      %p25 = por %p23, %p24
      %p26 = scmp.ne.s32.totalorder %s18, %s20
      %p27 = scmp.eq.s32.totalorder %s15, 1
      %p28 = por %p26, %p27
      %p29 = scmp.ne.s32.totalorder %s20, %s21
      %p30 = scmp.eq.s32.totalorder %s15, 0
      %p31 = por %p29, %p30
      %p32 = scmp.ne.s32.totalorder %s20, %s21
      %p33 = scmp.eq.s32.totalorder %s16, 1
      %p34 = por %p32, %p33
      %p36 = scmp.ne.s32.totalorder %s21, %s35
      %p37 = scmp.eq.s32.totalorder %s16, 0
      %p38 = por %p36, %p37
      %s39 = ssub.s32 %s10, %s17
      %p40 = scmp.eq.s32.totalorder %s39, 0
      %s42 = sadd.s32 %s41, 1
      %s43 = scalar_select %p40, %s41, %s42
      %p46 = pneg %p40
      %p47 = scmp.eq.s32.totalorder %s10, 1
      %p48 = por %p46, %p47
      %p49 = scmp.ne.s32.totalorder %s41, %s44
      %p50 = scmp.eq.s32.totalorder %s10, 0
      %p51 = por %p49, %p50
      %p52 = scmp.ne.s32.totalorder %s41, %s44
      %p53 = scmp.eq.s32.totalorder %s15, 1
      %p54 = por %p52, %p53
      %p55 = scmp.ne.s32.totalorder %s44, %s45
      %p56 = scmp.eq.s32.totalorder %s15, 0
      %p57 = por %p55, %p56
      %p58 = scmp.ne.s32.totalorder %s44, %s45
      %p59 = scmp.eq.s32.totalorder %s16, 1
      %p60 = por %p58, %p59
      %p62 = scmp.ne.s32.totalorder %s45, %s61
      %p63 = scmp.eq.s32.totalorder %s16, 0
      %p64 = por %p62, %p63
      %s66 = sadd.s32 %s65, 1
      %p69 = scmp.eq.s32.totalorder %s10, 1
      %p70 = scmp.ne.s32.totalorder %s65, %s67
      %p71 = scmp.eq.s32.totalorder %s10, 0
      %p72 = por %p70, %p71
      %p73 = scmp.ne.s32.totalorder %s65, %s67
      %p74 = scmp.eq.s32.totalorder %s15, 1
      %p75 = por %p73, %p74
      %p76 = scmp.ne.s32.totalorder %s67, %s68
      %p77 = scmp.eq.s32.totalorder %s15, 0
      %p78 = por %p76, %p77
      %p79 = scmp.ne.s32.totalorder %s67, %s68
      %p80 = scmp.eq.s32.totalorder %s16, 1
      %p81 = por %p79, %p80
      %p83 = scmp.ne.s32.totalorder %s68, %s82
      %p84 = scmp.eq.s32.totalorder %s16, 0
      %p85 = por %p83, %p84
      %s86 = ssub.s32 %s10, %s17
      %p87 = scmp.eq.s32.totalorder %s86, 0
      %s89 = sadd.s32 %s88, 1
      %s90 = scalar_select %p87, %s88, %s89
      %p93 = pneg %p87
      %p94 = scmp.eq.s32.totalorder %s10, 1
      %p95 = por %p93, %p94
      %p96 = scmp.ne.s32.totalorder %s88, %s91
      %p97 = scmp.eq.s32.totalorder %s10, 0
      %p98 = por %p96, %p97
      %p99 = scmp.ne.s32.totalorder %s88, %s91
      %p100 = scmp.eq.s32.totalorder %s15, 1
      %p101 = por %p99, %p100
      %p102 = scmp.ne.s32.totalorder %s91, %s92
      %p103 = scmp.eq.s32.totalorder %s15, 0
      %p104 = por %p102, %p103
      %p105 = scmp.ne.s32.totalorder %s91, %s92
      %p106 = scmp.eq.s32.totalorder %s16, 1
      %p107 = por %p105, %p106
      %p109 = scmp.ne.s32.totalorder %s92, %s108
      %p110 = scmp.eq.s32.totalorder %s16, 0
      %p111 = por %p109, %p110
      %s112 = ssub.s32 %s10, %s17
      %p113 = scmp.eq.s32.totalorder %s112, 0
      %s115 = sadd.s32 %s114, 1
      %s116 = scalar_select %p113, %s114, %s115
      %p119 = pneg %p113
      %p120 = scmp.eq.s32.totalorder %s10, 1
      %p121 = por %p119, %p120
      %p122 = scmp.ne.s32.totalorder %s114, %s117
      %p123 = scmp.eq.s32.totalorder %s10, 0
      %p124 = por %p122, %p123
      %p125 = scmp.ne.s32.totalorder %s114, %s117
      %p126 = scmp.eq.s32.totalorder %s15, 1
      %p127 = por %p125, %p126
      %p128 = scmp.ne.s32.totalorder %s117, %s118
      %p129 = scmp.eq.s32.totalorder %s15, 0
      %p130 = por %p128, %p129
      %p131 = scmp.ne.s32.totalorder %s117, %s118
      %p132 = scmp.eq.s32.totalorder %s16, 1
      %p133 = por %p131, %p132
      %p135 = scmp.ne.s32.totalorder %s118, %s134
      %p136 = scmp.eq.s32.totalorder %s16, 0
      %p137 = por %p135, %p136
      %p138 = scmp.le.s32.totalorder 1, %s10
      %p139 = scmp.lt.s32.totalorder %s10, 3
      %p140 = pnand %p138, %p139
      %p141 = pneg %p140
      // Predicated region
      $region9: #{_lambda_.16} parent=5 // pred_check
        _
      $region10: #{_lambda_.16} parent=5 // pred_check_branch
        %143 = sbr.rel (%p140) target = $region12
      $region11: #{_lambda_.16} parent=5 // pred_region
        %s144 = ssub.s32 %s10, 1
        // Predicated region
        $region13: #{_lambda_.16} parent=11 // pred_check
          %p145 = pneg %p31
        $region14: #{_lambda_.16} parent=11 // pred_check_branch
          %147 = sbr.rel (%p145) target = $region16
        $region15: #{_lambda_.16} parent=11 // pred_region
          _
        $region16: #{_lambda_.16} parent=11 // pred_fallthru
          _
        // Predicated region
        $region17: #{_lambda_.16} parent=11 // pred_check
          %p148 = pneg %p78
        $region18: #{_lambda_.16} parent=11 // pred_check_branch
          %150 = sbr.rel (%p148) target = $region20
        $region19: #{_lambda_.16} parent=11 // pred_region
          _
        $region20: #{_lambda_.16} parent=11 // pred_fallthru
          _
      $region12: #{_lambda_.16} parent=5 // pred_fallthru
        _
      %p151 = scmp.lt.s32.totalorder %s10, 2
      // Predicated region
      $region21: #{_lambda_.16} parent=5 // pred_check
        %p152 = pneg %p151
      $region22: #{_lambda_.16} parent=5 // pred_check_branch
        %154 = sbr.rel (%p152) target = $region24
      $region23: #{_lambda_.16} parent=5 // pred_region
        // Predicated region
        $region25: #{_lambda_.16} parent=23 // pred_check
          %p155 = pneg %p51
        $region26: #{_lambda_.16} parent=23 // pred_check_branch
          %157 = sbr.rel (%p155) target = $region28
        $region27: #{_lambda_.16} parent=23 // pred_region
          %s158 = smul.u32 4, %s10
          %p159 = scmp.lt.s32.totalorder %s158, 7
          %s160 = scalar_select %p159, %s158, 7
          %s161 = smul.addr %s160, 4
          %s162 = scalar_lea.vmem %s1, %s161
          %s163 = smul.u32 4, %s10
        $region28: #{_lambda_.16} parent=23 // pred_fallthru
          _
        // Predicated region
        $region29: #{_lambda_.16} parent=23 // pred_check
          %p164 = pneg %p98
        $region30: #{_lambda_.16} parent=23 // pred_check_branch
          %166 = sbr.rel (%p164) target = $region32
        $region31: #{_lambda_.16} parent=23 // pred_region
          %s167 = sand.u32 %s88, 1
          %s168 = sand.u32 %s88, 1
          %s169 = smul.addr %s168, 128
          %s170 = scalar_lea.vmem [#allocation2], %s169
          %s171 = smul.u32 4, %s10
          %s172 = smul.addr %s171, 8
          %s173 = scalar_lea.vmem %s3, %s172
          // Predicated region
          $region33: #{_lambda_.16} parent=31 // pred_check
            _
          $region34: #{_lambda_.16} parent=31 // pred_check_branch
            %175 = sbr.rel (0) target = $region36
          $region35: #{_lambda_.16} parent=31 // pred_region
            // Predicated region
            $region37: #{_lambda_.16} parent=35 // pred_check
              _
            $region38: #{_lambda_.16} parent=35 // pred_check_branch
              %177 = sbr.rel (0) target = $region40
            $region39: #{_lambda_.16} parent=35 // pred_region
              loop: start=0, step=1, limit=1
              $region41: #{_lambda_.16} parent=39 // loop_pre_header
                _
              $region42: #{_lambda_.16} parent=39 // loop_header
                %s179 = sphi 0, %s183
                %p180 = scmp.ge.s32.totalorder %s179, 1
                %s184 = sphi %s173, %s173
                %s185 = sphi %s170, %s170
              $region43: #{_lambda_.16} parent=39 // loop_header_branch
                %182 = sbr.rel (%p180) target = $region47
              $region44: #{_lambda_.16} parent=39 // loop_body
                %v186 = vld [vmem:[%s184] sm:$0xff]
                %187 = vst [vmem:[%s185] sm:$0xff] %v186
                %v188 = vld [vmem:[%s184 + $0x8] sm:$0xff]
                %189 = vst [vmem:[%s185 + $0x8] sm:$0xff] %v188
                %v190 = vld [vmem:[%s184 + $0x10] sm:$0xff]
                %191 = vst [vmem:[%s185 + $0x10] sm:$0xff] %v190
                %v192 = vld [vmem:[%s184 + $0x18] sm:$0xff]
                %193 = vst [vmem:[%s185 + $0x18] sm:$0xff] %v192
                %v194 = vld [vmem:[%s184 + $0x40] sm:$0xff]
                %195 = vst [vmem:[%s185 + $0x20] sm:$0xff] %v194
                %v196 = vld [vmem:[%s184 + $0x48] sm:$0xff]
                %197 = vst [vmem:[%s185 + $0x28] sm:$0xff] %v196
                %v198 = vld [vmem:[%s184 + $0x50] sm:$0xff]
                %199 = vst [vmem:[%s185 + $0x30] sm:$0xff] %v198
                %v200 = vld [vmem:[%s184 + $0x58] sm:$0xff]
                %201 = vst [vmem:[%s185 + $0x38] sm:$0xff] %v200
                %v202 = vld [vmem:[%s184 + $0x80] sm:$0xff]
                %203 = vst [vmem:[%s185 + $0x40] sm:$0xff] %v202
                %v204 = vld [vmem:[%s184 + $0x88] sm:$0xff]
                %205 = vst [vmem:[%s185 + $0x48] sm:$0xff] %v204
                %v206 = vld [vmem:[%s184 + $0x90] sm:$0xff]
                %207 = vst [vmem:[%s185 + $0x50] sm:$0xff] %v206
                %v208 = vld [vmem:[%s184 + $0x98] sm:$0xff]
                %209 = vst [vmem:[%s185 + $0x58] sm:$0xff] %v208
                %v210 = vld [vmem:[%s184 + $0xc0] sm:$0xff]
                %211 = vst [vmem:[%s185 + $0x60] sm:$0xff] %v210
                %v212 = vld [vmem:[%s184 + $0xc8] sm:$0xff]
                %213 = vst [vmem:[%s185 + $0x68] sm:$0xff] %v212
                %v214 = vld [vmem:[%s184 + $0xd0] sm:$0xff]
                %215 = vst [vmem:[%s185 + $0x70] sm:$0xff] %v214
                %v216 = vld [vmem:[%s184 + $0xd8] sm:$0xff]
                %217 = vst [vmem:[%s185 + $0x78] sm:$0xff] %v216
              $region45: #{_lambda_.16} parent=39 // loop_footer
                %s183 = sadd.s32 1, %s179
              $region46: #{_lambda_.16} parent=39 // loop_footer_branch
                %178 = sbr.rel target = $region42
              $region47: #{_lambda_.16} parent=39 // loop_exit
                _
            $region40: #{_lambda_.16} parent=35 // pred_fallthru
              _
            // Predicated region
            $region48: #{_lambda_.16} parent=35 // pred_check
              _
            $region49: #{_lambda_.16} parent=35 // pred_check_branch
              %219 = sbr.rel target = $region51
            $region50: #{_lambda_.16} parent=35 // pred_region
              _
            $region51: #{_lambda_.16} parent=35 // pred_fallthru
              _
          $region36: #{_lambda_.16} parent=31 // pred_fallthru
            _
          %220 = vnop
        $region32: #{_lambda_.16} parent=23 // pred_fallthru
          _
      $region24: #{_lambda_.16} parent=5 // pred_fallthru
        _
      %p221 = scmp.le.s32.totalorder 1, %s10
      %p222 = scmp.lt.s32.totalorder %s10, 3
      %p223 = pnand %p221, %p222
      %p224 = pneg %p223
      // Predicated region
      $region52: #{_lambda_.16} parent=5 // pred_check
        _
      $region53: #{_lambda_.16} parent=5 // pred_check_branch
        %226 = sbr.rel (%p223) target = $region55
      $region54: #{_lambda_.16} parent=5 // pred_region
        %s227 = ssub.s32 %s10, 1
        %s228 = sand.u32 %s91, 1
        %s229 = sand.u32 %s91, 1
        %s230 = smul.addr %s229, 128
        %s231 = scalar_lea.vmem [#allocation2], %s230
        // Predicated region
        $region56: #{_lambda_.16} parent=54 // pred_check
          %p232 = pneg %p104
        $region57: #{_lambda_.16} parent=54 // pred_check_branch
          %234 = sbr.rel (%p232) target = $region59
        $region58: #{_lambda_.16} parent=54 // pred_region
          _
        $region59: #{_lambda_.16} parent=54 // pred_fallthru
          _
        %p235 = pneg %p31
        %p236 = pneg %p28
        %s237 = smul.u32 4, %s15
        %p238 = scmp.lt.s32.totalorder %s237, 7
        %s239 = scalar_select %p238, %s237, 7
        %s240 = smul.addr %s239, 4
        %s241 = scalar_lea.vmem %s1, %s240
        %p242 = pneg %p57
        %p243 = pneg %p54
        %p244 = pneg %p78
        %p245 = pneg %p75
        %s246 = sand.u32 %s91, 1
        %s247 = sand.u32 %s91, 1
        %s248 = smul.addr %s247, 128
        %s249 = scalar_lea.vmem [#allocation2], %s248
        %p250 = pneg %p104
        %p251 = pneg %p101
        %p252 = pneg %p130
        %p253 = pneg %p127
        %s254 = sand.u32 %s117, 1
        %s255 = sand.u32 %s117, 1
        %s256 = smul.addr %s255, 128
        %s257 = scalar_lea.vmem [#allocation3], %s256
        %s258 = smul.u32 4, %s15
        %p259 = scmp.lt.s32.totalorder %s258, 7
        %s260 = scalar_select %p259, %s258, 7
        %s261 = smul.addr %s260, 4
        %s262 = scalar_lea.vmem %s1, %s261
        %s263 = smul.u32 4, %s15
        %s264 = smul.u32 4, %s15
        %s265 = smul.u32 4, %s15
        %v267 = vld [vmem:[%s0] sm:$0xf]
        %v268 = vld [vmem:[%s0 + $0x4] sm:$0xf]
        %v269 = vld [vmem:[%s0 + $0x8] sm:$0xf]
        %v270 = vld [vmem:[%s0 + $0xc] sm:$0xf]
        %v271 = vld [vmem:[%s262] sm:$0xff]
        %v272 = vld [vmem:[%s262 + $0x8] sm:$0xff]
        %v273 = vld [vmem:[%s2] sm:$0xff]
        %v274 = vld [vmem:[%s2 + $0x8] sm:$0xff]
        %v275 = vld [vmem:[%s2 + $0x10] sm:$0xff]
        %v276 = vld [vmem:[%s2 + $0x18] sm:$0xff]
        %278 = vset.pattern.permute.xlu0 0
        %279 = vperm.xlu0 %278, %v273
        %v280 = vpop.permute.xlu0 %279
        %283 = vset.pattern.permute.xlu0 0
        %284 = vperm.xlu0 %283, %v274
        %v285 = vpop.permute.xlu0 %284
        %288 = vset.pattern.permute.xlu0 0
        %289 = vperm.xlu0 %288, %v275
        %v290 = vpop.permute.xlu0 %289
        %293 = vset.pattern.permute.xlu0 0
        %294 = vperm.xlu0 %293, %v276
        %v295 = vpop.permute.xlu0 %294
        %v301 = vunpack.c.l.b16 %v267
        %v302 = vunpack.c.l.b16 %v268
        %v303 = vunpack.c.l.b16 %v269
        %v304 = vunpack.c.l.b16 %v270
        %v305 = vpack.c.b16 %v302, %v301
        %v306 = vpack.c.b16 %v304, %v303
        %v309 = vunpack.c.l.b16 %v271
        %v310 = vunpack.c.h.b16 %v271
        %v311 = vunpack.c.l.b16 %v272
        %v312 = vunpack.c.h.b16 %v272
        %v313 = vpack.c.b16 %v309, %v309
        %v314 = vpack.c.b16 %v310, %v310
        %v315 = vpack.c.b16 %v311, %v311
        %v316 = vpack.c.b16 %v312, %v312
        %vm317 = vcmask 64512
        %v319 = vsel %vm317, %v305, 0
        %v322 = vsel %vm317, %v306, 0
        %vm324 = vcmask 1043456
        %v326 = vsel %vm324, %v313, 0
        %v329 = vsel %vm324, %v314, 0
        %v332 = vsel %vm324, %v315, 0
        %v335 = vsel %vm324, %v316, 0
        %337 = vmatprep.subr.bf16.mxu0 %v329
        %338 = vmatpush1.bf16.msra.mxu0 %v326
        %339 = vmatprep.subr.bf16.mxu0 0
        %340 = vmatpush1.bf16.msra.mxu0 0
        %341 = vmatprep.subr.bf16.mxu0 0
        %342 = vmatpush1.bf16.msra.mxu0 0
        %343 = vmatprep.subr.bf16.mxu0 0
        %344 = vmatpush1.bf16.msra.mxu0 0
        %345 = vmatprep.subr.bf16.mxu0 0
        %346 = vmatpush1.bf16.msra.mxu0 0
        %347 = vmatprep.subr.bf16.mxu0 0
        %348 = vmatpush1.bf16.msra.mxu0 0
        %349 = vmatprep.subr.bf16.mxu0 0
        %350 = vmatpush1.bf16.msra.mxu0 0
        %351 = vmatprep.subr.bf16.mxu0 0
        %352 = vmatpush1.bf16.msra.mxu0 0
        %353 = vmatprep.subr.bf16.mxu0 0
        %354 = vmatpush1.bf16.msra.mxu0 0
        %355 = vmatprep.subr.bf16.mxu0 0
        %356 = vmatpush1.bf16.msra.mxu0 0
        %357 = vmatprep.subr.bf16.mxu0 0
        %358 = vmatpush1.bf16.msra.mxu0 0
        %359 = vmatprep.subr.bf16.mxu0 0
        %360 = vmatpush1.bf16.msra.mxu0 0
        %361 = vmatprep.subr.bf16.mxu0 0
        %362 = vmatpush1.bf16.msra.mxu0 0
        %363 = vmatprep.subr.bf16.mxu0 0
        %364 = vmatpush1.bf16.msra.mxu0 0
        %365 = vmatprep.subr.bf16.mxu0 0
        %366 = vmatpush1.bf16.msra.mxu0 0
        %367 = vmatprep.subr.bf16.mxu0 0
        %368 = vmatpush1.bf16.msra.mxu0 0
        %369 = vmatprep.mubr.bf16.mxu0 0
        %370 = vmatmul.mubr.bf16.gmra.mrb[0].mxu0 %v319
        %v371 = vpop.f32.mrb[0].mxu0
        %v372 = vadd.f32 %v280, %v371
        %v373 = vpop.f32.mrb[0].mxu0
        %v374 = vadd.f32 %v280, %v373
        %v375 = vpop.f32.mrb[0].mxu0
        %v376 = vadd.f32 %v285, %v375
        %v377 = vpop.f32.mrb[0].mxu0
        %v378 = vadd.f32 %v285, %v377
        %379 = vmatprep.mubr.bf16.mxu0 0
        %380 = vmatmul.mubr.bf16.gmra.mrb[0].mxu0 %v322
        %v381 = vpop.f32.mrb[0].mxu0
        %v382 = vadd.f32 %v290, %v381
        %v383 = vpop.f32.mrb[0].mxu0
        %v384 = vadd.f32 %v290, %v383
        %v385 = vpop.f32.mrb[0].mxu0
        %v386 = vadd.f32 %v295, %v385
        %v387 = vpop.f32.mrb[0].mxu0
        %v388 = vadd.f32 %v295, %v387
        %389 = vdwg.mxu0
        %390 = vmatprep.subr.bf16.mxu0 %v335
        %391 = vmatpush1.bf16.msra.mxu0 %v332
        %392 = vmatprep.subr.bf16.mxu0 0
        %393 = vmatpush1.bf16.msra.mxu0 0
        %394 = vmatprep.subr.bf16.mxu0 0
        %395 = vmatpush1.bf16.msra.mxu0 0
        %396 = vmatprep.subr.bf16.mxu0 0
        %397 = vmatpush1.bf16.msra.mxu0 0
        %398 = vmatprep.subr.bf16.mxu0 0
        %399 = vmatpush1.bf16.msra.mxu0 0
        %400 = vmatprep.subr.bf16.mxu0 0
        %401 = vmatpush1.bf16.msra.mxu0 0
        %402 = vmatprep.subr.bf16.mxu0 0
        %403 = vmatpush1.bf16.msra.mxu0 0
        %404 = vmatprep.subr.bf16.mxu0 0
        %405 = vmatpush1.bf16.msra.mxu0 0
        %406 = vmatprep.subr.bf16.mxu0 0
        %407 = vmatpush1.bf16.msra.mxu0 0
        %408 = vmatprep.subr.bf16.mxu0 0
        %409 = vmatpush1.bf16.msra.mxu0 0
        %410 = vmatprep.subr.bf16.mxu0 0
        %411 = vmatpush1.bf16.msra.mxu0 0
        %412 = vmatprep.subr.bf16.mxu0 0
        %413 = vmatpush1.bf16.msra.mxu0 0
        %414 = vmatprep.subr.bf16.mxu0 0
        %415 = vmatpush1.bf16.msra.mxu0 0
        %416 = vmatprep.subr.bf16.mxu0 0
        %417 = vmatpush1.bf16.msra.mxu0 0
        %418 = vmatprep.subr.bf16.mxu0 0
        %419 = vmatpush1.bf16.msra.mxu0 0
        %420 = vmatprep.subr.bf16.mxu0 0
        %421 = vmatpush1.bf16.msra.mxu0 0
        %422 = vmatprep.mubr.bf16.mxu0 0
        %423 = vmatmul.mubr.bf16.gmra.mrb[0].mxu0 %v319
        %v424 = vpop.f32.mrb[0].mxu0
        %v425 = vadd.f32 %v280, %v424
        %v426 = vpop.f32.mrb[0].mxu0
        %v427 = vadd.f32 %v280, %v426
        %v428 = vpop.f32.mrb[0].mxu0
        %v429 = vadd.f32 %v285, %v428
        %v430 = vpop.f32.mrb[0].mxu0
        %v431 = vadd.f32 %v285, %v430
        %432 = vmatprep.mubr.bf16.mxu0 0
        %433 = vmatmul.mubr.bf16.gmra.mrb[0].mxu0 %v322
        %v434 = vpop.f32.mrb[0].mxu0
        %v435 = vadd.f32 %v290, %v434
        %v436 = vpop.f32.mrb[0].mxu0
        %v437 = vadd.f32 %v290, %v436
        %v438 = vpop.f32.mrb[0].mxu0
        %v439 = vadd.f32 %v295, %v438
        %v440 = vpop.f32.mrb[0].mxu0
        %v441 = vadd.f32 %v295, %v440
        %442 = vdwg.mxu0
        %v443 = vld [vmem:[%s231] sm:$0xff]
        %v444 = vld [vmem:[%s231 + $0x8] sm:$0xff]
        %v445 = vld [vmem:[%s231 + $0x10] sm:$0xff]
        %v446 = vld [vmem:[%s231 + $0x18] sm:$0xff]
        %v447 = vld [vmem:[%s231 + $0x20] sm:$0xff]
        %v448 = vld [vmem:[%s231 + $0x28] sm:$0xff]
        %v449 = vld [vmem:[%s231 + $0x30] sm:$0xff]
        %v450 = vld [vmem:[%s231 + $0x38] sm:$0xff]
        %v451 = vld [vmem:[%s231 + $0x40] sm:$0xff]
        %v452 = vld [vmem:[%s231 + $0x48] sm:$0xff]
        %v453 = vld [vmem:[%s231 + $0x50] sm:$0xff]
        %v454 = vld [vmem:[%s231 + $0x58] sm:$0xff]
        %v455 = vld [vmem:[%s231 + $0x60] sm:$0xff]
        %v456 = vld [vmem:[%s231 + $0x68] sm:$0xff]
        %v457 = vld [vmem:[%s231 + $0x70] sm:$0xff]
        %v458 = vld [vmem:[%s231 + $0x78] sm:$0xff]
        %v459 = vadd.f32 %v372, %v443
        %v460 = vadd.f32 %v374, %v444
        %v461 = vadd.f32 %v425, %v445
        %v462 = vadd.f32 %v427, %v446
        %v463 = vadd.f32 %v376, %v447
        %v464 = vadd.f32 %v378, %v448
        %v465 = vadd.f32 %v429, %v449
        %v466 = vadd.f32 %v431, %v450
        %v467 = vadd.f32 %v382, %v451
        %v468 = vadd.f32 %v384, %v452
        %v469 = vadd.f32 %v435, %v453
        %v470 = vadd.f32 %v437, %v454
        %v471 = vadd.f32 %v386, %v455
        %v472 = vadd.f32 %v388, %v456
        %v473 = vadd.f32 %v439, %v457
        %v474 = vadd.f32 %v441, %v458
        %v475 = vmax.f32 %v459, 0.0
        %v476 = vmax.f32 %v460, 0.0
        %v477 = vmax.f32 %v461, 0.0
        %v478 = vmax.f32 %v462, 0.0
        %v479 = vmax.f32 %v463, 0.0
        %v480 = vmax.f32 %v464, 0.0
        %v481 = vmax.f32 %v465, 0.0
        %v482 = vmax.f32 %v466, 0.0
        %v483 = vmax.f32 %v467, 0.0
        %v484 = vmax.f32 %v468, 0.0
        %v485 = vmax.f32 %v469, 0.0
        %v486 = vmax.f32 %v470, 0.0
        %v487 = vmax.f32 %v471, 0.0
        %v488 = vmax.f32 %v472, 0.0
        %v489 = vmax.f32 %v473, 0.0
        %v490 = vmax.f32 %v474, 0.0
        %491 = vst [vmem:[%s257] sm:$0xff] %v475
        %492 = vst [vmem:[%s257 + $0x8] sm:$0xff] %v476
        %493 = vst [vmem:[%s257 + $0x10] sm:$0xff] %v477
        %494 = vst [vmem:[%s257 + $0x18] sm:$0xff] %v478
        %495 = vst [vmem:[%s257 + $0x20] sm:$0xff] %v479
        %496 = vst [vmem:[%s257 + $0x28] sm:$0xff] %v480
        %497 = vst [vmem:[%s257 + $0x30] sm:$0xff] %v481
        %498 = vst [vmem:[%s257 + $0x38] sm:$0xff] %v482
        %499 = vst [vmem:[%s257 + $0x40] sm:$0xff] %v483
        %500 = vst [vmem:[%s257 + $0x48] sm:$0xff] %v484
        %501 = vst [vmem:[%s257 + $0x50] sm:$0xff] %v485
        %502 = vst [vmem:[%s257 + $0x58] sm:$0xff] %v486
        %503 = vst [vmem:[%s257 + $0x60] sm:$0xff] %v487
        %504 = vst [vmem:[%s257 + $0x68] sm:$0xff] %v488
        %505 = vst [vmem:[%s257 + $0x70] sm:$0xff] %v489
        %506 = vst [vmem:[%s257 + $0x78] sm:$0xff] %v490
        %s507 = sand.u32 %s117, 1
        %s508 = sand.u32 %s117, 1
        %s509 = smul.addr %s508, 128
        %s510 = scalar_lea.vmem [#allocation3], %s509
        // Predicated region
        $region60: #{_lambda_.16} parent=54 // pred_check
          %p511 = pneg %p127
        $region61: #{_lambda_.16} parent=54 // pred_check_branch
          %513 = sbr.rel (%p511) target = $region63
        $region62: #{_lambda_.16} parent=54 // pred_region
          %s514 = smul.u32 4, %s15
          %s515 = smul.addr %s514, 8
          %s516 = scalar_lea.vmem %s4, %s515
          // Predicated region
          $region64: #{_lambda_.16} parent=62 // pred_check
            _
          $region65: #{_lambda_.16} parent=62 // pred_check_branch
            %518 = sbr.rel (0) target = $region67
          $region66: #{_lambda_.16} parent=62 // pred_region
            // Predicated region
            $region68: #{_lambda_.16} parent=66 // pred_check
              _
            $region69: #{_lambda_.16} parent=66 // pred_check_branch
              %520 = sbr.rel (0) target = $region71
            $region70: #{_lambda_.16} parent=66 // pred_region
              loop: start=0, step=1, limit=1
              $region72: #{_lambda_.16} parent=70 // loop_pre_header
                _
              $region73: #{_lambda_.16} parent=70 // loop_header
                %s522 = sphi 0, %s526
                %p523 = scmp.ge.s32.totalorder %s522, 1
                %s527 = sphi %s510, %s510
                %s528 = sphi %s516, %s516
              $region74: #{_lambda_.16} parent=70 // loop_header_branch
                %525 = sbr.rel (%p523) target = $region78
              $region75: #{_lambda_.16} parent=70 // loop_body
                %v529 = vld [vmem:[%s527] sm:$0xff]
                %530 = vst [vmem:[%s528] sm:$0xff] %v529
                %v531 = vld [vmem:[%s527 + $0x8] sm:$0xff]
                %532 = vst [vmem:[%s528 + $0x8] sm:$0xff] %v531
                %v533 = vld [vmem:[%s527 + $0x10] sm:$0xff]
                %534 = vst [vmem:[%s528 + $0x10] sm:$0xff] %v533
                %v535 = vld [vmem:[%s527 + $0x18] sm:$0xff]
                %536 = vst [vmem:[%s528 + $0x18] sm:$0xff] %v535
                %v537 = vld [vmem:[%s527 + $0x20] sm:$0xff]
                %538 = vst [vmem:[%s528 + $0x40] sm:$0xff] %v537
                %v539 = vld [vmem:[%s527 + $0x28] sm:$0xff]
                %540 = vst [vmem:[%s528 + $0x48] sm:$0xff] %v539
                %v541 = vld [vmem:[%s527 + $0x30] sm:$0xff]
                %542 = vst [vmem:[%s528 + $0x50] sm:$0xff] %v541
                %v543 = vld [vmem:[%s527 + $0x38] sm:$0xff]
                %544 = vst [vmem:[%s528 + $0x58] sm:$0xff] %v543
                %v545 = vld [vmem:[%s527 + $0x40] sm:$0xff]
                %546 = vst [vmem:[%s528 + $0x80] sm:$0xff] %v545
                %v547 = vld [vmem:[%s527 + $0x48] sm:$0xff]
                %548 = vst [vmem:[%s528 + $0x88] sm:$0xff] %v547
                %v549 = vld [vmem:[%s527 + $0x50] sm:$0xff]
                %550 = vst [vmem:[%s528 + $0x90] sm:$0xff] %v549
                %v551 = vld [vmem:[%s527 + $0x58] sm:$0xff]
                %552 = vst [vmem:[%s528 + $0x98] sm:$0xff] %v551
                %v553 = vld [vmem:[%s527 + $0x60] sm:$0xff]
                %554 = vst [vmem:[%s528 + $0xc0] sm:$0xff] %v553
                %v555 = vld [vmem:[%s527 + $0x68] sm:$0xff]
                %556 = vst [vmem:[%s528 + $0xc8] sm:$0xff] %v555
                %v557 = vld [vmem:[%s527 + $0x70] sm:$0xff]
                %558 = vst [vmem:[%s528 + $0xd0] sm:$0xff] %v557
                %v559 = vld [vmem:[%s527 + $0x78] sm:$0xff]
                %560 = vst [vmem:[%s528 + $0xd8] sm:$0xff] %v559
              $region76: #{_lambda_.16} parent=70 // loop_footer
                %s526 = sadd.s32 1, %s522
              $region77: #{_lambda_.16} parent=70 // loop_footer_branch
                %521 = sbr.rel target = $region73
              $region78: #{_lambda_.16} parent=70 // loop_exit
                _
            $region71: #{_lambda_.16} parent=66 // pred_fallthru
              _
            // Predicated region
            $region79: #{_lambda_.16} parent=66 // pred_check
              _
            $region80: #{_lambda_.16} parent=66 // pred_check_branch
              %562 = sbr.rel target = $region82
            $region81: #{_lambda_.16} parent=66 // pred_region
              _
            $region82: #{_lambda_.16} parent=66 // pred_fallthru
              _
          $region67: #{_lambda_.16} parent=62 // pred_fallthru
            _
          %563 = vnop
        $region63: #{_lambda_.16} parent=54 // pred_fallthru
          _
      $region55: #{_lambda_.16} parent=5 // pred_fallthru
        _
      %p564 = scmp.le.s32.totalorder 2, %s10
      // Predicated region
      $region83: #{_lambda_.16} parent=5 // pred_check
        %p565 = pneg %p564
      $region84: #{_lambda_.16} parent=5 // pred_check_branch
        %567 = sbr.rel (%p565) target = $region86
      $region85: #{_lambda_.16} parent=5 // pred_region
        %s568 = ssub.s32 %s10, 2
        // Predicated region
        $region87: #{_lambda_.16} parent=85 // pred_check
          %p569 = pneg %p133
        $region88: #{_lambda_.16} parent=85 // pred_check_branch
          %571 = sbr.rel (%p569) target = $region90
        $region89: #{_lambda_.16} parent=85 // pred_region
          %s572 = sand.u32 %s118, 1
          %s573 = sand.u32 %s118, 1
          %s574 = smul.addr %s573, 128
          %s575 = scalar_lea.vmem [#allocation3], %s574
        $region90: #{_lambda_.16} parent=85 // pred_fallthru
          _
      $region86: #{_lambda_.16} parent=5 // pred_fallthru
        _
    $region6: #{_lambda_.16} parent=1 // loop_footer
      %s14 = sadd.s32 1, %s10
    $region7: #{_lambda_.16} parent=1 // loop_footer_branch
      %9 = sbr.rel target = $region3
    $region8: #{_lambda_.16} parent=1 // loop_exit
      _

// kernel: _lambda_.17
$region0: #{_lambda_.17}
  #allocation0 [shape = 'u32[]', space=smem, size = 0x4, offset = 0x4, fixed_abs, tag = 'smem constant byte address 0x4 - core index']
  #allocation1 [shape = 'u32[144,128]{1,0:T(1,128)}', space=vmem, size = 0x12000, scoped, tag = 'internal scratch']
  %s0 = inlined_call_operand.vmem [shape: bf16[16,96], index: 0, kind: input, shape index: {}]
  %s1 = inlined_call_operand.vmem [shape: bf16[96,1024], index: 1, kind: input, shape index: {}]
  %s2 = inlined_call_operand.vmem [shape: f32[16,1], index: 2, kind: input, shape index: {}]
  %s3 = inlined_call_operand.vmem [shape: f32[16,1024], index: 3, kind: output, shape index: {}]
  %s4 = sld [smem:[#allocation0]]
  $region87: #{_lambda_.17} parent=0
    _
  %s6 = ssub.s32 1, %s4
  %s7 = scalar_select 0, %s6, %s4
  $region1: #{_lambda_.17} parent=0
    #allocation2 [shape = 'u8[196608]{0}', space=vmem, size = 0x30000, scoped, tag = 'input window, operand 1']
    #allocation3 [shape = 'u8[65536]{0}', space=vmem, size = 0x10000, scoped, tag = 'output window, operand 0']
    loop: start=0, step=1, limit=4
    $region2: #{_lambda_.17} parent=1 // loop_pre_header
      _
    $region3: #{_lambda_.17} parent=1 // loop_header
      %s9 = sphi 0, %s13
      %p10 = scmp.ge.s32.totalorder %s9, 4
      %s17 = sphi 0, %s17
      %s19 = sphi 0, %s17
      %s20 = sphi 0, %s19
      %s34 = sphi 0, %s20
      %s40 = sphi 0, %s42
      %s43 = sphi 0, %s40
      %s44 = sphi 0, %s43
      %s60 = sphi 0, %s44
      %s64 = sphi 0, %s64
      %s66 = sphi 0, %s64
      %s67 = sphi 0, %s66
      %s81 = sphi 0, %s67
      %s87 = sphi 0, %s89
      %s90 = sphi 0, %s87
      %s91 = sphi 0, %s90
      %s107 = sphi 0, %s91
    $region4: #{_lambda_.17} parent=1 // loop_header_branch
      %12 = sbr.rel (%p10) target = $region8
    $region5: #{_lambda_.17} parent=1 // loop_body
      %s14 = ssub.s32 %s9, 1
      %s15 = ssub.s32 %s9, 2
      %s16 = sadd.s32 %s9, 1
      %s18 = sadd.s32 %s17, 1
      %p21 = scmp.eq.s32.totalorder %s9, 1
      %p22 = scmp.ne.s32.totalorder %s17, %s19
      %p23 = scmp.eq.s32.totalorder %s9, 0
      %p24 = por %p22, %p23
      %p25 = scmp.ne.s32.totalorder %s17, %s19
      %p26 = scmp.eq.s32.totalorder %s14, 1
      %p27 = por %p25, %p26
      %p28 = scmp.ne.s32.totalorder %s19, %s20
      %p29 = scmp.eq.s32.totalorder %s14, 0
      %p30 = por %p28, %p29
      %p31 = scmp.ne.s32.totalorder %s19, %s20
      %p32 = scmp.eq.s32.totalorder %s15, 1
      %p33 = por %p31, %p32
      %p35 = scmp.ne.s32.totalorder %s20, %s34
      %p36 = scmp.eq.s32.totalorder %s15, 0
      %p37 = por %p35, %p36
      %s38 = ssub.s32 %s9, %s16
      %p39 = scmp.eq.s32.totalorder %s38, 0
      %s41 = sadd.s32 %s40, 1
      %s42 = scalar_select %p39, %s40, %s41
      %p45 = pneg %p39
      %p46 = scmp.eq.s32.totalorder %s9, 1
      %p47 = por %p45, %p46
      %p48 = scmp.ne.s32.totalorder %s40, %s43
      %p49 = scmp.eq.s32.totalorder %s9, 0
      %p50 = por %p48, %p49
      %p51 = scmp.ne.s32.totalorder %s40, %s43
      %p52 = scmp.eq.s32.totalorder %s14, 1
      %p53 = por %p51, %p52
      %p54 = scmp.ne.s32.totalorder %s43, %s44
      %p55 = scmp.eq.s32.totalorder %s14, 0
      %p56 = por %p54, %p55
      %p57 = scmp.ne.s32.totalorder %s43, %s44
      %p58 = scmp.eq.s32.totalorder %s15, 1
      %p59 = por %p57, %p58
      %p61 = scmp.ne.s32.totalorder %s44, %s60
      %p62 = scmp.eq.s32.totalorder %s15, 0
      %p63 = por %p61, %p62
      %s65 = sadd.s32 %s64, 1
      %p68 = scmp.eq.s32.totalorder %s9, 1
      %p69 = scmp.ne.s32.totalorder %s64, %s66
      %p70 = scmp.eq.s32.totalorder %s9, 0
      %p71 = por %p69, %p70
      %p72 = scmp.ne.s32.totalorder %s64, %s66
      %p73 = scmp.eq.s32.totalorder %s14, 1
      %p74 = por %p72, %p73
      %p75 = scmp.ne.s32.totalorder %s66, %s67
      %p76 = scmp.eq.s32.totalorder %s14, 0
      %p77 = por %p75, %p76
      %p78 = scmp.ne.s32.totalorder %s66, %s67
      %p79 = scmp.eq.s32.totalorder %s15, 1
      %p80 = por %p78, %p79
      %p82 = scmp.ne.s32.totalorder %s67, %s81
      %p83 = scmp.eq.s32.totalorder %s15, 0
      %p84 = por %p82, %p83
      %s85 = ssub.s32 %s9, %s16
      %p86 = scmp.eq.s32.totalorder %s85, 0
      %s88 = sadd.s32 %s87, 1
      %s89 = scalar_select %p86, %s87, %s88
      %p92 = pneg %p86
      %p93 = scmp.eq.s32.totalorder %s9, 1
      %p94 = por %p92, %p93
      %p95 = scmp.ne.s32.totalorder %s87, %s90
      %p96 = scmp.eq.s32.totalorder %s9, 0
      %p97 = por %p95, %p96
      %p98 = scmp.ne.s32.totalorder %s87, %s90
      %p99 = scmp.eq.s32.totalorder %s14, 1
      %p100 = por %p98, %p99
      %p101 = scmp.ne.s32.totalorder %s90, %s91
      %p102 = scmp.eq.s32.totalorder %s14, 0
      %p103 = por %p101, %p102
      %p104 = scmp.ne.s32.totalorder %s90, %s91
      %p105 = scmp.eq.s32.totalorder %s15, 1
      %p106 = por %p104, %p105
      %p108 = scmp.ne.s32.totalorder %s91, %s107
      %p109 = scmp.eq.s32.totalorder %s15, 0
      %p110 = por %p108, %p109
      %p111 = scmp.le.s32.totalorder 1, %s9
      %p112 = scmp.lt.s32.totalorder %s9, 3
      %p113 = pnand %p111, %p112
      %p114 = pneg %p113
      // Predicated region
      $region9: #{_lambda_.17} parent=5 // pred_check
        _
      $region10: #{_lambda_.17} parent=5 // pred_check_branch
        %116 = sbr.rel (%p113) target = $region12
      $region11: #{_lambda_.17} parent=5 // pred_region
        %s117 = ssub.s32 %s9, 1
        // Predicated region
        $region13: #{_lambda_.17} parent=11 // pred_check
          %p118 = pneg %p30
        $region14: #{_lambda_.17} parent=11 // pred_check_branch
          %120 = sbr.rel (%p118) target = $region16
        $region15: #{_lambda_.17} parent=11 // pred_region
          _
        $region16: #{_lambda_.17} parent=11 // pred_fallthru
          _
        // Predicated region
        $region17: #{_lambda_.17} parent=11 // pred_check
          %p121 = pneg %p77
        $region18: #{_lambda_.17} parent=11 // pred_check_branch
          %123 = sbr.rel (%p121) target = $region20
        $region19: #{_lambda_.17} parent=11 // pred_region
          _
        $region20: #{_lambda_.17} parent=11 // pred_fallthru
          _
      $region12: #{_lambda_.17} parent=5 // pred_fallthru
        _
      %p124 = scmp.lt.s32.totalorder %s9, 2
      // Predicated region
      $region21: #{_lambda_.17} parent=5 // pred_check
        %p125 = pneg %p124
      $region22: #{_lambda_.17} parent=5 // pred_check_branch
        %127 = sbr.rel (%p125) target = $region24
      $region23: #{_lambda_.17} parent=5 // pred_region
        // Predicated region
        $region25: #{_lambda_.17} parent=23 // pred_check
          %p128 = pneg %p50
        $region26: #{_lambda_.17} parent=23 // pred_check_branch
          %130 = sbr.rel (%p128) target = $region28
        $region27: #{_lambda_.17} parent=23 // pred_region
          %s131 = sand.u32 %s40, 1
          %s132 = sand.u32 %s40, 1
          %s133 = smul.addr %s132, 192
          %s134 = scalar_lea.vmem [#allocation2], %s133
          %s135 = smul.u32 4, %s9
          %s136 = smul.addr %s135, 4
          %s137 = scalar_lea.vmem %s1, %s136
          // Predicated region
          $region29: #{_lambda_.17} parent=27 // pred_check
            _
          $region30: #{_lambda_.17} parent=27 // pred_check_branch
            %139 = sbr.rel (0) target = $region32
          $region31: #{_lambda_.17} parent=27 // pred_region
            // Predicated region
            $region33: #{_lambda_.17} parent=31 // pred_check
              _
            $region34: #{_lambda_.17} parent=31 // pred_check_branch
              %141 = sbr.rel (0) target = $region36
            $region35: #{_lambda_.17} parent=31 // pred_region
              loop: start=0, step=1, limit=1
              $region37: #{_lambda_.17} parent=35 // loop_pre_header
                _
              $region38: #{_lambda_.17} parent=35 // loop_header
                %s143 = sphi 0, %s147
                %p144 = scmp.ge.s32.totalorder %s143, 1
                %s148 = sphi %s137, %s137
                %s149 = sphi %s134, %s134
              $region39: #{_lambda_.17} parent=35 // loop_header_branch
                %146 = sbr.rel (%p144) target = $region43
              $region40: #{_lambda_.17} parent=35 // loop_body
                %v150 = vld [vmem:[%s148] sm:$0xff]
                %151 = vst [vmem:[%s149] sm:$0xff] %v150
                %v152 = vld [vmem:[%s148 + $0x8] sm:$0xff]
                %153 = vst [vmem:[%s149 + $0x8] sm:$0xff] %v152
                %v154 = vld [vmem:[%s148 + $0x20] sm:$0xff]
                %155 = vst [vmem:[%s149 + $0x10] sm:$0xff] %v154
                %v156 = vld [vmem:[%s148 + $0x28] sm:$0xff]
                %157 = vst [vmem:[%s149 + $0x18] sm:$0xff] %v156
                %v158 = vld [vmem:[%s148 + $0x40] sm:$0xff]
                %159 = vst [vmem:[%s149 + $0x20] sm:$0xff] %v158
                %v160 = vld [vmem:[%s148 + $0x48] sm:$0xff]
                %161 = vst [vmem:[%s149 + $0x28] sm:$0xff] %v160
                %v162 = vld [vmem:[%s148 + $0x60] sm:$0xff]
                %163 = vst [vmem:[%s149 + $0x30] sm:$0xff] %v162
                %v164 = vld [vmem:[%s148 + $0x68] sm:$0xff]
                %165 = vst [vmem:[%s149 + $0x38] sm:$0xff] %v164
                %v166 = vld [vmem:[%s148 + $0x80] sm:$0xff]
                %167 = vst [vmem:[%s149 + $0x40] sm:$0xff] %v166
                %v168 = vld [vmem:[%s148 + $0x88] sm:$0xff]
                %169 = vst [vmem:[%s149 + $0x48] sm:$0xff] %v168
                %v170 = vld [vmem:[%s148 + $0xa0] sm:$0xff]
                %171 = vst [vmem:[%s149 + $0x50] sm:$0xff] %v170
                %v172 = vld [vmem:[%s148 + $0xa8] sm:$0xff]
                %173 = vst [vmem:[%s149 + $0x58] sm:$0xff] %v172
                %v174 = vld [vmem:[%s148 + $0xc0] sm:$0xff]
                %175 = vst [vmem:[%s149 + $0x60] sm:$0xff] %v174
                %v176 = vld [vmem:[%s148 + $0xc8] sm:$0xff]
                %177 = vst [vmem:[%s149 + $0x68] sm:$0xff] %v176
                %v178 = vld [vmem:[%s148 + $0xe0] sm:$0xff]
                %179 = vst [vmem:[%s149 + $0x70] sm:$0xff] %v178
                %v180 = vld [vmem:[%s148 + $0xe8] sm:$0xff]
                %181 = vst [vmem:[%s149 + $0x78] sm:$0xff] %v180
                %v182 = vld [vmem:[%s148 + $0x100] sm:$0xff]
                %183 = vst [vmem:[%s149 + $0x80] sm:$0xff] %v182
                %v184 = vld [vmem:[%s148 + $0x108] sm:$0xff]
                %185 = vst [vmem:[%s149 + $0x88] sm:$0xff] %v184
                %v186 = vld [vmem:[%s148 + $0x120] sm:$0xff]
                %187 = vst [vmem:[%s149 + $0x90] sm:$0xff] %v186
                %v188 = vld [vmem:[%s148 + $0x128] sm:$0xff]
                %189 = vst [vmem:[%s149 + $0x98] sm:$0xff] %v188
                %v190 = vld [vmem:[%s148 + $0x140] sm:$0xff]
                %191 = vst [vmem:[%s149 + $0xa0] sm:$0xff] %v190
                %v192 = vld [vmem:[%s148 + $0x148] sm:$0xff]
                %193 = vst [vmem:[%s149 + $0xa8] sm:$0xff] %v192
                %v194 = vld [vmem:[%s148 + $0x160] sm:$0xff]
                %195 = vst [vmem:[%s149 + $0xb0] sm:$0xff] %v194
                %v196 = vld [vmem:[%s148 + $0x168] sm:$0xff]
                %197 = vst [vmem:[%s149 + $0xb8] sm:$0xff] %v196
              $region41: #{_lambda_.17} parent=35 // loop_footer
                %s147 = sadd.s32 1, %s143
              $region42: #{_lambda_.17} parent=35 // loop_footer_branch
                %142 = sbr.rel target = $region38
              $region43: #{_lambda_.17} parent=35 // loop_exit
                _
            $region36: #{_lambda_.17} parent=31 // pred_fallthru
              _
            // Predicated region
            $region44: #{_lambda_.17} parent=31 // pred_check
              _
            $region45: #{_lambda_.17} parent=31 // pred_check_branch
              %199 = sbr.rel target = $region47
            $region46: #{_lambda_.17} parent=31 // pred_region
              _
            $region47: #{_lambda_.17} parent=31 // pred_fallthru
              _
          $region32: #{_lambda_.17} parent=27 // pred_fallthru
            _
          %200 = vnop
        $region28: #{_lambda_.17} parent=23 // pred_fallthru
          _
      $region24: #{_lambda_.17} parent=5 // pred_fallthru
        _
      %p201 = scmp.le.s32.totalorder 1, %s9
      %p202 = scmp.lt.s32.totalorder %s9, 3
      %p203 = pnand %p201, %p202
      %p204 = pneg %p203
      // Predicated region
      $region48: #{_lambda_.17} parent=5 // pred_check
        _
      $region49: #{_lambda_.17} parent=5 // pred_check_branch
        %206 = sbr.rel (%p203) target = $region51
      $region50: #{_lambda_.17} parent=5 // pred_region
        %s207 = ssub.s32 %s9, 1
        %s208 = sand.u32 %s43, 1
        %s209 = sand.u32 %s43, 1
        %s210 = smul.addr %s209, 192
        %s211 = scalar_lea.vmem [#allocation2], %s210
        // Predicated region
        $region52: #{_lambda_.17} parent=50 // pred_check
          %p212 = pneg %p56
        $region53: #{_lambda_.17} parent=50 // pred_check_branch
          %214 = sbr.rel (%p212) target = $region55
        $region54: #{_lambda_.17} parent=50 // pred_region
          _
        $region55: #{_lambda_.17} parent=50 // pred_fallthru
          _
        %p215 = pneg %p30
        %p216 = pneg %p27
        %s217 = sand.u32 %s43, 1
        %s218 = sand.u32 %s43, 1
        %s219 = smul.addr %s218, 192
        %s220 = scalar_lea.vmem [#allocation2], %s219
        %p221 = pneg %p56
        %p222 = pneg %p53
        %p223 = pneg %p77
        %p224 = pneg %p74
        %p225 = pneg %p103
        %p226 = pneg %p100
        %s227 = sand.u32 %s90, 1
        %s228 = sand.u32 %s90, 1
        %s229 = smul.addr %s228, 64
        %s230 = scalar_lea.vmem [#allocation3], %s229
        %s231 = smul.u32 4, %s14
        %s232 = smul.u32 4, %s14
        %v234 = vld [vmem:[%s0] sm:$0xf]
        %v235 = vld [vmem:[%s0 + $0x4] sm:$0xf]
        %v236 = vld [vmem:[%s211] sm:$0xff]
        %v237 = vld [vmem:[%s211 + $0x8] sm:$0xff]
        %v238 = vld [vmem:[%s211 + $0x10] sm:$0xff]
        %v239 = vld [vmem:[%s211 + $0x18] sm:$0xff]
        %v240 = vld [vmem:[%s211 + $0x20] sm:$0xff]
        %v241 = vld [vmem:[%s211 + $0x28] sm:$0xff]
        %v242 = vld [vmem:[%s211 + $0x30] sm:$0xff]
        %v243 = vld [vmem:[%s211 + $0x38] sm:$0xff]
        %v244 = vld [vmem:[%s211 + $0x40] sm:$0xff]
        %v245 = vld [vmem:[%s211 + $0x48] sm:$0xff]
        %v246 = vld [vmem:[%s211 + $0x50] sm:$0xff]
        %v247 = vld [vmem:[%s211 + $0x58] sm:$0xff]
        %v248 = vld [vmem:[%s211 + $0x60] sm:$0xff]
        %v249 = vld [vmem:[%s211 + $0x68] sm:$0xff]
        %v250 = vld [vmem:[%s211 + $0x70] sm:$0xff]
        %v251 = vld [vmem:[%s211 + $0x78] sm:$0xff]
        %v252 = vld [vmem:[%s211 + $0x80] sm:$0xff]
        %v253 = vld [vmem:[%s211 + $0x88] sm:$0xff]
        %v254 = vld [vmem:[%s211 + $0x90] sm:$0xff]
        %v255 = vld [vmem:[%s211 + $0x98] sm:$0xff]
        %v256 = vld [vmem:[%s211 + $0xa0] sm:$0xff]
        %v257 = vld [vmem:[%s211 + $0xa8] sm:$0xff]
        %v258 = vld [vmem:[%s211 + $0xb0] sm:$0xff]
        %v259 = vld [vmem:[%s211 + $0xb8] sm:$0xff]
        %v260 = vld [vmem:[%s2] sm:$0xff]
        %v261 = vld [vmem:[%s2 + $0x8] sm:$0xff]
        %263 = vset.pattern.permute.xlu0 0
        %264 = vperm.xlu0 %263, %v260
        %v265 = vpop.permute.xlu0 %264
        %268 = vset.pattern.permute.xlu0 0
        %269 = vperm.xlu0 %268, %v261
        %v270 = vpop.permute.xlu0 %269
        %v274 = vunpack.c.l.b16 %v234
        %v275 = vunpack.c.l.b16 %v235
        %v276 = vpack.c.b16 %v275, %v274
        %v301 = vunpack.c.l.b16 %v236
        %v302 = vunpack.c.h.b16 %v236
        %v303 = vunpack.c.l.b16 %v237
        %v304 = vunpack.c.h.b16 %v237
        %v305 = vunpack.c.l.b16 %v238
        %v306 = vunpack.c.h.b16 %v238
        %v307 = vunpack.c.l.b16 %v239
        %v308 = vunpack.c.h.b16 %v239
        %v309 = vunpack.c.l.b16 %v240
        %v310 = vunpack.c.h.b16 %v240
        %v311 = vunpack.c.l.b16 %v241
        %v312 = vunpack.c.h.b16 %v241
        %v313 = vunpack.c.l.b16 %v242
        %v314 = vunpack.c.h.b16 %v242
        %v315 = vunpack.c.l.b16 %v243
        %v316 = vunpack.c.h.b16 %v243
        %v317 = vunpack.c.l.b16 %v244
        %v318 = vunpack.c.h.b16 %v244
        %v319 = vunpack.c.l.b16 %v245
        %v320 = vunpack.c.h.b16 %v245
        %v321 = vunpack.c.l.b16 %v246
        %v322 = vunpack.c.h.b16 %v246
        %v323 = vunpack.c.l.b16 %v247
        %v324 = vunpack.c.h.b16 %v247
        %v325 = vunpack.c.l.b16 %v248
        %v326 = vunpack.c.h.b16 %v248
        %v327 = vunpack.c.l.b16 %v249
        %v328 = vunpack.c.h.b16 %v249
        %v329 = vunpack.c.l.b16 %v250
        %v330 = vunpack.c.h.b16 %v250
        %v331 = vunpack.c.l.b16 %v251
        %v332 = vunpack.c.h.b16 %v251
        %v333 = vunpack.c.l.b16 %v252
        %v334 = vunpack.c.h.b16 %v252
        %v335 = vunpack.c.l.b16 %v253
        %v336 = vunpack.c.h.b16 %v253
        %v337 = vunpack.c.l.b16 %v254
        %v338 = vunpack.c.h.b16 %v254
        %v339 = vunpack.c.l.b16 %v255
        %v340 = vunpack.c.h.b16 %v255
        %v341 = vunpack.c.l.b16 %v256
        %v342 = vunpack.c.h.b16 %v256
        %v343 = vunpack.c.l.b16 %v257
        %v344 = vunpack.c.h.b16 %v257
        %v345 = vunpack.c.l.b16 %v258
        %v346 = vunpack.c.h.b16 %v258
        %v347 = vunpack.c.l.b16 %v259
        %v348 = vunpack.c.h.b16 %v259
        %v349 = vpack.c.b16 %v305, %v301
        %v350 = vpack.c.b16 %v306, %v302
        %v351 = vpack.c.b16 %v307, %v303
        %v352 = vpack.c.b16 %v308, %v304
        %v353 = vpack.c.b16 %v313, %v309
        %v354 = vpack.c.b16 %v314, %v310
        %v355 = vpack.c.b16 %v315, %v311
        %v356 = vpack.c.b16 %v316, %v312
        %v357 = vpack.c.b16 %v321, %v317
        %v358 = vpack.c.b16 %v322, %v318
        %v359 = vpack.c.b16 %v323, %v319
        %v360 = vpack.c.b16 %v324, %v320
        %v361 = vpack.c.b16 %v329, %v325
        %v362 = vpack.c.b16 %v330, %v326
        %v363 = vpack.c.b16 %v331, %v327
        %v364 = vpack.c.b16 %v332, %v328
        %v365 = vpack.c.b16 %v337, %v333
        %v366 = vpack.c.b16 %v338, %v334
        %v367 = vpack.c.b16 %v339, %v335
        %v368 = vpack.c.b16 %v340, %v336
        %v369 = vpack.c.b16 %v345, %v341
        %v370 = vpack.c.b16 %v346, %v342
        %v371 = vpack.c.b16 %v347, %v343
        %v372 = vpack.c.b16 %v348, %v344
        %vm397 = vcmask 785408
        %v399 = vsel %vm397, %v276, 0
        %401 = vmatprep.subr.bf16.mxu0 %v350
        %402 = vmatpush1.bf16.msra.mxu0 %v349
        %403 = vmatprep.subr.bf16.mxu0 %v354
        %404 = vmatpush1.bf16.msra.mxu0 %v353
        %405 = vmatprep.subr.bf16.mxu0 %v358
        %406 = vmatpush1.bf16.msra.mxu0 %v357
        %407 = vmatprep.subr.bf16.mxu0 %v362
        %408 = vmatpush1.bf16.msra.mxu0 %v361
        %409 = vmatprep.subr.bf16.mxu0 %v366
        %410 = vmatpush1.bf16.msra.mxu0 %v365
        %411 = vmatprep.subr.bf16.mxu0 %v370
        %412 = vmatpush1.bf16.msra.mxu0 %v369
        %413 = vmatprep.subr.bf16.mxu0 0
        %414 = vmatpush1.bf16.msra.mxu0 0
        %415 = vmatprep.subr.bf16.mxu0 0
        %416 = vmatpush1.bf16.msra.mxu0 0
        %417 = vmatprep.subr.bf16.mxu0 0
        %418 = vmatpush1.bf16.msra.mxu0 0
        %419 = vmatprep.subr.bf16.mxu0 0
        %420 = vmatpush1.bf16.msra.mxu0 0
        %421 = vmatprep.subr.bf16.mxu0 0
        %422 = vmatpush1.bf16.msra.mxu0 0
        %423 = vmatprep.subr.bf16.mxu0 0
        %424 = vmatpush1.bf16.msra.mxu0 0
        %425 = vmatprep.subr.bf16.mxu0 0
        %426 = vmatpush1.bf16.msra.mxu0 0
        %427 = vmatprep.subr.bf16.mxu0 0
        %428 = vmatpush1.bf16.msra.mxu0 0
        %429 = vmatprep.subr.bf16.mxu0 0
        %430 = vmatpush1.bf16.msra.mxu0 0
        %431 = vmatprep.subr.bf16.mxu0 0
        %432 = vmatpush1.bf16.msra.mxu0 0
        %433 = vmatprep.mubr.bf16.mxu0 0
        %434 = vmatmul.mubr.bf16.gmra.mrb[0].mxu0 %v399
        %v435 = vpop.f32.mrb[0].mxu0
        %v436 = vadd.f32 %v265, %v435
        %v437 = vpop.f32.mrb[0].mxu0
        %v438 = vadd.f32 %v265, %v437
        %v439 = vpop.f32.mrb[0].mxu0
        %v440 = vadd.f32 %v270, %v439
        %v441 = vpop.f32.mrb[0].mxu0
        %v442 = vadd.f32 %v270, %v441
        %443 = vdwg.mxu0
        %444 = vmatprep.subr.bf16.mxu0 %v352
        %445 = vmatpush1.bf16.msra.mxu0 %v351
        %446 = vmatprep.subr.bf16.mxu0 %v356
        %447 = vmatpush1.bf16.msra.mxu0 %v355
        %448 = vmatprep.subr.bf16.mxu0 %v360
        %449 = vmatpush1.bf16.msra.mxu0 %v359
        %450 = vmatprep.subr.bf16.mxu0 %v364
        %451 = vmatpush1.bf16.msra.mxu0 %v363
        %452 = vmatprep.subr.bf16.mxu0 %v368
        %453 = vmatpush1.bf16.msra.mxu0 %v367
        %454 = vmatprep.subr.bf16.mxu0 %v372
        %455 = vmatpush1.bf16.msra.mxu0 %v371
        %456 = vmatprep.subr.bf16.mxu0 0
        %457 = vmatpush1.bf16.msra.mxu0 0
        %458 = vmatprep.subr.bf16.mxu0 0
        %459 = vmatpush1.bf16.msra.mxu0 0
        %460 = vmatprep.subr.bf16.mxu0 0
        %461 = vmatpush1.bf16.msra.mxu0 0
        %462 = vmatprep.subr.bf16.mxu0 0
        %463 = vmatpush1.bf16.msra.mxu0 0
        %464 = vmatprep.subr.bf16.mxu0 0
        %465 = vmatpush1.bf16.msra.mxu0 0
        %466 = vmatprep.subr.bf16.mxu0 0
        %467 = vmatpush1.bf16.msra.mxu0 0
        %468 = vmatprep.subr.bf16.mxu0 0
        %469 = vmatpush1.bf16.msra.mxu0 0
        %470 = vmatprep.subr.bf16.mxu0 0
        %471 = vmatpush1.bf16.msra.mxu0 0
        %472 = vmatprep.subr.bf16.mxu0 0
        %473 = vmatpush1.bf16.msra.mxu0 0
        %474 = vmatprep.subr.bf16.mxu0 0
        %475 = vmatpush1.bf16.msra.mxu0 0
        %476 = vmatprep.mubr.bf16.mxu0 0
        %477 = vmatmul.mubr.bf16.gmra.mrb[0].mxu0 %v399
        %v478 = vpop.f32.mrb[0].mxu0
        %v479 = vadd.f32 %v265, %v478
        %v480 = vpop.f32.mrb[0].mxu0
        %v481 = vadd.f32 %v265, %v480
        %v482 = vpop.f32.mrb[0].mxu0
        %v483 = vadd.f32 %v270, %v482
        %v484 = vpop.f32.mrb[0].mxu0
        %v485 = vadd.f32 %v270, %v484
        %486 = vdwg.mxu0
        %v487 = vmax.f32 %v436, 0.0
        %v488 = vmax.f32 %v438, 0.0
        %v489 = vmax.f32 %v479, 0.0
        %v490 = vmax.f32 %v481, 0.0
        %v491 = vmax.f32 %v440, 0.0
        %v492 = vmax.f32 %v442, 0.0
        %v493 = vmax.f32 %v483, 0.0
        %v494 = vmax.f32 %v485, 0.0
        %495 = vst [vmem:[%s230] sm:$0xff] %v487
        %496 = vst [vmem:[%s230 + $0x8] sm:$0xff] %v488
        %497 = vst [vmem:[%s230 + $0x10] sm:$0xff] %v489
        %498 = vst [vmem:[%s230 + $0x18] sm:$0xff] %v490
        %499 = vst [vmem:[%s230 + $0x20] sm:$0xff] %v491
        %500 = vst [vmem:[%s230 + $0x28] sm:$0xff] %v492
        %501 = vst [vmem:[%s230 + $0x30] sm:$0xff] %v493
        %502 = vst [vmem:[%s230 + $0x38] sm:$0xff] %v494
        %s503 = sand.u32 %s90, 1
        %s504 = sand.u32 %s90, 1
        %s505 = smul.addr %s504, 64
        %s506 = scalar_lea.vmem [#allocation3], %s505
        // Predicated region
        $region56: #{_lambda_.17} parent=50 // pred_check
          %p507 = pneg %p100
        $region57: #{_lambda_.17} parent=50 // pred_check_branch
          %509 = sbr.rel (%p507) target = $region59
        $region58: #{_lambda_.17} parent=50 // pred_region
          %s510 = smul.u32 4, %s14
          %s511 = smul.addr %s510, 8
          %s512 = scalar_lea.vmem %s3, %s511
          // Predicated region
          $region60: #{_lambda_.17} parent=58 // pred_check
            _
          $region61: #{_lambda_.17} parent=58 // pred_check_branch
            %514 = sbr.rel (0) target = $region63
          $region62: #{_lambda_.17} parent=58 // pred_region
            // Predicated region
            $region64: #{_lambda_.17} parent=62 // pred_check
              _
            $region65: #{_lambda_.17} parent=62 // pred_check_branch
              %516 = sbr.rel (0) target = $region67
            $region66: #{_lambda_.17} parent=62 // pred_region
              loop: start=0, step=1, limit=1
              $region68: #{_lambda_.17} parent=66 // loop_pre_header
                _
              $region69: #{_lambda_.17} parent=66 // loop_header
                %s518 = sphi 0, %s522
                %p519 = scmp.ge.s32.totalorder %s518, 1
                %s523 = sphi %s506, %s506
                %s524 = sphi %s512, %s512
              $region70: #{_lambda_.17} parent=66 // loop_header_branch
                %521 = sbr.rel (%p519) target = $region74
              $region71: #{_lambda_.17} parent=66 // loop_body
                %v525 = vld [vmem:[%s523] sm:$0xff]
                %526 = vst [vmem:[%s524] sm:$0xff] %v525
                %v527 = vld [vmem:[%s523 + $0x8] sm:$0xff]
                %528 = vst [vmem:[%s524 + $0x8] sm:$0xff] %v527
                %v529 = vld [vmem:[%s523 + $0x10] sm:$0xff]
                %530 = vst [vmem:[%s524 + $0x10] sm:$0xff] %v529
                %v531 = vld [vmem:[%s523 + $0x18] sm:$0xff]
                %532 = vst [vmem:[%s524 + $0x18] sm:$0xff] %v531
                %v533 = vld [vmem:[%s523 + $0x20] sm:$0xff]
                %534 = vst [vmem:[%s524 + $0x40] sm:$0xff] %v533
                %v535 = vld [vmem:[%s523 + $0x28] sm:$0xff]
                %536 = vst [vmem:[%s524 + $0x48] sm:$0xff] %v535
                %v537 = vld [vmem:[%s523 + $0x30] sm:$0xff]
                %538 = vst [vmem:[%s524 + $0x50] sm:$0xff] %v537
                %v539 = vld [vmem:[%s523 + $0x38] sm:$0xff]
                %540 = vst [vmem:[%s524 + $0x58] sm:$0xff] %v539
              $region72: #{_lambda_.17} parent=66 // loop_footer
                %s522 = sadd.s32 1, %s518
              $region73: #{_lambda_.17} parent=66 // loop_footer_branch
                %517 = sbr.rel target = $region69
              $region74: #{_lambda_.17} parent=66 // loop_exit
                _
            $region67: #{_lambda_.17} parent=62 // pred_fallthru
              _
            // Predicated region
            $region75: #{_lambda_.17} parent=62 // pred_check
              _
            $region76: #{_lambda_.17} parent=62 // pred_check_branch
              %542 = sbr.rel target = $region78
            $region77: #{_lambda_.17} parent=62 // pred_region
              _
            $region78: #{_lambda_.17} parent=62 // pred_fallthru
              _
          $region63: #{_lambda_.17} parent=58 // pred_fallthru
            _
          %543 = vnop
        $region59: #{_lambda_.17} parent=50 // pred_fallthru
          _
      $region51: #{_lambda_.17} parent=5 // pred_fallthru
        _
      %p544 = scmp.le.s32.totalorder 2, %s9
      // Predicated region
      $region79: #{_lambda_.17} parent=5 // pred_check
        %p545 = pneg %p544
      $region80: #{_lambda_.17} parent=5 // pred_check_branch
        %547 = sbr.rel (%p545) target = $region82
      $region81: #{_lambda_.17} parent=5 // pred_region
        %s548 = ssub.s32 %s9, 2
        // Predicated region
        $region83: #{_lambda_.17} parent=81 // pred_check
          %p549 = pneg %p106
        $region84: #{_lambda_.17} parent=81 // pred_check_branch
          %551 = sbr.rel (%p549) target = $region86
        $region85: #{_lambda_.17} parent=81 // pred_region
          %s552 = sand.u32 %s91, 1
          %s553 = sand.u32 %s91, 1
          %s554 = smul.addr %s553, 64
          %s555 = scalar_lea.vmem [#allocation3], %s554
        $region86: #{_lambda_.17} parent=81 // pred_fallthru
          _
      $region82: #{_lambda_.17} parent=5 // pred_fallthru
        _
    $region6: #{_lambda_.17} parent=1 // loop_footer
      %s13 = sadd.s32 1, %s9
    $region7: #{_lambda_.17} parent=1 // loop_footer_branch
      %8 = sbr.rel target = $region3
    $region8: #{_lambda_.17} parent=1 // loop_exit
      _

// kernel: _lambda_.18
$region0: #{_lambda_.18}
  #allocation0 [shape = 'u32[]', space=smem, size = 0x4, offset = 0x4, fixed_abs, tag = 'smem constant byte address 0x4 - core index']
  #allocation1 [shape = 'u32[144,128]{1,0:T(1,128)}', space=vmem, size = 0x12000, scoped, tag = 'internal scratch']
  %s0 = inlined_call_operand.vmem [shape: bf16[16,144], index: 0, kind: input, shape index: {}]
  %s1 = inlined_call_operand.vmem [shape: bf16[144,128], index: 1, kind: input, shape index: {}]
  %s2 = inlined_call_operand.vmem [shape: f32[16,1], index: 2, kind: input, shape index: {}]
  %s3 = inlined_call_operand.vmem [shape: f32[16,128], index: 3, kind: output, shape index: {}]
  %s4 = sld [smem:[#allocation0]]
  $region22: #{_lambda_.18} parent=0
    _
  %s6 = ssub.s32 1, %s4
  %s7 = scalar_select 0, %s6, %s4
  // Predicated region
  $region2: #{_lambda_.18} parent=0 // pred_check
    _
  $region3: #{_lambda_.18} parent=0 // pred_check_branch
    %9 = sbr.rel (0) target = $region5
  $region4: #{_lambda_.18} parent=0 // pred_region
    _
  $region5: #{_lambda_.18} parent=0 // pred_fallthru
    _
  // Predicated region
  $region6: #{_lambda_.18} parent=0 // pred_check
    _
  $region7: #{_lambda_.18} parent=0 // pred_check_branch
    %11 = sbr.rel (0) target = $region9
  $region8: #{_lambda_.18} parent=0 // pred_region
    _
  $region9: #{_lambda_.18} parent=0 // pred_fallthru
    _
  // Predicated region
  $region10: #{_lambda_.18} parent=0 // pred_check
    _
  $region11: #{_lambda_.18} parent=0 // pred_check_branch
    %13 = sbr.rel (0) target = $region13
  $region12: #{_lambda_.18} parent=0 // pred_region
    _
  $region13: #{_lambda_.18} parent=0 // pred_fallthru
    _
  %v15 = vld [vmem:[%s0] sm:$0xff]
  %v16 = vld [vmem:[%s0 + $0x8] sm:$0xff]
  %v17 = vld [vmem:[%s1] sm:$0xf]
  %v18 = vld [vmem:[%s1 + $0x4] sm:$0xf]
  %v19 = vld [vmem:[%s1 + $0x8] sm:$0xf]
  %v20 = vld [vmem:[%s1 + $0xc] sm:$0xf]
  %v21 = vld [vmem:[%s1 + $0x10] sm:$0xf]
  %v22 = vld [vmem:[%s1 + $0x14] sm:$0xf]
  %v23 = vld [vmem:[%s1 + $0x18] sm:$0xf]
  %v24 = vld [vmem:[%s1 + $0x1c] sm:$0xf]
  %v25 = vld [vmem:[%s1 + $0x20] sm:$0xf]
  %v26 = vld [vmem:[%s1 + $0x24] sm:$0xf]
  %v27 = vld [vmem:[%s1 + $0x28] sm:$0xf]
  %v28 = vld [vmem:[%s1 + $0x2c] sm:$0xf]
  %v29 = vld [vmem:[%s1 + $0x30] sm:$0xf]
  %v30 = vld [vmem:[%s1 + $0x34] sm:$0xf]
  %v31 = vld [vmem:[%s1 + $0x38] sm:$0xf]
  %v32 = vld [vmem:[%s1 + $0x3c] sm:$0xf]
  %v33 = vld [vmem:[%s1 + $0x40] sm:$0xf]
  %v34 = vld [vmem:[%s1 + $0x44] sm:$0xf]
  %v35 = vld [vmem:[%s2] sm:$0xff]
  %v36 = vld [vmem:[%s2 + $0x8] sm:$0xff]
  %38 = vset.pattern.permute.xlu0 0
  %39 = vperm.xlu0 %38, %v35
  %v40 = vpop.permute.xlu0 %39
  %43 = vset.pattern.permute.xlu0 0
  %44 = vperm.xlu0 %43, %v36
  %v45 = vpop.permute.xlu0 %44
  %v49 = vunpack.c.l.b16 %v15
  %v50 = vunpack.c.h.b16 %v15
  %v51 = vunpack.c.l.b16 %v16
  %v52 = vunpack.c.h.b16 %v16
  %v53 = vpack.c.b16 %v51, %v49
  %v54 = vpack.c.b16 %v52, %v50
  %v74 = vunpack.c.l.b16 %v17
  %v75 = vunpack.c.l.b16 %v18
  %v76 = vunpack.c.l.b16 %v19
  %v77 = vunpack.c.l.b16 %v20
  %v78 = vunpack.c.l.b16 %v21
  %v79 = vunpack.c.l.b16 %v22
  %v80 = vunpack.c.l.b16 %v23
  %v81 = vunpack.c.l.b16 %v24
  %v82 = vunpack.c.l.b16 %v25
  %v83 = vunpack.c.l.b16 %v26
  %v84 = vunpack.c.l.b16 %v27
  %v85 = vunpack.c.l.b16 %v28
  %v86 = vunpack.c.l.b16 %v29
  %v87 = vunpack.c.l.b16 %v30
  %v88 = vunpack.c.l.b16 %v31
  %v89 = vunpack.c.l.b16 %v32
  %v90 = vunpack.c.l.b16 %v33
  %v91 = vunpack.c.l.b16 %v34
  %v92 = vpack.c.b16 %v75, %v74
  %v93 = vpack.c.b16 %v77, %v76
  %v94 = vpack.c.b16 %v79, %v78
  %v95 = vpack.c.b16 %v81, %v80
  %v96 = vpack.c.b16 %v83, %v82
  %v97 = vpack.c.b16 %v85, %v84
  %v98 = vpack.c.b16 %v87, %v86
  %v99 = vpack.c.b16 %v89, %v88
  %v100 = vpack.c.b16 %v91, %v90
  %vm110 = vcmask 130048
  %v112 = vsel %vm110, %v54, 0
  %114 = vmatprep.subr.bf16.mxu0 0
  %115 = vmatpush1.bf16.msra.mxu0 %v92
  %116 = vmatprep.subr.bf16.mxu0 0
  %117 = vmatpush1.bf16.msra.mxu0 %v93
  %118 = vmatprep.subr.bf16.mxu0 0
  %119 = vmatpush1.bf16.msra.mxu0 %v94
  %120 = vmatprep.subr.bf16.mxu0 0
  %121 = vmatpush1.bf16.msra.mxu0 %v95
  %122 = vmatprep.subr.bf16.mxu0 0
  %123 = vmatpush1.bf16.msra.mxu0 %v96
  %124 = vmatprep.subr.bf16.mxu0 0
  %125 = vmatpush1.bf16.msra.mxu0 %v97
  %126 = vmatprep.subr.bf16.mxu0 0
  %127 = vmatpush1.bf16.msra.mxu0 %v98
  %128 = vmatprep.subr.bf16.mxu0 0
  %129 = vmatpush1.bf16.msra.mxu0 %v99
  %130 = vmatprep.subr.bf16.mxu0 0
  %131 = vmatpush1.bf16.msra.mxu0 %v100
  %132 = vmatprep.subr.bf16.mxu0 0
  %133 = vmatpush1.bf16.msra.mxu0 0
  %134 = vmatprep.subr.bf16.mxu0 0
  %135 = vmatpush1.bf16.msra.mxu0 0
  %136 = vmatprep.subr.bf16.mxu0 0
  %137 = vmatpush1.bf16.msra.mxu0 0
  %138 = vmatprep.subr.bf16.mxu0 0
  %139 = vmatpush1.bf16.msra.mxu0 0
  %140 = vmatprep.subr.bf16.mxu0 0
  %141 = vmatpush1.bf16.msra.mxu0 0
  %142 = vmatprep.subr.bf16.mxu0 0
  %143 = vmatpush1.bf16.msra.mxu0 0
  %144 = vmatprep.subr.bf16.mxu0 0
  %145 = vmatpush1.bf16.msra.mxu0 0
  %146 = vmatprep.mubr.bf16.mxu0 %v112
  %147 = vmatmul.mubr.bf16.gmra.mrb[0].mxu0 %v53
  %v148 = vpop.f32.mrb[0].mxu0
  %v149 = vadd.f32 %v40, %v148
  %v150 = vpop.f32.mrb[0].mxu0
  %v151 = vpop.f32.mrb[0].mxu0
  %v152 = vadd.f32 %v45, %v151
  %v153 = vpop.f32.mrb[0].mxu0
  %154 = vdwg.mxu0
  %v155 = vmax.f32 %v149, 0.0
  %v156 = vmax.f32 %v152, 0.0
  %157 = vst [vmem:[%s3] sm:$0xff] %v155
  %158 = vst [vmem:[%s3 + $0x8] sm:$0xff] %v156
  // Predicated region
  $region14: #{_lambda_.18} parent=0 // pred_check
    _
  $region15: #{_lambda_.18} parent=0 // pred_check_branch
    %160 = sbr.rel (0) target = $region17
  $region16: #{_lambda_.18} parent=0 // pred_region
    _
  $region17: #{_lambda_.18} parent=0 // pred_fallthru
    _
  // Predicated region
  $region18: #{_lambda_.18} parent=0 // pred_check
    _
  $region19: #{_lambda_.18} parent=0 // pred_check_branch
    %162 = sbr.rel (0) target = $region21
  $region20: #{_lambda_.18} parent=0 // pred_region
    _
  $region21: #{_lambda_.18} parent=0 // pred_fallthru
    _

// kernel: _lambda_.19
$region0: #{_lambda_.19}
  #allocation0 [shape = 'u32[]', space=smem, size = 0x4, offset = 0x4, fixed_abs, tag = 'smem constant byte address 0x4 - core index']
  #allocation1 [shape = 'u32[144,128]{1,0:T(1,128)}', space=vmem, size = 0x12000, scoped, tag = 'internal scratch']
  %s0 = inlined_call_operand.vmem [shape: bf16[64,32], index: 0, kind: input, shape index: {}]
  %s1 = inlined_call_operand.vmem [shape: bf16[32,128], index: 1, kind: input, shape index: {}]
  %s2 = inlined_call_operand.vmem [shape: f32[64,1], index: 2, kind: input, shape index: {}]
  %s3 = inlined_call_operand.vmem [shape: f32[64,128], index: 3, kind: output, shape index: {}]
  %s4 = sld [smem:[#allocation0]]
  $region22: #{_lambda_.19} parent=0
    _
  %s6 = ssub.s32 1, %s4
  %s7 = scalar_select 0, %s6, %s4
  // Predicated region
  $region2: #{_lambda_.19} parent=0 // pred_check
    _
  $region3: #{_lambda_.19} parent=0 // pred_check_branch
    %9 = sbr.rel (0) target = $region5
  $region4: #{_lambda_.19} parent=0 // pred_region
    _
  $region5: #{_lambda_.19} parent=0 // pred_fallthru
    _
  // Predicated region
  $region6: #{_lambda_.19} parent=0 // pred_check
    _
  $region7: #{_lambda_.19} parent=0 // pred_check_branch
    %11 = sbr.rel (0) target = $region9
  $region8: #{_lambda_.19} parent=0 // pred_region
    _
  $region9: #{_lambda_.19} parent=0 // pred_fallthru
    _
  // Predicated region
  $region10: #{_lambda_.19} parent=0 // pred_check
    _
  $region11: #{_lambda_.19} parent=0 // pred_check_branch
    %13 = sbr.rel (0) target = $region13
  $region12: #{_lambda_.19} parent=0 // pred_region
    _
  $region13: #{_lambda_.19} parent=0 // pred_fallthru
    _
  %v15 = vld [vmem:[%s0] sm:$0xf]
  %v16 = vld [vmem:[%s0 + $0x4] sm:$0xf]
  %v17 = vld [vmem:[%s0 + $0x8] sm:$0xf]
  %v18 = vld [vmem:[%s0 + $0xc] sm:$0xf]
  %v19 = vld [vmem:[%s0 + $0x10] sm:$0xf]
  %v20 = vld [vmem:[%s0 + $0x14] sm:$0xf]
  %v21 = vld [vmem:[%s0 + $0x18] sm:$0xf]
  %v22 = vld [vmem:[%s0 + $0x1c] sm:$0xf]
  %v23 = vld [vmem:[%s1] sm:$0xf]
  %v24 = vld [vmem:[%s1 + $0x4] sm:$0xf]
  %v25 = vld [vmem:[%s1 + $0x8] sm:$0xf]
  %v26 = vld [vmem:[%s1 + $0xc] sm:$0xf]
  %v27 = vld [vmem:[%s2] sm:$0xff]
  %v28 = vld [vmem:[%s2 + $0x8] sm:$0xff]
  %v29 = vld [vmem:[%s2 + $0x10] sm:$0xff]
  %v30 = vld [vmem:[%s2 + $0x18] sm:$0xff]
  %v31 = vld [vmem:[%s2 + $0x20] sm:$0xff]
  %v32 = vld [vmem:[%s2 + $0x28] sm:$0xff]
  %v33 = vld [vmem:[%s2 + $0x30] sm:$0xff]
  %v34 = vld [vmem:[%s2 + $0x38] sm:$0xff]
  %36 = vset.pattern.permute.xlu0 0
  %37 = vperm.xlu0 %36, %v27
  %v38 = vpop.permute.xlu0 %37
  %41 = vset.pattern.permute.xlu0 0
  %42 = vperm.xlu0 %41, %v28
  %v43 = vpop.permute.xlu0 %42
  %46 = vset.pattern.permute.xlu0 0
  %47 = vperm.xlu0 %46, %v29
  %v48 = vpop.permute.xlu0 %47
  %51 = vset.pattern.permute.xlu0 0
  %52 = vperm.xlu0 %51, %v30
  %v53 = vpop.permute.xlu0 %52
  %56 = vset.pattern.permute.xlu0 0
  %57 = vperm.xlu0 %56, %v31
  %v58 = vpop.permute.xlu0 %57
  %61 = vset.pattern.permute.xlu0 0
  %62 = vperm.xlu0 %61, %v32
  %v63 = vpop.permute.xlu0 %62
  %66 = vset.pattern.permute.xlu0 0
  %67 = vperm.xlu0 %66, %v33
  %v68 = vpop.permute.xlu0 %67
  %71 = vset.pattern.permute.xlu0 0
  %72 = vperm.xlu0 %71, %v34
  %v73 = vpop.permute.xlu0 %72
  %v83 = vunpack.c.l.b16 %v15
  %v84 = vunpack.c.l.b16 %v16
  %v85 = vunpack.c.l.b16 %v17
  %v86 = vunpack.c.l.b16 %v18
  %v87 = vunpack.c.l.b16 %v19
  %v88 = vunpack.c.l.b16 %v20
  %v89 = vunpack.c.l.b16 %v21
  %v90 = vunpack.c.l.b16 %v22
  %v91 = vpack.c.b16 %v84, %v83
  %v92 = vpack.c.b16 %v86, %v85
  %v93 = vpack.c.b16 %v88, %v87
  %v94 = vpack.c.b16 %v90, %v89
  %v99 = vunpack.c.l.b16 %v23
  %v100 = vunpack.c.l.b16 %v24
  %v101 = vunpack.c.l.b16 %v25
  %v102 = vunpack.c.l.b16 %v26
  %v103 = vpack.c.b16 %v100, %v99
  %v104 = vpack.c.b16 %v102, %v101
  %vm107 = vcmask 261120
  %v109 = vsel %vm107, %v91, 0
  %v112 = vsel %vm107, %v92, 0
  %v115 = vsel %vm107, %v93, 0
  %v118 = vsel %vm107, %v94, 0
  %120 = vmatprep.subr.bf16.mxu0 0
  %121 = vmatpush1.bf16.msra.mxu0 %v103
  %122 = vmatprep.subr.bf16.mxu0 0
  %123 = vmatpush1.bf16.msra.mxu0 %v104
  %124 = vmatprep.subr.bf16.mxu0 0
  %125 = vmatpush1.bf16.msra.mxu0 0
  %126 = vmatprep.subr.bf16.mxu0 0
  %127 = vmatpush1.bf16.msra.mxu0 0
  %128 = vmatprep.subr.bf16.mxu0 0
  %129 = vmatpush1.bf16.msra.mxu0 0
  %130 = vmatprep.subr.bf16.mxu0 0
  %131 = vmatpush1.bf16.msra.mxu0 0
  %132 = vmatprep.subr.bf16.mxu0 0
  %133 = vmatpush1.bf16.msra.mxu0 0
  %134 = vmatprep.subr.bf16.mxu0 0
  %135 = vmatpush1.bf16.msra.mxu0 0
  %136 = vmatprep.subr.bf16.mxu0 0
  %137 = vmatpush1.bf16.msra.mxu0 0
  %138 = vmatprep.subr.bf16.mxu0 0
  %139 = vmatpush1.bf16.msra.mxu0 0
  %140 = vmatprep.subr.bf16.mxu0 0
  %141 = vmatpush1.bf16.msra.mxu0 0
  %142 = vmatprep.subr.bf16.mxu0 0
  %143 = vmatpush1.bf16.msra.mxu0 0
  %144 = vmatprep.subr.bf16.mxu0 0
  %145 = vmatpush1.bf16.msra.mxu0 0
  %146 = vmatprep.subr.bf16.mxu0 0
  %147 = vmatpush1.bf16.msra.mxu0 0
  %148 = vmatprep.subr.bf16.mxu0 0
  %149 = vmatpush1.bf16.msra.mxu0 0
  %150 = vmatprep.subr.bf16.mxu0 0
  %151 = vmatpush1.bf16.msra.mxu0 0
  %152 = vmatprep.mubr.bf16.mxu0 0
  %153 = vmatmul.mubr.bf16.gmra.mrb[0].mxu0 %v109
  %v154 = vpop.f32.mrb[0].mxu0
  %v155 = vadd.f32 %v38, %v154
  %v156 = vpop.f32.mrb[0].mxu0
  %v157 = vpop.f32.mrb[0].mxu0
  %v158 = vadd.f32 %v43, %v157
  %v159 = vpop.f32.mrb[0].mxu0
  %160 = vmatprep.mubr.bf16.mxu0 0
  %161 = vmatmul.mubr.bf16.gmra.mrb[0].mxu0 %v112
  %v162 = vpop.f32.mrb[0].mxu0
  %v163 = vadd.f32 %v48, %v162
  %v164 = vpop.f32.mrb[0].mxu0
  %v165 = vpop.f32.mrb[0].mxu0
  %v166 = vadd.f32 %v53, %v165
  %v167 = vpop.f32.mrb[0].mxu0
  %168 = vmatprep.mubr.bf16.mxu0 0
  %169 = vmatmul.mubr.bf16.gmra.mrb[0].mxu0 %v115
  %v170 = vpop.f32.mrb[0].mxu0
  %v171 = vadd.f32 %v58, %v170
  %v172 = vpop.f32.mrb[0].mxu0
  %v173 = vpop.f32.mrb[0].mxu0
  %v174 = vadd.f32 %v63, %v173
  %v175 = vpop.f32.mrb[0].mxu0
  %176 = vmatprep.mubr.bf16.mxu0 0
  %177 = vmatmul.mubr.bf16.gmra.mrb[0].mxu0 %v118
  %v178 = vpop.f32.mrb[0].mxu0
  %v179 = vadd.f32 %v68, %v178
  %v180 = vpop.f32.mrb[0].mxu0
  %v181 = vpop.f32.mrb[0].mxu0
  %v182 = vadd.f32 %v73, %v181
  %v183 = vpop.f32.mrb[0].mxu0
  %184 = vdwg.mxu0
  %185 = vst [vmem:[%s3] sm:$0xff] %v155
  %186 = vst [vmem:[%s3 + $0x8] sm:$0xff] %v158
  %187 = vst [vmem:[%s3 + $0x10] sm:$0xff] %v163
  %188 = vst [vmem:[%s3 + $0x18] sm:$0xff] %v166
  %189 = vst [vmem:[%s3 + $0x20] sm:$0xff] %v171
  %190 = vst [vmem:[%s3 + $0x28] sm:$0xff] %v174
  %191 = vst [vmem:[%s3 + $0x30] sm:$0xff] %v179
  %192 = vst [vmem:[%s3 + $0x38] sm:$0xff] %v182
  // Predicated region
  $region14: #{_lambda_.19} parent=0 // pred_check
    _
  $region15: #{_lambda_.19} parent=0 // pred_check_branch
    %194 = sbr.rel (0) target = $region17
  $region16: #{_lambda_.19} parent=0 // pred_region
    _
  $region17: #{_lambda_.19} parent=0 // pred_fallthru
    _
  // Predicated region
  $region18: #{_lambda_.19} parent=0 // pred_check
    _
  $region19: #{_lambda_.19} parent=0 // pred_check_branch
    %196 = sbr.rel (0) target = $region21
  $region20: #{_lambda_.19} parent=0 // pred_region
    _
  $region21: #{_lambda_.19} parent=0 // pred_fallthru
    _

// kernel: _lambda_.20
$region0: #{_lambda_.20}
  #allocation0 [shape = 'u32[]', space=smem, size = 0x4, offset = 0x4, fixed_abs, tag = 'smem constant byte address 0x4 - core index']
  #allocation1 [shape = 'u32[144,128]{1,0:T(1,128)}', space=vmem, size = 0x12000, scoped, tag = 'internal scratch']
  %s0 = inlined_call_operand.vmem [shape: bf16[64,16], index: 0, kind: input, shape index: {}]
  %s1 = inlined_call_operand.vmem [shape: bf16[16,128], index: 1, kind: input, shape index: {}]
  %s2 = inlined_call_operand.vmem [shape: f32[64,1], index: 2, kind: input, shape index: {}]
  %s3 = inlined_call_operand.vmem [shape: f32[64,128], index: 3, kind: input, shape index: {}]
  %s4 = inlined_call_operand.vmem [shape: f32[64,128], index: 4, kind: output, shape index: {}]
  %s5 = sld [smem:[#allocation0]]
  $region26: #{_lambda_.20} parent=0
    _
  %s7 = ssub.s32 1, %s5
  %s8 = scalar_select 0, %s7, %s5
  // Predicated region
  $region2: #{_lambda_.20} parent=0 // pred_check
    _
  $region3: #{_lambda_.20} parent=0 // pred_check_branch
    %10 = sbr.rel (0) target = $region5
  $region4: #{_lambda_.20} parent=0 // pred_region
    _
  $region5: #{_lambda_.20} parent=0 // pred_fallthru
    _
  // Predicated region
  $region6: #{_lambda_.20} parent=0 // pred_check
    _
  $region7: #{_lambda_.20} parent=0 // pred_check_branch
    %12 = sbr.rel (0) target = $region9
  $region8: #{_lambda_.20} parent=0 // pred_region
    _
  $region9: #{_lambda_.20} parent=0 // pred_fallthru
    _
  // Predicated region
  $region10: #{_lambda_.20} parent=0 // pred_check
    _
  $region11: #{_lambda_.20} parent=0 // pred_check_branch
    %14 = sbr.rel (0) target = $region13
  $region12: #{_lambda_.20} parent=0 // pred_region
    _
  $region13: #{_lambda_.20} parent=0 // pred_fallthru
    _
  // Predicated region
  $region14: #{_lambda_.20} parent=0 // pred_check
    _
  $region15: #{_lambda_.20} parent=0 // pred_check_branch
    %16 = sbr.rel (0) target = $region17
  $region16: #{_lambda_.20} parent=0 // pred_region
    _
  $region17: #{_lambda_.20} parent=0 // pred_fallthru
    _
  %v18 = vld [vmem:[%s0] sm:$0xf]
  %v19 = vld [vmem:[%s0 + $0x4] sm:$0xf]
  %v20 = vld [vmem:[%s0 + $0x8] sm:$0xf]
  %v21 = vld [vmem:[%s0 + $0xc] sm:$0xf]
  %v22 = vld [vmem:[%s0 + $0x10] sm:$0xf]
  %v23 = vld [vmem:[%s0 + $0x14] sm:$0xf]
  %v24 = vld [vmem:[%s0 + $0x18] sm:$0xf]
  %v25 = vld [vmem:[%s0 + $0x1c] sm:$0xf]
  %v26 = vld [vmem:[%s1] sm:$0xf]
  %v27 = vld [vmem:[%s1 + $0x4] sm:$0xf]
  %v28 = vld [vmem:[%s2] sm:$0xff]
  %v29 = vld [vmem:[%s2 + $0x8] sm:$0xff]
  %v30 = vld [vmem:[%s2 + $0x10] sm:$0xff]
  %v31 = vld [vmem:[%s2 + $0x18] sm:$0xff]
  %v32 = vld [vmem:[%s2 + $0x20] sm:$0xff]
  %v33 = vld [vmem:[%s2 + $0x28] sm:$0xff]
  %v34 = vld [vmem:[%s2 + $0x30] sm:$0xff]
  %v35 = vld [vmem:[%s2 + $0x38] sm:$0xff]
  %37 = vset.pattern.permute.xlu0 0
  %38 = vperm.xlu0 %37, %v28
  %v39 = vpop.permute.xlu0 %38
  %42 = vset.pattern.permute.xlu0 0
  %43 = vperm.xlu0 %42, %v29
  %v44 = vpop.permute.xlu0 %43
  %47 = vset.pattern.permute.xlu0 0
  %48 = vperm.xlu0 %47, %v30
  %v49 = vpop.permute.xlu0 %48
  %52 = vset.pattern.permute.xlu0 0
  %53 = vperm.xlu0 %52, %v31
  %v54 = vpop.permute.xlu0 %53
  %57 = vset.pattern.permute.xlu0 0
  %58 = vperm.xlu0 %57, %v32
  %v59 = vpop.permute.xlu0 %58
  %62 = vset.pattern.permute.xlu0 0
  %63 = vperm.xlu0 %62, %v33
  %v64 = vpop.permute.xlu0 %63
  %67 = vset.pattern.permute.xlu0 0
  %68 = vperm.xlu0 %67, %v34
  %v69 = vpop.permute.xlu0 %68
  %72 = vset.pattern.permute.xlu0 0
  %73 = vperm.xlu0 %72, %v35
  %v74 = vpop.permute.xlu0 %73
  %v84 = vunpack.c.l.b16 %v18
  %v85 = vunpack.c.l.b16 %v19
  %v86 = vunpack.c.l.b16 %v20
  %v87 = vunpack.c.l.b16 %v21
  %v88 = vunpack.c.l.b16 %v22
  %v89 = vunpack.c.l.b16 %v23
  %v90 = vunpack.c.l.b16 %v24
  %v91 = vunpack.c.l.b16 %v25
  %v92 = vpack.c.b16 %v85, %v84
  %v93 = vpack.c.b16 %v87, %v86
  %v94 = vpack.c.b16 %v89, %v88
  %v95 = vpack.c.b16 %v91, %v90
  %v98 = vunpack.c.l.b16 %v26
  %v99 = vunpack.c.l.b16 %v27
  %v100 = vpack.c.b16 %v99, %v98
  %vm102 = vcmask 130048
  %v104 = vsel %vm102, %v92, 0
  %v107 = vsel %vm102, %v93, 0
  %v110 = vsel %vm102, %v94, 0
  %v113 = vsel %vm102, %v95, 0
  %115 = vmatprep.subr.bf16.mxu0 0
  %116 = vmatpush1.bf16.msra.mxu0 %v100
  %117 = vmatprep.subr.bf16.mxu0 0
  %118 = vmatpush1.bf16.msra.mxu0 0
  %119 = vmatprep.subr.bf16.mxu0 0
  %120 = vmatpush1.bf16.msra.mxu0 0
  %121 = vmatprep.subr.bf16.mxu0 0
  %122 = vmatpush1.bf16.msra.mxu0 0
  %123 = vmatprep.subr.bf16.mxu0 0
  %124 = vmatpush1.bf16.msra.mxu0 0
  %125 = vmatprep.subr.bf16.mxu0 0
  %126 = vmatpush1.bf16.msra.mxu0 0
  %127 = vmatprep.subr.bf16.mxu0 0
  %128 = vmatpush1.bf16.msra.mxu0 0
  %129 = vmatprep.subr.bf16.mxu0 0
  %130 = vmatpush1.bf16.msra.mxu0 0
  %131 = vmatprep.subr.bf16.mxu0 0
  %132 = vmatpush1.bf16.msra.mxu0 0
  %133 = vmatprep.subr.bf16.mxu0 0
  %134 = vmatpush1.bf16.msra.mxu0 0
  %135 = vmatprep.subr.bf16.mxu0 0
  %136 = vmatpush1.bf16.msra.mxu0 0
  %137 = vmatprep.subr.bf16.mxu0 0
  %138 = vmatpush1.bf16.msra.mxu0 0
  %139 = vmatprep.subr.bf16.mxu0 0
  %140 = vmatpush1.bf16.msra.mxu0 0
  %141 = vmatprep.subr.bf16.mxu0 0
  %142 = vmatpush1.bf16.msra.mxu0 0
  %143 = vmatprep.subr.bf16.mxu0 0
  %144 = vmatpush1.bf16.msra.mxu0 0
  %145 = vmatprep.subr.bf16.mxu0 0
  %146 = vmatpush1.bf16.msra.mxu0 0
  %147 = vmatprep.mubr.bf16.mxu0 0
  %148 = vmatmul.mubr.bf16.gmra.mrb[0].mxu0 %v104
  %v149 = vpop.f32.mrb[0].mxu0
  %v150 = vadd.f32 %v39, %v149
  %v151 = vpop.f32.mrb[0].mxu0
  %v152 = vpop.f32.mrb[0].mxu0
  %v153 = vadd.f32 %v44, %v152
  %v154 = vpop.f32.mrb[0].mxu0
  %155 = vmatprep.mubr.bf16.mxu0 0
  %156 = vmatmul.mubr.bf16.gmra.mrb[0].mxu0 %v107
  %v157 = vpop.f32.mrb[0].mxu0
  %v158 = vadd.f32 %v49, %v157
  %v159 = vpop.f32.mrb[0].mxu0
  %v160 = vpop.f32.mrb[0].mxu0
  %v161 = vadd.f32 %v54, %v160
  %v162 = vpop.f32.mrb[0].mxu0
  %163 = vmatprep.mubr.bf16.mxu0 0
  %164 = vmatmul.mubr.bf16.gmra.mrb[0].mxu0 %v110
  %v165 = vpop.f32.mrb[0].mxu0
  %v166 = vadd.f32 %v59, %v165
  %v167 = vpop.f32.mrb[0].mxu0
  %v168 = vpop.f32.mrb[0].mxu0
  %v169 = vadd.f32 %v64, %v168
  %v170 = vpop.f32.mrb[0].mxu0
  %171 = vmatprep.mubr.bf16.mxu0 0
  %172 = vmatmul.mubr.bf16.gmra.mrb[0].mxu0 %v113
  %v173 = vpop.f32.mrb[0].mxu0
  %v174 = vadd.f32 %v69, %v173
  %v175 = vpop.f32.mrb[0].mxu0
  %v176 = vpop.f32.mrb[0].mxu0
  %v177 = vadd.f32 %v74, %v176
  %v178 = vpop.f32.mrb[0].mxu0
  %179 = vdwg.mxu0
  %v180 = vld [vmem:[%s3] sm:$0xff]
  %v181 = vld [vmem:[%s3 + $0x8] sm:$0xff]
  %v182 = vld [vmem:[%s3 + $0x10] sm:$0xff]
  %v183 = vld [vmem:[%s3 + $0x18] sm:$0xff]
  %v184 = vld [vmem:[%s3 + $0x20] sm:$0xff]
  %v185 = vld [vmem:[%s3 + $0x28] sm:$0xff]
  %v186 = vld [vmem:[%s3 + $0x30] sm:$0xff]
  %v187 = vld [vmem:[%s3 + $0x38] sm:$0xff]
  %v188 = vadd.f32 %v150, %v180
  %v189 = vadd.f32 %v153, %v181
  %v190 = vadd.f32 %v158, %v182
  %v191 = vadd.f32 %v161, %v183
  %v192 = vadd.f32 %v166, %v184
  %v193 = vadd.f32 %v169, %v185
  %v194 = vadd.f32 %v174, %v186
  %v195 = vadd.f32 %v177, %v187
  %v196 = vmax.f32 %v188, 0.0
  %v197 = vmax.f32 %v189, 0.0
  %v198 = vmax.f32 %v190, 0.0
  %v199 = vmax.f32 %v191, 0.0
  %v200 = vmax.f32 %v192, 0.0
  %v201 = vmax.f32 %v193, 0.0
  %v202 = vmax.f32 %v194, 0.0
  %v203 = vmax.f32 %v195, 0.0
  %204 = vst [vmem:[%s4] sm:$0xff] %v196
  %205 = vst [vmem:[%s4 + $0x8] sm:$0xff] %v197
  %206 = vst [vmem:[%s4 + $0x10] sm:$0xff] %v198
  %207 = vst [vmem:[%s4 + $0x18] sm:$0xff] %v199
  %208 = vst [vmem:[%s4 + $0x20] sm:$0xff] %v200
  %209 = vst [vmem:[%s4 + $0x28] sm:$0xff] %v201
  %210 = vst [vmem:[%s4 + $0x30] sm:$0xff] %v202
  %211 = vst [vmem:[%s4 + $0x38] sm:$0xff] %v203
  // Predicated region
  $region18: #{_lambda_.20} parent=0 // pred_check
    _
  $region19: #{_lambda_.20} parent=0 // pred_check_branch
    %213 = sbr.rel (0) target = $region21
  $region20: #{_lambda_.20} parent=0 // pred_region
    _
  $region21: #{_lambda_.20} parent=0 // pred_fallthru
    _
  // Predicated region
  $region22: #{_lambda_.20} parent=0 // pred_check
    _
  $region23: #{_lambda_.20} parent=0 // pred_check_branch
    %215 = sbr.rel (0) target = $region25
  $region24: #{_lambda_.20} parent=0 // pred_region
    _
  $region25: #{_lambda_.20} parent=0 // pred_fallthru
    _

// kernel: _lambda_.21
$region0: #{_lambda_.21}
  #allocation0 [shape = 'u32[]', space=smem, size = 0x4, offset = 0x4, fixed_abs, tag = 'smem constant byte address 0x4 - core index']
  #allocation1 [shape = 'u32[144,128]{1,0:T(1,128)}', space=vmem, size = 0x12000, scoped, tag = 'internal scratch']
  %s0 = inlined_call_operand.vmem [shape: f32[64,2,64], index: 0, kind: input, shape index: {}]
  %s1 = inlined_call_operand.vmem [shape: f32[10,64], index: 1, kind: input, shape index: {}]
  %s2 = inlined_call_operand.vmem [shape: f32[10,1], index: 2, kind: input, shape index: {}]
  %s3 = inlined_call_operand.vmem [shape: f32[10,2], index: 3, kind: output, shape index: {}]
  %s4 = sld [smem:[#allocation0]]
  $region22: #{_lambda_.21} parent=0
    _
  %s6 = ssub.s32 1, %s4
  %s7 = scalar_select 0, %s6, %s4
  // Predicated region
  $region2: #{_lambda_.21} parent=0 // pred_check
    _
  $region3: #{_lambda_.21} parent=0 // pred_check_branch
    %9 = sbr.rel (0) target = $region5
  $region4: #{_lambda_.21} parent=0 // pred_region
    _
  $region5: #{_lambda_.21} parent=0 // pred_fallthru
    _
  // Predicated region
  $region6: #{_lambda_.21} parent=0 // pred_check
    _
  $region7: #{_lambda_.21} parent=0 // pred_check_branch
    %11 = sbr.rel (0) target = $region9
  $region8: #{_lambda_.21} parent=0 // pred_region
    _
  $region9: #{_lambda_.21} parent=0 // pred_fallthru
    _
  // Predicated region
  $region10: #{_lambda_.21} parent=0 // pred_check
    _
  $region11: #{_lambda_.21} parent=0 // pred_check_branch
    %13 = sbr.rel (0) target = $region13
  $region12: #{_lambda_.21} parent=0 // pred_region
    _
  $region13: #{_lambda_.21} parent=0 // pred_fallthru
    _
  %v14 = vld [vmem:[%s0] sm:$0x3]
  %v15 = vld [vmem:[%s0 + $0x2] sm:$0x3]
  %v16 = vld [vmem:[%s0 + $0x4] sm:$0x3]
  %v17 = vld [vmem:[%s0 + $0x6] sm:$0x3]
  %v18 = vld [vmem:[%s0 + $0x8] sm:$0x3]
  %v19 = vld [vmem:[%s0 + $0xa] sm:$0x3]
  %v20 = vld [vmem:[%s0 + $0xc] sm:$0x3]
  %v21 = vld [vmem:[%s0 + $0xe] sm:$0x3]
  %v22 = vld [vmem:[%s0 + $0x10] sm:$0x3]
  %v23 = vld [vmem:[%s0 + $0x12] sm:$0x3]
  %v24 = vld [vmem:[%s0 + $0x14] sm:$0x3]
  %v25 = vld [vmem:[%s0 + $0x16] sm:$0x3]
  %v26 = vld [vmem:[%s0 + $0x18] sm:$0x3]
  %v27 = vld [vmem:[%s0 + $0x1a] sm:$0x3]
  %v28 = vld [vmem:[%s0 + $0x1c] sm:$0x3]
  %v29 = vld [vmem:[%s0 + $0x1e] sm:$0x3]
  %v30 = vld [vmem:[%s0 + $0x20] sm:$0x3]
  %v31 = vld [vmem:[%s0 + $0x22] sm:$0x3]
  %v32 = vld [vmem:[%s0 + $0x24] sm:$0x3]
  %v33 = vld [vmem:[%s0 + $0x26] sm:$0x3]
  %v34 = vld [vmem:[%s0 + $0x28] sm:$0x3]
  %v35 = vld [vmem:[%s0 + $0x2a] sm:$0x3]
  %v36 = vld [vmem:[%s0 + $0x2c] sm:$0x3]
  %v37 = vld [vmem:[%s0 + $0x2e] sm:$0x3]
  %v38 = vld [vmem:[%s0 + $0x30] sm:$0x3]
  %v39 = vld [vmem:[%s0 + $0x32] sm:$0x3]
  %v40 = vld [vmem:[%s0 + $0x34] sm:$0x3]
  %v41 = vld [vmem:[%s0 + $0x36] sm:$0x3]
  %v42 = vld [vmem:[%s0 + $0x38] sm:$0x3]
  %v43 = vld [vmem:[%s0 + $0x3a] sm:$0x3]
  %v44 = vld [vmem:[%s0 + $0x3c] sm:$0x3]
  %v45 = vld [vmem:[%s0 + $0x3e] sm:$0x3]
  %v46 = vld [vmem:[%s0 + $0x40] sm:$0x3]
  %v47 = vld [vmem:[%s0 + $0x42] sm:$0x3]
  %v48 = vld [vmem:[%s0 + $0x44] sm:$0x3]
  %v49 = vld [vmem:[%s0 + $0x46] sm:$0x3]
  %v50 = vld [vmem:[%s0 + $0x48] sm:$0x3]
  %v51 = vld [vmem:[%s0 + $0x4a] sm:$0x3]
  %v52 = vld [vmem:[%s0 + $0x4c] sm:$0x3]
  %v53 = vld [vmem:[%s0 + $0x4e] sm:$0x3]
  %v54 = vld [vmem:[%s0 + $0x50] sm:$0x3]
  %v55 = vld [vmem:[%s0 + $0x52] sm:$0x3]
  %v56 = vld [vmem:[%s0 + $0x54] sm:$0x3]
  %v57 = vld [vmem:[%s0 + $0x56] sm:$0x3]
  %v58 = vld [vmem:[%s0 + $0x58] sm:$0x3]
  %v59 = vld [vmem:[%s0 + $0x5a] sm:$0x3]
  %v60 = vld [vmem:[%s0 + $0x5c] sm:$0x3]
  %v61 = vld [vmem:[%s0 + $0x5e] sm:$0x3]
  %v62 = vld [vmem:[%s0 + $0x60] sm:$0x3]
  %v63 = vld [vmem:[%s0 + $0x62] sm:$0x3]
  %v64 = vld [vmem:[%s0 + $0x64] sm:$0x3]
  %v65 = vld [vmem:[%s0 + $0x66] sm:$0x3]
  %v66 = vld [vmem:[%s0 + $0x68] sm:$0x3]
  %v67 = vld [vmem:[%s0 + $0x6a] sm:$0x3]
  %v68 = vld [vmem:[%s0 + $0x6c] sm:$0x3]
  %v69 = vld [vmem:[%s0 + $0x6e] sm:$0x3]
  %v70 = vld [vmem:[%s0 + $0x70] sm:$0x3]
  %v71 = vld [vmem:[%s0 + $0x72] sm:$0x3]
  %v72 = vld [vmem:[%s0 + $0x74] sm:$0x3]
  %v73 = vld [vmem:[%s0 + $0x76] sm:$0x3]
  %v74 = vld [vmem:[%s0 + $0x78] sm:$0x3]
  %v75 = vld [vmem:[%s0 + $0x7a] sm:$0x3]
  %v76 = vld [vmem:[%s0 + $0x7c] sm:$0x3]
  %v77 = vld [vmem:[%s0 + $0x7e] sm:$0x3]
  %vm78 = vcmask 517120
  %v79 = vsel %vm78, %v14, 0.0
  %80 = vadd.xlane.f32.xlu0 %v79
  %v81 = vpop.xlane.xlu0 %80
  %v82 = vsel %vm78, %v15, 0.0
  %83 = vadd.xlane.f32.xlu0 %v82
  %v84 = vpop.xlane.xlu0 %83
  %v85 = vsel %vm78, %v16, 0.0
  %86 = vadd.xlane.f32.xlu0 %v85
  %v87 = vpop.xlane.xlu0 %86
  %v88 = vsel %vm78, %v17, 0.0
  %89 = vadd.xlane.f32.xlu0 %v88
  %v90 = vpop.xlane.xlu0 %89
  %v91 = vsel %vm78, %v18, 0.0
  %92 = vadd.xlane.f32.xlu0 %v91
  %v93 = vpop.xlane.xlu0 %92
  %v94 = vsel %vm78, %v19, 0.0
  %95 = vadd.xlane.f32.xlu0 %v94
  %v96 = vpop.xlane.xlu0 %95
  %v97 = vsel %vm78, %v20, 0.0
  %98 = vadd.xlane.f32.xlu0 %v97
  %v99 = vpop.xlane.xlu0 %98
  %v100 = vsel %vm78, %v21, 0.0
  %101 = vadd.xlane.f32.xlu0 %v100
  %v102 = vpop.xlane.xlu0 %101
  %v103 = vsel %vm78, %v22, 0.0
  %104 = vadd.xlane.f32.xlu0 %v103
  %v105 = vpop.xlane.xlu0 %104
  %v106 = vsel %vm78, %v23, 0.0
  %107 = vadd.xlane.f32.xlu0 %v106
  %v108 = vpop.xlane.xlu0 %107
  %v109 = vsel %vm78, %v24, 0.0
  %110 = vadd.xlane.f32.xlu0 %v109
  %v111 = vpop.xlane.xlu0 %110
  %v112 = vsel %vm78, %v25, 0.0
  %113 = vadd.xlane.f32.xlu0 %v112
  %v114 = vpop.xlane.xlu0 %113
  %v115 = vsel %vm78, %v26, 0.0
  %116 = vadd.xlane.f32.xlu0 %v115
  %v117 = vpop.xlane.xlu0 %116
  %v118 = vsel %vm78, %v27, 0.0
  %119 = vadd.xlane.f32.xlu0 %v118
  %v120 = vpop.xlane.xlu0 %119
  %v121 = vsel %vm78, %v28, 0.0
  %122 = vadd.xlane.f32.xlu0 %v121
  %v123 = vpop.xlane.xlu0 %122
  %v124 = vsel %vm78, %v29, 0.0
  %125 = vadd.xlane.f32.xlu0 %v124
  %v126 = vpop.xlane.xlu0 %125
  %v127 = vsel %vm78, %v30, 0.0
  %128 = vadd.xlane.f32.xlu0 %v127
  %v129 = vpop.xlane.xlu0 %128
  %v130 = vsel %vm78, %v31, 0.0
  %131 = vadd.xlane.f32.xlu0 %v130
  %v132 = vpop.xlane.xlu0 %131
  %v133 = vsel %vm78, %v32, 0.0
  %134 = vadd.xlane.f32.xlu0 %v133
  %v135 = vpop.xlane.xlu0 %134
  %v136 = vsel %vm78, %v33, 0.0
  %137 = vadd.xlane.f32.xlu0 %v136
  %v138 = vpop.xlane.xlu0 %137
  %v139 = vsel %vm78, %v34, 0.0
  %140 = vadd.xlane.f32.xlu0 %v139
  %v141 = vpop.xlane.xlu0 %140
  %v142 = vsel %vm78, %v35, 0.0
  %143 = vadd.xlane.f32.xlu0 %v142
  %v144 = vpop.xlane.xlu0 %143
  %v145 = vsel %vm78, %v36, 0.0
  %146 = vadd.xlane.f32.xlu0 %v145
  %v147 = vpop.xlane.xlu0 %146
  %v148 = vsel %vm78, %v37, 0.0
  %149 = vadd.xlane.f32.xlu0 %v148
  %v150 = vpop.xlane.xlu0 %149
  %v151 = vsel %vm78, %v38, 0.0
  %152 = vadd.xlane.f32.xlu0 %v151
  %v153 = vpop.xlane.xlu0 %152
  %v154 = vsel %vm78, %v39, 0.0
  %155 = vadd.xlane.f32.xlu0 %v154
  %v156 = vpop.xlane.xlu0 %155
  %v157 = vsel %vm78, %v40, 0.0
  %158 = vadd.xlane.f32.xlu0 %v157
  %v159 = vpop.xlane.xlu0 %158
  %v160 = vsel %vm78, %v41, 0.0
  %161 = vadd.xlane.f32.xlu0 %v160
  %v162 = vpop.xlane.xlu0 %161
  %v163 = vsel %vm78, %v42, 0.0
  %164 = vadd.xlane.f32.xlu0 %v163
  %v165 = vpop.xlane.xlu0 %164
  %v166 = vsel %vm78, %v43, 0.0
  %167 = vadd.xlane.f32.xlu0 %v166
  %v168 = vpop.xlane.xlu0 %167
  %v169 = vsel %vm78, %v44, 0.0
  %170 = vadd.xlane.f32.xlu0 %v169
  %v171 = vpop.xlane.xlu0 %170
  %v172 = vsel %vm78, %v45, 0.0
  %173 = vadd.xlane.f32.xlu0 %v172
  %v174 = vpop.xlane.xlu0 %173
  %v175 = vsel %vm78, %v46, 0.0
  %176 = vadd.xlane.f32.xlu0 %v175
  %v177 = vpop.xlane.xlu0 %176
  %v178 = vsel %vm78, %v47, 0.0
  %179 = vadd.xlane.f32.xlu0 %v178
  %v180 = vpop.xlane.xlu0 %179
  %v181 = vsel %vm78, %v48, 0.0
  %182 = vadd.xlane.f32.xlu0 %v181
  %v183 = vpop.xlane.xlu0 %182
  %v184 = vsel %vm78, %v49, 0.0
  %185 = vadd.xlane.f32.xlu0 %v184
  %v186 = vpop.xlane.xlu0 %185
  %v187 = vsel %vm78, %v50, 0.0
  %188 = vadd.xlane.f32.xlu0 %v187
  %v189 = vpop.xlane.xlu0 %188
  %v190 = vsel %vm78, %v51, 0.0
  %191 = vadd.xlane.f32.xlu0 %v190
  %v192 = vpop.xlane.xlu0 %191
  %v193 = vsel %vm78, %v52, 0.0
  %194 = vadd.xlane.f32.xlu0 %v193
  %v195 = vpop.xlane.xlu0 %194
  %v196 = vsel %vm78, %v53, 0.0
  %197 = vadd.xlane.f32.xlu0 %v196
  %v198 = vpop.xlane.xlu0 %197
  %v199 = vsel %vm78, %v54, 0.0
  %200 = vadd.xlane.f32.xlu0 %v199
  %v201 = vpop.xlane.xlu0 %200
  %v202 = vsel %vm78, %v55, 0.0
  %203 = vadd.xlane.f32.xlu0 %v202
  %v204 = vpop.xlane.xlu0 %203
  %v205 = vsel %vm78, %v56, 0.0
  %206 = vadd.xlane.f32.xlu0 %v205
  %v207 = vpop.xlane.xlu0 %206
  %v208 = vsel %vm78, %v57, 0.0
  %209 = vadd.xlane.f32.xlu0 %v208
  %v210 = vpop.xlane.xlu0 %209
  %v211 = vsel %vm78, %v58, 0.0
  %212 = vadd.xlane.f32.xlu0 %v211
  %v213 = vpop.xlane.xlu0 %212
  %v214 = vsel %vm78, %v59, 0.0
  %215 = vadd.xlane.f32.xlu0 %v214
  %v216 = vpop.xlane.xlu0 %215
  %v217 = vsel %vm78, %v60, 0.0
  %218 = vadd.xlane.f32.xlu0 %v217
  %v219 = vpop.xlane.xlu0 %218
  %v220 = vsel %vm78, %v61, 0.0
  %221 = vadd.xlane.f32.xlu0 %v220
  %v222 = vpop.xlane.xlu0 %221
  %v223 = vsel %vm78, %v62, 0.0
  %224 = vadd.xlane.f32.xlu0 %v223
  %v225 = vpop.xlane.xlu0 %224
  %v226 = vsel %vm78, %v63, 0.0
  %227 = vadd.xlane.f32.xlu0 %v226
  %v228 = vpop.xlane.xlu0 %227
  %v229 = vsel %vm78, %v64, 0.0
  %230 = vadd.xlane.f32.xlu0 %v229
  %v231 = vpop.xlane.xlu0 %230
  %v232 = vsel %vm78, %v65, 0.0
  %233 = vadd.xlane.f32.xlu0 %v232
  %v234 = vpop.xlane.xlu0 %233
  %v235 = vsel %vm78, %v66, 0.0
  %236 = vadd.xlane.f32.xlu0 %v235
  %v237 = vpop.xlane.xlu0 %236
  %v238 = vsel %vm78, %v67, 0.0
  %239 = vadd.xlane.f32.xlu0 %v238
  %v240 = vpop.xlane.xlu0 %239
  %v241 = vsel %vm78, %v68, 0.0
  %242 = vadd.xlane.f32.xlu0 %v241
  %v243 = vpop.xlane.xlu0 %242
  %v244 = vsel %vm78, %v69, 0.0
  %245 = vadd.xlane.f32.xlu0 %v244
  %v246 = vpop.xlane.xlu0 %245
  %v247 = vsel %vm78, %v70, 0.0
  %248 = vadd.xlane.f32.xlu0 %v247
  %v249 = vpop.xlane.xlu0 %248
  %v250 = vsel %vm78, %v71, 0.0
  %251 = vadd.xlane.f32.xlu0 %v250
  %v252 = vpop.xlane.xlu0 %251
  %v253 = vsel %vm78, %v72, 0.0
  %254 = vadd.xlane.f32.xlu0 %v253
  %v255 = vpop.xlane.xlu0 %254
  %v256 = vsel %vm78, %v73, 0.0
  %257 = vadd.xlane.f32.xlu0 %v256
  %v258 = vpop.xlane.xlu0 %257
  %v259 = vsel %vm78, %v74, 0.0
  %260 = vadd.xlane.f32.xlu0 %v259
  %v261 = vpop.xlane.xlu0 %260
  %v262 = vsel %vm78, %v75, 0.0
  %263 = vadd.xlane.f32.xlu0 %v262
  %v264 = vpop.xlane.xlu0 %263
  %v265 = vsel %vm78, %v76, 0.0
  %266 = vadd.xlane.f32.xlu0 %v265
  %v267 = vpop.xlane.xlu0 %266
  %v268 = vsel %vm78, %v77, 0.0
  %269 = vadd.xlane.f32.xlu0 %v268
  %v270 = vpop.xlane.xlu0 %269
  %v271 = vrcp.pop 64.0
  %v272 = vmul.f32 %v81, %v271
  %v273 = vmul.f32 %v84, %v271
  %v274 = vmul.f32 %v87, %v271
  %v275 = vmul.f32 %v90, %v271
  %v276 = vmul.f32 %v93, %v271
  %v277 = vmul.f32 %v96, %v271
  %v278 = vmul.f32 %v99, %v271
  %v279 = vmul.f32 %v102, %v271
  %v280 = vmul.f32 %v105, %v271
  %v281 = vmul.f32 %v108, %v271
  %v282 = vmul.f32 %v111, %v271
  %v283 = vmul.f32 %v114, %v271
  %v284 = vmul.f32 %v117, %v271
  %v285 = vmul.f32 %v120, %v271
  %v286 = vmul.f32 %v123, %v271
  %v287 = vmul.f32 %v126, %v271
  %v288 = vmul.f32 %v129, %v271
  %v289 = vmul.f32 %v132, %v271
  %v290 = vmul.f32 %v135, %v271
  %v291 = vmul.f32 %v138, %v271
  %v292 = vmul.f32 %v141, %v271
  %v293 = vmul.f32 %v144, %v271
  %v294 = vmul.f32 %v147, %v271
  %v295 = vmul.f32 %v150, %v271
  %v296 = vmul.f32 %v153, %v271
  %v297 = vmul.f32 %v156, %v271
  %v298 = vmul.f32 %v159, %v271
  %v299 = vmul.f32 %v162, %v271
  %v300 = vmul.f32 %v165, %v271
  %v301 = vmul.f32 %v168, %v271
  %v302 = vmul.f32 %v171, %v271
  %v303 = vmul.f32 %v174, %v271
  %v304 = vmul.f32 %v177, %v271
  %v305 = vmul.f32 %v180, %v271
  %v306 = vmul.f32 %v183, %v271
  %v307 = vmul.f32 %v186, %v271
  %v308 = vmul.f32 %v189, %v271
  %v309 = vmul.f32 %v192, %v271
  %v310 = vmul.f32 %v195, %v271
  %v311 = vmul.f32 %v198, %v271
  %v312 = vmul.f32 %v201, %v271
  %v313 = vmul.f32 %v204, %v271
  %v314 = vmul.f32 %v207, %v271
  %v315 = vmul.f32 %v210, %v271
  %v316 = vmul.f32 %v213, %v271
  %v317 = vmul.f32 %v216, %v271
  %v318 = vmul.f32 %v219, %v271
  %v319 = vmul.f32 %v222, %v271
  %v320 = vmul.f32 %v225, %v271
  %v321 = vmul.f32 %v228, %v271
  %v322 = vmul.f32 %v231, %v271
  %v323 = vmul.f32 %v234, %v271
  %v324 = vmul.f32 %v237, %v271
  %v325 = vmul.f32 %v240, %v271
  %v326 = vmul.f32 %v243, %v271
  %v327 = vmul.f32 %v246, %v271
  %v328 = vmul.f32 %v249, %v271
  %v329 = vmul.f32 %v252, %v271
  %v330 = vmul.f32 %v255, %v271
  %v331 = vmul.f32 %v258, %v271
  %v332 = vmul.f32 %v261, %v271
  %v333 = vmul.f32 %v264, %v271
  %v334 = vmul.f32 %v267, %v271
  %v335 = vmul.f32 %v270, %v271
  %v336 = vld [vmem:[%s1] sm:$0xff]
  %v337 = vld [vmem:[%s1 + $0x8] sm:$0x3]
  %v338 = vld [vmem:[%s2] sm:$0xff]
  %v339 = vld [vmem:[%s2 + $0x8] sm:$0x3]
  %341 = vset.pattern.permute.xlu0 0
  %342 = vperm.xlu0 %341, %v338
  %v343 = vpop.permute.xlu0 %342
  %346 = vset.pattern.permute.xlu0 0
  %347 = vperm.xlu0 %346, %v339
  %v348 = vpop.permute.xlu0 %347
  %v414 = vlaneseq
  %v415 = vand.u32 %v414, 127
  %v416 = vlaneseq
  %v417 = vshrl.u32 %v416, 7
  %v418 = vsub.s32 %v415, %v417
  %v419 = vrot.slane %v272, %v418
  %v420 = vlaneseq
  %v421 = vshrl.u32 %v420, 7
  %v422 = vsub.s32 %v415, %v421
  %v423 = vrot.slane %v273, %v422
  %v424 = vlaneseq
  %v425 = vshrl.u32 %v424, 7
  %v426 = vsub.s32 %v415, %v425
  %v427 = vrot.slane %v274, %v426
  %v428 = vlaneseq
  %v429 = vshrl.u32 %v428, 7
  %v430 = vsub.s32 %v415, %v429
  %v431 = vrot.slane %v275, %v430
  %v432 = vlaneseq
  %v433 = vshrl.u32 %v432, 7
  %v434 = vsub.s32 %v415, %v433
  %v435 = vrot.slane %v276, %v434
  %v436 = vlaneseq
  %v437 = vshrl.u32 %v436, 7
  %v438 = vsub.s32 %v415, %v437
  %v439 = vrot.slane %v277, %v438
  %v440 = vlaneseq
  %v441 = vshrl.u32 %v440, 7
  %v442 = vsub.s32 %v415, %v441
  %v443 = vrot.slane %v278, %v442
  %v444 = vlaneseq
  %v445 = vshrl.u32 %v444, 7
  %v446 = vsub.s32 %v415, %v445
  %v447 = vrot.slane %v279, %v446
  %v448 = vlaneseq
  %v449 = vshrl.u32 %v448, 7
  %v450 = vsub.s32 %v415, %v449
  %v451 = vrot.slane %v280, %v450
  %v452 = vlaneseq
  %v453 = vshrl.u32 %v452, 7
  %v454 = vsub.s32 %v415, %v453
  %v455 = vrot.slane %v281, %v454
  %v456 = vlaneseq
  %v457 = vshrl.u32 %v456, 7
  %v458 = vsub.s32 %v415, %v457
  %v459 = vrot.slane %v282, %v458
  %v460 = vlaneseq
  %v461 = vshrl.u32 %v460, 7
  %v462 = vsub.s32 %v415, %v461
  %v463 = vrot.slane %v283, %v462
  %v464 = vlaneseq
  %v465 = vshrl.u32 %v464, 7
  %v466 = vsub.s32 %v415, %v465
  %v467 = vrot.slane %v284, %v466
  %v468 = vlaneseq
  %v469 = vshrl.u32 %v468, 7
  %v470 = vsub.s32 %v415, %v469
  %v471 = vrot.slane %v285, %v470
  %v472 = vlaneseq
  %v473 = vshrl.u32 %v472, 7
  %v474 = vsub.s32 %v415, %v473
  %v475 = vrot.slane %v286, %v474
  %v476 = vlaneseq
  %v477 = vshrl.u32 %v476, 7
  %v478 = vsub.s32 %v415, %v477
  %v479 = vrot.slane %v287, %v478
  %v480 = vlaneseq
  %v481 = vshrl.u32 %v480, 7
  %v482 = vsub.s32 %v415, %v481
  %v483 = vrot.slane %v288, %v482
  %v484 = vlaneseq
  %v485 = vshrl.u32 %v484, 7
  %v486 = vsub.s32 %v415, %v485
  %v487 = vrot.slane %v289, %v486
  %v488 = vlaneseq
  %v489 = vshrl.u32 %v488, 7
  %v490 = vsub.s32 %v415, %v489
  %v491 = vrot.slane %v290, %v490
  %v492 = vlaneseq
  %v493 = vshrl.u32 %v492, 7
  %v494 = vsub.s32 %v415, %v493
  %v495 = vrot.slane %v291, %v494
  %v496 = vlaneseq
  %v497 = vshrl.u32 %v496, 7
  %v498 = vsub.s32 %v415, %v497
  %v499 = vrot.slane %v292, %v498
  %v500 = vlaneseq
  %v501 = vshrl.u32 %v500, 7
  %v502 = vsub.s32 %v415, %v501
  %v503 = vrot.slane %v293, %v502
  %v504 = vlaneseq
  %v505 = vshrl.u32 %v504, 7
  %v506 = vsub.s32 %v415, %v505
  %v507 = vrot.slane %v294, %v506
  %v508 = vlaneseq
  %v509 = vshrl.u32 %v508, 7
  %v510 = vsub.s32 %v415, %v509
  %v511 = vrot.slane %v295, %v510
  %v512 = vlaneseq
  %v513 = vshrl.u32 %v512, 7
  %v514 = vsub.s32 %v415, %v513
  %v515 = vrot.slane %v296, %v514
  %v516 = vlaneseq
  %v517 = vshrl.u32 %v516, 7
  %v518 = vsub.s32 %v415, %v517
  %v519 = vrot.slane %v297, %v518
  %v520 = vlaneseq
  %v521 = vshrl.u32 %v520, 7
  %v522 = vsub.s32 %v415, %v521
  %v523 = vrot.slane %v298, %v522
  %v524 = vlaneseq
  %v525 = vshrl.u32 %v524, 7
  %v526 = vsub.s32 %v415, %v525
  %v527 = vrot.slane %v299, %v526
  %v528 = vlaneseq
  %v529 = vshrl.u32 %v528, 7
  %v530 = vsub.s32 %v415, %v529
  %v531 = vrot.slane %v300, %v530
  %v532 = vlaneseq
  %v533 = vshrl.u32 %v532, 7
  %v534 = vsub.s32 %v415, %v533
  %v535 = vrot.slane %v301, %v534
  %v536 = vlaneseq
  %v537 = vshrl.u32 %v536, 7
  %v538 = vsub.s32 %v415, %v537
  %v539 = vrot.slane %v302, %v538
  %v540 = vlaneseq
  %v541 = vshrl.u32 %v540, 7
  %v542 = vsub.s32 %v415, %v541
  %v543 = vrot.slane %v303, %v542
  %v544 = vlaneseq
  %v545 = vshrl.u32 %v544, 7
  %v546 = vsub.s32 %v415, %v545
  %v547 = vrot.slane %v304, %v546
  %v548 = vlaneseq
  %v549 = vshrl.u32 %v548, 7
  %v550 = vsub.s32 %v415, %v549
  %v551 = vrot.slane %v305, %v550
  %v552 = vlaneseq
  %v553 = vshrl.u32 %v552, 7
  %v554 = vsub.s32 %v415, %v553
  %v555 = vrot.slane %v306, %v554
  %v556 = vlaneseq
  %v557 = vshrl.u32 %v556, 7
  %v558 = vsub.s32 %v415, %v557
  %v559 = vrot.slane %v307, %v558
  %v560 = vlaneseq
  %v561 = vshrl.u32 %v560, 7
  %v562 = vsub.s32 %v415, %v561
  %v563 = vrot.slane %v308, %v562
  %v564 = vlaneseq
  %v565 = vshrl.u32 %v564, 7
  %v566 = vsub.s32 %v415, %v565
  %v567 = vrot.slane %v309, %v566
  %v568 = vlaneseq
  %v569 = vshrl.u32 %v568, 7
  %v570 = vsub.s32 %v415, %v569
  %v571 = vrot.slane %v310, %v570
  %v572 = vlaneseq
  %v573 = vshrl.u32 %v572, 7
  %v574 = vsub.s32 %v415, %v573
  %v575 = vrot.slane %v311, %v574
  %v576 = vlaneseq
  %v577 = vshrl.u32 %v576, 7
  %v578 = vsub.s32 %v415, %v577
  %v579 = vrot.slane %v312, %v578
  %v580 = vlaneseq
  %v581 = vshrl.u32 %v580, 7
  %v582 = vsub.s32 %v415, %v581
  %v583 = vrot.slane %v313, %v582
  %v584 = vlaneseq
  %v585 = vshrl.u32 %v584, 7
  %v586 = vsub.s32 %v415, %v585
  %v587 = vrot.slane %v314, %v586
  %v588 = vlaneseq
  %v589 = vshrl.u32 %v588, 7
  %v590 = vsub.s32 %v415, %v589
  %v591 = vrot.slane %v315, %v590
  %v592 = vlaneseq
  %v593 = vshrl.u32 %v592, 7
  %v594 = vsub.s32 %v415, %v593
  %v595 = vrot.slane %v316, %v594
  %v596 = vlaneseq
  %v597 = vshrl.u32 %v596, 7
  %v598 = vsub.s32 %v415, %v597
  %v599 = vrot.slane %v317, %v598
  %v600 = vlaneseq
  %v601 = vshrl.u32 %v600, 7
  %v602 = vsub.s32 %v415, %v601
  %v603 = vrot.slane %v318, %v602
  %v604 = vlaneseq
  %v605 = vshrl.u32 %v604, 7
  %v606 = vsub.s32 %v415, %v605
  %v607 = vrot.slane %v319, %v606
  %v608 = vlaneseq
  %v609 = vshrl.u32 %v608, 7
  %v610 = vsub.s32 %v415, %v609
  %v611 = vrot.slane %v320, %v610
  %v612 = vlaneseq
  %v613 = vshrl.u32 %v612, 7
  %v614 = vsub.s32 %v415, %v613
  %v615 = vrot.slane %v321, %v614
  %v616 = vlaneseq
  %v617 = vshrl.u32 %v616, 7
  %v618 = vsub.s32 %v415, %v617
  %v619 = vrot.slane %v322, %v618
  %v620 = vlaneseq
  %v621 = vshrl.u32 %v620, 7
  %v622 = vsub.s32 %v415, %v621
  %v623 = vrot.slane %v323, %v622
  %v624 = vlaneseq
  %v625 = vshrl.u32 %v624, 7
  %v626 = vsub.s32 %v415, %v625
  %v627 = vrot.slane %v324, %v626
  %v628 = vlaneseq
  %v629 = vshrl.u32 %v628, 7
  %v630 = vsub.s32 %v415, %v629
  %v631 = vrot.slane %v325, %v630
  %v632 = vlaneseq
  %v633 = vshrl.u32 %v632, 7
  %v634 = vsub.s32 %v415, %v633
  %v635 = vrot.slane %v326, %v634
  %v636 = vlaneseq
  %v637 = vshrl.u32 %v636, 7
  %v638 = vsub.s32 %v415, %v637
  %v639 = vrot.slane %v327, %v638
  %v640 = vlaneseq
  %v641 = vshrl.u32 %v640, 7
  %v642 = vsub.s32 %v415, %v641
  %v643 = vrot.slane %v328, %v642
  %v644 = vlaneseq
  %v645 = vshrl.u32 %v644, 7
  %v646 = vsub.s32 %v415, %v645
  %v647 = vrot.slane %v329, %v646
  %v648 = vlaneseq
  %v649 = vshrl.u32 %v648, 7
  %v650 = vsub.s32 %v415, %v649
  %v651 = vrot.slane %v330, %v650
  %v652 = vlaneseq
  %v653 = vshrl.u32 %v652, 7
  %v654 = vsub.s32 %v415, %v653
  %v655 = vrot.slane %v331, %v654
  %v656 = vlaneseq
  %v657 = vshrl.u32 %v656, 7
  %v658 = vsub.s32 %v415, %v657
  %v659 = vrot.slane %v332, %v658
  %v660 = vlaneseq
  %v661 = vshrl.u32 %v660, 7
  %v662 = vsub.s32 %v415, %v661
  %v663 = vrot.slane %v333, %v662
  %v664 = vlaneseq
  %v665 = vshrl.u32 %v664, 7
  %v666 = vsub.s32 %v415, %v665
  %v667 = vrot.slane %v334, %v666
  %v668 = vlaneseq
  %v669 = vshrl.u32 %v668, 7
  %v670 = vsub.s32 %v415, %v669
  %v671 = vrot.slane %v335, %v670
  %vm672 = vcmask 1041409
  %v673 = vsel %vm672, %v423, %v419
  %vm674 = vcmask 1042434
  %v675 = vsel %vm674, %v427, %v673
  %vm676 = vcmask 1043459
  %v677 = vsel %vm676, %v431, %v675
  %vm678 = vcmask 1044484
  %v679 = vsel %vm678, %v435, %v677
  %vm680 = vcmask 1045509
  %v681 = vsel %vm680, %v439, %v679
  %vm682 = vcmask 1046534
  %v683 = vsel %vm682, %v443, %v681
  %vm684 = vcmask 1047559
  %v685 = vsel %vm684, %v447, %v683
  %v686 = vsel %vm672, %v455, %v451
  %v687 = vsel %vm674, %v459, %v686
  %v688 = vsel %vm676, %v463, %v687
  %v689 = vsel %vm678, %v467, %v688
  %v690 = vsel %vm680, %v471, %v689
  %v691 = vsel %vm682, %v475, %v690
  %v692 = vsel %vm684, %v479, %v691
  %v693 = vsel %vm672, %v487, %v483
  %v694 = vsel %vm674, %v491, %v693
  %v695 = vsel %vm676, %v495, %v694
  %v696 = vsel %vm678, %v499, %v695
  %v697 = vsel %vm680, %v503, %v696
  %v698 = vsel %vm682, %v507, %v697
  %v699 = vsel %vm684, %v511, %v698
  %v700 = vsel %vm672, %v519, %v515
  %v701 = vsel %vm674, %v523, %v700
  %v702 = vsel %vm676, %v527, %v701
  %v703 = vsel %vm678, %v531, %v702
  %v704 = vsel %vm680, %v535, %v703
  %v705 = vsel %vm682, %v539, %v704
  %v706 = vsel %vm684, %v543, %v705
  %v707 = vsel %vm672, %v551, %v547
  %v708 = vsel %vm674, %v555, %v707
  %v709 = vsel %vm676, %v559, %v708
  %v710 = vsel %vm678, %v563, %v709
  %v711 = vsel %vm680, %v567, %v710
  %v712 = vsel %vm682, %v571, %v711
  %v713 = vsel %vm684, %v575, %v712
  %v714 = vsel %vm672, %v583, %v579
  %v715 = vsel %vm674, %v587, %v714
  %v716 = vsel %vm676, %v591, %v715
  %v717 = vsel %vm678, %v595, %v716
  %v718 = vsel %vm680, %v599, %v717
  %v719 = vsel %vm682, %v603, %v718
  %v720 = vsel %vm684, %v607, %v719
  %v721 = vsel %vm672, %v615, %v611
  %v722 = vsel %vm674, %v619, %v721
  %v723 = vsel %vm676, %v623, %v722
  %v724 = vsel %vm678, %v627, %v723
  %v725 = vsel %vm680, %v631, %v724
  %v726 = vsel %vm682, %v635, %v725
  %v727 = vsel %vm684, %v639, %v726
  %v728 = vsel %vm672, %v647, %v643
  %v729 = vsel %vm674, %v651, %v728
  %v730 = vsel %vm676, %v655, %v729
  %v731 = vsel %vm678, %v659, %v730
  %v732 = vsel %vm680, %v663, %v731
  %v733 = vsel %vm682, %v667, %v732
  %v734 = vsel %vm684, %v671, %v733
  %vm743 = vcmask 523264
  %v745 = vsel %vm743, %v336, 0
  %v748 = vsel %vm743, %v337, 0
  %750 = vmatprep.subr.mxu0 0.0
  %751 = vmatpush1.msra.mxu0 %v685
  %752 = vmatprep.subr.mxu0 0.0
  %753 = vmatpush1.msra.mxu0 %v692
  %754 = vmatprep.subr.mxu0 0.0
  %755 = vmatpush1.msra.mxu0 %v699
  %756 = vmatprep.subr.mxu0 0.0
  %757 = vmatpush1.msra.mxu0 %v706
  %758 = vmatprep.subr.mxu0 0.0
  %759 = vmatpush1.msra.mxu0 %v713
  %760 = vmatprep.subr.mxu0 0.0
  %761 = vmatpush1.msra.mxu0 %v720
  %762 = vmatprep.subr.mxu0 0.0
  %763 = vmatpush1.msra.mxu0 %v727
  %764 = vmatprep.subr.mxu0 0.0
  %765 = vmatpush1.msra.mxu0 %v734
  %766 = vmatprep.subr.mxu0 0.0
  %767 = vmatpush1.msra.mxu0 0.0
  %768 = vmatprep.subr.mxu0 0.0
  %769 = vmatpush1.msra.mxu0 0.0
  %770 = vmatprep.subr.mxu0 0.0
  %771 = vmatpush1.msra.mxu0 0.0
  %772 = vmatprep.subr.mxu0 0.0
  %773 = vmatpush1.msra.mxu0 0.0
  %774 = vmatprep.subr.mxu0 0.0
  %775 = vmatpush1.msra.mxu0 0.0
  %776 = vmatprep.subr.mxu0 0.0
  %777 = vmatpush1.msra.mxu0 0.0
  %778 = vmatprep.subr.mxu0 0.0
  %779 = vmatpush1.msra.mxu0 0.0
  %780 = vmatprep.subr.mxu0 0.0
  %781 = vmatpush1.msra.mxu0 0.0
  %782 = vmatprep.subr.mxu0 0.0
  %783 = vmatpush1.msra.mxu0 0.0
  %784 = vmatprep.subr.mxu0 0.0
  %785 = vmatpush1.msra.mxu0 0.0
  %786 = vmatprep.subr.mxu0 0.0
  %787 = vmatpush1.msra.mxu0 0.0
  %788 = vmatprep.subr.mxu0 0.0
  %789 = vmatpush1.msra.mxu0 0.0
  %790 = vmatprep.subr.mxu0 0.0
  %791 = vmatpush1.msra.mxu0 0.0
  %792 = vmatprep.subr.mxu0 0.0
  %793 = vmatpush1.msra.mxu0 0.0
  %794 = vmatprep.subr.mxu0 0.0
  %795 = vmatpush1.msra.mxu0 0.0
  %796 = vmatprep.subr.mxu0 0.0
  %797 = vmatpush1.msra.mxu0 0.0
  %798 = vmatprep.subr.mxu0 0.0
  %799 = vmatpush1.msra.mxu0 0.0
  %800 = vmatprep.subr.mxu0 0.0
  %801 = vmatpush1.msra.mxu0 0.0
  %802 = vmatprep.subr.mxu0 0.0
  %803 = vmatpush1.msra.mxu0 0.0
  %804 = vmatprep.subr.mxu0 0.0
  %805 = vmatpush1.msra.mxu0 0.0
  %806 = vmatprep.subr.mxu0 0.0
  %807 = vmatpush1.msra.mxu0 0.0
  %808 = vmatprep.subr.mxu0 0.0
  %809 = vmatpush1.msra.mxu0 0.0
  %810 = vmatprep.subr.mxu0 0.0
  %811 = vmatpush1.msra.mxu0 0.0
  %812 = vmatprep.subr.mxu0 0.0
  %813 = vmatpush1.msra.mxu0 0.0
  %814 = vmatprep.mubr.f32.mxu0 0.0
  %815 = vmatmul.mubr.f32.gmra.mrb[0].mxu0 %v745
  %v816 = vpop.f32.mrb[0].mxu0
  %v817 = vadd.f32 %v343, %v816
  %v818 = vpop.f32.mrb[0].mxu0
  %819 = vmatprep.mubr.f32.mxu0 0.0
  %820 = vmatmul.mubr.f32.gmra.mrb[0].mxu0 %v748
  %v821 = vpop.f32.mrb[0].mxu0
  %v822 = vadd.f32 %v348, %v821
  %v823 = vpop.f32.mrb[0].mxu0
  %824 = vdwg.mxu0
  %vm825 = vcmask 15360
  %826 = vst.msk [vmem:[%s3] sm:$0xff] %vm825, %v817
  %vm827 = vcmask 9216
  %828 = vst.msk [vmem:[%s3 + $0x8] sm:$0x3] %vm827, %v822
  // Predicated region
  $region14: #{_lambda_.21} parent=0 // pred_check
    _
  $region15: #{_lambda_.21} parent=0 // pred_check_branch
    %830 = sbr.rel (0) target = $region17
  $region16: #{_lambda_.21} parent=0 // pred_region
    _
  $region17: #{_lambda_.21} parent=0 // pred_fallthru
    _
  // Predicated region
  $region18: #{_lambda_.21} parent=0 // pred_check
    _
  $region19: #{_lambda_.21} parent=0 // pred_check_branch
    %832 = sbr.rel (0) target = $region21
  $region20: #{_lambda_.21} parent=0 // pred_region
    _
  $region21: #{_lambda_.21} parent=0 // pred_fallthru
    _

</llo_original>
